<compile_context>
chip_gen: v7x
topology: tpu7x:2x2x1
jax: 0.10.0
libtpu: 0.0.40
codegen_flags: <defaults>
</compile_context>

<pallas_src>
import functools
import math

import jax
import jax.numpy as jnp
from jax.experimental import pallas as pl
from jax.experimental.pallas import tpu as pltpu

_F32 = jnp.float32
_BF16 = jnp.bfloat16
_NEG = -1000000000000.0  # same fill value as the reference masked_fill / m2


# ----------------------------------------------------------------------------
# Pallas kernels
# ----------------------------------------------------------------------------
def _linear_kernel(*refs, act, residual):
    if residual:
        x_ref, w_ref, b_ref, r_ref, o_ref = refs
    else:
        x_ref, w_ref, b_ref, o_ref = refs
    y = jnp.dot(x_ref[...], w_ref[...], preferred_element_type=jnp.float32)
    y = y + b_ref[...]
    if act == "relu":
        y = jnp.maximum(y, 0.0)
    if residual:
        y = y + r_ref[...]
    o_ref[...] = y


def _layernorm_kernel(*refs, residual, eps):
    if residual:
        x_ref, r_ref, g_ref, b_ref, o_ref = refs
    else:
        x_ref, g_ref, b_ref, o_ref = refs
    x = x_ref[...]
    if residual:
        x = x + r_ref[...]
    mu = jnp.mean(x, axis=-1, keepdims=True)
    xc = x - mu
    var = jnp.mean(xc * xc, axis=-1, keepdims=True)
    o_ref[...] = xc * jax.lax.rsqrt(var + eps) * g_ref[...] + b_ref[...]


def _mha_kernel(q_ref, k_ref, v_ref, o_ref, *, num_heads, causal, q_tile):
    """softmax(qK^T + additive causal bias) @ V, all heads per grid step.

    q is already pre-scaled by 1/sqrt(d_head). Blocks are (1, TQ, d)/(1, Lk, d)
    bf16; heads are static lane slices so the output store is (TQ, d) dense.
    """
    qs = q_ref[0]                                   # (TQ, d)  bf16, pre-scaled
    k = k_ref[0]                                    # (Lk, d)  bf16
    v = v_ref[0]                                    # (Lk, d)  bf16
    tq, d = qs.shape
    lk = k.shape[0]
    dh = d // num_heads
    if causal:
        row = (pl.program_id(1) * q_tile
               + jax.lax.broadcasted_iota(jnp.int32, (tq, lk), 0))
        col = jax.lax.broadcasted_iota(jnp.int32, (tq, lk), 1)
        bias = jnp.where(col > row, jnp.float32(_NEG), jnp.float32(0.0))
    outs = []
    for h in range(num_heads):
        hs = slice(h * dh, (h + 1) * dh)
        s = jax.lax.dot_general(qs[:, hs], k[:, hs], (((1,), (1,)), ((), ())),
                                preferred_element_type=jnp.float32)  # (TQ, Lk)
        if causal:
            s = s + bias
        m = jnp.max(s, axis=-1, keepdims=True)
        e = jnp.exp(s - m)
        denom = jnp.sum(e, axis=-1, keepdims=True)
        oh = jax.lax.dot_general(e.astype(_BF16), v[:, hs],
                                 (((1,), (0,)), ((), ())),
                                 preferred_element_type=jnp.float32)  # (TQ, dh)
        outs.append(oh * pl.reciprocal(denom, approx=True))
    o_ref[0] = jnp.concatenate(outs, axis=-1)


def _per_row_roll(x, amounts, width):
    """result[r, c] = x[r, (c - amounts[r]) % width].

    Per-row cyclic right-roll built from log2(width) static roll + select
    stages (static lane slices + concat + where only -- no gather, no strided
    rotate, no reshape), so it lowers robustly on every TPU generation.
    """
    out = x
    for b in range(max(1, int(width).bit_length())):
        s = (1 << b) % width
        if s == 0:
            continue
        rolled = jnp.concatenate([out[:, width - s:], out[:, :width - s]],
                                 axis=1)
        out = jnp.where(((amounts >> b) & 1) == 1, rolled, out)
    return out


def _rel_attn_kernel(q_ref, k_ref, p_ref, v_ref, u_ref, vb_ref, o_ref, *,
                     num_heads, scale, mem_len, q_tile):
    """Fused Transformer-XL relative attention for one (batch, q-tile).

    Computes (q+u)K^T and (q+v)R^T, applies the relative shift in-kernel via a
    per-row cyclic roll, applies the causal mask (iota), softmax and @V.
    Query rows are restricted to the x-part of mememb (the only rows the
    decoder layer keeps), which is exact because the Linear/attention rows are
    independent; global mememb row index = mem_len + query position.
    """
    q = q_ref[0]                                    # (TQ, d)  f32
    k = k_ref[0]                                    # (L,  d)  bf16
    p = p_ref[0]                                    # (L,  d)  bf16 rel-pos
    v = v_ref[0]                                    # (L,  d)  bf16
    u = u_ref[...]                                  # (1, dh)  f32
    vb = vb_ref[...]                                # (1, dh)  f32
    tq, d = q.shape
    L = k.shape[0]
    dh = d // num_heads

    row0 = mem_len + pl.program_id(1) * q_tile
    rows = row0 + jax.lax.broadcasted_iota(jnp.int32, (tq, L), 0)
    cols = jax.lax.broadcasted_iota(jnp.int32, (tq, L), 1)
    # row r of bd must be rolled right by (r + 1): bd_shift[r, c] = bd[r, L-1-r+c]
    amounts = row0 + 1 + jax.lax.broadcasted_iota(jnp.int32, (tq, 1), 0)

    outs = []
    for h in range(num_heads):
        hs = slice(h * dh, (h + 1) * dh)
        qh = q[:, hs]
        qu = ((qh + u) * scale).astype(_BF16)       # fold scale into operands
        qv = ((qh + vb) * scale).astype(_BF16)
        ac = jax.lax.dot_general(qu, k[:, hs], (((1,), (1,)), ((), ())),
                                 preferred_element_type=jnp.float32)  # (TQ, L)
        bd = jax.lax.dot_general(qv, p[:, hs], (((1,), (1,)), ((), ())),
                                 preferred_element_type=jnp.float32)  # (TQ, L)
        bd = _per_row_roll(bd, amounts, L)
        s = ac + bd
        # causal mask == reference mask1 (triu, diagonal=1); entries where the
        # rolled bd differs from the exact torch shift are exactly the masked
        # ones, so post-mask the result is identical to the reference.
        s = jnp.where(cols > rows, jnp.float32(_NEG), s)
        m = jnp.max(s, axis=-1, keepdims=True)
        e = jnp.exp(s - m)
        denom = jnp.sum(e, axis=-1, keepdims=True)
        oh = jax.lax.dot_general(e.astype(_BF16), v[:, hs],
                                 (((1,), (0,)), ((), ())),
                                 preferred_element_type=jnp.float32)  # (TQ, dh)
        outs.append(oh * pl.reciprocal(denom, approx=True))
    o_ref[0] = jnp.concatenate(outs, axis=-1)


# ----------------------------------------------------------------------------
# Thin wrappers around pallas_call
# ----------------------------------------------------------------------------
def _row_tile(M, limit=256):
    return M if M <= limit else limit


def linear(x, w, b, act="none", residual=None):
    """y = x @ W + b (+ReLU) (+residual); bf16 operands, f32 accum, M-tiled."""
    orig = x.shape
    K = orig[-1]
    N = w.shape[-1]
    M = math.prod(orig[:-1])
    x2 = x.reshape(M, K).astype(_BF16)
    args = [x2, w.astype(_BF16), b.reshape(1, N).astype(_F32)]
    TM = _row_tile(M)
    in_specs = [
        pl.BlockSpec((TM, K), lambda i: (i, 0)),
        pl.BlockSpec((K, N), lambda i: (0, 0)),
        pl.BlockSpec((1, N), lambda i: (0, 0)),
    ]
    if residual is not None:
        in_specs.append(pl.BlockSpec((TM, N), lambda i: (i, 0)))
        args.append(residual.reshape(M, N).astype(_F32))
    out = pl.pallas_call(
        functools.partial(_linear_kernel, act=act,
                          residual=residual is not None),
        grid=(pl.cdiv(M, TM),),
        in_specs=in_specs,
        out_specs=pl.BlockSpec((TM, N), lambda i: (i, 0)),
        out_shape=jax.ShapeDtypeStruct((M, N), _F32),
        compiler_params=pltpu.CompilerParams(
            dimension_semantics=("parallel",)),
    )(*args)
    return out.reshape(orig[:-1] + (N,))


def layernorm(x, g, b, residual=None):
    """LayerNorm(x [+ residual]); row-tiled, eps=1e-5 like nn.LayerNorm."""
    shape = x.shape
    D = shape[-1]
    M = math.prod(shape[:-1])
    x2 = x.reshape(M, D).astype(_F32)
    TM = _row_tile(M)
    in_specs = [pl.BlockSpec((TM, D), lambda i: (i, 0))]
    args = [x2]
    if residual is not None:
        in_specs.append(pl.BlockSpec((TM, D), lambda i: (i, 0)))
        args.append(residual.reshape(M, D).astype(_F32))
    in_specs += [pl.BlockSpec((1, D), lambda i: (0, 0)),
                 pl.BlockSpec((1, D), lambda i: (0, 0))]
    args += [g.reshape(1, D).astype(_F32), b.reshape(1, D).astype(_F32)]
    out = pl.pallas_call(
        functools.partial(_layernorm_kernel,
                          residual=residual is not None, eps=1e-5),
        grid=(pl.cdiv(M, TM),),
        in_specs=in_specs,
        out_specs=pl.BlockSpec((TM, D), lambda i: (i, 0)),
        out_shape=jax.ShapeDtypeStruct((M, D), _F32),
        compiler_params=pltpu.CompilerParams(
            dimension_semantics=("parallel",)),
    )(*args)
    return out.reshape(shape)


def mha(ap, x_q, x_kv, num_heads, causal):
    """nn.MultiheadAttention core (batch_first, eval): returns the attention
    context (before out_proj).  causal=True reproduces the additive float m2
    mask of the reference (generated in-kernel, so the batch/head-ordering
    concern of the tiled torch mask does not arise)."""
    B, Lq, d = x_q.shape
    Lk = x_kv.shape[1]
    dh = d // num_heads
    if x_q is x_kv:                       # self-attention: fused QKV matmul
        qkv = linear(x_q, ap["w_in"], ap["b_in"])
        q, k, v = qkv[..., :d], qkv[..., d:2 * d], qkv[..., 2 * d:]
    else:                                 # cross-attention: Q and fused KV
        q = linear(x_q, ap["w_in"][:, :d], ap["b_in"][:d])
        kv = linear(x_kv, ap["w_in"][:, d:], ap["b_in"][d:])
        k, v = kv[..., :d], kv[..., d:]
    qs = (q * (1.0 / math.sqrt(dh))).astype(_BF16)   # pre-scale q, bf16 operand
    TQ = _row_tile(Lq)
    out = pl.pallas_call(
        functools.partial(_mha_kernel, num_heads=num_heads, causal=causal,
                          q_tile=TQ),
        grid=(B, pl.cdiv(Lq, TQ)),
        in_specs=[
            pl.BlockSpec((1, TQ, d), lambda b, i: (b, i, 0)),
            pl.BlockSpec((1, Lk, d), lambda b, i: (b, 0, 0)),
            pl.BlockSpec((1, Lk, d), lambda b, i: (b, 0, 0)),
        ],
        out_specs=pl.BlockSpec((1, TQ, d), lambda b, i: (b, i, 0)),
        out_shape=jax.ShapeDtypeStruct((B, Lq, d), _F32),
        compiler_params=pltpu.CompilerParams(
            dimension_semantics=("parallel", "parallel")),
    )(qs, k.astype(_BF16), v.astype(_BF16))
    return out


def rel_attention(rp, nx, u, v, pos, mem, cfg):
    """Fused Transformer-XL relative attention; returns the per-position
    context (B, T, d) for the x-part rows (before the cw projection)."""
    d = cfg["d_model"]
    H = cfg["num_heads"]
    dh = d // H
    B, T, _ = nx.shape
    mememb = nx if mem is None else jnp.concatenate([mem, nx], axis=1)
    L = mememb.shape[1]
    ml = L - T
    q = linear(nx, rp["w_q"], rp["b_q"])              # queries: x-part rows only
    kv = linear(mememb, rp["w_kv"], rp["b_kv"])       # fused K/V over mem + x
    k, vv = kv[..., :d], kv[..., d:]
    scale = 1.0 / math.sqrt(d)   # reference RelAttention.scale = d_model ** -0.5
    TQ = _row_tile(T)
    pos2 = pos.reshape(1, L, d).astype(_BF16)         # shared across batch
    out = pl.pallas_call(
        functools.partial(_rel_attn_kernel, num_heads=H, scale=scale,
                          mem_len=ml, q_tile=TQ),
        grid=(B, pl.cdiv(T, TQ)),
        in_specs=[
            pl.BlockSpec((1, TQ, d), lambda b, i: (b, i, 0)),
            pl.BlockSpec((1, L, d), lambda b, i: (b, 0, 0)),
            pl.BlockSpec((1, L, d), lambda b, i: (0, 0, 0)),
            pl.BlockSpec((1, L, d), lambda b, i: (b, 0, 0)),
            pl.BlockSpec((1, dh), lambda b, i: (0, 0)),
            pl.BlockSpec((1, dh), lambda b, i: (0, 0)),
        ],
        out_specs=pl.BlockSpec((1, TQ, d), lambda b, i: (b, i, 0)),
        out_shape=jax.ShapeDtypeStruct((B, T, d), _F32),
        compiler_params=pltpu.CompilerParams(
            dimension_semantics=("parallel", "parallel")),
    )(q.astype(_F32), k.astype(_BF16), pos2, vv.astype(_BF16),
      u.reshape(1, dh).astype(_F32), v.reshape(1, dh).astype(_F32))
    return out


# ----------------------------------------------------------------------------
# Model forward (glue in plain JAX)
# ----------------------------------------------------------------------------
def pos_encode_jax(max_len, d_model):
    position = jnp.arange(max_len, dtype=_F32)[:, None]
    div_term = jnp.exp(jnp.arange(0, d_model, 2, dtype=_F32)
                       * (-math.log(10000.0) / d_model))
    pe = jnp.zeros((max_len, d_model), _F32)
    pe = pe.at[:, 0::2].set(jnp.sin(position * div_term))
    pe = pe.at[:, 1::2].set(jnp.cos(position * div_term))
    return pe


def rel_pos_jax(pos_seq, demb):
    inv_freq = 1.0 / jnp.power(10000.0, jnp.arange(0.0, demb, 2.0) / demb)
    sinusoid = jnp.outer(pos_seq, inv_freq)
    return jnp.concatenate([jnp.sin(sinusoid), jnp.cos(sinusoid)], axis=-1)


def encoder_layer_forward(lp, x, num_heads):
    # nn.TransformerEncoderLayer, norm_first=True, eval mode.
    nx = layernorm(x, lp["ln1_g"], lp["ln1_b"])
    ctx = mha(lp["attn"], nx, nx, num_heads, causal=False)
    x = linear(ctx, lp["attn"]["wo"], lp["attn"]["bo"], residual=x)
    nx2 = layernorm(x, lp["ln2_g"], lp["ln2_b"])
    h = linear(nx2, lp["ff_w1"], lp["ff_b1"], act="relu")
    return linear(h, lp["ff_w2"], lp["ff_b2"], residual=x)


def vis_encode(params, x, cfg):
    h = linear(x, params["ve_w1"], params["ve_b1"], act="relu")
    h = linear(h, params["ve_w2"], params["ve_b2"])
    h = h + params["pos"][: h.shape[1], :]
    for lp in params["enc_layers"]:
        h = encoder_layer_forward(lp, h, cfg["num_heads"])
    return h


def decoder_layer_forward(lp, x, y_enc, u, v, pos, mem, cfg):
    H = cfg["num_heads"]
    nx = layernorm(x, lp["ln1_g"], lp["ln1_b"])
    ctx = rel_attention(lp["rmha"], nx, u, v, pos, mem, cfg)
    rl = linear(ctx, lp["rmha"]["cw_w"], lp["rmha"]["cw_b"])
    no = layernorm(rl, lp["ln2_g"], lp["ln2_b"], residual=nx)     # ln2(nx + rl)
    attn_ctx = mha(lp["ca"], no, y_enc, H, causal=True)
    atv = linear(attn_ctx, lp["ca"]["wo"], lp["ca"]["bo"])
    lv = layernorm(atv, lp["ln3_g"], lp["ln3_b"], residual=no)    # ln3(no + atv)
    h = linear(lv, lp["ff_w1"], lp["ff_b1"], act="relu")
    return linear(h, lp["ff_w2"], lp["ff_b2"], residual=lv)       # lv + ff(lv)


def decoder_forward(dp, x, y_enc, mem, cfg):
    d = cfg["d_model"]
    ml = mem[0].shape[1] if mem is not None else 0
    sl = x.shape[1] + ml
    pos_seq = jnp.arange(sl - 1, -1, -1.0)
    pos = rel_pos_jax(pos_seq, d)                                 # (sl, d)
    out = x
    new_mem = []
    for i, lp in enumerate(dp["layers"]):
        m = mem[i] if mem is not None else None
        out = decoder_layer_forward(lp, out, y_enc, dp["u"], dp["v"], pos, m,
                                    cfg)
        new_mem.append(out)
    return out, new_mem


def text_decode(params, vx, y, cfg):
    # TODO(synk): embedding lookup is a plain-JAX gather (no Pallas equivalent
    #             needed); causal masks are generated in-kernel, never stored.
    ey = params["embedding"][y]                                   # (B, T, d)
    T = ey.shape[1]
    mem = None
    outs = []
    for start in range(0, T, cfg["seq_len"]):
        chunk = ey[:, start:start + cfg["seq_len"], :]
        out, nm = decoder_forward(params["decoder"], chunk, vx, mem, cfg)
        mem = [mv[:, -cfg["mem_len"]:, :] for mv in nm]
        outs.append(out)
    return jnp.concatenate(outs, axis=1), mem


def vitxl_forward(params, x, y, cfg):
    vx = vis_encode(params, x, cfg)
    out, _ = text_decode(params, vx, y, cfg)
    return vx, out


# ----------------------------------------------------------------------------
# Deterministic parameter init (synthetic weights, not a checkpoint)
# ----------------------------------------------------------------------------
def init_params(key, cfg):
    d, dff, H = cfg["d_model"], cfg["dff"], cfg["num_heads"]
    dh = d // H
    kit = iter(jax.random.split(key, 4096))

    def nrm(shape, scale=0.05):
        return (scale * jax.random.normal(next(kit), shape)).astype(_F32)

    zeros = lambda s: jnp.zeros(s, _F32)
    ones = lambda s: jnp.ones(s, _F32)

    def mha_params():  # fused in_proj (q|k|v) like nn.MultiheadAttention
        return dict(w_in=nrm((d, 3 * d)), b_in=zeros((3 * d,)),
                    wo=nrm((d, d)), bo=zeros((d,)))

    enc_layers = [dict(ln1_g=ones((d,)), ln1_b=zeros((d,)),
                       ln2_g=ones((d,)), ln2_b=zeros((d,)),
                       attn=mha_params(),
                       ff_w1=nrm((d, dff)), ff_b1=zeros((dff,)),
                       ff_w2=nrm((dff, d)), ff_b2=zeros((d,)))
                  for _ in range(cfg["num_layers"])]

    dec_layers = [dict(ln1_g=ones((d,)), ln1_b=zeros((d,)),
                       ln2_g=ones((d,)), ln2_b=zeros((d,)),
                       ln3_g=ones((d,)), ln3_b=zeros((d,)),
                       rmha=dict(w_q=nrm((d, d)), b_q=zeros((d,)),
                                 w_kv=nrm((d, 2 * d)), b_kv=zeros((2 * d,)),
                                 cw_w=nrm((d, d)), cw_b=zeros((d,))),
                       ca=mha_params(),
                       ff_w1=nrm((d, dff)), ff_b1=zeros((dff,)),
                       ff_w2=nrm((dff, d)), ff_b2=zeros((d,)))
                  for _ in range(cfg["num_layers"])]

    emb = nrm((cfg["vocab_size"], d), scale=0.1)
    emb = emb.at[0].set(0.0)                                      # padding_idx=0

    return dict(
        ve_w1=nrm((cfg["vsize"], dff)), ve_b1=zeros((dff,)),
        ve_w2=nrm((dff, d)), ve_b2=zeros((d,)),
        pos=pos_encode_jax(cfg["max_len"], d),
        enc_layers=enc_layers,
        embedding=emb,
        decoder=dict(
            u=jax.random.uniform(next(kit), (1, 1, dh), dtype=_F32),
            v=jax.random.uniform(next(kit), (1, 1, dh), dtype=_F32),
            layers=dec_layers),
    )


# ----------------------------------------------------------------------------
if __name__ == "__main__":
    cfg = dict(vocab_size=50, vsize=8, d_model=32, num_heads=4, dff=64,
               num_layers=2, max_len=64, seq_len=1024, mem_len=512)

    key = jax.random.PRNGKey(0)
    pkey, xkey, ykey = jax.random.split(key, 3)
    params = init_params(pkey, cfg)

    B, Sv, St = 2, 6, 8
    x = jax.random.normal(xkey, (B, Sv, cfg["vsize"]), dtype=jnp.float32)
    y = jax.random.randint(ykey, (B, St), 0, cfg["vocab_size"])

    fwd = jax.jit(lambda p, xv, yv: vitxl_forward(p, xv, yv, cfg))
    vx, out = fwd(params, x, y)
    jax.block_until_ready((vx, out))
    assert vx.shape == (B, Sv, cfg["d_model"])
    assert out.shape == (B, St, cfg["d_model"])
    print("KERNEL_OK")
</pallas_src>

<mosaic_0001>
module attributes {stable_mosaic.version = 11 : i64} {
  func.func @_linear_kernel(%arg0: i32, %arg1: memref<12x8xbf16, #tpu.memory_space<vmem>>, %arg2: memref<8x64xbf16, #tpu.memory_space<vmem>>, %arg3: memref<1x64xf32, #tpu.memory_space<vmem>>, %arg4: memref<12x64xf32, #tpu.memory_space<vmem>>) attributes {dimension_semantics = [#tpu.dimension_semantics<parallel>], iteration_bounds = array<i64: 1>, scalar_prefetch = 0 : i64, scratch_operands = 0 : i64, tpu.core_type = #tpu.core_type<tc>, window_params = [{transform_indices = @transform_0, window_bounds = array<i64: 12, 8>}, {pipeline_mode = #tpu.pipeline_mode<synchronous>, transform_indices = @transform_1, window_bounds = array<i64: 8, 64>}, {pipeline_mode = #tpu.pipeline_mode<synchronous>, transform_indices = @transform_2, window_bounds = array<i64: 1, 64>}, {transform_indices = @transform_3, window_bounds = array<i64: 12, 64>}]} {
    %c0 = arith.constant 0 : index
    %c0_0 = arith.constant 0 : index
    %0 = vector.load %arg1[%c0, %c0_0] : memref<12x8xbf16, #tpu.memory_space<vmem>>, vector<12x8xbf16>
    %c0_1 = arith.constant 0 : index
    %c0_2 = arith.constant 0 : index
    %1 = vector.load %arg2[%c0_1, %c0_2] : memref<8x64xbf16, #tpu.memory_space<vmem>>, vector<8x64xbf16>
    %cst = arith.constant dense<0.000000e+00> : vector<12x64xf32>
    %2 = tpu.matmul %0, %1, %cst {dimension_numbers = #tpu.dot_dimension_numbers<[1], [0], [0], [1], [0, 0, 1, 1], [], []>} : vector<12x8xbf16>, vector<8x64xbf16>, vector<12x64xf32> -> vector<12x64xf32>
    %c0_3 = arith.constant 0 : index
    %c0_4 = arith.constant 0 : index
    %3 = vector.load %arg3[%c0_3, %c0_4] : memref<1x64xf32, #tpu.memory_space<vmem>>, vector<1x64xf32>
    %4 = vector.broadcast %3 : vector<1x64xf32> to vector<12x64xf32>
    %5 = arith.addf %2, %4 : vector<12x64xf32>
    %cst_5 = arith.constant 0.000000e+00 : f32
    %6 = vector.broadcast %cst_5 : f32 to vector<12x64xf32>
    %7 = arith.maximumf %5, %6 : vector<12x64xf32>
    %c0_6 = arith.constant 0 : index
    %c0_7 = arith.constant 0 : index
    %8 = vector.load %arg4[%c0_6, %c0_7] : memref<12x64xf32, #tpu.memory_space<vmem>>, vector<12x64xf32>
    tpu.vector_store %arg4[%c0_6, %c0_7], %7 {strides = array<i32>} : memref<12x64xf32, #tpu.memory_space<vmem>>, vector<12x64xf32>,
    return
  }
  func.func @transform_0(%arg0: i32) -> (i32, i32) {
    %c0_i32 = arith.constant 0 : i32
    %c0_i32_0 = arith.constant 0 : i32
    return %arg0, %c0_i32 : i32, i32
  }
  func.func @transform_1(%arg0: i32) -> (i32, i32) {
    %c0_i32 = arith.constant 0 : i32
    %c0_i32_0 = arith.constant 0 : i32
    %c0_i32_1 = arith.constant 0 : i32
    return %c0_i32, %c0_i32_0 : i32, i32
  }
  func.func @transform_2(%arg0: i32) -> (i32, i32) {
    %c0_i32 = arith.constant 0 : i32
    %c0_i32_0 = arith.constant 0 : i32
    %c0_i32_1 = arith.constant 0 : i32
    return %c0_i32, %c0_i32_0 : i32, i32
  }
  func.func @transform_3(%arg0: i32) -> (i32, i32) {
    %c0_i32 = arith.constant 0 : i32
    %c0_i32_0 = arith.constant 0 : i32
    return %arg0, %c0_i32 : i32, i32
  }
}

module attributes {stable_mosaic.version = 11 : i64} {
  func.func @_linear_kernel(%arg0: i32, %arg1: memref<12x64xbf16, #tpu.memory_space<vmem>>, %arg2: memref<64x32xbf16, #tpu.memory_space<vmem>>, %arg3: memref<1x32xf32, #tpu.memory_space<vmem>>, %arg4: memref<12x32xf32, #tpu.memory_space<vmem>>) attributes {dimension_semantics = [#tpu.dimension_semantics<parallel>], iteration_bounds = array<i64: 1>, scalar_prefetch = 0 : i64, scratch_operands = 0 : i64, tpu.core_type = #tpu.core_type<tc>, window_params = [{transform_indices = @transform_0, window_bounds = array<i64: 12, 64>}, {pipeline_mode = #tpu.pipeline_mode<synchronous>, transform_indices = @transform_1, window_bounds = array<i64: 64, 32>}, {pipeline_mode = #tpu.pipeline_mode<synchronous>, transform_indices = @transform_2, window_bounds = array<i64: 1, 32>}, {transform_indices = @transform_3, window_bounds = array<i64: 12, 32>}]} {
    %c0 = arith.constant 0 : index
    %c0_0 = arith.constant 0 : index
    %0 = vector.load %arg1[%c0, %c0_0] : memref<12x64xbf16, #tpu.memory_space<vmem>>, vector<12x64xbf16>
    %c0_1 = arith.constant 0 : index
    %c0_2 = arith.constant 0 : index
    %1 = vector.load %arg2[%c0_1, %c0_2] : memref<64x32xbf16, #tpu.memory_space<vmem>>, vector<64x32xbf16>
    %cst = arith.constant dense<0.000000e+00> : vector<12x32xf32>
    %2 = tpu.matmul %0, %1, %cst {dimension_numbers = #tpu.dot_dimension_numbers<[1], [0], [0], [1], [0, 0, 1, 1], [], []>} : vector<12x64xbf16>, vector<64x32xbf16>, vector<12x32xf32> -> vector<12x32xf32>
    %c0_3 = arith.constant 0 : index
    %c0_4 = arith.constant 0 : index
    %3 = vector.load %arg3[%c0_3, %c0_4] : memref<1x32xf32, #tpu.memory_space<vmem>>, vector<1x32xf32>
    %4 = vector.broadcast %3 : vector<1x32xf32> to vector<12x32xf32>
    %5 = arith.addf %2, %4 : vector<12x32xf32>
    %c0_5 = arith.constant 0 : index
    %c0_6 = arith.constant 0 : index
    %6 = vector.load %arg4[%c0_5, %c0_6] : memref<12x32xf32, #tpu.memory_space<vmem>>, vector<12x32xf32>
    tpu.vector_store %arg4[%c0_5, %c0_6], %5 {strides = array<i32>} : memref<12x32xf32, #tpu.memory_space<vmem>>, vector<12x32xf32>,
    return
  }
  func.func @transform_0(%arg0: i32) -> (i32, i32) {
    %c0_i32 = arith.constant 0 : i32
    %c0_i32_0 = arith.constant 0 : i32
    return %arg0, %c0_i32 : i32, i32
  }
  func.func @transform_1(%arg0: i32) -> (i32, i32) {
    %c0_i32 = arith.constant 0 : i32
    %c0_i32_0 = arith.constant 0 : i32
    %c0_i32_1 = arith.constant 0 : i32
    return %c0_i32, %c0_i32_0 : i32, i32
  }
  func.func @transform_2(%arg0: i32) -> (i32, i32) {
    %c0_i32 = arith.constant 0 : i32
    %c0_i32_0 = arith.constant 0 : i32
    %c0_i32_1 = arith.constant 0 : i32
    return %c0_i32, %c0_i32_0 : i32, i32
  }
  func.func @transform_3(%arg0: i32) -> (i32, i32) {
    %c0_i32 = arith.constant 0 : i32
    %c0_i32_0 = arith.constant 0 : i32
    return %arg0, %c0_i32 : i32, i32
  }
}

module attributes {stable_mosaic.version = 11 : i64} {
  func.func @_layernorm_kernel(%arg0: i32, %arg1: memref<12x32xf32, #tpu.memory_space<vmem>>, %arg2: memref<1x32xf32, #tpu.memory_space<vmem>>, %arg3: memref<1x32xf32, #tpu.memory_space<vmem>>, %arg4: memref<12x32xf32, #tpu.memory_space<vmem>>) attributes {dimension_semantics = [#tpu.dimension_semantics<parallel>], iteration_bounds = array<i64: 1>, scalar_prefetch = 0 : i64, scratch_operands = 0 : i64, tpu.core_type = #tpu.core_type<tc>, window_params = [{transform_indices = @transform_0, window_bounds = array<i64: 12, 32>}, {pipeline_mode = #tpu.pipeline_mode<synchronous>, transform_indices = @transform_1, window_bounds = array<i64: 1, 32>}, {pipeline_mode = #tpu.pipeline_mode<synchronous>, transform_indices = @transform_2, window_bounds = array<i64: 1, 32>}, {transform_indices = @transform_3, window_bounds = array<i64: 12, 32>}]} {
    %c0 = arith.constant 0 : index
    %c0_0 = arith.constant 0 : index
    %0 = vector.load %arg1[%c0, %c0_0] : memref<12x32xf32, #tpu.memory_space<vmem>>, vector<12x32xf32>
    %cst = arith.constant dense<0.000000e+00> : vector<12xf32>
    %1 = vector.multi_reduction <add>, %0, %cst [1] : vector<12x32xf32> to vector<12xf32>
    %2 = vector.shape_cast %1 : vector<12xf32> to vector<12x1xf32>
    %cst_1 = arith.constant 3.200000e+01 : f32
    %3 = vector.broadcast %cst_1 : f32 to vector<12x1xf32>
    %4 = arith.divf %2, %3 : vector<12x1xf32>
    %5 = vector.broadcast %4 : vector<12x1xf32> to vector<12x32xf32>
    %6 = arith.subf %0, %5 : vector<12x32xf32>
    %7 = arith.mulf %6, %6 : vector<12x32xf32>
    %cst_2 = arith.constant dense<0.000000e+00> : vector<12xf32>
    %8 = vector.multi_reduction <add>, %7, %cst_2 [1] : vector<12x32xf32> to vector<12xf32>
    %9 = vector.shape_cast %8 : vector<12xf32> to vector<12x1xf32>
    %cst_3 = arith.constant 3.200000e+01 : f32
    %10 = vector.broadcast %cst_3 : f32 to vector<12x1xf32>
    %11 = arith.divf %9, %10 : vector<12x1xf32>
    %cst_4 = arith.constant 9.99999974E-6 : f32
    %12 = vector.broadcast %cst_4 : f32 to vector<12x1xf32>
    %13 = arith.addf %11, %12 : vector<12x1xf32>
    %14 = math.rsqrt %13 : vector<12x1xf32>
    %15 = vector.broadcast %14 : vector<12x1xf32> to vector<12x32xf32>
    %16 = arith.mulf %6, %15 : vector<12x32xf32>
    %c0_5 = arith.constant 0 : index
    %c0_6 = arith.constant 0 : index
    %17 = vector.load %arg2[%c0_5, %c0_6] : memref<1x32xf32, #tpu.memory_space<vmem>>, vector<1x32xf32>
    %18 = vector.broadcast %17 : vector<1x32xf32> to vector<12x32xf32>
    %19 = arith.mulf %16, %18 : vector<12x32xf32>
    %c0_7 = arith.constant 0 : index
    %c0_8 = arith.constant 0 : index
    %20 = vector.load %arg3[%c0_7, %c0_8] : memref<1x32xf32, #tpu.memory_space<vmem>>, vector<1x32xf32>
    %21 = vector.broadcast %20 : vector<1x32xf32> to vector<12x32xf32>
    %22 = arith.addf %19, %21 : vector<12x32xf32>
    %c0_9 = arith.constant 0 : index
    %c0_10 = arith.constant 0 : index
    %23 = vector.load %arg4[%c0_9, %c0_10] : memref<12x32xf32, #tpu.memory_space<vmem>>, vector<12x32xf32>
    tpu.vector_store %arg4[%c0_9, %c0_10], %22 {strides = array<i32>} : memref<12x32xf32, #tpu.memory_space<vmem>>, vector<12x32xf32>,
    return
  }
  func.func @transform_0(%arg0: i32) -> (i32, i32) {
    %c0_i32 = arith.constant 0 : i32
    %c0_i32_0 = arith.constant 0 : i32
    return %arg0, %c0_i32 : i32, i32
  }
  func.func @transform_1(%arg0: i32) -> (i32, i32) {
    %c0_i32 = arith.constant 0 : i32
    %c0_i32_0 = arith.constant 0 : i32
    %c0_i32_1 = arith.constant 0 : i32
    return %c0_i32, %c0_i32_0 : i32, i32
  }
  func.func @transform_2(%arg0: i32) -> (i32, i32) {
    %c0_i32 = arith.constant 0 : i32
    %c0_i32_0 = arith.constant 0 : i32
    %c0_i32_1 = arith.constant 0 : i32
    return %c0_i32, %c0_i32_0 : i32, i32
  }
  func.func @transform_3(%arg0: i32) -> (i32, i32) {
    %c0_i32 = arith.constant 0 : i32
    %c0_i32_0 = arith.constant 0 : i32
    return %arg0, %c0_i32 : i32, i32
  }
}

module attributes {stable_mosaic.version = 11 : i64} {
  func.func @_linear_kernel(%arg0: i32, %arg1: memref<12x32xbf16, #tpu.memory_space<vmem>>, %arg2: memref<32x96xbf16, #tpu.memory_space<vmem>>, %arg3: memref<1x96xf32, #tpu.memory_space<vmem>>, %arg4: memref<12x96xf32, #tpu.memory_space<vmem>>) attributes {dimension_semantics = [#tpu.dimension_semantics<parallel>], iteration_bounds = array<i64: 1>, scalar_prefetch = 0 : i64, scratch_operands = 0 : i64, tpu.core_type = #tpu.core_type<tc>, window_params = [{transform_indices = @transform_0, window_bounds = array<i64: 12, 32>}, {pipeline_mode = #tpu.pipeline_mode<synchronous>, transform_indices = @transform_1, window_bounds = array<i64: 32, 96>}, {pipeline_mode = #tpu.pipeline_mode<synchronous>, transform_indices = @transform_2, window_bounds = array<i64: 1, 96>}, {transform_indices = @transform_3, window_bounds = array<i64: 12, 96>}]} {
    %c0 = arith.constant 0 : index
    %c0_0 = arith.constant 0 : index
    %0 = vector.load %arg1[%c0, %c0_0] : memref<12x32xbf16, #tpu.memory_space<vmem>>, vector<12x32xbf16>
    %c0_1 = arith.constant 0 : index
    %c0_2 = arith.constant 0 : index
    %1 = vector.load %arg2[%c0_1, %c0_2] : memref<32x96xbf16, #tpu.memory_space<vmem>>, vector<32x96xbf16>
    %cst = arith.constant dense<0.000000e+00> : vector<12x96xf32>
    %2 = tpu.matmul %0, %1, %cst {dimension_numbers = #tpu.dot_dimension_numbers<[1], [0], [0], [1], [0, 0, 1, 1], [], []>} : vector<12x32xbf16>, vector<32x96xbf16>, vector<12x96xf32> -> vector<12x96xf32>
    %c0_3 = arith.constant 0 : index
    %c0_4 = arith.constant 0 : index
    %3 = vector.load %arg3[%c0_3, %c0_4] : memref<1x96xf32, #tpu.memory_space<vmem>>, vector<1x96xf32>
    %4 = vector.broadcast %3 : vector<1x96xf32> to vector<12x96xf32>
    %5 = arith.addf %2, %4 : vector<12x96xf32>
    %c0_5 = arith.constant 0 : index
    %c0_6 = arith.constant 0 : index
    %6 = vector.load %arg4[%c0_5, %c0_6] : memref<12x96xf32, #tpu.memory_space<vmem>>, vector<12x96xf32>
    tpu.vector_store %arg4[%c0_5, %c0_6], %5 {strides = array<i32>} : memref<12x96xf32, #tpu.memory_space<vmem>>, vector<12x96xf32>,
    return
  }
  func.func @transform_0(%arg0: i32) -> (i32, i32) {
    %c0_i32 = arith.constant 0 : i32
    %c0_i32_0 = arith.constant 0 : i32
    return %arg0, %c0_i32 : i32, i32
  }
  func.func @transform_1(%arg0: i32) -> (i32, i32) {
    %c0_i32 = arith.constant 0 : i32
    %c0_i32_0 = arith.constant 0 : i32
    %c0_i32_1 = arith.constant 0 : i32
    return %c0_i32, %c0_i32_0 : i32, i32
  }
  func.func @transform_2(%arg0: i32) -> (i32, i32) {
    %c0_i32 = arith.constant 0 : i32
    %c0_i32_0 = arith.constant 0 : i32
    %c0_i32_1 = arith.constant 0 : i32
    return %c0_i32, %c0_i32_0 : i32, i32
  }
  func.func @transform_3(%arg0: i32) -> (i32, i32) {
    %c0_i32 = arith.constant 0 : i32
    %c0_i32_0 = arith.constant 0 : i32
    return %arg0, %c0_i32 : i32, i32
  }
}

module attributes {stable_mosaic.version = 11 : i64} {
  func.func @_mha_kernel(%arg0: i32, %arg1: i32, %arg2: memref<1x6x32xbf16, #tpu.memory_space<vmem>>, %arg3: memref<1x6x32xbf16, #tpu.memory_space<vmem>>, %arg4: memref<1x6x32xbf16, #tpu.memory_space<vmem>>, %arg5: memref<1x6x32xf32, #tpu.memory_space<vmem>>) attributes {dimension_semantics = [#tpu.dimension_semantics<parallel>, #tpu.dimension_semantics<parallel>], iteration_bounds = array<i64: 2, 1>, scalar_prefetch = 0 : i64, scratch_operands = 0 : i64, tpu.core_type = #tpu.core_type<tc>, window_params = [{transform_indices = @transform_0, window_bounds = array<i64: 1, 6, 32>}, {transform_indices = @transform_1, window_bounds = array<i64: 1, 6, 32>}, {transform_indices = @transform_2, window_bounds = array<i64: 1, 6, 32>}, {transform_indices = @transform_3, window_bounds = array<i64: 1, 6, 32>}]} {
    %c0 = arith.constant 0 : index
    %c0_0 = arith.constant 0 : index
    %c0_1 = arith.constant 0 : index
    %0 = vector.load %arg2[%c0, %c0_0, %c0_1] : memref<1x6x32xbf16, #tpu.memory_space<vmem>>, vector<1x6x32xbf16>
    %1 = vector.shape_cast %0 : vector<1x6x32xbf16> to vector<6x32xbf16>
    %c0_2 = arith.constant 0 : index
    %c0_3 = arith.constant 0 : index
    %c0_4 = arith.constant 0 : index
    %2 = vector.load %arg3[%c0_2, %c0_3, %c0_4] : memref<1x6x32xbf16, #tpu.memory_space<vmem>>, vector<1x6x32xbf16>
    %3 = vector.shape_cast %2 : vector<1x6x32xbf16> to vector<6x32xbf16>
    %c0_5 = arith.constant 0 : index
    %c0_6 = arith.constant 0 : index
    %c0_7 = arith.constant 0 : index
    %4 = vector.load %arg4[%c0_5, %c0_6, %c0_7] : memref<1x6x32xbf16, #tpu.memory_space<vmem>>, vector<1x6x32xbf16>
    %5 = vector.shape_cast %4 : vector<1x6x32xbf16> to vector<6x32xbf16>
    %6 = vector.extract_strided_slice %1 {offsets = [0, 0], sizes = [6, 8], strides = [1, 1]} : vector<6x32xbf16> to vector<6x8xbf16>
    %7 = vector.extract_strided_slice %3 {offsets = [0, 0], sizes = [6, 8], strides = [1, 1]} : vector<6x32xbf16> to vector<6x8xbf16>
    %cst = arith.constant dense<0.000000e+00> : vector<6x6xf32>
    %8 = tpu.matmul %6, %7, %cst {dimension_numbers = #tpu.dot_dimension_numbers<[1], [1], [0], [0], [0, 0, 1, 0], [], []>} : vector<6x8xbf16>, vector<6x8xbf16>, vector<6x6xf32> -> vector<6x6xf32>
    %cst_8 = arith.constant dense<0xFF800000> : vector<6xf32>
    %9 = vector.multi_reduction <maximumf>, %8, %cst_8 [1] : vector<6x6xf32> to vector<6xf32>
    %10 = vector.shape_cast %9 : vector<6xf32> to vector<6x1xf32>
    %11 = vector.broadcast %10 : vector<6x1xf32> to vector<6x6xf32>
    %12 = arith.subf %8, %11 : vector<6x6xf32>
    %13 = math.exp %12 : vector<6x6xf32>
    %cst_9 = arith.constant dense<0.000000e+00> : vector<6xf32>
    %14 = vector.multi_reduction <add>, %13, %cst_9 [1] : vector<6x6xf32> to vector<6xf32>
    %15 = vector.shape_cast %14 : vector<6xf32> to vector<6x1xf32>
    %16 = arith.truncf %13 : vector<6x6xf32> to vector<6x6xbf16>
    %17 = vector.extract_strided_slice %5 {offsets = [0, 0], sizes = [6, 8], strides = [1, 1]} : vector<6x32xbf16> to vector<6x8xbf16>
    %cst_10 = arith.constant dense<0.000000e+00> : vector<6x8xf32>
    %18 = tpu.matmul %16, %17, %cst_10 {dimension_numbers = #tpu.dot_dimension_numbers<[1], [0], [0], [1], [0, 0, 1, 1], [], []>} : vector<6x6xbf16>, vector<6x8xbf16>, vector<6x8xf32> -> vector<6x8xf32>
    %19 = tpu.reciprocal %15 {approx = true} : vector<6x1xf32> -> vector<6x1xf32>
    %20 = vector.broadcast %19 : vector<6x1xf32> to vector<6x8xf32>
    %21 = arith.mulf %18, %20 : vector<6x8xf32>
    %22 = vector.extract_strided_slice %1 {offsets = [0, 8], sizes = [6, 8], strides = [1, 1]} : vector<6x32xbf16> to vector<6x8xbf16>
    %23 = vector.extract_strided_slice %3 {offsets = [0, 8], sizes = [6, 8], strides = [1, 1]} : vector<6x32xbf16> to vector<6x8xbf16>
    %cst_11 = arith.constant dense<0.000000e+00> : vector<6x6xf32>
    %24 = tpu.matmul %22, %23, %cst_11 {dimension_numbers = #tpu.dot_dimension_numbers<[1], [1], [0], [0], [0, 0, 1, 0], [], []>} : vector<6x8xbf16>, vector<6x8xbf16>, vector<6x6xf32> -> vector<6x6xf32>
    %cst_12 = arith.constant dense<0xFF800000> : vector<6xf32>
    %25 = vector.multi_reduction <maximumf>, %24, %cst_12 [1] : vector<6x6xf32> to vector<6xf32>
    %26 = vector.shape_cast %25 : vector<6xf32> to vector<6x1xf32>
    %27 = vector.broadcast %26 : vector<6x1xf32> to vector<6x6xf32>
    %28 = arith.subf %24, %27 : vector<6x6xf32>
    %29 = math.exp %28 : vector<6x6xf32>
    %cst_13 = arith.constant dense<0.000000e+00> : vector<6xf32>
    %30 = vector.multi_reduction <add>, %29, %cst_13 [1] : vector<6x6xf32> to vector<6xf32>
    %31 = vector.shape_cast %30 : vector<6xf32> to vector<6x1xf32>
    %32 = arith.truncf %29 : vector<6x6xf32> to vector<6x6xbf16>
    %33 = vector.extract_strided_slice %5 {offsets = [0, 8], sizes = [6, 8], strides = [1, 1]} : vector<6x32xbf16> to vector<6x8xbf16>
    %cst_14 = arith.constant dense<0.000000e+00> : vector<6x8xf32>
    %34 = tpu.matmul %32, %33, %cst_14 {dimension_numbers = #tpu.dot_dimension_numbers<[1], [0], [0], [1], [0, 0, 1, 1], [], []>} : vector<6x6xbf16>, vector<6x8xbf16>, vector<6x8xf32> -> vector<6x8xf32>
    %35 = tpu.reciprocal %31 {approx = true} : vector<6x1xf32> -> vector<6x1xf32>
    %36 = vector.broadcast %35 : vector<6x1xf32> to vector<6x8xf32>
    %37 = arith.mulf %34, %36 : vector<6x8xf32>
    %38 = vector.extract_strided_slice %1 {offsets = [0, 16], sizes = [6, 8], strides = [1, 1]} : vector<6x32xbf16> to vector<6x8xbf16>
    %39 = vector.extract_strided_slice %3 {offsets = [0, 16], sizes = [6, 8], strides = [1, 1]} : vector<6x32xbf16> to vector<6x8xbf16>
    %cst_15 = arith.constant dense<0.000000e+00> : vector<6x6xf32>
    %40 = tpu.matmul %38, %39, %cst_15 {dimension_numbers = #tpu.dot_dimension_numbers<[1], [1], [0], [0], [0, 0, 1, 0], [], []>} : vector<6x8xbf16>, vector<6x8xbf16>, vector<6x6xf32> -> vector<6x6xf32>
    %cst_16 = arith.constant dense<0xFF800000> : vector<6xf32>
    %41 = vector.multi_reduction <maximumf>, %40, %cst_16 [1] : vector<6x6xf32> to vector<6xf32>
    %42 = vector.shape_cast %41 : vector<6xf32> to vector<6x1xf32>
    %43 = vector.broadcast %42 : vector<6x1xf32> to vector<6x6xf32>
    %44 = arith.subf %40, %43 : vector<6x6xf32>
    %45 = math.exp %44 : vector<6x6xf32>
    %cst_17 = arith.constant dense<0.000000e+00> : vector<6xf32>
    %46 = vector.multi_reduction <add>, %45, %cst_17 [1] : vector<6x6xf32> to vector<6xf32>
    %47 = vector.shape_cast %46 : vector<6xf32> to vector<6x1xf32>
    %48 = arith.truncf %45 : vector<6x6xf32> to vector<6x6xbf16>
    %49 = vector.extract_strided_slice %5 {offsets = [0, 16], sizes = [6, 8], strides = [1, 1]} : vector<6x32xbf16> to vector<6x8xbf16>
    %cst_18 = arith.constant dense<0.000000e+00> : vector<6x8xf32>
    %50 = tpu.matmul %48, %49, %cst_18 {dimension_numbers = #tpu.dot_dimension_numbers<[1], [0], [0], [1], [0, 0, 1, 1], [], []>} : vector<6x6xbf16>, vector<6x8xbf16>, vector<6x8xf32> -> vector<6x8xf32>
    %51 = tpu.reciprocal %47 {approx = true} : vector<6x1xf32> -> vector<6x1xf32>
    %52 = vector.broadcast %51 : vector<6x1xf32> to vector<6x8xf32>
    %53 = arith.mulf %50, %52 : vector<6x8xf32>
    %54 = vector.extract_strided_slice %1 {offsets = [0, 24], sizes = [6, 8], strides = [1, 1]} : vector<6x32xbf16> to vector<6x8xbf16>
    %55 = vector.extract_strided_slice %3 {offsets = [0, 24], sizes = [6, 8], strides = [1, 1]} : vector<6x32xbf16> to vector<6x8xbf16>
    %cst_19 = arith.constant dense<0.000000e+00> : vector<6x6xf32>
    %56 = tpu.matmul %54, %55, %cst_19 {dimension_numbers = #tpu.dot_dimension_numbers<[1], [1], [0], [0], [0, 0, 1, 0], [], []>} : vector<6x8xbf16>, vector<6x8xbf16>, vector<6x6xf32> -> vector<6x6xf32>
    %cst_20 = arith.constant dense<0xFF800000> : vector<6xf32>
    %57 = vector.multi_reduction <maximumf>, %56, %cst_20 [1] : vector<6x6xf32> to vector<6xf32>
    %58 = vector.shape_cast %57 : vector<6xf32> to vector<6x1xf32>
    %59 = vector.broadcast %58 : vector<6x1xf32> to vector<6x6xf32>
    %60 = arith.subf %56, %59 : vector<6x6xf32>
    %61 = math.exp %60 : vector<6x6xf32>
    %cst_21 = arith.constant dense<0.000000e+00> : vector<6xf32>
    %62 = vector.multi_reduction <add>, %61, %cst_21 [1] : vector<6x6xf32> to vector<6xf32>
    %63 = vector.shape_cast %62 : vector<6xf32> to vector<6x1xf32>
    %64 = arith.truncf %61 : vector<6x6xf32> to vector<6x6xbf16>
    %65 = vector.extract_strided_slice %5 {offsets = [0, 24], sizes = [6, 8], strides = [1, 1]} : vector<6x32xbf16> to vector<6x8xbf16>
    %cst_22 = arith.constant dense<0.000000e+00> : vector<6x8xf32>
    %66 = tpu.matmul %64, %65, %cst_22 {dimension_numbers = #tpu.dot_dimension_numbers<[1], [0], [0], [1], [0, 0, 1, 1], [], []>} : vector<6x6xbf16>, vector<6x8xbf16>, vector<6x8xf32> -> vector<6x8xf32>
    %67 = tpu.reciprocal %63 {approx = true} : vector<6x1xf32> -> vector<6x1xf32>
    %68 = vector.broadcast %67 : vector<6x1xf32> to vector<6x8xf32>
    %69 = arith.mulf %66, %68 : vector<6x8xf32>
    %70 = tpu.concatenate %21, %37, %53, %69 in 1 : vector<6x8xf32>, vector<6x8xf32>, vector<6x8xf32>, vector<6x8xf32> -> vector<6x32xf32>
    %c0_23 = arith.constant 0 : index
    %c0_24 = arith.constant 0 : index
    %c0_25 = arith.constant 0 : index
    %71 = vector.load %arg5[%c0_23, %c0_24, %c0_25] : memref<1x6x32xf32, #tpu.memory_space<vmem>>, vector<1x6x32xf32>
    %72 = vector.shape_cast %71 : vector<1x6x32xf32> to vector<6x32xf32>
    %73 = vector.shape_cast %70 : vector<6x32xf32> to vector<1x6x32xf32>
    tpu.vector_store %arg5[%c0_23, %c0_24, %c0_25], %73 {strides = array<i32>} : memref<1x6x32xf32, #tpu.memory_space<vmem>>, vector<1x6x32xf32>,
    return
  }
  func.func @transform_0(%arg0: i32, %arg1: i32) -> (i32, i32, i32) {
    %c0_i32 = arith.constant 0 : i32
    %c0_i32_0 = arith.constant 0 : i32
    return %arg0, %arg1, %c0_i32 : i32, i32, i32
  }
  func.func @transform_1(%arg0: i32, %arg1: i32) -> (i32, i32, i32) {
    %c0_i32 = arith.constant 0 : i32
    %c0_i32_0 = arith.constant 0 : i32
    %c0_i32_1 = arith.constant 0 : i32
    return %arg0, %c0_i32, %c0_i32_0 : i32, i32, i32
  }
  func.func @transform_2(%arg0: i32, %arg1: i32) -> (i32, i32, i32) {
    %c0_i32 = arith.constant 0 : i32
    %c0_i32_0 = arith.constant 0 : i32
    %c0_i32_1 = arith.constant 0 : i32
    return %arg0, %c0_i32, %c0_i32_0 : i32, i32, i32
  }
  func.func @transform_3(%arg0: i32, %arg1: i32) -> (i32, i32, i32) {
    %c0_i32 = arith.constant 0 : i32
    %c0_i32_0 = arith.constant 0 : i32
    return %arg0, %arg1, %c0_i32 : i32, i32, i32
  }
}

module attributes {stable_mosaic.version = 11 : i64} {
  func.func @_linear_kernel(%arg0: i32, %arg1: memref<12x32xbf16, #tpu.memory_space<vmem>>, %arg2: memref<32x32xbf16, #tpu.memory_space<vmem>>, %arg3: memref<1x32xf32, #tpu.memory_space<vmem>>, %arg4: memref<12x32xf32, #tpu.memory_space<vmem>>, %arg5: memref<12x32xf32, #tpu.memory_space<vmem>>) attributes {dimension_semantics = [#tpu.dimension_semantics<parallel>], iteration_bounds = array<i64: 1>, scalar_prefetch = 0 : i64, scratch_operands = 0 : i64, tpu.core_type = #tpu.core_type<tc>, window_params = [{transform_indices = @transform_0, window_bounds = array<i64: 12, 32>}, {pipeline_mode = #tpu.pipeline_mode<synchronous>, transform_indices = @transform_1, window_bounds = array<i64: 32, 32>}, {pipeline_mode = #tpu.pipeline_mode<synchronous>, transform_indices = @transform_2, window_bounds = array<i64: 1, 32>}, {transform_indices = @transform_3, window_bounds = array<i64: 12, 32>}, {transform_indices = @transform_4, window_bounds = array<i64: 12, 32>}]} {
    %c0 = arith.constant 0 : index
    %c0_0 = arith.constant 0 : index
    %0 = vector.load %arg1[%c0, %c0_0] : memref<12x32xbf16, #tpu.memory_space<vmem>>, vector<12x32xbf16>
    %c0_1 = arith.constant 0 : index
    %c0_2 = arith.constant 0 : index
    %1 = vector.load %arg2[%c0_1, %c0_2] : memref<32x32xbf16, #tpu.memory_space<vmem>>, vector<32x32xbf16>
    %cst = arith.constant dense<0.000000e+00> : vector<12x32xf32>
    %2 = tpu.matmul %0, %1, %cst {dimension_numbers = #tpu.dot_dimension_numbers<[1], [0], [0], [1], [0, 0, 1, 1], [], []>} : vector<12x32xbf16>, vector<32x32xbf16>, vector<12x32xf32> -> vector<12x32xf32>
    %c0_3 = arith.constant 0 : index
    %c0_4 = arith.constant 0 : index
    %3 = vector.load %arg3[%c0_3, %c0_4] : memref<1x32xf32, #tpu.memory_space<vmem>>, vector<1x32xf32>
    %4 = vector.broadcast %3 : vector<1x32xf32> to vector<12x32xf32>
    %5 = arith.addf %2, %4 : vector<12x32xf32>
    %c0_5 = arith.constant 0 : index
    %c0_6 = arith.constant 0 : index
    %6 = vector.load %arg4[%c0_5, %c0_6] : memref<12x32xf32, #tpu.memory_space<vmem>>, vector<12x32xf32>
    %7 = arith.addf %5, %6 : vector<12x32xf32>
    %c0_7 = arith.constant 0 : index
    %c0_8 = arith.constant 0 : index
    %8 = vector.load %arg5[%c0_7, %c0_8] : memref<12x32xf32, #tpu.memory_space<vmem>>, vector<12x32xf32>
    tpu.vector_store %arg5[%c0_7, %c0_8], %7 {strides = array<i32>} : memref<12x32xf32, #tpu.memory_space<vmem>>, vector<12x32xf32>,
    return
  }
  func.func @transform_0(%arg0: i32) -> (i32, i32) {
    %c0_i32 = arith.constant 0 : i32
    %c0_i32_0 = arith.constant 0 : i32
    return %arg0, %c0_i32 : i32, i32
  }
  func.func @transform_1(%arg0: i32) -> (i32, i32) {
    %c0_i32 = arith.constant 0 : i32
    %c0_i32_0 = arith.constant 0 : i32
    %c0_i32_1 = arith.constant 0 : i32
    return %c0_i32, %c0_i32_0 : i32, i32
  }
  func.func @transform_2(%arg0: i32) -> (i32, i32) {
    %c0_i32 = arith.constant 0 : i32
    %c0_i32_0 = arith.constant 0 : i32
    %c0_i32_1 = arith.constant 0 : i32
    return %c0_i32, %c0_i32_0 : i32, i32
  }
  func.func @transform_3(%arg0: i32) -> (i32, i32) {
    %c0_i32 = arith.constant 0 : i32
    %c0_i32_0 = arith.constant 0 : i32
    return %arg0, %c0_i32 : i32, i32
  }
  func.func @transform_4(%arg0: i32) -> (i32, i32) {
    %c0_i32 = arith.constant 0 : i32
    %c0_i32_0 = arith.constant 0 : i32
    return %arg0, %c0_i32 : i32, i32
  }
}

module attributes {stable_mosaic.version = 11 : i64} {
  func.func @_linear_kernel(%arg0: i32, %arg1: memref<12x32xbf16, #tpu.memory_space<vmem>>, %arg2: memref<32x64xbf16, #tpu.memory_space<vmem>>, %arg3: memref<1x64xf32, #tpu.memory_space<vmem>>, %arg4: memref<12x64xf32, #tpu.memory_space<vmem>>) attributes {dimension_semantics = [#tpu.dimension_semantics<parallel>], iteration_bounds = array<i64: 1>, scalar_prefetch = 0 : i64, scratch_operands = 0 : i64, tpu.core_type = #tpu.core_type<tc>, window_params = [{transform_indices = @transform_0, window_bounds = array<i64: 12, 32>}, {pipeline_mode = #tpu.pipeline_mode<synchronous>, transform_indices = @transform_1, window_bounds = array<i64: 32, 64>}, {pipeline_mode = #tpu.pipeline_mode<synchronous>, transform_indices = @transform_2, window_bounds = array<i64: 1, 64>}, {transform_indices = @transform_3, window_bounds = array<i64: 12, 64>}]} {
    %c0 = arith.constant 0 : index
    %c0_0 = arith.constant 0 : index
    %0 = vector.load %arg1[%c0, %c0_0] : memref<12x32xbf16, #tpu.memory_space<vmem>>, vector<12x32xbf16>
    %c0_1 = arith.constant 0 : index
    %c0_2 = arith.constant 0 : index
    %1 = vector.load %arg2[%c0_1, %c0_2] : memref<32x64xbf16, #tpu.memory_space<vmem>>, vector<32x64xbf16>
    %cst = arith.constant dense<0.000000e+00> : vector<12x64xf32>
    %2 = tpu.matmul %0, %1, %cst {dimension_numbers = #tpu.dot_dimension_numbers<[1], [0], [0], [1], [0, 0, 1, 1], [], []>} : vector<12x32xbf16>, vector<32x64xbf16>, vector<12x64xf32> -> vector<12x64xf32>
    %c0_3 = arith.constant 0 : index
    %c0_4 = arith.constant 0 : index
    %3 = vector.load %arg3[%c0_3, %c0_4] : memref<1x64xf32, #tpu.memory_space<vmem>>, vector<1x64xf32>
    %4 = vector.broadcast %3 : vector<1x64xf32> to vector<12x64xf32>
    %5 = arith.addf %2, %4 : vector<12x64xf32>
    %cst_5 = arith.constant 0.000000e+00 : f32
    %6 = vector.broadcast %cst_5 : f32 to vector<12x64xf32>
    %7 = arith.maximumf %5, %6 : vector<12x64xf32>
    %c0_6 = arith.constant 0 : index
    %c0_7 = arith.constant 0 : index
    %8 = vector.load %arg4[%c0_6, %c0_7] : memref<12x64xf32, #tpu.memory_space<vmem>>, vector<12x64xf32>
    tpu.vector_store %arg4[%c0_6, %c0_7], %7 {strides = array<i32>} : memref<12x64xf32, #tpu.memory_space<vmem>>, vector<12x64xf32>,
    return
  }
  func.func @transform_0(%arg0: i32) -> (i32, i32) {
    %c0_i32 = arith.constant 0 : i32
    %c0_i32_0 = arith.constant 0 : i32
    return %arg0, %c0_i32 : i32, i32
  }
  func.func @transform_1(%arg0: i32) -> (i32, i32) {
    %c0_i32 = arith.constant 0 : i32
    %c0_i32_0 = arith.constant 0 : i32
    %c0_i32_1 = arith.constant 0 : i32
    return %c0_i32, %c0_i32_0 : i32, i32
  }
  func.func @transform_2(%arg0: i32) -> (i32, i32) {
    %c0_i32 = arith.constant 0 : i32
    %c0_i32_0 = arith.constant 0 : i32
    %c0_i32_1 = arith.constant 0 : i32
    return %c0_i32, %c0_i32_0 : i32, i32
  }
  func.func @transform_3(%arg0: i32) -> (i32, i32) {
    %c0_i32 = arith.constant 0 : i32
    %c0_i32_0 = arith.constant 0 : i32
    return %arg0, %c0_i32 : i32, i32
  }
}

module attributes {stable_mosaic.version = 11 : i64} {
  func.func @_linear_kernel(%arg0: i32, %arg1: memref<12x64xbf16, #tpu.memory_space<vmem>>, %arg2: memref<64x32xbf16, #tpu.memory_space<vmem>>, %arg3: memref<1x32xf32, #tpu.memory_space<vmem>>, %arg4: memref<12x32xf32, #tpu.memory_space<vmem>>, %arg5: memref<12x32xf32, #tpu.memory_space<vmem>>) attributes {dimension_semantics = [#tpu.dimension_semantics<parallel>], iteration_bounds = array<i64: 1>, scalar_prefetch = 0 : i64, scratch_operands = 0 : i64, tpu.core_type = #tpu.core_type<tc>, window_params = [{transform_indices = @transform_0, window_bounds = array<i64: 12, 64>}, {pipeline_mode = #tpu.pipeline_mode<synchronous>, transform_indices = @transform_1, window_bounds = array<i64: 64, 32>}, {pipeline_mode = #tpu.pipeline_mode<synchronous>, transform_indices = @transform_2, window_bounds = array<i64: 1, 32>}, {transform_indices = @transform_3, window_bounds = array<i64: 12, 32>}, {transform_indices = @transform_4, window_bounds = array<i64: 12, 32>}]} {
    %c0 = arith.constant 0 : index
    %c0_0 = arith.constant 0 : index
    %0 = vector.load %arg1[%c0, %c0_0] : memref<12x64xbf16, #tpu.memory_space<vmem>>, vector<12x64xbf16>
    %c0_1 = arith.constant 0 : index
    %c0_2 = arith.constant 0 : index
    %1 = vector.load %arg2[%c0_1, %c0_2] : memref<64x32xbf16, #tpu.memory_space<vmem>>, vector<64x32xbf16>
    %cst = arith.constant dense<0.000000e+00> : vector<12x32xf32>
    %2 = tpu.matmul %0, %1, %cst {dimension_numbers = #tpu.dot_dimension_numbers<[1], [0], [0], [1], [0, 0, 1, 1], [], []>} : vector<12x64xbf16>, vector<64x32xbf16>, vector<12x32xf32> -> vector<12x32xf32>
    %c0_3 = arith.constant 0 : index
    %c0_4 = arith.constant 0 : index
    %3 = vector.load %arg3[%c0_3, %c0_4] : memref<1x32xf32, #tpu.memory_space<vmem>>, vector<1x32xf32>
    %4 = vector.broadcast %3 : vector<1x32xf32> to vector<12x32xf32>
    %5 = arith.addf %2, %4 : vector<12x32xf32>
    %c0_5 = arith.constant 0 : index
    %c0_6 = arith.constant 0 : index
    %6 = vector.load %arg4[%c0_5, %c0_6] : memref<12x32xf32, #tpu.memory_space<vmem>>, vector<12x32xf32>
    %7 = arith.addf %5, %6 : vector<12x32xf32>
    %c0_7 = arith.constant 0 : index
    %c0_8 = arith.constant 0 : index
    %8 = vector.load %arg5[%c0_7, %c0_8] : memref<12x32xf32, #tpu.memory_space<vmem>>, vector<12x32xf32>
    tpu.vector_store %arg5[%c0_7, %c0_8], %7 {strides = array<i32>} : memref<12x32xf32, #tpu.memory_space<vmem>>, vector<12x32xf32>,
    return
  }
  func.func @transform_0(%arg0: i32) -> (i32, i32) {
    %c0_i32 = arith.constant 0 : i32
    %c0_i32_0 = arith.constant 0 : i32
    return %arg0, %c0_i32 : i32, i32
  }
  func.func @transform_1(%arg0: i32) -> (i32, i32) {
    %c0_i32 = arith.constant 0 : i32
    %c0_i32_0 = arith.constant 0 : i32
    %c0_i32_1 = arith.constant 0 : i32
    return %c0_i32, %c0_i32_0 : i32, i32
  }
  func.func @transform_2(%arg0: i32) -> (i32, i32) {
    %c0_i32 = arith.constant 0 : i32
    %c0_i32_0 = arith.constant 0 : i32
    %c0_i32_1 = arith.constant 0 : i32
    return %c0_i32, %c0_i32_0 : i32, i32
  }
  func.func @transform_3(%arg0: i32) -> (i32, i32) {
    %c0_i32 = arith.constant 0 : i32
    %c0_i32_0 = arith.constant 0 : i32
    return %arg0, %c0_i32 : i32, i32
  }
  func.func @transform_4(%arg0: i32) -> (i32, i32) {
    %c0_i32 = arith.constant 0 : i32
    %c0_i32_0 = arith.constant 0 : i32
    return %arg0, %c0_i32 : i32, i32
  }
}

module attributes {stable_mosaic.version = 11 : i64} {
  func.func @_layernorm_kernel(%arg0: i32, %arg1: memref<16x32xf32, #tpu.memory_space<vmem>>, %arg2: memref<1x32xf32, #tpu.memory_space<vmem>>, %arg3: memref<1x32xf32, #tpu.memory_space<vmem>>, %arg4: memref<16x32xf32, #tpu.memory_space<vmem>>) attributes {dimension_semantics = [#tpu.dimension_semantics<parallel>], iteration_bounds = array<i64: 1>, scalar_prefetch = 0 : i64, scratch_operands = 0 : i64, tpu.core_type = #tpu.core_type<tc>, window_params = [{transform_indices = @transform_0, window_bounds = array<i64: 16, 32>}, {pipeline_mode = #tpu.pipeline_mode<synchronous>, transform_indices = @transform_1, window_bounds = array<i64: 1, 32>}, {pipeline_mode = #tpu.pipeline_mode<synchronous>, transform_indices = @transform_2, window_bounds = array<i64: 1, 32>}, {transform_indices = @transform_3, window_bounds = array<i64: 16, 32>}]} {
    %c0 = arith.constant 0 : index
    %c0_0 = arith.constant 0 : index
    %0 = vector.load %arg1[%c0, %c0_0] : memref<16x32xf32, #tpu.memory_space<vmem>>, vector<16x32xf32>
    %cst = arith.constant dense<0.000000e+00> : vector<16xf32>
    %1 = vector.multi_reduction <add>, %0, %cst [1] : vector<16x32xf32> to vector<16xf32>
    %2 = vector.shape_cast %1 : vector<16xf32> to vector<16x1xf32>
    %cst_1 = arith.constant 3.200000e+01 : f32
    %3 = vector.broadcast %cst_1 : f32 to vector<16x1xf32>
    %4 = arith.divf %2, %3 : vector<16x1xf32>
    %5 = vector.broadcast %4 : vector<16x1xf32> to vector<16x32xf32>
    %6 = arith.subf %0, %5 : vector<16x32xf32>
    %7 = arith.mulf %6, %6 : vector<16x32xf32>
    %cst_2 = arith.constant dense<0.000000e+00> : vector<16xf32>
    %8 = vector.multi_reduction <add>, %7, %cst_2 [1] : vector<16x32xf32> to vector<16xf32>
    %9 = vector.shape_cast %8 : vector<16xf32> to vector<16x1xf32>
    %cst_3 = arith.constant 3.200000e+01 : f32
    %10 = vector.broadcast %cst_3 : f32 to vector<16x1xf32>
    %11 = arith.divf %9, %10 : vector<16x1xf32>
    %cst_4 = arith.constant 9.99999974E-6 : f32
    %12 = vector.broadcast %cst_4 : f32 to vector<16x1xf32>
    %13 = arith.addf %11, %12 : vector<16x1xf32>
    %14 = math.rsqrt %13 : vector<16x1xf32>
    %15 = vector.broadcast %14 : vector<16x1xf32> to vector<16x32xf32>
    %16 = arith.mulf %6, %15 : vector<16x32xf32>
    %c0_5 = arith.constant 0 : index
    %c0_6 = arith.constant 0 : index
    %17 = vector.load %arg2[%c0_5, %c0_6] : memref<1x32xf32, #tpu.memory_space<vmem>>, vector<1x32xf32>
    %18 = vector.broadcast %17 : vector<1x32xf32> to vector<16x32xf32>
    %19 = arith.mulf %16, %18 : vector<16x32xf32>
    %c0_7 = arith.constant 0 : index
    %c0_8 = arith.constant 0 : index
    %20 = vector.load %arg3[%c0_7, %c0_8] : memref<1x32xf32, #tpu.memory_space<vmem>>, vector<1x32xf32>
    %21 = vector.broadcast %20 : vector<1x32xf32> to vector<16x32xf32>
    %22 = arith.addf %19, %21 : vector<16x32xf32>
    %c0_9 = arith.constant 0 : index
    %c0_10 = arith.constant 0 : index
    %23 = vector.load %arg4[%c0_9, %c0_10] : memref<16x32xf32, #tpu.memory_space<vmem>>, vector<16x32xf32>
    tpu.vector_store %arg4[%c0_9, %c0_10], %22 {strides = array<i32>} : memref<16x32xf32, #tpu.memory_space<vmem>>, vector<16x32xf32>,
    return
  }
  func.func @transform_0(%arg0: i32) -> (i32, i32) {
    %c0_i32 = arith.constant 0 : i32
    %c0_i32_0 = arith.constant 0 : i32
    return %arg0, %c0_i32 : i32, i32
  }
  func.func @transform_1(%arg0: i32) -> (i32, i32) {
    %c0_i32 = arith.constant 0 : i32
    %c0_i32_0 = arith.constant 0 : i32
    %c0_i32_1 = arith.constant 0 : i32
    return %c0_i32, %c0_i32_0 : i32, i32
  }
  func.func @transform_2(%arg0: i32) -> (i32, i32) {
    %c0_i32 = arith.constant 0 : i32
    %c0_i32_0 = arith.constant 0 : i32
    %c0_i32_1 = arith.constant 0 : i32
    return %c0_i32, %c0_i32_0 : i32, i32
  }
  func.func @transform_3(%arg0: i32) -> (i32, i32) {
    %c0_i32 = arith.constant 0 : i32
    %c0_i32_0 = arith.constant 0 : i32
    return %arg0, %c0_i32 : i32, i32
  }
}

module attributes {stable_mosaic.version = 11 : i64} {
  func.func @_linear_kernel(%arg0: i32, %arg1: memref<16x32xbf16, #tpu.memory_space<vmem>>, %arg2: memref<32x32xbf16, #tpu.memory_space<vmem>>, %arg3: memref<1x32xf32, #tpu.memory_space<vmem>>, %arg4: memref<16x32xf32, #tpu.memory_space<vmem>>) attributes {dimension_semantics = [#tpu.dimension_semantics<parallel>], iteration_bounds = array<i64: 1>, scalar_prefetch = 0 : i64, scratch_operands = 0 : i64, tpu.core_type = #tpu.core_type<tc>, window_params = [{transform_indices = @transform_0, window_bounds = array<i64: 16, 32>}, {pipeline_mode = #tpu.pipeline_mode<synchronous>, transform_indices = @transform_1, window_bounds = array<i64: 32, 32>}, {pipeline_mode = #tpu.pipeline_mode<synchronous>, transform_indices = @transform_2, window_bounds = array<i64: 1, 32>}, {transform_indices = @transform_3, window_bounds = array<i64: 16, 32>}]} {
    %c0 = arith.constant 0 : index
    %c0_0 = arith.constant 0 : index
    %0 = vector.load %arg1[%c0, %c0_0] : memref<16x32xbf16, #tpu.memory_space<vmem>>, vector<16x32xbf16>
    %c0_1 = arith.constant 0 : index
    %c0_2 = arith.constant 0 : index
    %1 = vector.load %arg2[%c0_1, %c0_2] : memref<32x32xbf16, #tpu.memory_space<vmem>>, vector<32x32xbf16>
    %cst = arith.constant dense<0.000000e+00> : vector<16x32xf32>
    %2 = tpu.matmul %0, %1, %cst {dimension_numbers = #tpu.dot_dimension_numbers<[1], [0], [0], [1], [0, 0, 1, 1], [], []>} : vector<16x32xbf16>, vector<32x32xbf16>, vector<16x32xf32> -> vector<16x32xf32>
    %c0_3 = arith.constant 0 : index
    %c0_4 = arith.constant 0 : index
    %3 = vector.load %arg3[%c0_3, %c0_4] : memref<1x32xf32, #tpu.memory_space<vmem>>, vector<1x32xf32>
    %4 = vector.broadcast %3 : vector<1x32xf32> to vector<16x32xf32>
    %5 = arith.addf %2, %4 : vector<16x32xf32>
    %c0_5 = arith.constant 0 : index
    %c0_6 = arith.constant 0 : index
    %6 = vector.load %arg4[%c0_5, %c0_6] : memref<16x32xf32, #tpu.memory_space<vmem>>, vector<16x32xf32>
    tpu.vector_store %arg4[%c0_5, %c0_6], %5 {strides = array<i32>} : memref<16x32xf32, #tpu.memory_space<vmem>>, vector<16x32xf32>,
    return
  }
  func.func @transform_0(%arg0: i32) -> (i32, i32) {
    %c0_i32 = arith.constant 0 : i32
    %c0_i32_0 = arith.constant 0 : i32
    return %arg0, %c0_i32 : i32, i32
  }
  func.func @transform_1(%arg0: i32) -> (i32, i32) {
    %c0_i32 = arith.constant 0 : i32
    %c0_i32_0 = arith.constant 0 : i32
    %c0_i32_1 = arith.constant 0 : i32
    return %c0_i32, %c0_i32_0 : i32, i32
  }
  func.func @transform_2(%arg0: i32) -> (i32, i32) {
    %c0_i32 = arith.constant 0 : i32
    %c0_i32_0 = arith.constant 0 : i32
    %c0_i32_1 = arith.constant 0 : i32
    return %c0_i32, %c0_i32_0 : i32, i32
  }
  func.func @transform_3(%arg0: i32) -> (i32, i32) {
    %c0_i32 = arith.constant 0 : i32
    %c0_i32_0 = arith.constant 0 : i32
    return %arg0, %c0_i32 : i32, i32
  }
}

module attributes {stable_mosaic.version = 11 : i64} {
  func.func @_linear_kernel(%arg0: i32, %arg1: memref<16x32xbf16, #tpu.memory_space<vmem>>, %arg2: memref<32x64xbf16, #tpu.memory_space<vmem>>, %arg3: memref<1x64xf32, #tpu.memory_space<vmem>>, %arg4: memref<16x64xf32, #tpu.memory_space<vmem>>) attributes {dimension_semantics = [#tpu.dimension_semantics<parallel>], iteration_bounds = array<i64: 1>, scalar_prefetch = 0 : i64, scratch_operands = 0 : i64, tpu.core_type = #tpu.core_type<tc>, window_params = [{transform_indices = @transform_0, window_bounds = array<i64: 16, 32>}, {pipeline_mode = #tpu.pipeline_mode<synchronous>, transform_indices = @transform_1, window_bounds = array<i64: 32, 64>}, {pipeline_mode = #tpu.pipeline_mode<synchronous>, transform_indices = @transform_2, window_bounds = array<i64: 1, 64>}, {transform_indices = @transform_3, window_bounds = array<i64: 16, 64>}]} {
    %c0 = arith.constant 0 : index
    %c0_0 = arith.constant 0 : index
    %0 = vector.load %arg1[%c0, %c0_0] : memref<16x32xbf16, #tpu.memory_space<vmem>>, vector<16x32xbf16>
    %c0_1 = arith.constant 0 : index
    %c0_2 = arith.constant 0 : index
    %1 = vector.load %arg2[%c0_1, %c0_2] : memref<32x64xbf16, #tpu.memory_space<vmem>>, vector<32x64xbf16>
    %cst = arith.constant dense<0.000000e+00> : vector<16x64xf32>
    %2 = tpu.matmul %0, %1, %cst {dimension_numbers = #tpu.dot_dimension_numbers<[1], [0], [0], [1], [0, 0, 1, 1], [], []>} : vector<16x32xbf16>, vector<32x64xbf16>, vector<16x64xf32> -> vector<16x64xf32>
    %c0_3 = arith.constant 0 : index
    %c0_4 = arith.constant 0 : index
    %3 = vector.load %arg3[%c0_3, %c0_4] : memref<1x64xf32, #tpu.memory_space<vmem>>, vector<1x64xf32>
    %4 = vector.broadcast %3 : vector<1x64xf32> to vector<16x64xf32>
    %5 = arith.addf %2, %4 : vector<16x64xf32>
    %c0_5 = arith.constant 0 : index
    %c0_6 = arith.constant 0 : index
    %6 = vector.load %arg4[%c0_5, %c0_6] : memref<16x64xf32, #tpu.memory_space<vmem>>, vector<16x64xf32>
    tpu.vector_store %arg4[%c0_5, %c0_6], %5 {strides = array<i32>} : memref<16x64xf32, #tpu.memory_space<vmem>>, vector<16x64xf32>,
    return
  }
  func.func @transform_0(%arg0: i32) -> (i32, i32) {
    %c0_i32 = arith.constant 0 : i32
    %c0_i32_0 = arith.constant 0 : i32
    return %arg0, %c0_i32 : i32, i32
  }
  func.func @transform_1(%arg0: i32) -> (i32, i32) {
    %c0_i32 = arith.constant 0 : i32
    %c0_i32_0 = arith.constant 0 : i32
    %c0_i32_1 = arith.constant 0 : i32
    return %c0_i32, %c0_i32_0 : i32, i32
  }
  func.func @transform_2(%arg0: i32) -> (i32, i32) {
    %c0_i32 = arith.constant 0 : i32
    %c0_i32_0 = arith.constant 0 : i32
    %c0_i32_1 = arith.constant 0 : i32
    return %c0_i32, %c0_i32_0 : i32, i32
  }
  func.func @transform_3(%arg0: i32) -> (i32, i32) {
    %c0_i32 = arith.constant 0 : i32
    %c0_i32_0 = arith.constant 0 : i32
    return %arg0, %c0_i32 : i32, i32
  }
}

module attributes {stable_mosaic.version = 11 : i64} {
  func.func @_layernorm_kernel(%arg0: i32, %arg1: memref<16x32xf32, #tpu.memory_space<vmem>>, %arg2: memref<16x32xf32, #tpu.memory_space<vmem>>, %arg3: memref<1x32xf32, #tpu.memory_space<vmem>>, %arg4: memref<1x32xf32, #tpu.memory_space<vmem>>, %arg5: memref<16x32xf32, #tpu.memory_space<vmem>>) attributes {dimension_semantics = [#tpu.dimension_semantics<parallel>], iteration_bounds = array<i64: 1>, scalar_prefetch = 0 : i64, scratch_operands = 0 : i64, tpu.core_type = #tpu.core_type<tc>, window_params = [{transform_indices = @transform_0, window_bounds = array<i64: 16, 32>}, {transform_indices = @transform_1, window_bounds = array<i64: 16, 32>}, {pipeline_mode = #tpu.pipeline_mode<synchronous>, transform_indices = @transform_2, window_bounds = array<i64: 1, 32>}, {pipeline_mode = #tpu.pipeline_mode<synchronous>, transform_indices = @transform_3, window_bounds = array<i64: 1, 32>}, {transform_indices = @transform_4, window_bounds = array<i64: 16, 32>}]} {
    %c0 = arith.constant 0 : index
    %c0_0 = arith.constant 0 : index
    %0 = vector.load %arg1[%c0, %c0_0] : memref<16x32xf32, #tpu.memory_space<vmem>>, vector<16x32xf32>
    %c0_1 = arith.constant 0 : index
    %c0_2 = arith.constant 0 : index
    %1 = vector.load %arg2[%c0_1, %c0_2] : memref<16x32xf32, #tpu.memory_space<vmem>>, vector<16x32xf32>
    %2 = arith.addf %0, %1 : vector<16x32xf32>
    %cst = arith.constant dense<0.000000e+00> : vector<16xf32>
    %3 = vector.multi_reduction <add>, %2, %cst [1] : vector<16x32xf32> to vector<16xf32>
    %4 = vector.shape_cast %3 : vector<16xf32> to vector<16x1xf32>
    %cst_3 = arith.constant 3.200000e+01 : f32
    %5 = vector.broadcast %cst_3 : f32 to vector<16x1xf32>
    %6 = arith.divf %4, %5 : vector<16x1xf32>
    %7 = vector.broadcast %6 : vector<16x1xf32> to vector<16x32xf32>
    %8 = arith.subf %2, %7 : vector<16x32xf32>
    %9 = arith.mulf %8, %8 : vector<16x32xf32>
    %cst_4 = arith.constant dense<0.000000e+00> : vector<16xf32>
    %10 = vector.multi_reduction <add>, %9, %cst_4 [1] : vector<16x32xf32> to vector<16xf32>
    %11 = vector.shape_cast %10 : vector<16xf32> to vector<16x1xf32>
    %cst_5 = arith.constant 3.200000e+01 : f32
    %12 = vector.broadcast %cst_5 : f32 to vector<16x1xf32>
    %13 = arith.divf %11, %12 : vector<16x1xf32>
    %cst_6 = arith.constant 9.99999974E-6 : f32
    %14 = vector.broadcast %cst_6 : f32 to vector<16x1xf32>
    %15 = arith.addf %13, %14 : vector<16x1xf32>
    %16 = math.rsqrt %15 : vector<16x1xf32>
    %17 = vector.broadcast %16 : vector<16x1xf32> to vector<16x32xf32>
    %18 = arith.mulf %8, %17 : vector<16x32xf32>
    %c0_7 = arith.constant 0 : index
    %c0_8 = arith.constant 0 : index
    %19 = vector.load %arg3[%c0_7, %c0_8] : memref<1x32xf32, #tpu.memory_space<vmem>>, vector<1x32xf32>
    %20 = vector.broadcast %19 : vector<1x32xf32> to vector<16x32xf32>
    %21 = arith.mulf %18, %20 : vector<16x32xf32>
    %c0_9 = arith.constant 0 : index
    %c0_10 = arith.constant 0 : index
    %22 = vector.load %arg4[%c0_9, %c0_10] : memref<1x32xf32, #tpu.memory_space<vmem>>, vector<1x32xf32>
    %23 = vector.broadcast %22 : vector<1x32xf32> to vector<16x32xf32>
    %24 = arith.addf %21, %23 : vector<16x32xf32>
    %c0_11 = arith.constant 0 : index
    %c0_12 = arith.constant 0 : index
    %25 = vector.load %arg5[%c0_11, %c0_12] : memref<16x32xf32, #tpu.memory_space<vmem>>, vector<16x32xf32>
    tpu.vector_store %arg5[%c0_11, %c0_12], %24 {strides = array<i32>} : memref<16x32xf32, #tpu.memory_space<vmem>>, vector<16x32xf32>,
    return
  }
  func.func @transform_0(%arg0: i32) -> (i32, i32) {
    %c0_i32 = arith.constant 0 : i32
    %c0_i32_0 = arith.constant 0 : i32
    return %arg0, %c0_i32 : i32, i32
  }
  func.func @transform_1(%arg0: i32) -> (i32, i32) {
    %c0_i32 = arith.constant 0 : i32
    %c0_i32_0 = arith.constant 0 : i32
    return %arg0, %c0_i32 : i32, i32
  }
  func.func @transform_2(%arg0: i32) -> (i32, i32) {
    %c0_i32 = arith.constant 0 : i32
    %c0_i32_0 = arith.constant 0 : i32
    %c0_i32_1 = arith.constant 0 : i32
    return %c0_i32, %c0_i32_0 : i32, i32
  }
  func.func @transform_3(%arg0: i32) -> (i32, i32) {
    %c0_i32 = arith.constant 0 : i32
    %c0_i32_0 = arith.constant 0 : i32
    %c0_i32_1 = arith.constant 0 : i32
    return %c0_i32, %c0_i32_0 : i32, i32
  }
  func.func @transform_4(%arg0: i32) -> (i32, i32) {
    %c0_i32 = arith.constant 0 : i32
    %c0_i32_0 = arith.constant 0 : i32
    return %arg0, %c0_i32 : i32, i32
  }
}

module attributes {stable_mosaic.version = 11 : i64} {
  func.func @_linear_kernel(%arg0: i32, %arg1: memref<12x32xbf16, #tpu.memory_space<vmem>>, %arg2: memref<32x64xbf16, #tpu.memory_space<vmem>>, %arg3: memref<1x64xf32, #tpu.memory_space<vmem>>, %arg4: memref<12x64xf32, #tpu.memory_space<vmem>>) attributes {dimension_semantics = [#tpu.dimension_semantics<parallel>], iteration_bounds = array<i64: 1>, scalar_prefetch = 0 : i64, scratch_operands = 0 : i64, tpu.core_type = #tpu.core_type<tc>, window_params = [{transform_indices = @transform_0, window_bounds = array<i64: 12, 32>}, {pipeline_mode = #tpu.pipeline_mode<synchronous>, transform_indices = @transform_1, window_bounds = array<i64: 32, 64>}, {pipeline_mode = #tpu.pipeline_mode<synchronous>, transform_indices = @transform_2, window_bounds = array<i64: 1, 64>}, {transform_indices = @transform_3, window_bounds = array<i64: 12, 64>}]} {
    %c0 = arith.constant 0 : index
    %c0_0 = arith.constant 0 : index
    %0 = vector.load %arg1[%c0, %c0_0] : memref<12x32xbf16, #tpu.memory_space<vmem>>, vector<12x32xbf16>
    %c0_1 = arith.constant 0 : index
    %c0_2 = arith.constant 0 : index
    %1 = vector.load %arg2[%c0_1, %c0_2] : memref<32x64xbf16, #tpu.memory_space<vmem>>, vector<32x64xbf16>
    %cst = arith.constant dense<0.000000e+00> : vector<12x64xf32>
    %2 = tpu.matmul %0, %1, %cst {dimension_numbers = #tpu.dot_dimension_numbers<[1], [0], [0], [1], [0, 0, 1, 1], [], []>} : vector<12x32xbf16>, vector<32x64xbf16>, vector<12x64xf32> -> vector<12x64xf32>
    %c0_3 = arith.constant 0 : index
    %c0_4 = arith.constant 0 : index
    %3 = vector.load %arg3[%c0_3, %c0_4] : memref<1x64xf32, #tpu.memory_space<vmem>>, vector<1x64xf32>
    %4 = vector.broadcast %3 : vector<1x64xf32> to vector<12x64xf32>
    %5 = arith.addf %2, %4 : vector<12x64xf32>
    %c0_5 = arith.constant 0 : index
    %c0_6 = arith.constant 0 : index
    %6 = vector.load %arg4[%c0_5, %c0_6] : memref<12x64xf32, #tpu.memory_space<vmem>>, vector<12x64xf32>
    tpu.vector_store %arg4[%c0_5, %c0_6], %5 {strides = array<i32>} : memref<12x64xf32, #tpu.memory_space<vmem>>, vector<12x64xf32>,
    return
  }
  func.func @transform_0(%arg0: i32) -> (i32, i32) {
    %c0_i32 = arith.constant 0 : i32
    %c0_i32_0 = arith.constant 0 : i32
    return %arg0, %c0_i32 : i32, i32
  }
  func.func @transform_1(%arg0: i32) -> (i32, i32) {
    %c0_i32 = arith.constant 0 : i32
    %c0_i32_0 = arith.constant 0 : i32
    %c0_i32_1 = arith.constant 0 : i32
    return %c0_i32, %c0_i32_0 : i32, i32
  }
  func.func @transform_2(%arg0: i32) -> (i32, i32) {
    %c0_i32 = arith.constant 0 : i32
    %c0_i32_0 = arith.constant 0 : i32
    %c0_i32_1 = arith.constant 0 : i32
    return %c0_i32, %c0_i32_0 : i32, i32
  }
  func.func @transform_3(%arg0: i32) -> (i32, i32) {
    %c0_i32 = arith.constant 0 : i32
    %c0_i32_0 = arith.constant 0 : i32
    return %arg0, %c0_i32 : i32, i32
  }
}

module attributes {stable_mosaic.version = 11 : i64} {
  func.func @_rel_attn_kernel(%arg0: i32, %arg1: i32, %arg2: memref<1x8x32xf32, #tpu.memory_space<vmem>>, %arg3: memref<1x8x32xbf16, #tpu.memory_space<vmem>>, %arg4: memref<1x8x32xbf16, #tpu.memory_space<vmem>>, %arg5: memref<1x8x32xbf16, #tpu.memory_space<vmem>>, %arg6: memref<1x8xf32, #tpu.memory_space<vmem>>, %arg7: memref<1x8xf32, #tpu.memory_space<vmem>>, %arg8: memref<1x8x32xf32, #tpu.memory_space<vmem>>) attributes {dimension_semantics = [#tpu.dimension_semantics<parallel>, #tpu.dimension_semantics<parallel>], iteration_bounds = array<i64: 2, 1>, scalar_prefetch = 0 : i64, scratch_operands = 0 : i64, tpu.core_type = #tpu.core_type<tc>, window_params = [{transform_indices = @transform_0, window_bounds = array<i64: 1, 8, 32>}, {transform_indices = @transform_1, window_bounds = array<i64: 1, 8, 32>}, {pipeline_mode = #tpu.pipeline_mode<synchronous>, transform_indices = @transform_2, window_bounds = array<i64: 1, 8, 32>}, {transform_indices = @transform_3, window_bounds = array<i64: 1, 8, 32>}, {pipeline_mode = #tpu.pipeline_mode<synchronous>, transform_indices = @transform_4, window_bounds = array<i64: 1, 8>}, {pipeline_mode = #tpu.pipeline_mode<synchronous>, transform_indices = @transform_5, window_bounds = array<i64: 1, 8>}, {transform_indices = @transform_6, window_bounds = array<i64: 1, 8, 32>}]} {
    %c0 = arith.constant 0 : index
    %c0_0 = arith.constant 0 : index
    %c0_1 = arith.constant 0 : index
    %0 = vector.load %arg2[%c0, %c0_0, %c0_1] : memref<1x8x32xf32, #tpu.memory_space<vmem>>, vector<1x8x32xf32>
    %1 = vector.shape_cast %0 : vector<1x8x32xf32> to vector<8x32xf32>
    %c0_2 = arith.constant 0 : index
    %c0_3 = arith.constant 0 : index
    %c0_4 = arith.constant 0 : index
    %2 = vector.load %arg3[%c0_2, %c0_3, %c0_4] : memref<1x8x32xbf16, #tpu.memory_space<vmem>>, vector<1x8x32xbf16>
    %3 = vector.shape_cast %2 : vector<1x8x32xbf16> to vector<8x32xbf16>
    %c0_5 = arith.constant 0 : index
    %c0_6 = arith.constant 0 : index
    %c0_7 = arith.constant 0 : index
    %4 = vector.load %arg4[%c0_5, %c0_6, %c0_7] : memref<1x8x32xbf16, #tpu.memory_space<vmem>>, vector<1x8x32xbf16>
    %5 = vector.shape_cast %4 : vector<1x8x32xbf16> to vector<8x32xbf16>
    %c0_8 = arith.constant 0 : index
    %c0_9 = arith.constant 0 : index
    %c0_10 = arith.constant 0 : index
    %6 = vector.load %arg5[%c0_8, %c0_9, %c0_10] : memref<1x8x32xbf16, #tpu.memory_space<vmem>>, vector<1x8x32xbf16>
    %7 = vector.shape_cast %6 : vector<1x8x32xbf16> to vector<8x32xbf16>
    %c0_11 = arith.constant 0 : index
    %c0_12 = arith.constant 0 : index
    %8 = vector.load %arg6[%c0_11, %c0_12] : memref<1x8xf32, #tpu.memory_space<vmem>>, vector<1x8xf32>
    %c0_13 = arith.constant 0 : index
    %c0_14 = arith.constant 0 : index
    %9 = vector.load %arg7[%c0_13, %c0_14] : memref<1x8xf32, #tpu.memory_space<vmem>>, vector<1x8xf32>
    %c8_i32 = arith.constant 8 : i32
    %10 = arith.muli %arg1, %c8_i32 : i32
    %c0_i32 = arith.constant 0 : i32
    %11 = arith.addi %c0_i32, %10 : i32
    %12 = tpu.iota {dimensions = array<i32: 0>} : vector<8x8xi32>
    %13 = vector.broadcast %11 : i32 to vector<8x8xi32>
    %14 = arith.addi %13, %12 : vector<8x8xi32>
    %15 = tpu.iota {dimensions = array<i32: 1>} : vector<8x8xi32>
    %c1_i32 = arith.constant 1 : i32
    %16 = arith.addi %11, %c1_i32 : i32
    %17 = tpu.iota {dimensions = array<i32: 0>} : vector<8x1xi32>
    %18 = vector.broadcast %16 : i32 to vector<8x1xi32>
    %19 = arith.addi %18, %17 : vector<8x1xi32>
    %20 = vector.extract_strided_slice %1 {offsets = [0, 0], sizes = [8, 8], strides = [1, 1]} : vector<8x32xf32> to vector<8x8xf32>
    %21 = vector.broadcast %8 : vector<1x8xf32> to vector<8x8xf32>
    %22 = arith.addf %20, %21 : vector<8x8xf32>
    %cst = arith.constant 0.176776692 : f32
    %23 = vector.broadcast %cst : f32 to vector<8x8xf32>
    %24 = arith.mulf %22, %23 : vector<8x8xf32>
    %25 = arith.truncf %24 : vector<8x8xf32> to vector<8x8xbf16>
    %26 = vector.broadcast %9 : vector<1x8xf32> to vector<8x8xf32>
    %27 = arith.addf %20, %26 : vector<8x8xf32>
    %cst_15 = arith.constant 0.176776692 : f32
    %28 = vector.broadcast %cst_15 : f32 to vector<8x8xf32>
    %29 = arith.mulf %27, %28 : vector<8x8xf32>
    %30 = arith.truncf %29 : vector<8x8xf32> to vector<8x8xbf16>
    %31 = vector.extract_strided_slice %3 {offsets = [0, 0], sizes = [8, 8], strides = [1, 1]} : vector<8x32xbf16> to vector<8x8xbf16>
    %cst_16 = arith.constant dense<0.000000e+00> : vector<8x8xf32>
    %32 = tpu.matmul %25, %31, %cst_16 {dimension_numbers = #tpu.dot_dimension_numbers<[1], [1], [0], [0], [0, 0, 1, 0], [], []>} : vector<8x8xbf16>, vector<8x8xbf16>, vector<8x8xf32> -> vector<8x8xf32>
    %33 = vector.extract_strided_slice %5 {offsets = [0, 0], sizes = [8, 8], strides = [1, 1]} : vector<8x32xbf16> to vector<8x8xbf16>
    %cst_17 = arith.constant dense<0.000000e+00> : vector<8x8xf32>
    %34 = tpu.matmul %30, %33, %cst_17 {dimension_numbers = #tpu.dot_dimension_numbers<[1], [1], [0], [0], [0, 0, 1, 0], [], []>} : vector<8x8xbf16>, vector<8x8xbf16>, vector<8x8xf32> -> vector<8x8xf32>
    %35 = vector.extract_strided_slice %34 {offsets = [0, 7], sizes = [8, 1], strides = [1, 1]} : vector<8x8xf32> to vector<8x1xf32>
    %36 = vector.extract_strided_slice %34 {offsets = [0, 0], sizes = [8, 7], strides = [1, 1]} : vector<8x8xf32> to vector<8x7xf32>
    %37 = tpu.concatenate %35, %36 in 1 : vector<8x1xf32>, vector<8x7xf32> -> vector<8x8xf32>
    %c0_i32_18 = arith.constant 0 : i32
    %38 = vector.broadcast %c0_i32_18 : i32 to vector<8x1xi32>
    %39 = arith.shrsi %19, %38 : vector<8x1xi32>
    %c1_i32_19 = arith.constant 1 : i32
    %40 = vector.broadcast %c1_i32_19 : i32 to vector<8x1xi32>
    %41 = arith.andi %39, %40 : vector<8x1xi32>
    %c1_i32_20 = arith.constant 1 : i32
    %42 = vector.broadcast %c1_i32_20 : i32 to vector<8x1xi32>
    %43 = arith.cmpi eq, %41, %42 : vector<8x1xi32>
    %44 = vector.shape_cast %43 : vector<8x1xi1> to vector<8x1xi1>
    %45 = vector.broadcast %44 : vector<8x1xi1> to vector<8x8xi1>
    %46 = arith.select %45, %37, %34 : vector<8x8xi1>, vector<8x8xf32>
    %47 = vector.extract_strided_slice %46 {offsets = [0, 6], sizes = [8, 2], strides = [1, 1]} : vector<8x8xf32> to vector<8x2xf32>
    %48 = vector.extract_strided_slice %46 {offsets = [0, 0], sizes = [8, 6], strides = [1, 1]} : vector<8x8xf32> to vector<8x6xf32>
    %49 = tpu.concatenate %47, %48 in 1 : vector<8x2xf32>, vector<8x6xf32> -> vector<8x8xf32>
    %c1_i32_21 = arith.constant 1 : i32
    %50 = vector.broadcast %c1_i32_21 : i32 to vector<8x1xi32>
    %51 = arith.shrsi %19, %50 : vector<8x1xi32>
    %c1_i32_22 = arith.constant 1 : i32
    %52 = vector.broadcast %c1_i32_22 : i32 to vector<8x1xi32>
    %53 = arith.andi %51, %52 : vector<8x1xi32>
    %c1_i32_23 = arith.constant 1 : i32
    %54 = vector.broadcast %c1_i32_23 : i32 to vector<8x1xi32>
    %55 = arith.cmpi eq, %53, %54 : vector<8x1xi32>
    %56 = vector.shape_cast %55 : vector<8x1xi1> to vector<8x1xi1>
    %57 = vector.broadcast %56 : vector<8x1xi1> to vector<8x8xi1>
    %58 = arith.select %57, %49, %46 : vector<8x8xi1>, vector<8x8xf32>
    %59 = vector.extract_strided_slice %58 {offsets = [0, 4], sizes = [8, 4], strides = [1, 1]} : vector<8x8xf32> to vector<8x4xf32>
    %60 = vector.extract_strided_slice %58 {offsets = [0, 0], sizes = [8, 4], strides = [1, 1]} : vector<8x8xf32> to vector<8x4xf32>
    %61 = tpu.concatenate %59, %60 in 1 : vector<8x4xf32>, vector<8x4xf32> -> vector<8x8xf32>
    %c2_i32 = arith.constant 2 : i32
    %62 = vector.broadcast %c2_i32 : i32 to vector<8x1xi32>
    %63 = arith.shrsi %19, %62 : vector<8x1xi32>
    %c1_i32_24 = arith.constant 1 : i32
    %64 = vector.broadcast %c1_i32_24 : i32 to vector<8x1xi32>
    %65 = arith.andi %63, %64 : vector<8x1xi32>
    %c1_i32_25 = arith.constant 1 : i32
    %66 = vector.broadcast %c1_i32_25 : i32 to vector<8x1xi32>
    %67 = arith.cmpi eq, %65, %66 : vector<8x1xi32>
    %68 = vector.shape_cast %67 : vector<8x1xi1> to vector<8x1xi1>
    %69 = vector.broadcast %68 : vector<8x1xi1> to vector<8x8xi1>
    %70 = arith.select %69, %61, %58 : vector<8x8xi1>, vector<8x8xf32>
    %71 = arith.addf %32, %70 : vector<8x8xf32>
    %72 = arith.cmpi sgt, %15, %14 : vector<8x8xi32>
    %cst_26 = arith.constant -9.99999995E+11 : f32
    %73 = vector.broadcast %cst_26 : f32 to vector<8x8xf32>
    %74 = arith.select %72, %73, %71 : vector<8x8xi1>, vector<8x8xf32>
    %cst_27 = arith.constant dense<0xFF800000> : vector<8xf32>
    %75 = vector.multi_reduction <maximumf>, %74, %cst_27 [1] : vector<8x8xf32> to vector<8xf32>
    %76 = vector.shape_cast %75 : vector<8xf32> to vector<8x1xf32>
    %77 = vector.broadcast %76 : vector<8x1xf32> to vector<8x8xf32>
    %78 = arith.subf %74, %77 : vector<8x8xf32>
    %79 = math.exp %78 : vector<8x8xf32>
    %cst_28 = arith.constant dense<0.000000e+00> : vector<8xf32>
    %80 = vector.multi_reduction <add>, %79, %cst_28 [1] : vector<8x8xf32> to vector<8xf32>
    %81 = vector.shape_cast %80 : vector<8xf32> to vector<8x1xf32>
    %82 = arith.truncf %79 : vector<8x8xf32> to vector<8x8xbf16>
    %83 = vector.extract_strided_slice %7 {offsets = [0, 0], sizes = [8, 8], strides = [1, 1]} : vector<8x32xbf16> to vector<8x8xbf16>
    %cst_29 = arith.constant dense<0.000000e+00> : vector<8x8xf32>
    %84 = tpu.matmul %82, %83, %cst_29 {dimension_numbers = #tpu.dot_dimension_numbers<[1], [0], [0], [1], [0, 0, 1, 1], [], []>} : vector<8x8xbf16>, vector<8x8xbf16>, vector<8x8xf32> -> vector<8x8xf32>
    %85 = tpu.reciprocal %81 {approx = true} : vector<8x1xf32> -> vector<8x1xf32>
    %86 = vector.broadcast %85 : vector<8x1xf32> to vector<8x8xf32>
    %87 = arith.mulf %84, %86 : vector<8x8xf32>
    %88 = vector.extract_strided_slice %1 {offsets = [0, 8], sizes = [8, 8], strides = [1, 1]} : vector<8x32xf32> to vector<8x8xf32>
    %89 = vector.broadcast %8 : vector<1x8xf32> to vector<8x8xf32>
    %90 = arith.addf %88, %89 : vector<8x8xf32>
    %cst_30 = arith.constant 0.176776692 : f32
    %91 = vector.broadcast %cst_30 : f32 to vector<8x8xf32>
    %92 = arith.mulf %90, %91 : vector<8x8xf32>
    %93 = arith.truncf %92 : vector<8x8xf32> to vector<8x8xbf16>
    %94 = vector.broadcast %9 : vector<1x8xf32> to vector<8x8xf32>
    %95 = arith.addf %88, %94 : vector<8x8xf32>
    %cst_31 = arith.constant 0.176776692 : f32
    %96 = vector.broadcast %cst_31 : f32 to vector<8x8xf32>
    %97 = arith.mulf %95, %96 : vector<8x8xf32>
    %98 = arith.truncf %97 : vector<8x8xf32> to vector<8x8xbf16>
    %99 = vector.extract_strided_slice %3 {offsets = [0, 8], sizes = [8, 8], strides = [1, 1]} : vector<8x32xbf16> to vector<8x8xbf16>
    %cst_32 = arith.constant dense<0.000000e+00> : vector<8x8xf32>
    %100 = tpu.matmul %93, %99, %cst_32 {dimension_numbers = #tpu.dot_dimension_numbers<[1], [1], [0], [0], [0, 0, 1, 0], [], []>} : vector<8x8xbf16>, vector<8x8xbf16>, vector<8x8xf32> -> vector<8x8xf32>
    %101 = vector.extract_strided_slice %5 {offsets = [0, 8], sizes = [8, 8], strides = [1, 1]} : vector<8x32xbf16> to vector<8x8xbf16>
    %cst_33 = arith.constant dense<0.000000e+00> : vector<8x8xf32>
    %102 = tpu.matmul %98, %101, %cst_33 {dimension_numbers = #tpu.dot_dimension_numbers<[1], [1], [0], [0], [0, 0, 1, 0], [], []>} : vector<8x8xbf16>, vector<8x8xbf16>, vector<8x8xf32> -> vector<8x8xf32>
    %103 = vector.extract_strided_slice %102 {offsets = [0, 7], sizes = [8, 1], strides = [1, 1]} : vector<8x8xf32> to vector<8x1xf32>
    %104 = vector.extract_strided_slice %102 {offsets = [0, 0], sizes = [8, 7], strides = [1, 1]} : vector<8x8xf32> to vector<8x7xf32>
    %105 = tpu.concatenate %103, %104 in 1 : vector<8x1xf32>, vector<8x7xf32> -> vector<8x8xf32>
    %c0_i32_34 = arith.constant 0 : i32
    %106 = vector.broadcast %c0_i32_34 : i32 to vector<8x1xi32>
    %107 = arith.shrsi %19, %106 : vector<8x1xi32>
    %c1_i32_35 = arith.constant 1 : i32
    %108 = vector.broadcast %c1_i32_35 : i32 to vector<8x1xi32>
    %109 = arith.andi %107, %108 : vector<8x1xi32>
    %c1_i32_36 = arith.constant 1 : i32
    %110 = vector.broadcast %c1_i32_36 : i32 to vector<8x1xi32>
    %111 = arith.cmpi eq, %109, %110 : vector<8x1xi32>
    %112 = vector.shape_cast %111 : vector<8x1xi1> to vector<8x1xi1>
    %113 = vector.broadcast %112 : vector<8x1xi1> to vector<8x8xi1>
    %114 = arith.select %113, %105, %102 : vector<8x8xi1>, vector<8x8xf32>
    %115 = vector.extract_strided_slice %114 {offsets = [0, 6], sizes = [8, 2], strides = [1, 1]} : vector<8x8xf32> to vector<8x2xf32>
    %116 = vector.extract_strided_slice %114 {offsets = [0, 0], sizes = [8, 6], strides = [1, 1]} : vector<8x8xf32> to vector<8x6xf32>
    %117 = tpu.concatenate %115, %116 in 1 : vector<8x2xf32>, vector<8x6xf32> -> vector<8x8xf32>
    %c1_i32_37 = arith.constant 1 : i32
    %118 = vector.broadcast %c1_i32_37 : i32 to vector<8x1xi32>
    %119 = arith.shrsi %19, %118 : vector<8x1xi32>
    %c1_i32_38 = arith.constant 1 : i32
    %120 = vector.broadcast %c1_i32_38 : i32 to vector<8x1xi32>
    %121 = arith.andi %119, %120 : vector<8x1xi32>
    %c1_i32_39 = arith.constant 1 : i32
    %122 = vector.broadcast %c1_i32_39 : i32 to vector<8x1xi32>
    %123 = arith.cmpi eq, %121, %122 : vector<8x1xi32>
    %124 = vector.shape_cast %123 : vector<8x1xi1> to vector<8x1xi1>
    %125 = vector.broadcast %124 : vector<8x1xi1> to vector<8x8xi1>
    %126 = arith.select %125, %117, %114 : vector<8x8xi1>, vector<8x8xf32>
    %127 = vector.extract_strided_slice %126 {offsets = [0, 4], sizes = [8, 4], strides = [1, 1]} : vector<8x8xf32> to vector<8x4xf32>
    %128 = vector.extract_strided_slice %126 {offsets = [0, 0], sizes = [8, 4], strides = [1, 1]} : vector<8x8xf32> to vector<8x4xf32>
    %129 = tpu.concatenate %127, %128 in 1 : vector<8x4xf32>, vector<8x4xf32> -> vector<8x8xf32>
    %c2_i32_40 = arith.constant 2 : i32
    %130 = vector.broadcast %c2_i32_40 : i32 to vector<8x1xi32>
    %131 = arith.shrsi %19, %130 : vector<8x1xi32>
    %c1_i32_41 = arith.constant 1 : i32
    %132 = vector.broadcast %c1_i32_41 : i32 to vector<8x1xi32>
    %133 = arith.andi %131, %132 : vector<8x1xi32>
    %c1_i32_42 = arith.constant 1 : i32
    %134 = vector.broadcast %c1_i32_42 : i32 to vector<8x1xi32>
    %135 = arith.cmpi eq, %133, %134 : vector<8x1xi32>
    %136 = vector.shape_cast %135 : vector<8x1xi1> to vector<8x1xi1>
    %137 = vector.broadcast %136 : vector<8x1xi1> to vector<8x8xi1>
    %138 = arith.select %137, %129, %126 : vector<8x8xi1>, vector<8x8xf32>
    %139 = arith.addf %100, %138 : vector<8x8xf32>
    %140 = arith.cmpi sgt, %15, %14 : vector<8x8xi32>
    %cst_43 = arith.constant -9.99999995E+11 : f32
    %141 = vector.broadcast %cst_43 : f32 to vector<8x8xf32>
    %142 = arith.select %140, %141, %139 : vector<8x8xi1>, vector<8x8xf32>
    %cst_44 = arith.constant dense<0xFF800000> : vector<8xf32>
    %143 = vector.multi_reduction <maximumf>, %142, %cst_44 [1] : vector<8x8xf32> to vector<8xf32>
    %144 = vector.shape_cast %143 : vector<8xf32> to vector<8x1xf32>
    %145 = vector.broadcast %144 : vector<8x1xf32> to vector<8x8xf32>
    %146 = arith.subf %142, %145 : vector<8x8xf32>
    %147 = math.exp %146 : vector<8x8xf32>
    %cst_45 = arith.constant dense<0.000000e+00> : vector<8xf32>
    %148 = vector.multi_reduction <add>, %147, %cst_45 [1] : vector<8x8xf32> to vector<8xf32>
    %149 = vector.shape_cast %148 : vector<8xf32> to vector<8x1xf32>
    %150 = arith.truncf %147 : vector<8x8xf32> to vector<8x8xbf16>
    %151 = vector.extract_strided_slice %7 {offsets = [0, 8], sizes = [8, 8], strides = [1, 1]} : vector<8x32xbf16> to vector<8x8xbf16>
    %cst_46 = arith.constant dense<0.000000e+00> : vector<8x8xf32>
    %152 = tpu.matmul %150, %151, %cst_46 {dimension_numbers = #tpu.dot_dimension_numbers<[1], [0], [0], [1], [0, 0, 1, 1], [], []>} : vector<8x8xbf16>, vector<8x8xbf16>, vector<8x8xf32> -> vector<8x8xf32>
    %153 = tpu.reciprocal %149 {approx = true} : vector<8x1xf32> -> vector<8x1xf32>
    %154 = vector.broadcast %153 : vector<8x1xf32> to vector<8x8xf32>
    %155 = arith.mulf %152, %154 : vector<8x8xf32>
    %156 = vector.extract_strided_slice %1 {offsets = [0, 16], sizes = [8, 8], strides = [1, 1]} : vector<8x32xf32> to vector<8x8xf32>
    %157 = vector.broadcast %8 : vector<1x8xf32> to vector<8x8xf32>
    %158 = arith.addf %156, %157 : vector<8x8xf32>
    %cst_47 = arith.constant 0.176776692 : f32
    %159 = vector.broadcast %cst_47 : f32 to vector<8x8xf32>
    %160 = arith.mulf %158, %159 : vector<8x8xf32>
    %161 = arith.truncf %160 : vector<8x8xf32> to vector<8x8xbf16>
    %162 = vector.broadcast %9 : vector<1x8xf32> to vector<8x8xf32>
    %163 = arith.addf %156, %162 : vector<8x8xf32>
    %cst_48 = arith.constant 0.176776692 : f32
    %164 = vector.broadcast %cst_48 : f32 to vector<8x8xf32>
    %165 = arith.mulf %163, %164 : vector<8x8xf32>
    %166 = arith.truncf %165 : vector<8x8xf32> to vector<8x8xbf16>
    %167 = vector.extract_strided_slice %3 {offsets = [0, 16], sizes = [8, 8], strides = [1, 1]} : vector<8x32xbf16> to vector<8x8xbf16>
    %cst_49 = arith.constant dense<0.000000e+00> : vector<8x8xf32>
    %168 = tpu.matmul %161, %167, %cst_49 {dimension_numbers = #tpu.dot_dimension_numbers<[1], [1], [0], [0], [0, 0, 1, 0], [], []>} : vector<8x8xbf16>, vector<8x8xbf16>, vector<8x8xf32> -> vector<8x8xf32>
    %169 = vector.extract_strided_slice %5 {offsets = [0, 16], sizes = [8, 8], strides = [1, 1]} : vector<8x32xbf16> to vector<8x8xbf16>
    %cst_50 = arith.constant dense<0.000000e+00> : vector<8x8xf32>
    %170 = tpu.matmul %166, %169, %cst_50 {dimension_numbers = #tpu.dot_dimension_numbers<[1], [1], [0], [0], [0, 0, 1, 0], [], []>} : vector<8x8xbf16>, vector<8x8xbf16>, vector<8x8xf32> -> vector<8x8xf32>
    %171 = vector.extract_strided_slice %170 {offsets = [0, 7], sizes = [8, 1], strides = [1, 1]} : vector<8x8xf32> to vector<8x1xf32>
    %172 = vector.extract_strided_slice %170 {offsets = [0, 0], sizes = [8, 7], strides = [1, 1]} : vector<8x8xf32> to vector<8x7xf32>
    %173 = tpu.concatenate %171, %172 in 1 : vector<8x1xf32>, vector<8x7xf32> -> vector<8x8xf32>
    %c0_i32_51 = arith.constant 0 : i32
    %174 = vector.broadcast %c0_i32_51 : i32 to vector<8x1xi32>
    %175 = arith.shrsi %19, %174 : vector<8x1xi32>
    %c1_i32_52 = arith.constant 1 : i32
    %176 = vector.broadcast %c1_i32_52 : i32 to vector<8x1xi32>
    %177 = arith.andi %175, %176 : vector<8x1xi32>
    %c1_i32_53 = arith.constant 1 : i32
    %178 = vector.broadcast %c1_i32_53 : i32 to vector<8x1xi32>
    %179 = arith.cmpi eq, %177, %178 : vector<8x1xi32>
    %180 = vector.shape_cast %179 : vector<8x1xi1> to vector<8x1xi1>
    %181 = vector.broadcast %180 : vector<8x1xi1> to vector<8x8xi1>
    %182 = arith.select %181, %173, %170 : vector<8x8xi1>, vector<8x8xf32>
    %183 = vector.extract_strided_slice %182 {offsets = [0, 6], sizes = [8, 2], strides = [1, 1]} : vector<8x8xf32> to vector<8x2xf32>
    %184 = vector.extract_strided_slice %182 {offsets = [0, 0], sizes = [8, 6], strides = [1, 1]} : vector<8x8xf32> to vector<8x6xf32>
    %185 = tpu.concatenate %183, %184 in 1 : vector<8x2xf32>, vector<8x6xf32> -> vector<8x8xf32>
    %c1_i32_54 = arith.constant 1 : i32
    %186 = vector.broadcast %c1_i32_54 : i32 to vector<8x1xi32>
    %187 = arith.shrsi %19, %186 : vector<8x1xi32>
    %c1_i32_55 = arith.constant 1 : i32
    %188 = vector.broadcast %c1_i32_55 : i32 to vector<8x1xi32>
    %189 = arith.andi %187, %188 : vector<8x1xi32>
    %c1_i32_56 = arith.constant 1 : i32
    %190 = vector.broadcast %c1_i32_56 : i32 to vector<8x1xi32>
    %191 = arith.cmpi eq, %189, %190 : vector<8x1xi32>
    %192 = vector.shape_cast %191 : vector<8x1xi1> to vector<8x1xi1>
    %193 = vector.broadcast %192 : vector<8x1xi1> to vector<8x8xi1>
    %194 = arith.select %193, %185, %182 : vector<8x8xi1>, vector<8x8xf32>
    %195 = vector.extract_strided_slice %194 {offsets = [0, 4], sizes = [8, 4], strides = [1, 1]} : vector<8x8xf32> to vector<8x4xf32>
    %196 = vector.extract_strided_slice %194 {offsets = [0, 0], sizes = [8, 4], strides = [1, 1]} : vector<8x8xf32> to vector<8x4xf32>
    %197 = tpu.concatenate %195, %196 in 1 : vector<8x4xf32>, vector<8x4xf32> -> vector<8x8xf32>
    %c2_i32_57 = arith.constant 2 : i32
    %198 = vector.broadcast %c2_i32_57 : i32 to vector<8x1xi32>
    %199 = arith.shrsi %19, %198 : vector<8x1xi32>
    %c1_i32_58 = arith.constant 1 : i32
    %200 = vector.broadcast %c1_i32_58 : i32 to vector<8x1xi32>
    %201 = arith.andi %199, %200 : vector<8x1xi32>
    %c1_i32_59 = arith.constant 1 : i32
    %202 = vector.broadcast %c1_i32_59 : i32 to vector<8x1xi32>
    %203 = arith.cmpi eq, %201, %202 : vector<8x1xi32>
    %204 = vector.shape_cast %203 : vector<8x1xi1> to vector<8x1xi1>
    %205 = vector.broadcast %204 : vector<8x1xi1> to vector<8x8xi1>
    %206 = arith.select %205, %197, %194 : vector<8x8xi1>, vector<8x8xf32>
    %207 = arith.addf %168, %206 : vector<8x8xf32>
    %208 = arith.cmpi sgt, %15, %14 : vector<8x8xi32>
    %cst_60 = arith.constant -9.99999995E+11 : f32
    %209 = vector.broadcast %cst_60 : f32 to vector<8x8xf32>
    %210 = arith.select %208, %209, %207 : vector<8x8xi1>, vector<8x8xf32>
    %cst_61 = arith.constant dense<0xFF800000> : vector<8xf32>
    %211 = vector.multi_reduction <maximumf>, %210, %cst_61 [1] : vector<8x8xf32> to vector<8xf32>
    %212 = vector.shape_cast %211 : vector<8xf32> to vector<8x1xf32>
    %213 = vector.broadcast %212 : vector<8x1xf32> to vector<8x8xf32>
    %214 = arith.subf %210, %213 : vector<8x8xf32>
    %215 = math.exp %214 : vector<8x8xf32>
    %cst_62 = arith.constant dense<0.000000e+00> : vector<8xf32>
    %216 = vector.multi_reduction <add>, %215, %cst_62 [1] : vector<8x8xf32> to vector<8xf32>
    %217 = vector.shape_cast %216 : vector<8xf32> to vector<8x1xf32>
    %218 = arith.truncf %215 : vector<8x8xf32> to vector<8x8xbf16>
    %219 = vector.extract_strided_slice %7 {offsets = [0, 16], sizes = [8, 8], strides = [1, 1]} : vector<8x32xbf16> to vector<8x8xbf16>
    %cst_63 = arith.constant dense<0.000000e+00> : vector<8x8xf32>
    %220 = tpu.matmul %218, %219, %cst_63 {dimension_numbers = #tpu.dot_dimension_numbers<[1], [0], [0], [1], [0, 0, 1, 1], [], []>} : vector<8x8xbf16>, vector<8x8xbf16>, vector<8x8xf32> -> vector<8x8xf32>
    %221 = tpu.reciprocal %217 {approx = true} : vector<8x1xf32> -> vector<8x1xf32>
    %222 = vector.broadcast %221 : vector<8x1xf32> to vector<8x8xf32>
    %223 = arith.mulf %220, %222 : vector<8x8xf32>
    %224 = vector.extract_strided_slice %1 {offsets = [0, 24], sizes = [8, 8], strides = [1, 1]} : vector<8x32xf32> to vector<8x8xf32>
    %225 = vector.broadcast %8 : vector<1x8xf32> to vector<8x8xf32>
    %226 = arith.addf %224, %225 : vector<8x8xf32>
    %cst_64 = arith.constant 0.176776692 : f32
    %227 = vector.broadcast %cst_64 : f32 to vector<8x8xf32>
    %228 = arith.mulf %226, %227 : vector<8x8xf32>
    %229 = arith.truncf %228 : vector<8x8xf32> to vector<8x8xbf16>
    %230 = vector.broadcast %9 : vector<1x8xf32> to vector<8x8xf32>
    %231 = arith.addf %224, %230 : vector<8x8xf32>
    %cst_65 = arith.constant 0.176776692 : f32
    %232 = vector.broadcast %cst_65 : f32 to vector<8x8xf32>
    %233 = arith.mulf %231, %232 : vector<8x8xf32>
    %234 = arith.truncf %233 : vector<8x8xf32> to vector<8x8xbf16>
    %235 = vector.extract_strided_slice %3 {offsets = [0, 24], sizes = [8, 8], strides = [1, 1]} : vector<8x32xbf16> to vector<8x8xbf16>
    %cst_66 = arith.constant dense<0.000000e+00> : vector<8x8xf32>
    %236 = tpu.matmul %229, %235, %cst_66 {dimension_numbers = #tpu.dot_dimension_numbers<[1], [1], [0], [0], [0, 0, 1, 0], [], []>} : vector<8x8xbf16>, vector<8x8xbf16>, vector<8x8xf32> -> vector<8x8xf32>
    %237 = vector.extract_strided_slice %5 {offsets = [0, 24], sizes = [8, 8], strides = [1, 1]} : vector<8x32xbf16> to vector<8x8xbf16>
    %cst_67 = arith.constant dense<0.000000e+00> : vector<8x8xf32>
    %238 = tpu.matmul %234, %237, %cst_67 {dimension_numbers = #tpu.dot_dimension_numbers<[1], [1], [0], [0], [0, 0, 1, 0], [], []>} : vector<8x8xbf16>, vector<8x8xbf16>, vector<8x8xf32> -> vector<8x8xf32>
    %239 = vector.extract_strided_slice %238 {offsets = [0, 7], sizes = [8, 1], strides = [1, 1]} : vector<8x8xf32> to vector<8x1xf32>
    %240 = vector.extract_strided_slice %238 {offsets = [0, 0], sizes = [8, 7], strides = [1, 1]} : vector<8x8xf32> to vector<8x7xf32>
    %241 = tpu.concatenate %239, %240 in 1 : vector<8x1xf32>, vector<8x7xf32> -> vector<8x8xf32>
    %c0_i32_68 = arith.constant 0 : i32
    %242 = vector.broadcast %c0_i32_68 : i32 to vector<8x1xi32>
    %243 = arith.shrsi %19, %242 : vector<8x1xi32>
    %c1_i32_69 = arith.constant 1 : i32
    %244 = vector.broadcast %c1_i32_69 : i32 to vector<8x1xi32>
    %245 = arith.andi %243, %244 : vector<8x1xi32>
    %c1_i32_70 = arith.constant 1 : i32
    %246 = vector.broadcast %c1_i32_70 : i32 to vector<8x1xi32>
    %247 = arith.cmpi eq, %245, %246 : vector<8x1xi32>
    %248 = vector.shape_cast %247 : vector<8x1xi1> to vector<8x1xi1>
    %249 = vector.broadcast %248 : vector<8x1xi1> to vector<8x8xi1>
    %250 = arith.select %249, %241, %238 : vector<8x8xi1>, vector<8x8xf32>
    %251 = vector.extract_strided_slice %250 {offsets = [0, 6], sizes = [8, 2], strides = [1, 1]} : vector<8x8xf32> to vector<8x2xf32>
    %252 = vector.extract_strided_slice %250 {offsets = [0, 0], sizes = [8, 6], strides = [1, 1]} : vector<8x8xf32> to vector<8x6xf32>
    %253 = tpu.concatenate %251, %252 in 1 : vector<8x2xf32>, vector<8x6xf32> -> vector<8x8xf32>
    %c1_i32_71 = arith.constant 1 : i32
    %254 = vector.broadcast %c1_i32_71 : i32 to vector<8x1xi32>
    %255 = arith.shrsi %19, %254 : vector<8x1xi32>
    %c1_i32_72 = arith.constant 1 : i32
    %256 = vector.broadcast %c1_i32_72 : i32 to vector<8x1xi32>
    %257 = arith.andi %255, %256 : vector<8x1xi32>
    %c1_i32_73 = arith.constant 1 : i32
    %258 = vector.broadcast %c1_i32_73 : i32 to vector<8x1xi32>
    %259 = arith.cmpi eq, %257, %258 : vector<8x1xi32>
    %260 = vector.shape_cast %259 : vector<8x1xi1> to vector<8x1xi1>
    %261 = vector.broadcast %260 : vector<8x1xi1> to vector<8x8xi1>
    %262 = arith.select %261, %253, %250 : vector<8x8xi1>, vector<8x8xf32>
    %263 = vector.extract_strided_slice %262 {offsets = [0, 4], sizes = [8, 4], strides = [1, 1]} : vector<8x8xf32> to vector<8x4xf32>
    %264 = vector.extract_strided_slice %262 {offsets = [0, 0], sizes = [8, 4], strides = [1, 1]} : vector<8x8xf32> to vector<8x4xf32>
    %265 = tpu.concatenate %263, %264 in 1 : vector<8x4xf32>, vector<8x4xf32> -> vector<8x8xf32>
    %c2_i32_74 = arith.constant 2 : i32
    %266 = vector.broadcast %c2_i32_74 : i32 to vector<8x1xi32>
    %267 = arith.shrsi %19, %266 : vector<8x1xi32>
    %c1_i32_75 = arith.constant 1 : i32
    %268 = vector.broadcast %c1_i32_75 : i32 to vector<8x1xi32>
    %269 = arith.andi %267, %268 : vector<8x1xi32>
    %c1_i32_76 = arith.constant 1 : i32
    %270 = vector.broadcast %c1_i32_76 : i32 to vector<8x1xi32>
    %271 = arith.cmpi eq, %269, %270 : vector<8x1xi32>
    %272 = vector.shape_cast %271 : vector<8x1xi1> to vector<8x1xi1>
    %273 = vector.broadcast %272 : vector<8x1xi1> to vector<8x8xi1>
    %274 = arith.select %273, %265, %262 : vector<8x8xi1>, vector<8x8xf32>
    %275 = arith.addf %236, %274 : vector<8x8xf32>
    %276 = arith.cmpi sgt, %15, %14 : vector<8x8xi32>
    %cst_77 = arith.constant -9.99999995E+11 : f32
    %277 = vector.broadcast %cst_77 : f32 to vector<8x8xf32>
    %278 = arith.select %276, %277, %275 : vector<8x8xi1>, vector<8x8xf32>
    %cst_78 = arith.constant dense<0xFF800000> : vector<8xf32>
    %279 = vector.multi_reduction <maximumf>, %278, %cst_78 [1] : vector<8x8xf32> to vector<8xf32>
    %280 = vector.shape_cast %279 : vector<8xf32> to vector<8x1xf32>
    %281 = vector.broadcast %280 : vector<8x1xf32> to vector<8x8xf32>
    %282 = arith.subf %278, %281 : vector<8x8xf32>
    %283 = math.exp %282 : vector<8x8xf32>
    %cst_79 = arith.constant dense<0.000000e+00> : vector<8xf32>
    %284 = vector.multi_reduction <add>, %283, %cst_79 [1] : vector<8x8xf32> to vector<8xf32>
    %285 = vector.shape_cast %284 : vector<8xf32> to vector<8x1xf32>
    %286 = arith.truncf %283 : vector<8x8xf32> to vector<8x8xbf16>
    %287 = vector.extract_strided_slice %7 {offsets = [0, 24], sizes = [8, 8], strides = [1, 1]} : vector<8x32xbf16> to vector<8x8xbf16>
    %cst_80 = arith.constant dense<0.000000e+00> : vector<8x8xf32>
    %288 = tpu.matmul %286, %287, %cst_80 {dimension_numbers = #tpu.dot_dimension_numbers<[1], [0], [0], [1], [0, 0, 1, 1], [], []>} : vector<8x8xbf16>, vector<8x8xbf16>, vector<8x8xf32> -> vector<8x8xf32>
    %289 = tpu.reciprocal %285 {approx = true} : vector<8x1xf32> -> vector<8x1xf32>
    %290 = vector.broadcast %289 : vector<8x1xf32> to vector<8x8xf32>
    %291 = arith.mulf %288, %290 : vector<8x8xf32>
    %292 = tpu.concatenate %87, %155, %223, %291 in 1 : vector<8x8xf32>, vector<8x8xf32>, vector<8x8xf32>, vector<8x8xf32> -> vector<8x32xf32>
    %c0_81 = arith.constant 0 : index
    %c0_82 = arith.constant 0 : index
    %c0_83 = arith.constant 0 : index
    %293 = vector.load %arg8[%c0_81, %c0_82, %c0_83] : memref<1x8x32xf32, #tpu.memory_space<vmem>>, vector<1x8x32xf32>
    %294 = vector.shape_cast %293 : vector<1x8x32xf32> to vector<8x32xf32>
    %295 = vector.shape_cast %292 : vector<8x32xf32> to vector<1x8x32xf32>
    tpu.vector_store %arg8[%c0_81, %c0_82, %c0_83], %295 {strides = array<i32>} : memref<1x8x32xf32, #tpu.memory_space<vmem>>, vector<1x8x32xf32>,
    return
  }
  func.func @transform_0(%arg0: i32, %arg1: i32) -> (i32, i32, i32) {
    %c0_i32 = arith.constant 0 : i32
    %c0_i32_0 = arith.constant 0 : i32
    return %arg0, %arg1, %c0_i32 : i32, i32, i32
  }
  func.func @transform_1(%arg0: i32, %arg1: i32) -> (i32, i32, i32) {
    %c0_i32 = arith.constant 0 : i32
    %c0_i32_0 = arith.constant 0 : i32
    %c0_i32_1 = arith.constant 0 : i32
    return %arg0, %c0_i32, %c0_i32_0 : i32, i32, i32
  }
  func.func @transform_2(%arg0: i32, %arg1: i32) -> (i32, i32, i32) {
    %c0_i32 = arith.constant 0 : i32
    %c0_i32_0 = arith.constant 0 : i32
    %c0_i32_1 = arith.constant 0 : i32
    %c0_i32_2 = arith.constant 0 : i32
    return %c0_i32, %c0_i32_0, %c0_i32_1 : i32, i32, i32
  }
  func.func @transform_3(%arg0: i32, %arg1: i32) -> (i32, i32, i32) {
    %c0_i32 = arith.constant 0 : i32
    %c0_i32_0 = arith.constant 0 : i32
    %c0_i32_1 = arith.constant 0 : i32
    return %arg0, %c0_i32, %c0_i32_0 : i32, i32, i32
  }
  func.func @transform_4(%arg0: i32, %arg1: i32) -> (i32, i32) {
    %c0_i32 = arith.constant 0 : i32
    %c0_i32_0 = arith.constant 0 : i32
    %c0_i32_1 = arith.constant 0 : i32
    return %c0_i32, %c0_i32_0 : i32, i32
  }
  func.func @transform_5(%arg0: i32, %arg1: i32) -> (i32, i32) {
    %c0_i32 = arith.constant 0 : i32
    %c0_i32_0 = arith.constant 0 : i32
    %c0_i32_1 = arith.constant 0 : i32
    return %c0_i32, %c0_i32_0 : i32, i32
  }
  func.func @transform_6(%arg0: i32, %arg1: i32) -> (i32, i32, i32) {
    %c0_i32 = arith.constant 0 : i32
    %c0_i32_0 = arith.constant 0 : i32
    return %arg0, %arg1, %c0_i32 : i32, i32, i32
  }
}

module attributes {stable_mosaic.version = 11 : i64} {
  func.func @_mha_kernel(%arg0: i32, %arg1: i32, %arg2: memref<1x8x32xbf16, #tpu.memory_space<vmem>>, %arg3: memref<1x6x32xbf16, #tpu.memory_space<vmem>>, %arg4: memref<1x6x32xbf16, #tpu.memory_space<vmem>>, %arg5: memref<1x8x32xf32, #tpu.memory_space<vmem>>) attributes {dimension_semantics = [#tpu.dimension_semantics<parallel>, #tpu.dimension_semantics<parallel>], iteration_bounds = array<i64: 2, 1>, scalar_prefetch = 0 : i64, scratch_operands = 0 : i64, tpu.core_type = #tpu.core_type<tc>, window_params = [{transform_indices = @transform_0, window_bounds = array<i64: 1, 8, 32>}, {transform_indices = @transform_1, window_bounds = array<i64: 1, 6, 32>}, {transform_indices = @transform_2, window_bounds = array<i64: 1, 6, 32>}, {transform_indices = @transform_3, window_bounds = array<i64: 1, 8, 32>}]} {
    %c0 = arith.constant 0 : index
    %c0_0 = arith.constant 0 : index
    %c0_1 = arith.constant 0 : index
    %0 = vector.load %arg2[%c0, %c0_0, %c0_1] : memref<1x8x32xbf16, #tpu.memory_space<vmem>>, vector<1x8x32xbf16>
    %1 = vector.shape_cast %0 : vector<1x8x32xbf16> to vector<8x32xbf16>
    %c0_2 = arith.constant 0 : index
    %c0_3 = arith.constant 0 : index
    %c0_4 = arith.constant 0 : index
    %2 = vector.load %arg3[%c0_2, %c0_3, %c0_4] : memref<1x6x32xbf16, #tpu.memory_space<vmem>>, vector<1x6x32xbf16>
    %3 = vector.shape_cast %2 : vector<1x6x32xbf16> to vector<6x32xbf16>
    %c0_5 = arith.constant 0 : index
    %c0_6 = arith.constant 0 : index
    %c0_7 = arith.constant 0 : index
    %4 = vector.load %arg4[%c0_5, %c0_6, %c0_7] : memref<1x6x32xbf16, #tpu.memory_space<vmem>>, vector<1x6x32xbf16>
    %5 = vector.shape_cast %4 : vector<1x6x32xbf16> to vector<6x32xbf16>
    %c8_i32 = arith.constant 8 : i32
    %6 = arith.muli %arg1, %c8_i32 : i32
    %7 = tpu.iota {dimensions = array<i32: 0>} : vector<8x6xi32>
    %8 = vector.broadcast %6 : i32 to vector<8x6xi32>
    %9 = arith.addi %8, %7 : vector<8x6xi32>
    %10 = tpu.iota {dimensions = array<i32: 1>} : vector<8x6xi32>
    %11 = arith.cmpi sgt, %10, %9 : vector<8x6xi32>
    %cst = arith.constant -9.99999995E+11 : f32
    %cst_8 = arith.constant 0.000000e+00 : f32
    %12 = vector.broadcast %cst : f32 to vector<8x6xf32>
    %13 = vector.broadcast %cst_8 : f32 to vector<8x6xf32>
    %14 = arith.select %11, %12, %13 : vector<8x6xi1>, vector<8x6xf32>
    %15 = vector.extract_strided_slice %1 {offsets = [0, 0], sizes = [8, 8], strides = [1, 1]} : vector<8x32xbf16> to vector<8x8xbf16>
    %16 = vector.extract_strided_slice %3 {offsets = [0, 0], sizes = [6, 8], strides = [1, 1]} : vector<6x32xbf16> to vector<6x8xbf16>
    %cst_9 = arith.constant dense<0.000000e+00> : vector<8x6xf32>
    %17 = tpu.matmul %15, %16, %cst_9 {dimension_numbers = #tpu.dot_dimension_numbers<[1], [1], [0], [0], [0, 0, 1, 0], [], []>} : vector<8x8xbf16>, vector<6x8xbf16>, vector<8x6xf32> -> vector<8x6xf32>
    %18 = arith.addf %17, %14 : vector<8x6xf32>
    %cst_10 = arith.constant dense<0xFF800000> : vector<8xf32>
    %19 = vector.multi_reduction <maximumf>, %18, %cst_10 [1] : vector<8x6xf32> to vector<8xf32>
    %20 = vector.shape_cast %19 : vector<8xf32> to vector<8x1xf32>
    %21 = vector.broadcast %20 : vector<8x1xf32> to vector<8x6xf32>
    %22 = arith.subf %18, %21 : vector<8x6xf32>
    %23 = math.exp %22 : vector<8x6xf32>
    %cst_11 = arith.constant dense<0.000000e+00> : vector<8xf32>
    %24 = vector.multi_reduction <add>, %23, %cst_11 [1] : vector<8x6xf32> to vector<8xf32>
    %25 = vector.shape_cast %24 : vector<8xf32> to vector<8x1xf32>
    %26 = arith.truncf %23 : vector<8x6xf32> to vector<8x6xbf16>
    %27 = vector.extract_strided_slice %5 {offsets = [0, 0], sizes = [6, 8], strides = [1, 1]} : vector<6x32xbf16> to vector<6x8xbf16>
    %cst_12 = arith.constant dense<0.000000e+00> : vector<8x8xf32>
    %28 = tpu.matmul %26, %27, %cst_12 {dimension_numbers = #tpu.dot_dimension_numbers<[1], [0], [0], [1], [0, 0, 1, 1], [], []>} : vector<8x6xbf16>, vector<6x8xbf16>, vector<8x8xf32> -> vector<8x8xf32>
    %29 = tpu.reciprocal %25 {approx = true} : vector<8x1xf32> -> vector<8x1xf32>
    %30 = vector.broadcast %29 : vector<8x1xf32> to vector<8x8xf32>
    %31 = arith.mulf %28, %30 : vector<8x8xf32>
    %32 = vector.extract_strided_slice %1 {offsets = [0, 8], sizes = [8, 8], strides = [1, 1]} : vector<8x32xbf16> to vector<8x8xbf16>
    %33 = vector.extract_strided_slice %3 {offsets = [0, 8], sizes = [6, 8], strides = [1, 1]} : vector<6x32xbf16> to vector<6x8xbf16>
    %cst_13 = arith.constant dense<0.000000e+00> : vector<8x6xf32>
    %34 = tpu.matmul %32, %33, %cst_13 {dimension_numbers = #tpu.dot_dimension_numbers<[1], [1], [0], [0], [0, 0, 1, 0], [], []>} : vector<8x8xbf16>, vector<6x8xbf16>, vector<8x6xf32> -> vector<8x6xf32>
    %35 = arith.addf %34, %14 : vector<8x6xf32>
    %cst_14 = arith.constant dense<0xFF800000> : vector<8xf32>
    %36 = vector.multi_reduction <maximumf>, %35, %cst_14 [1] : vector<8x6xf32> to vector<8xf32>
    %37 = vector.shape_cast %36 : vector<8xf32> to vector<8x1xf32>
    %38 = vector.broadcast %37 : vector<8x1xf32> to vector<8x6xf32>
    %39 = arith.subf %35, %38 : vector<8x6xf32>
    %40 = math.exp %39 : vector<8x6xf32>
    %cst_15 = arith.constant dense<0.000000e+00> : vector<8xf32>
    %41 = vector.multi_reduction <add>, %40, %cst_15 [1] : vector<8x6xf32> to vector<8xf32>
    %42 = vector.shape_cast %41 : vector<8xf32> to vector<8x1xf32>
    %43 = arith.truncf %40 : vector<8x6xf32> to vector<8x6xbf16>
    %44 = vector.extract_strided_slice %5 {offsets = [0, 8], sizes = [6, 8], strides = [1, 1]} : vector<6x32xbf16> to vector<6x8xbf16>
    %cst_16 = arith.constant dense<0.000000e+00> : vector<8x8xf32>
    %45 = tpu.matmul %43, %44, %cst_16 {dimension_numbers = #tpu.dot_dimension_numbers<[1], [0], [0], [1], [0, 0, 1, 1], [], []>} : vector<8x6xbf16>, vector<6x8xbf16>, vector<8x8xf32> -> vector<8x8xf32>
    %46 = tpu.reciprocal %42 {approx = true} : vector<8x1xf32> -> vector<8x1xf32>
    %47 = vector.broadcast %46 : vector<8x1xf32> to vector<8x8xf32>
    %48 = arith.mulf %45, %47 : vector<8x8xf32>
    %49 = vector.extract_strided_slice %1 {offsets = [0, 16], sizes = [8, 8], strides = [1, 1]} : vector<8x32xbf16> to vector<8x8xbf16>
    %50 = vector.extract_strided_slice %3 {offsets = [0, 16], sizes = [6, 8], strides = [1, 1]} : vector<6x32xbf16> to vector<6x8xbf16>
    %cst_17 = arith.constant dense<0.000000e+00> : vector<8x6xf32>
    %51 = tpu.matmul %49, %50, %cst_17 {dimension_numbers = #tpu.dot_dimension_numbers<[1], [1], [0], [0], [0, 0, 1, 0], [], []>} : vector<8x8xbf16>, vector<6x8xbf16>, vector<8x6xf32> -> vector<8x6xf32>
    %52 = arith.addf %51, %14 : vector<8x6xf32>
    %cst_18 = arith.constant dense<0xFF800000> : vector<8xf32>
    %53 = vector.multi_reduction <maximumf>, %52, %cst_18 [1] : vector<8x6xf32> to vector<8xf32>
    %54 = vector.shape_cast %53 : vector<8xf32> to vector<8x1xf32>
    %55 = vector.broadcast %54 : vector<8x1xf32> to vector<8x6xf32>
    %56 = arith.subf %52, %55 : vector<8x6xf32>
    %57 = math.exp %56 : vector<8x6xf32>
    %cst_19 = arith.constant dense<0.000000e+00> : vector<8xf32>
    %58 = vector.multi_reduction <add>, %57, %cst_19 [1] : vector<8x6xf32> to vector<8xf32>
    %59 = vector.shape_cast %58 : vector<8xf32> to vector<8x1xf32>
    %60 = arith.truncf %57 : vector<8x6xf32> to vector<8x6xbf16>
    %61 = vector.extract_strided_slice %5 {offsets = [0, 16], sizes = [6, 8], strides = [1, 1]} : vector<6x32xbf16> to vector<6x8xbf16>
    %cst_20 = arith.constant dense<0.000000e+00> : vector<8x8xf32>
    %62 = tpu.matmul %60, %61, %cst_20 {dimension_numbers = #tpu.dot_dimension_numbers<[1], [0], [0], [1], [0, 0, 1, 1], [], []>} : vector<8x6xbf16>, vector<6x8xbf16>, vector<8x8xf32> -> vector<8x8xf32>
    %63 = tpu.reciprocal %59 {approx = true} : vector<8x1xf32> -> vector<8x1xf32>
    %64 = vector.broadcast %63 : vector<8x1xf32> to vector<8x8xf32>
    %65 = arith.mulf %62, %64 : vector<8x8xf32>
    %66 = vector.extract_strided_slice %1 {offsets = [0, 24], sizes = [8, 8], strides = [1, 1]} : vector<8x32xbf16> to vector<8x8xbf16>
    %67 = vector.extract_strided_slice %3 {offsets = [0, 24], sizes = [6, 8], strides = [1, 1]} : vector<6x32xbf16> to vector<6x8xbf16>
    %cst_21 = arith.constant dense<0.000000e+00> : vector<8x6xf32>
    %68 = tpu.matmul %66, %67, %cst_21 {dimension_numbers = #tpu.dot_dimension_numbers<[1], [1], [0], [0], [0, 0, 1, 0], [], []>} : vector<8x8xbf16>, vector<6x8xbf16>, vector<8x6xf32> -> vector<8x6xf32>
    %69 = arith.addf %68, %14 : vector<8x6xf32>
    %cst_22 = arith.constant dense<0xFF800000> : vector<8xf32>
    %70 = vector.multi_reduction <maximumf>, %69, %cst_22 [1] : vector<8x6xf32> to vector<8xf32>
    %71 = vector.shape_cast %70 : vector<8xf32> to vector<8x1xf32>
    %72 = vector.broadcast %71 : vector<8x1xf32> to vector<8x6xf32>
    %73 = arith.subf %69, %72 : vector<8x6xf32>
    %74 = math.exp %73 : vector<8x6xf32>
    %cst_23 = arith.constant dense<0.000000e+00> : vector<8xf32>
    %75 = vector.multi_reduction <add>, %74, %cst_23 [1] : vector<8x6xf32> to vector<8xf32>
    %76 = vector.shape_cast %75 : vector<8xf32> to vector<8x1xf32>
    %77 = arith.truncf %74 : vector<8x6xf32> to vector<8x6xbf16>
    %78 = vector.extract_strided_slice %5 {offsets = [0, 24], sizes = [6, 8], strides = [1, 1]} : vector<6x32xbf16> to vector<6x8xbf16>
    %cst_24 = arith.constant dense<0.000000e+00> : vector<8x8xf32>
    %79 = tpu.matmul %77, %78, %cst_24 {dimension_numbers = #tpu.dot_dimension_numbers<[1], [0], [0], [1], [0, 0, 1, 1], [], []>} : vector<8x6xbf16>, vector<6x8xbf16>, vector<8x8xf32> -> vector<8x8xf32>
    %80 = tpu.reciprocal %76 {approx = true} : vector<8x1xf32> -> vector<8x1xf32>
    %81 = vector.broadcast %80 : vector<8x1xf32> to vector<8x8xf32>
    %82 = arith.mulf %79, %81 : vector<8x8xf32>
    %83 = tpu.concatenate %31, %48, %65, %82 in 1 : vector<8x8xf32>, vector<8x8xf32>, vector<8x8xf32>, vector<8x8xf32> -> vector<8x32xf32>
    %c0_25 = arith.constant 0 : index
    %c0_26 = arith.constant 0 : index
    %c0_27 = arith.constant 0 : index
    %84 = vector.load %arg5[%c0_25, %c0_26, %c0_27] : memref<1x8x32xf32, #tpu.memory_space<vmem>>, vector<1x8x32xf32>
    %85 = vector.shape_cast %84 : vector<1x8x32xf32> to vector<8x32xf32>
    %86 = vector.shape_cast %83 : vector<8x32xf32> to vector<1x8x32xf32>
    tpu.vector_store %arg5[%c0_25, %c0_26, %c0_27], %86 {strides = array<i32>} : memref<1x8x32xf32, #tpu.memory_space<vmem>>, vector<1x8x32xf32>,
    return
  }
  func.func @transform_0(%arg0: i32, %arg1: i32) -> (i32, i32, i32) {
    %c0_i32 = arith.constant 0 : i32
    %c0_i32_0 = arith.constant 0 : i32
    return %arg0, %arg1, %c0_i32 : i32, i32, i32
  }
  func.func @transform_1(%arg0: i32, %arg1: i32) -> (i32, i32, i32) {
    %c0_i32 = arith.constant 0 : i32
    %c0_i32_0 = arith.constant 0 : i32
    %c0_i32_1 = arith.constant 0 : i32
    return %arg0, %c0_i32, %c0_i32_0 : i32, i32, i32
  }
  func.func @transform_2(%arg0: i32, %arg1: i32) -> (i32, i32, i32) {
    %c0_i32 = arith.constant 0 : i32
    %c0_i32_0 = arith.constant 0 : i32
    %c0_i32_1 = arith.constant 0 : i32
    return %arg0, %c0_i32, %c0_i32_0 : i32, i32, i32
  }
  func.func @transform_3(%arg0: i32, %arg1: i32) -> (i32, i32, i32) {
    %c0_i32 = arith.constant 0 : i32
    %c0_i32_0 = arith.constant 0 : i32
    return %arg0, %arg1, %c0_i32 : i32, i32, i32
  }
}

module attributes {stable_mosaic.version = 11 : i64} {
  func.func @_linear_kernel(%arg0: i32, %arg1: memref<16x32xbf16, #tpu.memory_space<vmem>>, %arg2: memref<32x64xbf16, #tpu.memory_space<vmem>>, %arg3: memref<1x64xf32, #tpu.memory_space<vmem>>, %arg4: memref<16x64xf32, #tpu.memory_space<vmem>>) attributes {dimension_semantics = [#tpu.dimension_semantics<parallel>], iteration_bounds = array<i64: 1>, scalar_prefetch = 0 : i64, scratch_operands = 0 : i64, tpu.core_type = #tpu.core_type<tc>, window_params = [{transform_indices = @transform_0, window_bounds = array<i64: 16, 32>}, {pipeline_mode = #tpu.pipeline_mode<synchronous>, transform_indices = @transform_1, window_bounds = array<i64: 32, 64>}, {pipeline_mode = #tpu.pipeline_mode<synchronous>, transform_indices = @transform_2, window_bounds = array<i64: 1, 64>}, {transform_indices = @transform_3, window_bounds = array<i64: 16, 64>}]} {
    %c0 = arith.constant 0 : index
    %c0_0 = arith.constant 0 : index
    %0 = vector.load %arg1[%c0, %c0_0] : memref<16x32xbf16, #tpu.memory_space<vmem>>, vector<16x32xbf16>
    %c0_1 = arith.constant 0 : index
    %c0_2 = arith.constant 0 : index
    %1 = vector.load %arg2[%c0_1, %c0_2] : memref<32x64xbf16, #tpu.memory_space<vmem>>, vector<32x64xbf16>
    %cst = arith.constant dense<0.000000e+00> : vector<16x64xf32>
    %2 = tpu.matmul %0, %1, %cst {dimension_numbers = #tpu.dot_dimension_numbers<[1], [0], [0], [1], [0, 0, 1, 1], [], []>} : vector<16x32xbf16>, vector<32x64xbf16>, vector<16x64xf32> -> vector<16x64xf32>
    %c0_3 = arith.constant 0 : index
    %c0_4 = arith.constant 0 : index
    %3 = vector.load %arg3[%c0_3, %c0_4] : memref<1x64xf32, #tpu.memory_space<vmem>>, vector<1x64xf32>
    %4 = vector.broadcast %3 : vector<1x64xf32> to vector<16x64xf32>
    %5 = arith.addf %2, %4 : vector<16x64xf32>
    %cst_5 = arith.constant 0.000000e+00 : f32
    %6 = vector.broadcast %cst_5 : f32 to vector<16x64xf32>
    %7 = arith.maximumf %5, %6 : vector<16x64xf32>
    %c0_6 = arith.constant 0 : index
    %c0_7 = arith.constant 0 : index
    %8 = vector.load %arg4[%c0_6, %c0_7] : memref<16x64xf32, #tpu.memory_space<vmem>>, vector<16x64xf32>
    tpu.vector_store %arg4[%c0_6, %c0_7], %7 {strides = array<i32>} : memref<16x64xf32, #tpu.memory_space<vmem>>, vector<16x64xf32>,
    return
  }
  func.func @transform_0(%arg0: i32) -> (i32, i32) {
    %c0_i32 = arith.constant 0 : i32
    %c0_i32_0 = arith.constant 0 : i32
    return %arg0, %c0_i32 : i32, i32
  }
  func.func @transform_1(%arg0: i32) -> (i32, i32) {
    %c0_i32 = arith.constant 0 : i32
    %c0_i32_0 = arith.constant 0 : i32
    %c0_i32_1 = arith.constant 0 : i32
    return %c0_i32, %c0_i32_0 : i32, i32
  }
  func.func @transform_2(%arg0: i32) -> (i32, i32) {
    %c0_i32 = arith.constant 0 : i32
    %c0_i32_0 = arith.constant 0 : i32
    %c0_i32_1 = arith.constant 0 : i32
    return %c0_i32, %c0_i32_0 : i32, i32
  }
  func.func @transform_3(%arg0: i32) -> (i32, i32) {
    %c0_i32 = arith.constant 0 : i32
    %c0_i32_0 = arith.constant 0 : i32
    return %arg0, %c0_i32 : i32, i32
  }
}

module attributes {stable_mosaic.version = 11 : i64} {
  func.func @_linear_kernel(%arg0: i32, %arg1: memref<16x64xbf16, #tpu.memory_space<vmem>>, %arg2: memref<64x32xbf16, #tpu.memory_space<vmem>>, %arg3: memref<1x32xf32, #tpu.memory_space<vmem>>, %arg4: memref<16x32xf32, #tpu.memory_space<vmem>>, %arg5: memref<16x32xf32, #tpu.memory_space<vmem>>) attributes {dimension_semantics = [#tpu.dimension_semantics<parallel>], iteration_bounds = array<i64: 1>, scalar_prefetch = 0 : i64, scratch_operands = 0 : i64, tpu.core_type = #tpu.core_type<tc>, window_params = [{transform_indices = @transform_0, window_bounds = array<i64: 16, 64>}, {pipeline_mode = #tpu.pipeline_mode<synchronous>, transform_indices = @transform_1, window_bounds = array<i64: 64, 32>}, {pipeline_mode = #tpu.pipeline_mode<synchronous>, transform_indices = @transform_2, window_bounds = array<i64: 1, 32>}, {transform_indices = @transform_3, window_bounds = array<i64: 16, 32>}, {transform_indices = @transform_4, window_bounds = array<i64: 16, 32>}]} {
    %c0 = arith.constant 0 : index
    %c0_0 = arith.constant 0 : index
    %0 = vector.load %arg1[%c0, %c0_0] : memref<16x64xbf16, #tpu.memory_space<vmem>>, vector<16x64xbf16>
    %c0_1 = arith.constant 0 : index
    %c0_2 = arith.constant 0 : index
    %1 = vector.load %arg2[%c0_1, %c0_2] : memref<64x32xbf16, #tpu.memory_space<vmem>>, vector<64x32xbf16>
    %cst = arith.constant dense<0.000000e+00> : vector<16x32xf32>
    %2 = tpu.matmul %0, %1, %cst {dimension_numbers = #tpu.dot_dimension_numbers<[1], [0], [0], [1], [0, 0, 1, 1], [], []>} : vector<16x64xbf16>, vector<64x32xbf16>, vector<16x32xf32> -> vector<16x32xf32>
    %c0_3 = arith.constant 0 : index
    %c0_4 = arith.constant 0 : index
    %3 = vector.load %arg3[%c0_3, %c0_4] : memref<1x32xf32, #tpu.memory_space<vmem>>, vector<1x32xf32>
    %4 = vector.broadcast %3 : vector<1x32xf32> to vector<16x32xf32>
    %5 = arith.addf %2, %4 : vector<16x32xf32>
    %c0_5 = arith.constant 0 : index
    %c0_6 = arith.constant 0 : index
    %6 = vector.load %arg4[%c0_5, %c0_6] : memref<16x32xf32, #tpu.memory_space<vmem>>, vector<16x32xf32>
    %7 = arith.addf %5, %6 : vector<16x32xf32>
    %c0_7 = arith.constant 0 : index
    %c0_8 = arith.constant 0 : index
    %8 = vector.load %arg5[%c0_7, %c0_8] : memref<16x32xf32, #tpu.memory_space<vmem>>, vector<16x32xf32>
    tpu.vector_store %arg5[%c0_7, %c0_8], %7 {strides = array<i32>} : memref<16x32xf32, #tpu.memory_space<vmem>>, vector<16x32xf32>,
    return
  }
  func.func @transform_0(%arg0: i32) -> (i32, i32) {
    %c0_i32 = arith.constant 0 : i32
    %c0_i32_0 = arith.constant 0 : i32
    return %arg0, %c0_i32 : i32, i32
  }
  func.func @transform_1(%arg0: i32) -> (i32, i32) {
    %c0_i32 = arith.constant 0 : i32
    %c0_i32_0 = arith.constant 0 : i32
    %c0_i32_1 = arith.constant 0 : i32
    return %c0_i32, %c0_i32_0 : i32, i32
  }
  func.func @transform_2(%arg0: i32) -> (i32, i32) {
    %c0_i32 = arith.constant 0 : i32
    %c0_i32_0 = arith.constant 0 : i32
    %c0_i32_1 = arith.constant 0 : i32
    return %c0_i32, %c0_i32_0 : i32, i32
  }
  func.func @transform_3(%arg0: i32) -> (i32, i32) {
    %c0_i32 = arith.constant 0 : i32
    %c0_i32_0 = arith.constant 0 : i32
    return %arg0, %c0_i32 : i32, i32
  }
  func.func @transform_4(%arg0: i32) -> (i32, i32) {
    %c0_i32 = arith.constant 0 : i32
    %c0_i32_0 = arith.constant 0 : i32
    return %arg0, %c0_i32 : i32, i32
  }
}

module attributes {stable_mosaic.version = 11 : i64} {
  func.func @_linear_kernel(%arg0: i32, %arg1: memref<16x64xbf16, #tpu.memory_space<vmem>>, %arg2: memref<64x32xbf16, #tpu.memory_space<vmem>>, %arg3: memref<1x32xf32, #tpu.memory_space<vmem>>, %arg4: memref<16x32xf32, #tpu.memory_space<vmem>>, %arg5: memref<16x32xf32, #tpu.memory_space<vmem>>) attributes {dimension_semantics = [#tpu.dimension_semantics<parallel>], iteration_bounds = array<i64: 1>, scalar_prefetch = 0 : i64, scratch_operands = 0 : i64, tpu.core_type = #tpu.core_type<tc>, window_params = [{transform_indices = @transform_0, window_bounds = array<i64: 16, 64>}, {pipeline_mode = #tpu.pipeline_mode<synchronous>, transform_indices = @transform_1, window_bounds = array<i64: 64, 32>}, {pipeline_mode = #tpu.pipeline_mode<synchronous>, transform_indices = @transform_2, window_bounds = array<i64: 1, 32>}, {transform_indices = @transform_3, window_bounds = array<i64: 16, 32>}, {transform_indices = @transform_4, window_bounds = array<i64: 16, 32>}]} {
    %c0 = arith.constant 0 : index
    %c0_0 = arith.constant 0 : index
    %0 = vector.load %arg1[%c0, %c0_0] : memref<16x64xbf16, #tpu.memory_space<vmem>>, vector<16x64xbf16>
    %c0_1 = arith.constant 0 : index
    %c0_2 = arith.constant 0 : index
    %1 = vector.load %arg2[%c0_1, %c0_2] : memref<64x32xbf16, #tpu.memory_space<vmem>>, vector<64x32xbf16>
    %cst = arith.constant dense<0.000000e+00> : vector<16x32xf32>
    %2 = tpu.matmul %0, %1, %cst {dimension_numbers = #tpu.dot_dimension_numbers<[1], [0], [0], [1], [0, 0, 1, 1], [], []>} : vector<16x64xbf16>, vector<64x32xbf16>, vector<16x32xf32> -> vector<16x32xf32>
    %c0_3 = arith.constant 0 : index
    %c0_4 = arith.constant 0 : index
    %3 = vector.load %arg3[%c0_3, %c0_4] : memref<1x32xf32, #tpu.memory_space<vmem>>, vector<1x32xf32>
    %4 = vector.broadcast %3 : vector<1x32xf32> to vector<16x32xf32>
    %5 = arith.addf %2, %4 : vector<16x32xf32>
    %c0_5 = arith.constant 0 : index
    %c0_6 = arith.constant 0 : index
    %6 = vector.load %arg4[%c0_5, %c0_6] : memref<16x32xf32, #tpu.memory_space<vmem>>, vector<16x32xf32>
    %7 = arith.addf %5, %6 : vector<16x32xf32>
    %c0_7 = arith.constant 0 : index
    %c0_8 = arith.constant 0 : index
    %8 = vector.load %arg5[%c0_7, %c0_8] : memref<16x32xf32, #tpu.memory_space<vmem>>, vector<16x32xf32>
    tpu.vector_store %arg5[%c0_7, %c0_8], %7 {strides = array<i32>} : memref<16x32xf32, #tpu.memory_space<vmem>>, vector<16x32xf32>,
    return
  }
  func.func @transform_0(%arg0: i32) -> (i32, i32) {
    %c0_i32 = arith.constant 0 : i32
    %c0_i32_0 = arith.constant 0 : i32
    return %arg0, %c0_i32 : i32, i32
  }
  func.func @transform_1(%arg0: i32) -> (i32, i32) {
    %c0_i32 = arith.constant 0 : i32
    %c0_i32_0 = arith.constant 0 : i32
    %c0_i32_1 = arith.constant 0 : i32
    return %c0_i32, %c0_i32_0 : i32, i32
  }
  func.func @transform_2(%arg0: i32) -> (i32, i32) {
    %c0_i32 = arith.constant 0 : i32
    %c0_i32_0 = arith.constant 0 : i32
    %c0_i32_1 = arith.constant 0 : i32
    return %c0_i32, %c0_i32_0 : i32, i32
  }
  func.func @transform_3(%arg0: i32) -> (i32, i32) {
    %c0_i32 = arith.constant 0 : i32
    %c0_i32_0 = arith.constant 0 : i32
    return %arg0, %c0_i32 : i32, i32
  }
  func.func @transform_4(%arg0: i32) -> (i32, i32) {
    %c0_i32 = arith.constant 0 : i32
    %c0_i32_0 = arith.constant 0 : i32
    return %arg0, %c0_i32 : i32, i32
  }
}

</mosaic_0001>

<llo_original>
// kernel: _lambda_.42
$region0: #{_lambda_.42}
  #allocation0 [shape = 'u32[]', space=smem, size = 0x4, offset = 0x4, fixed_abs, tag = 'smem constant byte address 0x4 - core index']
  #allocation1 [shape = 'u32[144,128]{1,0:T(1,128)}', space=vmem, size = 0x12000, scoped, tag = 'internal scratch']
  %s0 = inlined_call_operand.vmem [shape: bf16[12,8], index: 0, kind: input, shape index: {}]
  %s1 = inlined_call_operand.vmem [shape: bf16[8,64], index: 1, kind: input, shape index: {}]
  %s2 = inlined_call_operand.vmem [shape: f32[1,64], index: 2, kind: input, shape index: {}]
  %s3 = inlined_call_operand.vmem [shape: f32[12,64], index: 3, kind: output, shape index: {}]
  %s4 = sld [smem:[#allocation0]]
  $region22: #{_lambda_.42} parent=0
    _
  %s6 = ssub.s32 1, %s4
  %s7 = scalar_select 0, %s6, %s4
  // Predicated region
  $region2: #{_lambda_.42} parent=0 // pred_check
    _
  $region3: #{_lambda_.42} parent=0 // pred_check_branch
    %9 = sbr.rel (0) target = $region5
  $region4: #{_lambda_.42} parent=0 // pred_region
    _
  $region5: #{_lambda_.42} parent=0 // pred_fallthru
    _
  // Predicated region
  $region6: #{_lambda_.42} parent=0 // pred_check
    _
  $region7: #{_lambda_.42} parent=0 // pred_check_branch
    %11 = sbr.rel (0) target = $region9
  $region8: #{_lambda_.42} parent=0 // pred_region
    _
  $region9: #{_lambda_.42} parent=0 // pred_fallthru
    _
  // Predicated region
  $region10: #{_lambda_.42} parent=0 // pred_check
    _
  $region11: #{_lambda_.42} parent=0 // pred_check_branch
    %13 = sbr.rel (0) target = $region13
  $region12: #{_lambda_.42} parent=0 // pred_region
    _
  $region13: #{_lambda_.42} parent=0 // pred_fallthru
    _
  %v15 = vld [vmem:[%s0] sm:$0xf]
  %v16 = vld [vmem:[%s0 + $0x4] sm:$0x3]
  %v17 = vld [vmem:[%s1] sm:$0xf]
  %v18 = vld [vmem:[%s2] sm:$0x1]
  %v20 = vlaneseq
  %v21 = vshrl.u32 %v20, 7
  %v22 = vsub.s32 0, %v21
  %v23 = vrot.slane %v18, %v22
  %v27 = vunpack.c.l.b16 %v15
  %v28 = vunpack.c.l.b16 %v16
  %v29 = vpack.c.b16 %v28, %v27
  %vm30 = vcmask 64512
  %v32 = vsel %vm30, %v29, 0
  %vm34 = vcmask 1043456
  %v36 = vsel %vm34, %v17, 0
  %38 = vmatprep.subr.bf16.mxu0 0
  %39 = vmatpush1.bf16.msra.mxu0 %v36
  %40 = vmatprep.subr.bf16.mxu0 0
  %41 = vmatpush1.bf16.msra.mxu0 0
  %42 = vmatprep.subr.bf16.mxu0 0
  %43 = vmatpush1.bf16.msra.mxu0 0
  %44 = vmatprep.subr.bf16.mxu0 0
  %45 = vmatpush1.bf16.msra.mxu0 0
  %46 = vmatprep.subr.bf16.mxu0 0
  %47 = vmatpush1.bf16.msra.mxu0 0
  %48 = vmatprep.subr.bf16.mxu0 0
  %49 = vmatpush1.bf16.msra.mxu0 0
  %50 = vmatprep.subr.bf16.mxu0 0
  %51 = vmatpush1.bf16.msra.mxu0 0
  %52 = vmatprep.subr.bf16.mxu0 0
  %53 = vmatpush1.bf16.msra.mxu0 0
  %54 = vmatprep.subr.bf16.mxu0 0
  %55 = vmatpush1.bf16.msra.mxu0 0
  %56 = vmatprep.subr.bf16.mxu0 0
  %57 = vmatpush1.bf16.msra.mxu0 0
  %58 = vmatprep.subr.bf16.mxu0 0
  %59 = vmatpush1.bf16.msra.mxu0 0
  %60 = vmatprep.subr.bf16.mxu0 0
  %61 = vmatpush1.bf16.msra.mxu0 0
  %62 = vmatprep.subr.bf16.mxu0 0
  %63 = vmatpush1.bf16.msra.mxu0 0
  %64 = vmatprep.subr.bf16.mxu0 0
  %65 = vmatpush1.bf16.msra.mxu0 0
  %66 = vmatprep.subr.bf16.mxu0 0
  %67 = vmatpush1.bf16.msra.mxu0 0
  %68 = vmatprep.subr.bf16.mxu0 0
  %69 = vmatpush1.bf16.msra.mxu0 0
  %70 = vmatprep.mubr.bf16.mxu0 0
  %71 = vmatmul.mubr.bf16.gmra.mrb[0].mxu0 %v32
  %v72 = vpop.f32.mrb[0].mxu0
  %v73 = vadd.f32 %v23, %v72
  %v74 = vpop.f32.mrb[0].mxu0
  %v75 = vpop.f32.mrb[0].mxu0
  %v76 = vadd.f32 %v23, %v75
  %v77 = vpop.f32.mrb[0].mxu0
  %78 = vdwg.mxu0
  %v79 = vmax.f32 %v73, 0.0
  %v80 = vmax.f32 %v76, 0.0
  %vm81 = vcmask 523264
  %82 = vst.msk [vmem:[%s3] sm:$0xff] %vm81, %v79
  %vm83 = vcmask 519168
  %84 = vst.msk [vmem:[%s3 + $0x8] sm:$0xf] %vm83, %v80
  // Predicated region
  $region14: #{_lambda_.42} parent=0 // pred_check
    _
  $region15: #{_lambda_.42} parent=0 // pred_check_branch
    %86 = sbr.rel (0) target = $region17
  $region16: #{_lambda_.42} parent=0 // pred_region
    _
  $region17: #{_lambda_.42} parent=0 // pred_fallthru
    _
  // Predicated region
  $region18: #{_lambda_.42} parent=0 // pred_check
    _
  $region19: #{_lambda_.42} parent=0 // pred_check_branch
    %88 = sbr.rel (0) target = $region21
  $region20: #{_lambda_.42} parent=0 // pred_region
    _
  $region21: #{_lambda_.42} parent=0 // pred_fallthru
    _

// kernel: _lambda_.43
$region0: #{_lambda_.43}
  #allocation0 [shape = 'u32[]', space=smem, size = 0x4, offset = 0x4, fixed_abs, tag = 'smem constant byte address 0x4 - core index']
  #allocation1 [shape = 'u32[144,128]{1,0:T(1,128)}', space=vmem, size = 0x12000, scoped, tag = 'internal scratch']
  %s0 = inlined_call_operand.vmem [shape: bf16[12,64], index: 0, kind: input, shape index: {}]
  %s1 = inlined_call_operand.vmem [shape: bf16[64,32], index: 1, kind: input, shape index: {}]
  %s2 = inlined_call_operand.vmem [shape: f32[1,32], index: 2, kind: input, shape index: {}]
  %s3 = inlined_call_operand.vmem [shape: f32[12,32], index: 3, kind: output, shape index: {}]
  %s4 = sld [smem:[#allocation0]]
  $region22: #{_lambda_.43} parent=0
    _
  %s6 = ssub.s32 1, %s4
  %s7 = scalar_select 0, %s6, %s4
  // Predicated region
  $region2: #{_lambda_.43} parent=0 // pred_check
    _
  $region3: #{_lambda_.43} parent=0 // pred_check_branch
    %9 = sbr.rel (0) target = $region5
  $region4: #{_lambda_.43} parent=0 // pred_region
    _
  $region5: #{_lambda_.43} parent=0 // pred_fallthru
    _
  // Predicated region
  $region6: #{_lambda_.43} parent=0 // pred_check
    _
  $region7: #{_lambda_.43} parent=0 // pred_check_branch
    %11 = sbr.rel (0) target = $region9
  $region8: #{_lambda_.43} parent=0 // pred_region
    _
  $region9: #{_lambda_.43} parent=0 // pred_fallthru
    _
  // Predicated region
  $region10: #{_lambda_.43} parent=0 // pred_check
    _
  $region11: #{_lambda_.43} parent=0 // pred_check_branch
    %13 = sbr.rel (0) target = $region13
  $region12: #{_lambda_.43} parent=0 // pred_region
    _
  $region13: #{_lambda_.43} parent=0 // pred_fallthru
    _
  %v15 = vld [vmem:[%s0] sm:$0xf]
  %v16 = vld [vmem:[%s0 + $0x4] sm:$0x3]
  %v17 = vld [vmem:[%s1] sm:$0xf]
  %v18 = vld [vmem:[%s1 + $0x4] sm:$0xf]
  %v19 = vld [vmem:[%s1 + $0x8] sm:$0xf]
  %v20 = vld [vmem:[%s1 + $0xc] sm:$0xf]
  %v21 = vld [vmem:[%s1 + $0x10] sm:$0xf]
  %v22 = vld [vmem:[%s1 + $0x14] sm:$0xf]
  %v23 = vld [vmem:[%s1 + $0x18] sm:$0xf]
  %v24 = vld [vmem:[%s1 + $0x1c] sm:$0xf]
  %v25 = vld [vmem:[%s2] sm:$0x1]
  %v27 = vlaneseq
  %v28 = vshrl.u32 %v27, 7
  %v29 = vsub.s32 0, %v28
  %v30 = vrot.slane %v25, %v29
  %v34 = vunpack.c.l.b16 %v15
  %v35 = vunpack.c.l.b16 %v16
  %v36 = vpack.c.b16 %v35, %v34
  %v45 = vunpack.c.l.b16 %v17
  %v46 = vunpack.c.l.b16 %v18
  %v47 = vunpack.c.l.b16 %v19
  %v48 = vunpack.c.l.b16 %v20
  %v49 = vunpack.c.l.b16 %v21
  %v50 = vunpack.c.l.b16 %v22
  %v51 = vunpack.c.l.b16 %v23
  %v52 = vunpack.c.l.b16 %v24
  %v53 = vpack.c.b16 %v46, %v45
  %v54 = vpack.c.b16 %v48, %v47
  %v55 = vpack.c.b16 %v50, %v49
  %v56 = vpack.c.b16 %v52, %v51
  %vm61 = vcmask 523264
  %v63 = vsel %vm61, %v36, 0
  %65 = vmatprep.subr.bf16.mxu0 0
  %66 = vmatpush1.bf16.msra.mxu0 %v53
  %67 = vmatprep.subr.bf16.mxu0 0
  %68 = vmatpush1.bf16.msra.mxu0 %v54
  %69 = vmatprep.subr.bf16.mxu0 0
  %70 = vmatpush1.bf16.msra.mxu0 %v55
  %71 = vmatprep.subr.bf16.mxu0 0
  %72 = vmatpush1.bf16.msra.mxu0 %v56
  %73 = vmatprep.subr.bf16.mxu0 0
  %74 = vmatpush1.bf16.msra.mxu0 0
  %75 = vmatprep.subr.bf16.mxu0 0
  %76 = vmatpush1.bf16.msra.mxu0 0
  %77 = vmatprep.subr.bf16.mxu0 0
  %78 = vmatpush1.bf16.msra.mxu0 0
  %79 = vmatprep.subr.bf16.mxu0 0
  %80 = vmatpush1.bf16.msra.mxu0 0
  %81 = vmatprep.subr.bf16.mxu0 0
  %82 = vmatpush1.bf16.msra.mxu0 0
  %83 = vmatprep.subr.bf16.mxu0 0
  %84 = vmatpush1.bf16.msra.mxu0 0
  %85 = vmatprep.subr.bf16.mxu0 0
  %86 = vmatpush1.bf16.msra.mxu0 0
  %87 = vmatprep.subr.bf16.mxu0 0
  %88 = vmatpush1.bf16.msra.mxu0 0
  %89 = vmatprep.subr.bf16.mxu0 0
  %90 = vmatpush1.bf16.msra.mxu0 0
  %91 = vmatprep.subr.bf16.mxu0 0
  %92 = vmatpush1.bf16.msra.mxu0 0
  %93 = vmatprep.subr.bf16.mxu0 0
  %94 = vmatpush1.bf16.msra.mxu0 0
  %95 = vmatprep.subr.bf16.mxu0 0
  %96 = vmatpush1.bf16.msra.mxu0 0
  %97 = vmatprep.mubr.bf16.mxu0 0
  %98 = vmatmul.mubr.bf16.gmra.mrb[0].mxu0 %v63
  %v99 = vpop.f32.mrb[0].mxu0
  %v100 = vadd.f32 %v30, %v99
  %v101 = vpop.f32.mrb[0].mxu0
  %v102 = vpop.f32.mrb[0].mxu0
  %v103 = vadd.f32 %v30, %v102
  %v104 = vpop.f32.mrb[0].mxu0
  %105 = vdwg.mxu0
  %vm106 = vcmask 261120
  %107 = vst.msk [vmem:[%s3] sm:$0xff] %vm106, %v100
  %vm108 = vcmask 257024
  %109 = vst.msk [vmem:[%s3 + $0x8] sm:$0xf] %vm108, %v103
  // Predicated region
  $region14: #{_lambda_.43} parent=0 // pred_check
    _
  $region15: #{_lambda_.43} parent=0 // pred_check_branch
    %111 = sbr.rel (0) target = $region17
  $region16: #{_lambda_.43} parent=0 // pred_region
    _
  $region17: #{_lambda_.43} parent=0 // pred_fallthru
    _
  // Predicated region
  $region18: #{_lambda_.43} parent=0 // pred_check
    _
  $region19: #{_lambda_.43} parent=0 // pred_check_branch
    %113 = sbr.rel (0) target = $region21
  $region20: #{_lambda_.43} parent=0 // pred_region
    _
  $region21: #{_lambda_.43} parent=0 // pred_fallthru
    _

// kernel: _lambda_.44
$region0: #{_lambda_.44}
  #allocation0 [shape = 'u32[]', space=smem, size = 0x4, offset = 0x4, fixed_abs, tag = 'smem constant byte address 0x4 - core index']
  #allocation1 [shape = 'u32[144,128]{1,0:T(1,128)}', space=vmem, size = 0x12000, scoped, tag = 'internal scratch']
  %s0 = inlined_call_operand.vmem [shape: f32[12,32], index: 0, kind: input, shape index: {}]
  %s1 = inlined_call_operand.vmem [shape: f32[1,32], index: 1, kind: input, shape index: {}]
  %s2 = inlined_call_operand.vmem [shape: f32[1,32], index: 2, kind: input, shape index: {}]
  %s3 = inlined_call_operand.vmem [shape: f32[12,32], index: 3, kind: output, shape index: {}]
  %s4 = sld [smem:[#allocation0]]
  $region22: #{_lambda_.44} parent=0
    _
  %s6 = ssub.s32 1, %s4
  %s7 = scalar_select 0, %s6, %s4
  // Predicated region
  $region2: #{_lambda_.44} parent=0 // pred_check
    _
  $region3: #{_lambda_.44} parent=0 // pred_check_branch
    %9 = sbr.rel (0) target = $region5
  $region4: #{_lambda_.44} parent=0 // pred_region
    _
  $region5: #{_lambda_.44} parent=0 // pred_fallthru
    _
  // Predicated region
  $region6: #{_lambda_.44} parent=0 // pred_check
    _
  $region7: #{_lambda_.44} parent=0 // pred_check_branch
    %11 = sbr.rel (0) target = $region9
  $region8: #{_lambda_.44} parent=0 // pred_region
    _
  $region9: #{_lambda_.44} parent=0 // pred_fallthru
    _
  // Predicated region
  $region10: #{_lambda_.44} parent=0 // pred_check
    _
  $region11: #{_lambda_.44} parent=0 // pred_check_branch
    %13 = sbr.rel (0) target = $region13
  $region12: #{_lambda_.44} parent=0 // pred_region
    _
  $region13: #{_lambda_.44} parent=0 // pred_fallthru
    _
  %v14 = vld [vmem:[%s0] sm:$0xff]
  %v15 = vld [vmem:[%s0 + $0x8] sm:$0xf]
  %vm16 = vcmask 261120
  %v17 = vsel %vm16, %v14, 0.0
  %18 = vadd.xlane.f32.xlu0 %v17
  %v19 = vpop.xlane.xlu0 %18
  %vm20 = vcmask 257024
  %v21 = vsel %vm20, %v15, 0.0
  %22 = vadd.xlane.f32.xlu0 %v21
  %v23 = vpop.xlane.xlu0 %22
  %v24 = vrcp.pop 32.0
  %v25 = vmul.f32 %v19, %v24
  %v26 = vmul.f32 %v23, %v24
  %v27 = vsub.f32 %v14, %v25
  %v28 = vsub.f32 %v15, %v26
  %v29 = vmul.f32 %v27, %v27
  %v30 = vmul.f32 %v28, %v28
  %v31 = vsel %vm16, %v29, 0.0
  %32 = vadd.xlane.f32.xlu0 %v31
  %v33 = vpop.xlane.xlu0 %32
  %v34 = vsel %vm20, %v30, 0.0
  %35 = vadd.xlane.f32.xlu0 %v34
  %v36 = vpop.xlane.xlu0 %35
  %v37 = vmul.f32 %v33, %v24
  %v38 = vmul.f32 %v36, %v24
  %v39 = vadd.f32 %v37, 1e-05
  %v40 = vadd.f32 %v38, 1e-05
  %v41 = vrsqrt.pop %v39
  %v42 = vrsqrt.pop %v40
  %v43 = vmul.f32 %v27, %v41
  %v44 = vmul.f32 %v28, %v42
  %v45 = vld [vmem:[%s1] sm:$0x1]
  %v47 = vlaneseq
  %v48 = vshrl.u32 %v47, 7
  %v49 = vsub.s32 0, %v48
  %v50 = vrot.slane %v45, %v49
  %v52 = vmul.f32 %v43, %v50
  %v53 = vmul.f32 %v44, %v50
  %v54 = vld [vmem:[%s2] sm:$0x1]
  %v56 = vlaneseq
  %v57 = vshrl.u32 %v56, 7
  %v58 = vsub.s32 0, %v57
  %v59 = vrot.slane %v54, %v58
  %v61 = vadd.f32 %v52, %v59
  %v62 = vadd.f32 %v53, %v59
  %63 = vst.msk [vmem:[%s3] sm:$0xff] %vm16, %v61
  %64 = vst.msk [vmem:[%s3 + $0x8] sm:$0xf] %vm20, %v62
  // Predicated region
  $region14: #{_lambda_.44} parent=0 // pred_check
    _
  $region15: #{_lambda_.44} parent=0 // pred_check_branch
    %66 = sbr.rel (0) target = $region17
  $region16: #{_lambda_.44} parent=0 // pred_region
    _
  $region17: #{_lambda_.44} parent=0 // pred_fallthru
    _
  // Predicated region
  $region18: #{_lambda_.44} parent=0 // pred_check
    _
  $region19: #{_lambda_.44} parent=0 // pred_check_branch
    %68 = sbr.rel (0) target = $region21
  $region20: #{_lambda_.44} parent=0 // pred_region
    _
  $region21: #{_lambda_.44} parent=0 // pred_fallthru
    _

// kernel: _lambda_.45
$region0: #{_lambda_.45}
  #allocation0 [shape = 'u32[]', space=smem, size = 0x4, offset = 0x4, fixed_abs, tag = 'smem constant byte address 0x4 - core index']
  #allocation1 [shape = 'u32[144,128]{1,0:T(1,128)}', space=vmem, size = 0x12000, scoped, tag = 'internal scratch']
  %s0 = inlined_call_operand.vmem [shape: bf16[12,32], index: 0, kind: input, shape index: {}]
  %s1 = inlined_call_operand.vmem [shape: bf16[32,96], index: 1, kind: input, shape index: {}]
  %s2 = inlined_call_operand.vmem [shape: f32[1,96], index: 2, kind: input, shape index: {}]
  %s3 = inlined_call_operand.vmem [shape: f32[12,96], index: 3, kind: output, shape index: {}]
  %s4 = sld [smem:[#allocation0]]
  $region22: #{_lambda_.45} parent=0
    _
  %s6 = ssub.s32 1, %s4
  %s7 = scalar_select 0, %s6, %s4
  // Predicated region
  $region2: #{_lambda_.45} parent=0 // pred_check
    _
  $region3: #{_lambda_.45} parent=0 // pred_check_branch
    %9 = sbr.rel (0) target = $region5
  $region4: #{_lambda_.45} parent=0 // pred_region
    _
  $region5: #{_lambda_.45} parent=0 // pred_fallthru
    _
  // Predicated region
  $region6: #{_lambda_.45} parent=0 // pred_check
    _
  $region7: #{_lambda_.45} parent=0 // pred_check_branch
    %11 = sbr.rel (0) target = $region9
  $region8: #{_lambda_.45} parent=0 // pred_region
    _
  $region9: #{_lambda_.45} parent=0 // pred_fallthru
    _
  // Predicated region
  $region10: #{_lambda_.45} parent=0 // pred_check
    _
  $region11: #{_lambda_.45} parent=0 // pred_check_branch
    %13 = sbr.rel (0) target = $region13
  $region12: #{_lambda_.45} parent=0 // pred_region
    _
  $region13: #{_lambda_.45} parent=0 // pred_fallthru
    _
  %v15 = vld [vmem:[%s0] sm:$0xf]
  %v16 = vld [vmem:[%s0 + $0x4] sm:$0x3]
  %v17 = vld [vmem:[%s1] sm:$0xf]
  %v18 = vld [vmem:[%s1 + $0x4] sm:$0xf]
  %v19 = vld [vmem:[%s1 + $0x8] sm:$0xf]
  %v20 = vld [vmem:[%s1 + $0xc] sm:$0xf]
  %v21 = vld [vmem:[%s2] sm:$0x1]
  %v23 = vlaneseq
  %v24 = vshrl.u32 %v23, 7
  %v25 = vsub.s32 0, %v24
  %v26 = vrot.slane %v21, %v25
  %v30 = vunpack.c.l.b16 %v15
  %v31 = vunpack.c.l.b16 %v16
  %v32 = vpack.c.b16 %v31, %v30
  %v37 = vunpack.c.l.b16 %v17
  %v38 = vunpack.c.l.b16 %v18
  %v39 = vunpack.c.l.b16 %v19
  %v40 = vunpack.c.l.b16 %v20
  %v41 = vpack.c.b16 %v38, %v37
  %v42 = vpack.c.b16 %v40, %v39
  %vm45 = vcmask 261120
  %v47 = vsel %vm45, %v32, 0
  %49 = vmatprep.subr.bf16.mxu0 0
  %50 = vmatpush1.bf16.msra.mxu0 %v41
  %51 = vmatprep.subr.bf16.mxu0 0
  %52 = vmatpush1.bf16.msra.mxu0 %v42
  %53 = vmatprep.subr.bf16.mxu0 0
  %54 = vmatpush1.bf16.msra.mxu0 0
  %55 = vmatprep.subr.bf16.mxu0 0
  %56 = vmatpush1.bf16.msra.mxu0 0
  %57 = vmatprep.subr.bf16.mxu0 0
  %58 = vmatpush1.bf16.msra.mxu0 0
  %59 = vmatprep.subr.bf16.mxu0 0
  %60 = vmatpush1.bf16.msra.mxu0 0
  %61 = vmatprep.subr.bf16.mxu0 0
  %62 = vmatpush1.bf16.msra.mxu0 0
  %63 = vmatprep.subr.bf16.mxu0 0
  %64 = vmatpush1.bf16.msra.mxu0 0
  %65 = vmatprep.subr.bf16.mxu0 0
  %66 = vmatpush1.bf16.msra.mxu0 0
  %67 = vmatprep.subr.bf16.mxu0 0
  %68 = vmatpush1.bf16.msra.mxu0 0
  %69 = vmatprep.subr.bf16.mxu0 0
  %70 = vmatpush1.bf16.msra.mxu0 0
  %71 = vmatprep.subr.bf16.mxu0 0
  %72 = vmatpush1.bf16.msra.mxu0 0
  %73 = vmatprep.subr.bf16.mxu0 0
  %74 = vmatpush1.bf16.msra.mxu0 0
  %75 = vmatprep.subr.bf16.mxu0 0
  %76 = vmatpush1.bf16.msra.mxu0 0
  %77 = vmatprep.subr.bf16.mxu0 0
  %78 = vmatpush1.bf16.msra.mxu0 0
  %79 = vmatprep.subr.bf16.mxu0 0
  %80 = vmatpush1.bf16.msra.mxu0 0
  %81 = vmatprep.mubr.bf16.mxu0 0
  %82 = vmatmul.mubr.bf16.gmra.mrb[0].mxu0 %v47
  %v83 = vpop.f32.mrb[0].mxu0
  %v84 = vadd.f32 %v26, %v83
  %v85 = vpop.f32.mrb[0].mxu0
  %v86 = vpop.f32.mrb[0].mxu0
  %v87 = vadd.f32 %v26, %v86
  %v88 = vpop.f32.mrb[0].mxu0
  %89 = vdwg.mxu0
  %vm90 = vcmask 785408
  %91 = vst.msk [vmem:[%s3] sm:$0xff] %vm90, %v84
  %vm92 = vcmask 781312
  %93 = vst.msk [vmem:[%s3 + $0x8] sm:$0xf] %vm92, %v87
  // Predicated region
  $region14: #{_lambda_.45} parent=0 // pred_check
    _
  $region15: #{_lambda_.45} parent=0 // pred_check_branch
    %95 = sbr.rel (0) target = $region17
  $region16: #{_lambda_.45} parent=0 // pred_region
    _
  $region17: #{_lambda_.45} parent=0 // pred_fallthru
    _
  // Predicated region
  $region18: #{_lambda_.45} parent=0 // pred_check
    _
  $region19: #{_lambda_.45} parent=0 // pred_check_branch
    %97 = sbr.rel (0) target = $region21
  $region20: #{_lambda_.45} parent=0 // pred_region
    _
  $region21: #{_lambda_.45} parent=0 // pred_fallthru
    _

// kernel: _lambda_.47
$region0: #{_lambda_.47}
  #allocation0 [shape = 'u32[]', space=smem, size = 0x4, offset = 0x4, fixed_abs, tag = 'smem constant byte address 0x4 - core index']
  #allocation1 [shape = 'u32[144,128]{1,0:T(1,128)}', space=vmem, size = 0x12000, scoped, tag = 'internal scratch']
  %s0 = inlined_call_operand.vmem [shape: bf16[12,32], index: 0, kind: input, shape index: {}]
  %s1 = inlined_call_operand.vmem [shape: bf16[32,32], index: 1, kind: input, shape index: {}]
  %s2 = inlined_call_operand.vmem [shape: f32[1,32], index: 2, kind: input, shape index: {}]
  %s3 = inlined_call_operand.vmem [shape: f32[12,32], index: 3, kind: input, shape index: {}]
  %s4 = inlined_call_operand.vmem [shape: f32[12,32], index: 4, kind: output, shape index: {}]
  %s5 = sld [smem:[#allocation0]]
  $region26: #{_lambda_.47} parent=0
    _
  %s7 = ssub.s32 1, %s5
  %s8 = scalar_select 0, %s7, %s5
  // Predicated region
  $region2: #{_lambda_.47} parent=0 // pred_check
    _
  $region3: #{_lambda_.47} parent=0 // pred_check_branch
    %10 = sbr.rel (0) target = $region5
  $region4: #{_lambda_.47} parent=0 // pred_region
    _
  $region5: #{_lambda_.47} parent=0 // pred_fallthru
    _
  // Predicated region
  $region6: #{_lambda_.47} parent=0 // pred_check
    _
  $region7: #{_lambda_.47} parent=0 // pred_check_branch
    %12 = sbr.rel (0) target = $region9
  $region8: #{_lambda_.47} parent=0 // pred_region
    _
  $region9: #{_lambda_.47} parent=0 // pred_fallthru
    _
  // Predicated region
  $region10: #{_lambda_.47} parent=0 // pred_check
    _
  $region11: #{_lambda_.47} parent=0 // pred_check_branch
    %14 = sbr.rel (0) target = $region13
  $region12: #{_lambda_.47} parent=0 // pred_region
    _
  $region13: #{_lambda_.47} parent=0 // pred_fallthru
    _
  // Predicated region
  $region14: #{_lambda_.47} parent=0 // pred_check
    _
  $region15: #{_lambda_.47} parent=0 // pred_check_branch
    %16 = sbr.rel (0) target = $region17
  $region16: #{_lambda_.47} parent=0 // pred_region
    _
  $region17: #{_lambda_.47} parent=0 // pred_fallthru
    _
  %v18 = vld [vmem:[%s0] sm:$0xf]
  %v19 = vld [vmem:[%s0 + $0x4] sm:$0x3]
  %v20 = vld [vmem:[%s1] sm:$0xf]
  %v21 = vld [vmem:[%s1 + $0x4] sm:$0xf]
  %v22 = vld [vmem:[%s1 + $0x8] sm:$0xf]
  %v23 = vld [vmem:[%s1 + $0xc] sm:$0xf]
  %v24 = vld [vmem:[%s2] sm:$0x1]
  %v26 = vlaneseq
  %v27 = vshrl.u32 %v26, 7
  %v28 = vsub.s32 0, %v27
  %v29 = vrot.slane %v24, %v28
  %v33 = vunpack.c.l.b16 %v18
  %v34 = vunpack.c.l.b16 %v19
  %v35 = vpack.c.b16 %v34, %v33
  %v40 = vunpack.c.l.b16 %v20
  %v41 = vunpack.c.l.b16 %v21
  %v42 = vunpack.c.l.b16 %v22
  %v43 = vunpack.c.l.b16 %v23
  %v44 = vpack.c.b16 %v41, %v40
  %v45 = vpack.c.b16 %v43, %v42
  %vm48 = vcmask 261120
  %v50 = vsel %vm48, %v35, 0
  %52 = vmatprep.subr.bf16.mxu0 0
  %53 = vmatpush1.bf16.msra.mxu0 %v44
  %54 = vmatprep.subr.bf16.mxu0 0
  %55 = vmatpush1.bf16.msra.mxu0 %v45
  %56 = vmatprep.subr.bf16.mxu0 0
  %57 = vmatpush1.bf16.msra.mxu0 0
  %58 = vmatprep.subr.bf16.mxu0 0
  %59 = vmatpush1.bf16.msra.mxu0 0
  %60 = vmatprep.subr.bf16.mxu0 0
  %61 = vmatpush1.bf16.msra.mxu0 0
  %62 = vmatprep.subr.bf16.mxu0 0
  %63 = vmatpush1.bf16.msra.mxu0 0
  %64 = vmatprep.subr.bf16.mxu0 0
  %65 = vmatpush1.bf16.msra.mxu0 0
  %66 = vmatprep.subr.bf16.mxu0 0
  %67 = vmatpush1.bf16.msra.mxu0 0
  %68 = vmatprep.subr.bf16.mxu0 0
  %69 = vmatpush1.bf16.msra.mxu0 0
  %70 = vmatprep.subr.bf16.mxu0 0
  %71 = vmatpush1.bf16.msra.mxu0 0
  %72 = vmatprep.subr.bf16.mxu0 0
  %73 = vmatpush1.bf16.msra.mxu0 0
  %74 = vmatprep.subr.bf16.mxu0 0
  %75 = vmatpush1.bf16.msra.mxu0 0
  %76 = vmatprep.subr.bf16.mxu0 0
  %77 = vmatpush1.bf16.msra.mxu0 0
  %78 = vmatprep.subr.bf16.mxu0 0
  %79 = vmatpush1.bf16.msra.mxu0 0
  %80 = vmatprep.subr.bf16.mxu0 0
  %81 = vmatpush1.bf16.msra.mxu0 0
  %82 = vmatprep.subr.bf16.mxu0 0
  %83 = vmatpush1.bf16.msra.mxu0 0
  %84 = vmatprep.mubr.bf16.mxu0 0
  %85 = vmatmul.mubr.bf16.gmra.mrb[0].mxu0 %v50
  %v86 = vpop.f32.mrb[0].mxu0
  %v87 = vadd.f32 %v29, %v86
  %v88 = vpop.f32.mrb[0].mxu0
  %v89 = vpop.f32.mrb[0].mxu0
  %v90 = vadd.f32 %v29, %v89
  %v91 = vpop.f32.mrb[0].mxu0
  %92 = vdwg.mxu0
  %v93 = vld [vmem:[%s3] sm:$0xff]
  %v94 = vld [vmem:[%s3 + $0x8] sm:$0xf]
  %v95 = vadd.f32 %v87, %v93
  %v96 = vadd.f32 %v90, %v94
  %97 = vst.msk [vmem:[%s4] sm:$0xff] %vm48, %v95
  %vm98 = vcmask 257024
  %99 = vst.msk [vmem:[%s4 + $0x8] sm:$0xf] %vm98, %v96
  // Predicated region
  $region18: #{_lambda_.47} parent=0 // pred_check
    _
  $region19: #{_lambda_.47} parent=0 // pred_check_branch
    %101 = sbr.rel (0) target = $region21
  $region20: #{_lambda_.47} parent=0 // pred_region
    _
  $region21: #{_lambda_.47} parent=0 // pred_fallthru
    _
  // Predicated region
  $region22: #{_lambda_.47} parent=0 // pred_check
    _
  $region23: #{_lambda_.47} parent=0 // pred_check_branch
    %103 = sbr.rel (0) target = $region25
  $region24: #{_lambda_.47} parent=0 // pred_region
    _
  $region25: #{_lambda_.47} parent=0 // pred_fallthru
    _

// kernel: _lambda_.49
$region0: #{_lambda_.49}
  #allocation0 [shape = 'u32[]', space=smem, size = 0x4, offset = 0x4, fixed_abs, tag = 'smem constant byte address 0x4 - core index']
  #allocation1 [shape = 'u32[144,128]{1,0:T(1,128)}', space=vmem, size = 0x12000, scoped, tag = 'internal scratch']
  %s0 = inlined_call_operand.vmem [shape: bf16[12,32], index: 0, kind: input, shape index: {}]
  %s1 = inlined_call_operand.vmem [shape: bf16[32,64], index: 1, kind: input, shape index: {}]
  %s2 = inlined_call_operand.vmem [shape: f32[1,64], index: 2, kind: input, shape index: {}]
  %s3 = inlined_call_operand.vmem [shape: f32[12,64], index: 3, kind: output, shape index: {}]
  %s4 = sld [smem:[#allocation0]]
  $region22: #{_lambda_.49} parent=0
    _
  %s6 = ssub.s32 1, %s4
  %s7 = scalar_select 0, %s6, %s4
  // Predicated region
  $region2: #{_lambda_.49} parent=0 // pred_check
    _
  $region3: #{_lambda_.49} parent=0 // pred_check_branch
    %9 = sbr.rel (0) target = $region5
  $region4: #{_lambda_.49} parent=0 // pred_region
    _
  $region5: #{_lambda_.49} parent=0 // pred_fallthru
    _
  // Predicated region
  $region6: #{_lambda_.49} parent=0 // pred_check
    _
  $region7: #{_lambda_.49} parent=0 // pred_check_branch
    %11 = sbr.rel (0) target = $region9
  $region8: #{_lambda_.49} parent=0 // pred_region
    _
  $region9: #{_lambda_.49} parent=0 // pred_fallthru
    _
  // Predicated region
  $region10: #{_lambda_.49} parent=0 // pred_check
    _
  $region11: #{_lambda_.49} parent=0 // pred_check_branch
    %13 = sbr.rel (0) target = $region13
  $region12: #{_lambda_.49} parent=0 // pred_region
    _
  $region13: #{_lambda_.49} parent=0 // pred_fallthru
    _
  %v15 = vld [vmem:[%s0] sm:$0xf]
  %v16 = vld [vmem:[%s0 + $0x4] sm:$0x3]
  %v17 = vld [vmem:[%s1] sm:$0xf]
  %v18 = vld [vmem:[%s1 + $0x4] sm:$0xf]
  %v19 = vld [vmem:[%s1 + $0x8] sm:$0xf]
  %v20 = vld [vmem:[%s1 + $0xc] sm:$0xf]
  %v21 = vld [vmem:[%s2] sm:$0x1]
  %v23 = vlaneseq
  %v24 = vshrl.u32 %v23, 7
  %v25 = vsub.s32 0, %v24
  %v26 = vrot.slane %v21, %v25
  %v30 = vunpack.c.l.b16 %v15
  %v31 = vunpack.c.l.b16 %v16
  %v32 = vpack.c.b16 %v31, %v30
  %v37 = vunpack.c.l.b16 %v17
  %v38 = vunpack.c.l.b16 %v18
  %v39 = vunpack.c.l.b16 %v19
  %v40 = vunpack.c.l.b16 %v20
  %v41 = vpack.c.b16 %v38, %v37
  %v42 = vpack.c.b16 %v40, %v39
  %vm45 = vcmask 261120
  %v47 = vsel %vm45, %v32, 0
  %49 = vmatprep.subr.bf16.mxu0 0
  %50 = vmatpush1.bf16.msra.mxu0 %v41
  %51 = vmatprep.subr.bf16.mxu0 0
  %52 = vmatpush1.bf16.msra.mxu0 %v42
  %53 = vmatprep.subr.bf16.mxu0 0
  %54 = vmatpush1.bf16.msra.mxu0 0
  %55 = vmatprep.subr.bf16.mxu0 0
  %56 = vmatpush1.bf16.msra.mxu0 0
  %57 = vmatprep.subr.bf16.mxu0 0
  %58 = vmatpush1.bf16.msra.mxu0 0
  %59 = vmatprep.subr.bf16.mxu0 0
  %60 = vmatpush1.bf16.msra.mxu0 0
  %61 = vmatprep.subr.bf16.mxu0 0
  %62 = vmatpush1.bf16.msra.mxu0 0
  %63 = vmatprep.subr.bf16.mxu0 0
  %64 = vmatpush1.bf16.msra.mxu0 0
  %65 = vmatprep.subr.bf16.mxu0 0
  %66 = vmatpush1.bf16.msra.mxu0 0
  %67 = vmatprep.subr.bf16.mxu0 0
  %68 = vmatpush1.bf16.msra.mxu0 0
  %69 = vmatprep.subr.bf16.mxu0 0
  %70 = vmatpush1.bf16.msra.mxu0 0
  %71 = vmatprep.subr.bf16.mxu0 0
  %72 = vmatpush1.bf16.msra.mxu0 0
  %73 = vmatprep.subr.bf16.mxu0 0
  %74 = vmatpush1.bf16.msra.mxu0 0
  %75 = vmatprep.subr.bf16.mxu0 0
  %76 = vmatpush1.bf16.msra.mxu0 0
  %77 = vmatprep.subr.bf16.mxu0 0
  %78 = vmatpush1.bf16.msra.mxu0 0
  %79 = vmatprep.subr.bf16.mxu0 0
  %80 = vmatpush1.bf16.msra.mxu0 0
  %81 = vmatprep.mubr.bf16.mxu0 0
  %82 = vmatmul.mubr.bf16.gmra.mrb[0].mxu0 %v47
  %v83 = vpop.f32.mrb[0].mxu0
  %v84 = vadd.f32 %v26, %v83
  %v85 = vpop.f32.mrb[0].mxu0
  %v86 = vpop.f32.mrb[0].mxu0
  %v87 = vadd.f32 %v26, %v86
  %v88 = vpop.f32.mrb[0].mxu0
  %89 = vdwg.mxu0
  %v90 = vmax.f32 %v84, 0.0
  %v91 = vmax.f32 %v87, 0.0
  %vm92 = vcmask 523264
  %93 = vst.msk [vmem:[%s3] sm:$0xff] %vm92, %v90
  %vm94 = vcmask 519168
  %95 = vst.msk [vmem:[%s3 + $0x8] sm:$0xf] %vm94, %v91
  // Predicated region
  $region14: #{_lambda_.49} parent=0 // pred_check
    _
  $region15: #{_lambda_.49} parent=0 // pred_check_branch
    %97 = sbr.rel (0) target = $region17
  $region16: #{_lambda_.49} parent=0 // pred_region
    _
  $region17: #{_lambda_.49} parent=0 // pred_fallthru
    _
  // Predicated region
  $region18: #{_lambda_.49} parent=0 // pred_check
    _
  $region19: #{_lambda_.49} parent=0 // pred_check_branch
    %99 = sbr.rel (0) target = $region21
  $region20: #{_lambda_.49} parent=0 // pred_region
    _
  $region21: #{_lambda_.49} parent=0 // pred_fallthru
    _

// kernel: _lambda_.50
$region0: #{_lambda_.50}
  #allocation0 [shape = 'u32[]', space=smem, size = 0x4, offset = 0x4, fixed_abs, tag = 'smem constant byte address 0x4 - core index']
  #allocation1 [shape = 'u32[144,128]{1,0:T(1,128)}', space=vmem, size = 0x12000, scoped, tag = 'internal scratch']
  %s0 = inlined_call_operand.vmem [shape: bf16[12,64], index: 0, kind: input, shape index: {}]
  %s1 = inlined_call_operand.vmem [shape: bf16[64,32], index: 1, kind: input, shape index: {}]
  %s2 = inlined_call_operand.vmem [shape: f32[1,32], index: 2, kind: input, shape index: {}]
  %s3 = inlined_call_operand.vmem [shape: f32[12,32], index: 3, kind: input, shape index: {}]
  %s4 = inlined_call_operand.vmem [shape: f32[12,32], index: 4, kind: output, shape index: {}]
  %s5 = sld [smem:[#allocation0]]
  $region26: #{_lambda_.50} parent=0
    _
  %s7 = ssub.s32 1, %s5
  %s8 = scalar_select 0, %s7, %s5
  // Predicated region
  $region2: #{_lambda_.50} parent=0 // pred_check
    _
  $region3: #{_lambda_.50} parent=0 // pred_check_branch
    %10 = sbr.rel (0) target = $region5
  $region4: #{_lambda_.50} parent=0 // pred_region
    _
  $region5: #{_lambda_.50} parent=0 // pred_fallthru
    _
  // Predicated region
  $region6: #{_lambda_.50} parent=0 // pred_check
    _
  $region7: #{_lambda_.50} parent=0 // pred_check_branch
    %12 = sbr.rel (0) target = $region9
  $region8: #{_lambda_.50} parent=0 // pred_region
    _
  $region9: #{_lambda_.50} parent=0 // pred_fallthru
    _
  // Predicated region
  $region10: #{_lambda_.50} parent=0 // pred_check
    _
  $region11: #{_lambda_.50} parent=0 // pred_check_branch
    %14 = sbr.rel (0) target = $region13
  $region12: #{_lambda_.50} parent=0 // pred_region
    _
  $region13: #{_lambda_.50} parent=0 // pred_fallthru
    _
  // Predicated region
  $region14: #{_lambda_.50} parent=0 // pred_check
    _
  $region15: #{_lambda_.50} parent=0 // pred_check_branch
    %16 = sbr.rel (0) target = $region17
  $region16: #{_lambda_.50} parent=0 // pred_region
    _
  $region17: #{_lambda_.50} parent=0 // pred_fallthru
    _
  %v18 = vld [vmem:[%s0] sm:$0xf]
  %v19 = vld [vmem:[%s0 + $0x4] sm:$0x3]
  %v20 = vld [vmem:[%s1] sm:$0xf]
  %v21 = vld [vmem:[%s1 + $0x4] sm:$0xf]
  %v22 = vld [vmem:[%s1 + $0x8] sm:$0xf]
  %v23 = vld [vmem:[%s1 + $0xc] sm:$0xf]
  %v24 = vld [vmem:[%s1 + $0x10] sm:$0xf]
  %v25 = vld [vmem:[%s1 + $0x14] sm:$0xf]
  %v26 = vld [vmem:[%s1 + $0x18] sm:$0xf]
  %v27 = vld [vmem:[%s1 + $0x1c] sm:$0xf]
  %v28 = vld [vmem:[%s2] sm:$0x1]
  %v30 = vlaneseq
  %v31 = vshrl.u32 %v30, 7
  %v32 = vsub.s32 0, %v31
  %v33 = vrot.slane %v28, %v32
  %v37 = vunpack.c.l.b16 %v18
  %v38 = vunpack.c.l.b16 %v19
  %v39 = vpack.c.b16 %v38, %v37
  %v48 = vunpack.c.l.b16 %v20
  %v49 = vunpack.c.l.b16 %v21
  %v50 = vunpack.c.l.b16 %v22
  %v51 = vunpack.c.l.b16 %v23
  %v52 = vunpack.c.l.b16 %v24
  %v53 = vunpack.c.l.b16 %v25
  %v54 = vunpack.c.l.b16 %v26
  %v55 = vunpack.c.l.b16 %v27
  %v56 = vpack.c.b16 %v49, %v48
  %v57 = vpack.c.b16 %v51, %v50
  %v58 = vpack.c.b16 %v53, %v52
  %v59 = vpack.c.b16 %v55, %v54
  %vm64 = vcmask 523264
  %v66 = vsel %vm64, %v39, 0
  %68 = vmatprep.subr.bf16.mxu0 0
  %69 = vmatpush1.bf16.msra.mxu0 %v56
  %70 = vmatprep.subr.bf16.mxu0 0
  %71 = vmatpush1.bf16.msra.mxu0 %v57
  %72 = vmatprep.subr.bf16.mxu0 0
  %73 = vmatpush1.bf16.msra.mxu0 %v58
  %74 = vmatprep.subr.bf16.mxu0 0
  %75 = vmatpush1.bf16.msra.mxu0 %v59
  %76 = vmatprep.subr.bf16.mxu0 0
  %77 = vmatpush1.bf16.msra.mxu0 0
  %78 = vmatprep.subr.bf16.mxu0 0
  %79 = vmatpush1.bf16.msra.mxu0 0
  %80 = vmatprep.subr.bf16.mxu0 0
  %81 = vmatpush1.bf16.msra.mxu0 0
  %82 = vmatprep.subr.bf16.mxu0 0
  %83 = vmatpush1.bf16.msra.mxu0 0
  %84 = vmatprep.subr.bf16.mxu0 0
  %85 = vmatpush1.bf16.msra.mxu0 0
  %86 = vmatprep.subr.bf16.mxu0 0
  %87 = vmatpush1.bf16.msra.mxu0 0
  %88 = vmatprep.subr.bf16.mxu0 0
  %89 = vmatpush1.bf16.msra.mxu0 0
  %90 = vmatprep.subr.bf16.mxu0 0
  %91 = vmatpush1.bf16.msra.mxu0 0
  %92 = vmatprep.subr.bf16.mxu0 0
  %93 = vmatpush1.bf16.msra.mxu0 0
  %94 = vmatprep.subr.bf16.mxu0 0
  %95 = vmatpush1.bf16.msra.mxu0 0
  %96 = vmatprep.subr.bf16.mxu0 0
  %97 = vmatpush1.bf16.msra.mxu0 0
  %98 = vmatprep.subr.bf16.mxu0 0
  %99 = vmatpush1.bf16.msra.mxu0 0
  %100 = vmatprep.mubr.bf16.mxu0 0
  %101 = vmatmul.mubr.bf16.gmra.mrb[0].mxu0 %v66
  %v102 = vpop.f32.mrb[0].mxu0
  %v103 = vadd.f32 %v33, %v102
  %v104 = vpop.f32.mrb[0].mxu0
  %v105 = vpop.f32.mrb[0].mxu0
  %v106 = vadd.f32 %v33, %v105
  %v107 = vpop.f32.mrb[0].mxu0
  %108 = vdwg.mxu0
  %v109 = vld [vmem:[%s3] sm:$0xff]
  %v110 = vld [vmem:[%s3 + $0x8] sm:$0xf]
  %v111 = vadd.f32 %v103, %v109
  %v112 = vadd.f32 %v106, %v110
  %vm113 = vcmask 261120
  %114 = vst.msk [vmem:[%s4] sm:$0xff] %vm113, %v111
  %vm115 = vcmask 257024
  %116 = vst.msk [vmem:[%s4 + $0x8] sm:$0xf] %vm115, %v112
  // Predicated region
  $region18: #{_lambda_.50} parent=0 // pred_check
    _
  $region19: #{_lambda_.50} parent=0 // pred_check_branch
    %118 = sbr.rel (0) target = $region21
  $region20: #{_lambda_.50} parent=0 // pred_region
    _
  $region21: #{_lambda_.50} parent=0 // pred_fallthru
    _
  // Predicated region
  $region22: #{_lambda_.50} parent=0 // pred_check
    _
  $region23: #{_lambda_.50} parent=0 // pred_check_branch
    %120 = sbr.rel (0) target = $region25
  $region24: #{_lambda_.50} parent=0 // pred_region
    _
  $region25: #{_lambda_.50} parent=0 // pred_fallthru
    _

// kernel: _lambda_.46
$region0: #{_lambda_.46}
  #allocation0 [shape = 'u32[]', space=smem, size = 0x4, offset = 0x4, fixed_abs, tag = 'smem constant byte address 0x4 - core index']
  #allocation1 [shape = 'u32[144,128]{1,0:T(1,128)}', space=vmem, size = 0x12000, scoped, tag = 'internal scratch']
  %s0 = inlined_call_operand.vmem [shape: bf16[2,6,32], index: 0, kind: input, shape index: {}]
  %s1 = inlined_call_operand.vmem [shape: bf16[2,6,32], index: 1, kind: input, shape index: {}]
  %s2 = inlined_call_operand.vmem [shape: bf16[2,6,32], index: 2, kind: input, shape index: {}]
  %s3 = inlined_call_operand.vmem [shape: f32[2,6,32], index: 3, kind: output, shape index: {}]
  %s4 = sld [smem:[#allocation0]]
  $region45: #{_lambda_.46} parent=0
    _
  %s6 = ssub.s32 1, %s4
  %s7 = scalar_select 0, %s6, %s4
  loop: start=0, step=1, limit=4
  $region2: #{_lambda_.46} parent=0 // loop_pre_header
    _
  $region3: #{_lambda_.46} parent=0 // loop_header
    %s9 = sphi 0, %s13
    %p10 = scmp.ge.s32.totalorder %s9, 4
    %s16 = sphi 0, %s28
    %s17 = sphi 0, %s24
    %s18 = sphi 0, %s16
    %s19 = sphi 0, %s17
    %s20 = sphi 0, %s18
    %s21 = sphi 0, %s19
    %s33 = sphi 0, %s35
    %s36 = sphi 0, %s33
    %s37 = sphi 0, %s36
    %s53 = sphi 0, %s37
    %s59 = sphi 0, %s61
    %s62 = sphi 0, %s59
    %s63 = sphi 0, %s62
    %s79 = sphi 0, %s63
    %s85 = sphi 0, %s87
    %s88 = sphi 0, %s85
    %s89 = sphi 0, %s88
    %s105 = sphi 0, %s89
    %s113 = sphi 0, %s115
    %s116 = sphi 0, %s113
    %s117 = sphi 0, %s116
    %s133 = sphi 0, %s117
  $region4: #{_lambda_.46} parent=0 // loop_header_branch
    %12 = sbr.rel (%p10) target = $region8
  $region5: #{_lambda_.46} parent=0 // loop_body
    %s14 = ssub.s32 %s9, 1
    %s15 = ssub.s32 %s9, 2
    %s22 = sadd.s32 1, %s17
    %p23 = scmp.ge.s32.totalorder %s22, 1
    %s24 = scalar_select %p23, 0, %s22
    %s25 = sadd.s32 1, %s16
    %s26 = scalar_select %p23, %s25, %s16
    %p27 = scmp.ge.s32.totalorder %s26, 2
    %s28 = scalar_select %p27, 0, %s26
    %s29 = ssub.s32 %s16, %s28
    %s30 = ssub.s32 %s17, %s24
    %s31 = sor.u32 %s29, %s30
    %p32 = scmp.eq.s32.totalorder %s31, 0
    %s34 = sadd.s32 %s33, 1
    %s35 = scalar_select %p32, %s33, %s34
    %p38 = pneg %p32
    %p39 = scmp.eq.s32.totalorder %s9, 1
    %p40 = por %p38, %p39
    %p41 = scmp.ne.s32.totalorder %s33, %s36
    %p42 = scmp.eq.s32.totalorder %s9, 0
    %p43 = por %p41, %p42
    %p44 = scmp.ne.s32.totalorder %s33, %s36
    %p45 = scmp.eq.s32.totalorder %s14, 1
    %p46 = por %p44, %p45
    %p47 = scmp.ne.s32.totalorder %s36, %s37
    %p48 = scmp.eq.s32.totalorder %s14, 0
    %p49 = por %p47, %p48
    %p50 = scmp.ne.s32.totalorder %s36, %s37
    %p51 = scmp.eq.s32.totalorder %s15, 1
    %p52 = por %p50, %p51
    %p54 = scmp.ne.s32.totalorder %s37, %s53
    %p55 = scmp.eq.s32.totalorder %s15, 0
    %p56 = por %p54, %p55
    %s57 = ssub.s32 %s16, %s28
    %p58 = scmp.eq.s32.totalorder %s57, 0
    %s60 = sadd.s32 %s59, 1
    %s61 = scalar_select %p58, %s59, %s60
    %p64 = pneg %p58
    %p65 = scmp.eq.s32.totalorder %s9, 1
    %p66 = por %p64, %p65
    %p67 = scmp.ne.s32.totalorder %s59, %s62
    %p68 = scmp.eq.s32.totalorder %s9, 0
    %p69 = por %p67, %p68
    %p70 = scmp.ne.s32.totalorder %s59, %s62
    %p71 = scmp.eq.s32.totalorder %s14, 1
    %p72 = por %p70, %p71
    %p73 = scmp.ne.s32.totalorder %s62, %s63
    %p74 = scmp.eq.s32.totalorder %s14, 0
    %p75 = por %p73, %p74
    %p76 = scmp.ne.s32.totalorder %s62, %s63
    %p77 = scmp.eq.s32.totalorder %s15, 1
    %p78 = por %p76, %p77
    %p80 = scmp.ne.s32.totalorder %s63, %s79
    %p81 = scmp.eq.s32.totalorder %s15, 0
    %p82 = por %p80, %p81
    %s83 = ssub.s32 %s16, %s28
    %p84 = scmp.eq.s32.totalorder %s83, 0
    %s86 = sadd.s32 %s85, 1
    %s87 = scalar_select %p84, %s85, %s86
    %p90 = pneg %p84
    %p91 = scmp.eq.s32.totalorder %s9, 1
    %p92 = por %p90, %p91
    %p93 = scmp.ne.s32.totalorder %s85, %s88
    %p94 = scmp.eq.s32.totalorder %s9, 0
    %p95 = por %p93, %p94
    %p96 = scmp.ne.s32.totalorder %s85, %s88
    %p97 = scmp.eq.s32.totalorder %s14, 1
    %p98 = por %p96, %p97
    %p99 = scmp.ne.s32.totalorder %s88, %s89
    %p100 = scmp.eq.s32.totalorder %s14, 0
    %p101 = por %p99, %p100
    %p102 = scmp.ne.s32.totalorder %s88, %s89
    %p103 = scmp.eq.s32.totalorder %s15, 1
    %p104 = por %p102, %p103
    %p106 = scmp.ne.s32.totalorder %s89, %s105
    %p107 = scmp.eq.s32.totalorder %s15, 0
    %p108 = por %p106, %p107
    %s109 = ssub.s32 %s16, %s28
    %s110 = ssub.s32 %s17, %s24
    %s111 = sor.u32 %s109, %s110
    %p112 = scmp.eq.s32.totalorder %s111, 0
    %s114 = sadd.s32 %s113, 1
    %s115 = scalar_select %p112, %s113, %s114
    %p118 = pneg %p112
    %p119 = scmp.eq.s32.totalorder %s9, 1
    %p120 = por %p118, %p119
    %p121 = scmp.ne.s32.totalorder %s113, %s116
    %p122 = scmp.eq.s32.totalorder %s9, 0
    %p123 = por %p121, %p122
    %p124 = scmp.ne.s32.totalorder %s113, %s116
    %p125 = scmp.eq.s32.totalorder %s14, 1
    %p126 = por %p124, %p125
    %p127 = scmp.ne.s32.totalorder %s116, %s117
    %p128 = scmp.eq.s32.totalorder %s14, 0
    %p129 = por %p127, %p128
    %p130 = scmp.ne.s32.totalorder %s116, %s117
    %p131 = scmp.eq.s32.totalorder %s15, 1
    %p132 = por %p130, %p131
    %p134 = scmp.ne.s32.totalorder %s117, %s133
    %p135 = scmp.eq.s32.totalorder %s15, 0
    %p136 = por %p134, %p135
    %p137 = scmp.le.s32.totalorder 1, %s9
    %p138 = scmp.lt.s32.totalorder %s9, 3
    %p139 = pnand %p137, %p138
    %p140 = pneg %p139
    // Predicated region
    $region9: #{_lambda_.46} parent=5 // pred_check
      _
    $region10: #{_lambda_.46} parent=5 // pred_check_branch
      %142 = sbr.rel (%p139) target = $region12
    $region11: #{_lambda_.46} parent=5 // pred_region
      %s143 = ssub.s32 %s9, 1
    $region12: #{_lambda_.46} parent=5 // pred_fallthru
      _
    %p144 = scmp.lt.s32.totalorder %s9, 2
    // Predicated region
    $region13: #{_lambda_.46} parent=5 // pred_check
      %p145 = pneg %p144
    $region14: #{_lambda_.46} parent=5 // pred_check_branch
      %147 = sbr.rel (%p145) target = $region16
    $region15: #{_lambda_.46} parent=5 // pred_region
      // Predicated region
      $region17: #{_lambda_.46} parent=15 // pred_check
        %p148 = pneg %p43
      $region18: #{_lambda_.46} parent=15 // pred_check_branch
        %150 = sbr.rel (%p148) target = $region20
      $region19: #{_lambda_.46} parent=15 // pred_region
        %p151 = scmp.lt.s32.totalorder %s16, 1
        %s152 = scalar_select %p151, %s16, 1
        %p153 = scmp.lt.s32.totalorder %s17, 0
        %s154 = scalar_select %p153, %s17, 0
        %s155 = sadd.s32 %s154, %s152
        %s156 = smul.addr %s155, 4
        %s157 = scalar_lea.vmem %s0, %s156
      $region20: #{_lambda_.46} parent=15 // pred_fallthru
        _
      // Predicated region
      $region21: #{_lambda_.46} parent=15 // pred_check
        %p158 = pneg %p69
      $region22: #{_lambda_.46} parent=15 // pred_check_branch
        %160 = sbr.rel (%p158) target = $region24
      $region23: #{_lambda_.46} parent=15 // pred_region
        %p161 = scmp.lt.s32.totalorder %s16, 1
        %s162 = scalar_select %p161, %s16, 1
        %s163 = smul.addr %s162, 4
        %s164 = scalar_lea.vmem %s1, %s163
      $region24: #{_lambda_.46} parent=15 // pred_fallthru
        _
      // Predicated region
      $region25: #{_lambda_.46} parent=15 // pred_check
        %p165 = pneg %p95
      $region26: #{_lambda_.46} parent=15 // pred_check_branch
        %167 = sbr.rel (%p165) target = $region28
      $region27: #{_lambda_.46} parent=15 // pred_region
        %p168 = scmp.lt.s32.totalorder %s16, 1
        %s169 = scalar_select %p168, %s16, 1
        %s170 = smul.addr %s169, 4
        %s171 = scalar_lea.vmem %s2, %s170
      $region28: #{_lambda_.46} parent=15 // pred_fallthru
        _
    $region16: #{_lambda_.46} parent=5 // pred_fallthru
      _
    %p172 = scmp.le.s32.totalorder 1, %s9
    %p173 = scmp.lt.s32.totalorder %s9, 3
    %p174 = pnand %p172, %p173
    %p175 = pneg %p174
    // Predicated region
    $region29: #{_lambda_.46} parent=5 // pred_check
      _
    $region30: #{_lambda_.46} parent=5 // pred_check_branch
      %177 = sbr.rel (%p174) target = $region32
    $region31: #{_lambda_.46} parent=5 // pred_region
      %s178 = ssub.s32 %s9, 1
      %p179 = scmp.lt.s32.totalorder %s18, 1
      %s180 = scalar_select %p179, %s18, 1
      %p181 = scmp.lt.s32.totalorder %s19, 0
      %s182 = scalar_select %p181, %s19, 0
      %s183 = sadd.s32 %s182, %s180
      %s184 = smul.addr %s183, 4
      %s185 = scalar_lea.vmem %s0, %s184
      %p186 = pneg %p49
      %p187 = pneg %p46
      %p188 = scmp.lt.s32.totalorder %s18, 1
      %s189 = scalar_select %p188, %s18, 1
      %s190 = smul.addr %s189, 4
      %s191 = scalar_lea.vmem %s1, %s190
      %p192 = pneg %p75
      %p193 = pneg %p72
      %p194 = scmp.lt.s32.totalorder %s18, 1
      %s195 = scalar_select %p194, %s18, 1
      %s196 = smul.addr %s195, 4
      %s197 = scalar_lea.vmem %s2, %s196
      %p198 = pneg %p101
      %p199 = pneg %p98
      %p200 = pneg %p129
      %p201 = pneg %p126
      %p202 = scmp.lt.s32.totalorder %s18, 1
      %s203 = scalar_select %p202, %s18, 1
      %p204 = scmp.lt.s32.totalorder %s19, 0
      %s205 = scalar_select %p204, %s19, 0
      %s206 = sadd.s32 %s205, %s203
      %s207 = smul.addr %s206, 8
      %s208 = scalar_lea.vmem %s3, %s207
      %p209 = scmp.lt.s32.totalorder %s18, 1
      %s210 = scalar_select %p209, %s18, 1
      %p211 = scmp.lt.s32.totalorder %s19, 0
      %s212 = scalar_select %p211, %s19, 0
      %s213 = sadd.s32 %s212, %s210
      %s214 = smul.addr %s213, 4
      %s215 = scalar_lea.vmem %s0, %s214
      %p216 = scmp.lt.s32.totalorder %s18, 1
      %s217 = scalar_select %p216, %s18, 1
      %s218 = smul.addr %s217, 4
      %s219 = scalar_lea.vmem %s1, %s218
      %p220 = scmp.lt.s32.totalorder %s18, 1
      %s221 = scalar_select %p220, %s18, 1
      %s222 = smul.addr %s221, 4
      %s223 = scalar_lea.vmem %s2, %s222
      %p224 = scmp.lt.s32.totalorder %s18, 1
      %s225 = scalar_select %p224, %s18, 1
      %p226 = scmp.lt.s32.totalorder %s19, 0
      %s227 = scalar_select %p226, %s19, 0
      %s228 = sadd.s32 %s227, %s225
      %s229 = smul.addr %s228, 8
      %s230 = scalar_lea.vmem %s3, %s229
      %v232 = vld [vmem:[%s215] sm:$0x7]
      %v233 = vld [vmem:[%s219] sm:$0x7]
      %v234 = vld [vmem:[%s223] sm:$0x7]
      %vm235 = vcmask 64512
      %v237 = vsel %vm235, %v232, 0
      %v240 = vsel %vm235, %v233, 0
      %242 = vmatprep.subr.bf16.mxu0 0
      %243 = vmatpush1.bf16.xpose.msra.mxu0 %v240
      %244 = vmatprep.subr.bf16.mxu0 0
      %245 = vmatpush1.bf16.xpose.msra.mxu0 0
      %246 = vmatprep.subr.bf16.mxu0 0
      %247 = vmatpush1.bf16.xpose.msra.mxu0 0
      %248 = vmatprep.subr.bf16.mxu0 0
      %249 = vmatpush1.bf16.xpose.msra.mxu0 0
      %250 = vmatprep.subr.bf16.mxu0 0
      %251 = vmatpush1.bf16.xpose.msra.mxu0 0
      %252 = vmatprep.subr.bf16.mxu0 0
      %253 = vmatpush1.bf16.xpose.msra.mxu0 0
      %254 = vmatprep.subr.bf16.mxu0 0
      %255 = vmatpush1.bf16.xpose.msra.mxu0 0
      %256 = vmatprep.subr.bf16.mxu0 0
      %257 = vmatpush1.bf16.xpose.msra.mxu0 0
      %258 = vmatprep.subr.bf16.mxu0 0
      %259 = vmatpush1.bf16.xpose.msra.mxu0 0
      %260 = vmatprep.subr.bf16.mxu0 0
      %261 = vmatpush1.bf16.xpose.msra.mxu0 0
      %262 = vmatprep.subr.bf16.mxu0 0
      %263 = vmatpush1.bf16.xpose.msra.mxu0 0
      %264 = vmatprep.subr.bf16.mxu0 0
      %265 = vmatpush1.bf16.xpose.msra.mxu0 0
      %266 = vmatprep.subr.bf16.mxu0 0
      %267 = vmatpush1.bf16.xpose.msra.mxu0 0
      %268 = vmatprep.subr.bf16.mxu0 0
      %269 = vmatpush1.bf16.xpose.msra.mxu0 0
      %270 = vmatprep.subr.bf16.mxu0 0
      %271 = vmatpush1.bf16.xpose.msra.mxu0 0
      %272 = vmatprep.subr.bf16.mxu0 0
      %273 = vmatpush1.bf16.xpose.msra.mxu0 0
      %274 = vmatprep.mubr.bf16.mxu0 0
      %275 = vmatmul.mubr.bf16.gmra.mrb[0].mxu0 %v237
      %v276 = vpop.f32.mrb[0].mxu0
      %v277 = vadd.f32 0.0, %v276
      %v278 = vpop.f32.mrb[0].mxu0
      %v279 = vpop.f32.mrb[0].mxu0
      %v280 = vpop.f32.mrb[0].mxu0
      %281 = vdwg.mxu0
      %vm282 = vcmask 46080
      %v283 = vsel %vm282, %v277, -inf
      %284 = vmax.xlane.f32.xlu0 %v283
      %v285 = vpop.xlane.xlu0 %284
      %v286 = vsub.f32 %v277, %v285
      %v287 = vmul.f32 %v286, 1.442695
      %v288 = vpow.pop %v287
      %v289 = vsel %vm282, %v288, 0.0
      %290 = vadd.xlane.f32.xlu0 %v289
      %v291 = vpop.xlane.xlu0 %290
      %v292 = vpack.c.bf16 %v288, %v288
      %vm293 = vcmask 48128
      %v295 = vsel %vm293, %v292, 0
      %vm297 = vcmask 1042432
      %v299 = vsel %vm297, %v234, 0
      %301 = vmatprep.subr.bf16.mxu0 0
      %302 = vmatpush1.bf16.msra.mxu0 %v299
      %303 = vmatprep.subr.bf16.mxu0 0
      %304 = vmatpush1.bf16.msra.mxu0 0
      %305 = vmatprep.subr.bf16.mxu0 0
      %306 = vmatpush1.bf16.msra.mxu0 0
      %307 = vmatprep.subr.bf16.mxu0 0
      %308 = vmatpush1.bf16.msra.mxu0 0
      %309 = vmatprep.subr.bf16.mxu0 0
      %310 = vmatpush1.bf16.msra.mxu0 0
      %311 = vmatprep.subr.bf16.mxu0 0
      %312 = vmatpush1.bf16.msra.mxu0 0
      %313 = vmatprep.subr.bf16.mxu0 0
      %314 = vmatpush1.bf16.msra.mxu0 0
      %315 = vmatprep.subr.bf16.mxu0 0
      %316 = vmatpush1.bf16.msra.mxu0 0
      %317 = vmatprep.subr.bf16.mxu0 0
      %318 = vmatpush1.bf16.msra.mxu0 0
      %319 = vmatprep.subr.bf16.mxu0 0
      %320 = vmatpush1.bf16.msra.mxu0 0
      %321 = vmatprep.subr.bf16.mxu0 0
      %322 = vmatpush1.bf16.msra.mxu0 0
      %323 = vmatprep.subr.bf16.mxu0 0
      %324 = vmatpush1.bf16.msra.mxu0 0
      %325 = vmatprep.subr.bf16.mxu0 0
      %326 = vmatpush1.bf16.msra.mxu0 0
      %327 = vmatprep.subr.bf16.mxu0 0
      %328 = vmatpush1.bf16.msra.mxu0 0
      %329 = vmatprep.subr.bf16.mxu0 0
      %330 = vmatpush1.bf16.msra.mxu0 0
      %331 = vmatprep.subr.bf16.mxu0 0
      %332 = vmatpush1.bf16.msra.mxu0 0
      %333 = vmatprep.mubr.bf16.mxu0 0
      %334 = vmatmul.mubr.bf16.gmra.mrb[0].mxu0 %v295
      %v335 = vpop.f32.mrb[0].mxu0
      %v336 = vadd.f32 0.0, %v335
      %v337 = vpop.f32.mrb[0].mxu0
      %v338 = vpop.f32.mrb[0].mxu0
      %v339 = vpop.f32.mrb[0].mxu0
      %340 = vdwg.mxu0
      %v341 = vrcp.pop %v291
      %v342 = vmul.f32 %v336, %v341
      %v344 = vunpack.c.l.b16 %v232
      %v345 = vpack.c.b16 %v344, %v344
      %346 = vrot.lane.b32.xlu0 %v345, 120
      %v347 = vpop.permute.xlu0 %346
      %v349 = vunpack.c.l.b16 %v233
      %v350 = vpack.c.b16 %v349, %v349
      %351 = vrot.lane.b32.xlu0 %v350, 120
      %v352 = vpop.permute.xlu0 %351
      %v354 = vsel %vm235, %v347, 0
      %v357 = vsel %vm235, %v352, 0
      %359 = vmatprep.subr.bf16.mxu0 0
      %360 = vmatpush1.bf16.xpose.msra.mxu0 %v357
      %361 = vmatprep.subr.bf16.mxu0 0
      %362 = vmatpush1.bf16.xpose.msra.mxu0 0
      %363 = vmatprep.subr.bf16.mxu0 0
      %364 = vmatpush1.bf16.xpose.msra.mxu0 0
      %365 = vmatprep.subr.bf16.mxu0 0
      %366 = vmatpush1.bf16.xpose.msra.mxu0 0
      %367 = vmatprep.subr.bf16.mxu0 0
      %368 = vmatpush1.bf16.xpose.msra.mxu0 0
      %369 = vmatprep.subr.bf16.mxu0 0
      %370 = vmatpush1.bf16.xpose.msra.mxu0 0
      %371 = vmatprep.subr.bf16.mxu0 0
      %372 = vmatpush1.bf16.xpose.msra.mxu0 0
      %373 = vmatprep.subr.bf16.mxu0 0
      %374 = vmatpush1.bf16.xpose.msra.mxu0 0
      %375 = vmatprep.subr.bf16.mxu0 0
      %376 = vmatpush1.bf16.xpose.msra.mxu0 0
      %377 = vmatprep.subr.bf16.mxu0 0
      %378 = vmatpush1.bf16.xpose.msra.mxu0 0
      %379 = vmatprep.subr.bf16.mxu0 0
      %380 = vmatpush1.bf16.xpose.msra.mxu0 0
      %381 = vmatprep.subr.bf16.mxu0 0
      %382 = vmatpush1.bf16.xpose.msra.mxu0 0
      %383 = vmatprep.subr.bf16.mxu0 0
      %384 = vmatpush1.bf16.xpose.msra.mxu0 0
      %385 = vmatprep.subr.bf16.mxu0 0
      %386 = vmatpush1.bf16.xpose.msra.mxu0 0
      %387 = vmatprep.subr.bf16.mxu0 0
      %388 = vmatpush1.bf16.xpose.msra.mxu0 0
      %389 = vmatprep.subr.bf16.mxu0 0
      %390 = vmatpush1.bf16.xpose.msra.mxu0 0
      %391 = vmatprep.mubr.bf16.mxu0 0
      %392 = vmatmul.mubr.bf16.gmra.mrb[0].mxu0 %v354
      %v393 = vpop.f32.mrb[0].mxu0
      %v394 = vadd.f32 0.0, %v393
      %v395 = vpop.f32.mrb[0].mxu0
      %v396 = vpop.f32.mrb[0].mxu0
      %v397 = vpop.f32.mrb[0].mxu0
      %398 = vdwg.mxu0
      %v399 = vsel %vm282, %v394, -inf
      %400 = vmax.xlane.f32.xlu0 %v399
      %v401 = vpop.xlane.xlu0 %400
      %v402 = vsub.f32 %v394, %v401
      %v403 = vmul.f32 %v402, 1.442695
      %v404 = vpow.pop %v403
      %v405 = vsel %vm282, %v404, 0.0
      %406 = vadd.xlane.f32.xlu0 %v405
      %v407 = vpop.xlane.xlu0 %406
      %v408 = vpack.c.bf16 %v404, %v404
      %v410 = vunpack.c.l.b16 %v234
      %v411 = vpack.c.b16 %v410, %v410
      %412 = vrot.lane.b32.xlu0 %v411, 120
      %v413 = vpop.permute.xlu0 %412
      %v415 = vsel %vm293, %v408, 0
      %v418 = vsel %vm297, %v413, 0
      %420 = vmatprep.subr.bf16.mxu0 0
      %421 = vmatpush1.bf16.msra.mxu0 %v418
      %422 = vmatprep.subr.bf16.mxu0 0
      %423 = vmatpush1.bf16.msra.mxu0 0
      %424 = vmatprep.subr.bf16.mxu0 0
      %425 = vmatpush1.bf16.msra.mxu0 0
      %426 = vmatprep.subr.bf16.mxu0 0
      %427 = vmatpush1.bf16.msra.mxu0 0
      %428 = vmatprep.subr.bf16.mxu0 0
      %429 = vmatpush1.bf16.msra.mxu0 0
      %430 = vmatprep.subr.bf16.mxu0 0
      %431 = vmatpush1.bf16.msra.mxu0 0
      %432 = vmatprep.subr.bf16.mxu0 0
      %433 = vmatpush1.bf16.msra.mxu0 0
      %434 = vmatprep.subr.bf16.mxu0 0
      %435 = vmatpush1.bf16.msra.mxu0 0
      %436 = vmatprep.subr.bf16.mxu0 0
      %437 = vmatpush1.bf16.msra.mxu0 0
      %438 = vmatprep.subr.bf16.mxu0 0
      %439 = vmatpush1.bf16.msra.mxu0 0
      %440 = vmatprep.subr.bf16.mxu0 0
      %441 = vmatpush1.bf16.msra.mxu0 0
      %442 = vmatprep.subr.bf16.mxu0 0
      %443 = vmatpush1.bf16.msra.mxu0 0
      %444 = vmatprep.subr.bf16.mxu0 0
      %445 = vmatpush1.bf16.msra.mxu0 0
      %446 = vmatprep.subr.bf16.mxu0 0
      %447 = vmatpush1.bf16.msra.mxu0 0
      %448 = vmatprep.subr.bf16.mxu0 0
      %449 = vmatpush1.bf16.msra.mxu0 0
      %450 = vmatprep.subr.bf16.mxu0 0
      %451 = vmatpush1.bf16.msra.mxu0 0
      %452 = vmatprep.mubr.bf16.mxu0 0
      %453 = vmatmul.mubr.bf16.gmra.mrb[0].mxu0 %v415
      %v454 = vpop.f32.mrb[0].mxu0
      %v455 = vadd.f32 0.0, %v454
      %v456 = vpop.f32.mrb[0].mxu0
      %v457 = vpop.f32.mrb[0].mxu0
      %v458 = vpop.f32.mrb[0].mxu0
      %459 = vdwg.mxu0
      %v460 = vrcp.pop %v407
      %v461 = vmul.f32 %v455, %v460
      %462 = vrot.lane.b32.xlu0 %v345, 112
      %v463 = vpop.permute.xlu0 %462
      %464 = vrot.lane.b32.xlu0 %v350, 112
      %v465 = vpop.permute.xlu0 %464
      %v467 = vsel %vm235, %v463, 0
      %v470 = vsel %vm235, %v465, 0
      %472 = vmatprep.subr.bf16.mxu0 0
      %473 = vmatpush1.bf16.xpose.msra.mxu0 %v470
      %474 = vmatprep.subr.bf16.mxu0 0
      %475 = vmatpush1.bf16.xpose.msra.mxu0 0
      %476 = vmatprep.subr.bf16.mxu0 0
      %477 = vmatpush1.bf16.xpose.msra.mxu0 0
      %478 = vmatprep.subr.bf16.mxu0 0
      %479 = vmatpush1.bf16.xpose.msra.mxu0 0
      %480 = vmatprep.subr.bf16.mxu0 0
      %481 = vmatpush1.bf16.xpose.msra.mxu0 0
      %482 = vmatprep.subr.bf16.mxu0 0
      %483 = vmatpush1.bf16.xpose.msra.mxu0 0
      %484 = vmatprep.subr.bf16.mxu0 0
      %485 = vmatpush1.bf16.xpose.msra.mxu0 0
      %486 = vmatprep.subr.bf16.mxu0 0
      %487 = vmatpush1.bf16.xpose.msra.mxu0 0
      %488 = vmatprep.subr.bf16.mxu0 0
      %489 = vmatpush1.bf16.xpose.msra.mxu0 0
      %490 = vmatprep.subr.bf16.mxu0 0
      %491 = vmatpush1.bf16.xpose.msra.mxu0 0
      %492 = vmatprep.subr.bf16.mxu0 0
      %493 = vmatpush1.bf16.xpose.msra.mxu0 0
      %494 = vmatprep.subr.bf16.mxu0 0
      %495 = vmatpush1.bf16.xpose.msra.mxu0 0
      %496 = vmatprep.subr.bf16.mxu0 0
      %497 = vmatpush1.bf16.xpose.msra.mxu0 0
      %498 = vmatprep.subr.bf16.mxu0 0
      %499 = vmatpush1.bf16.xpose.msra.mxu0 0
      %500 = vmatprep.subr.bf16.mxu0 0
      %501 = vmatpush1.bf16.xpose.msra.mxu0 0
      %502 = vmatprep.subr.bf16.mxu0 0
      %503 = vmatpush1.bf16.xpose.msra.mxu0 0
      %504 = vmatprep.mubr.bf16.mxu0 0
      %505 = vmatmul.mubr.bf16.gmra.mrb[0].mxu0 %v467
      %v506 = vpop.f32.mrb[0].mxu0
      %v507 = vadd.f32 0.0, %v506
      %v508 = vpop.f32.mrb[0].mxu0
      %v509 = vpop.f32.mrb[0].mxu0
      %v510 = vpop.f32.mrb[0].mxu0
      %511 = vdwg.mxu0
      %v512 = vsel %vm282, %v507, -inf
      %513 = vmax.xlane.f32.xlu0 %v512
      %v514 = vpop.xlane.xlu0 %513
      %v515 = vsub.f32 %v507, %v514
      %v516 = vmul.f32 %v515, 1.442695
      %v517 = vpow.pop %v516
      %v518 = vsel %vm282, %v517, 0.0
      %519 = vadd.xlane.f32.xlu0 %v518
      %v520 = vpop.xlane.xlu0 %519
      %v521 = vpack.c.bf16 %v517, %v517
      %522 = vrot.lane.b32.xlu0 %v411, 112
      %v523 = vpop.permute.xlu0 %522
      %v525 = vsel %vm293, %v521, 0
      %v528 = vsel %vm297, %v523, 0
      %530 = vmatprep.subr.bf16.mxu0 0
      %531 = vmatpush1.bf16.msra.mxu0 %v528
      %532 = vmatprep.subr.bf16.mxu0 0
      %533 = vmatpush1.bf16.msra.mxu0 0
      %534 = vmatprep.subr.bf16.mxu0 0
      %535 = vmatpush1.bf16.msra.mxu0 0
      %536 = vmatprep.subr.bf16.mxu0 0
      %537 = vmatpush1.bf16.msra.mxu0 0
      %538 = vmatprep.subr.bf16.mxu0 0
      %539 = vmatpush1.bf16.msra.mxu0 0
      %540 = vmatprep.subr.bf16.mxu0 0
      %541 = vmatpush1.bf16.msra.mxu0 0
      %542 = vmatprep.subr.bf16.mxu0 0
      %543 = vmatpush1.bf16.msra.mxu0 0
      %544 = vmatprep.subr.bf16.mxu0 0
      %545 = vmatpush1.bf16.msra.mxu0 0
      %546 = vmatprep.subr.bf16.mxu0 0
      %547 = vmatpush1.bf16.msra.mxu0 0
      %548 = vmatprep.subr.bf16.mxu0 0
      %549 = vmatpush1.bf16.msra.mxu0 0
      %550 = vmatprep.subr.bf16.mxu0 0
      %551 = vmatpush1.bf16.msra.mxu0 0
      %552 = vmatprep.subr.bf16.mxu0 0
      %553 = vmatpush1.bf16.msra.mxu0 0
      %554 = vmatprep.subr.bf16.mxu0 0
      %555 = vmatpush1.bf16.msra.mxu0 0
      %556 = vmatprep.subr.bf16.mxu0 0
      %557 = vmatpush1.bf16.msra.mxu0 0
      %558 = vmatprep.subr.bf16.mxu0 0
      %559 = vmatpush1.bf16.msra.mxu0 0
      %560 = vmatprep.subr.bf16.mxu0 0
      %561 = vmatpush1.bf16.msra.mxu0 0
      %562 = vmatprep.mubr.bf16.mxu0 0
      %563 = vmatmul.mubr.bf16.gmra.mrb[0].mxu0 %v525
      %v564 = vpop.f32.mrb[0].mxu0
      %v565 = vadd.f32 0.0, %v564
      %v566 = vpop.f32.mrb[0].mxu0
      %v567 = vpop.f32.mrb[0].mxu0
      %v568 = vpop.f32.mrb[0].mxu0
      %569 = vdwg.mxu0
      %v570 = vrcp.pop %v520
      %v571 = vmul.f32 %v565, %v570
      %572 = vrot.lane.b32.xlu0 %v345, 104
      %v573 = vpop.permute.xlu0 %572
      %574 = vrot.lane.b32.xlu0 %v350, 104
      %v575 = vpop.permute.xlu0 %574
      %v577 = vsel %vm235, %v573, 0
      %v580 = vsel %vm235, %v575, 0
      %582 = vmatprep.subr.bf16.mxu0 0
      %583 = vmatpush1.bf16.xpose.msra.mxu0 %v580
      %584 = vmatprep.subr.bf16.mxu0 0
      %585 = vmatpush1.bf16.xpose.msra.mxu0 0
      %586 = vmatprep.subr.bf16.mxu0 0
      %587 = vmatpush1.bf16.xpose.msra.mxu0 0
      %588 = vmatprep.subr.bf16.mxu0 0
      %589 = vmatpush1.bf16.xpose.msra.mxu0 0
      %590 = vmatprep.subr.bf16.mxu0 0
      %591 = vmatpush1.bf16.xpose.msra.mxu0 0
      %592 = vmatprep.subr.bf16.mxu0 0
      %593 = vmatpush1.bf16.xpose.msra.mxu0 0
      %594 = vmatprep.subr.bf16.mxu0 0
      %595 = vmatpush1.bf16.xpose.msra.mxu0 0
      %596 = vmatprep.subr.bf16.mxu0 0
      %597 = vmatpush1.bf16.xpose.msra.mxu0 0
      %598 = vmatprep.subr.bf16.mxu0 0
      %599 = vmatpush1.bf16.xpose.msra.mxu0 0
      %600 = vmatprep.subr.bf16.mxu0 0
      %601 = vmatpush1.bf16.xpose.msra.mxu0 0
      %602 = vmatprep.subr.bf16.mxu0 0
      %603 = vmatpush1.bf16.xpose.msra.mxu0 0
      %604 = vmatprep.subr.bf16.mxu0 0
      %605 = vmatpush1.bf16.xpose.msra.mxu0 0
      %606 = vmatprep.subr.bf16.mxu0 0
      %607 = vmatpush1.bf16.xpose.msra.mxu0 0
      %608 = vmatprep.subr.bf16.mxu0 0
      %609 = vmatpush1.bf16.xpose.msra.mxu0 0
      %610 = vmatprep.subr.bf16.mxu0 0
      %611 = vmatpush1.bf16.xpose.msra.mxu0 0
      %612 = vmatprep.subr.bf16.mxu0 0
      %613 = vmatpush1.bf16.xpose.msra.mxu0 0
      %614 = vmatprep.mubr.bf16.mxu0 0
      %615 = vmatmul.mubr.bf16.gmra.mrb[0].mxu0 %v577
      %v616 = vpop.f32.mrb[0].mxu0
      %v617 = vadd.f32 0.0, %v616
      %v618 = vpop.f32.mrb[0].mxu0
      %v619 = vpop.f32.mrb[0].mxu0
      %v620 = vpop.f32.mrb[0].mxu0
      %621 = vdwg.mxu0
      %v622 = vsel %vm282, %v617, -inf
      %623 = vmax.xlane.f32.xlu0 %v622
      %v624 = vpop.xlane.xlu0 %623
      %v625 = vsub.f32 %v617, %v624
      %v626 = vmul.f32 %v625, 1.442695
      %v627 = vpow.pop %v626
      %v628 = vsel %vm282, %v627, 0.0
      %629 = vadd.xlane.f32.xlu0 %v628
      %v630 = vpop.xlane.xlu0 %629
      %v631 = vpack.c.bf16 %v627, %v627
      %632 = vrot.lane.b32.xlu0 %v411, 104
      %v633 = vpop.permute.xlu0 %632
      %v635 = vsel %vm293, %v631, 0
      %v638 = vsel %vm297, %v633, 0
      %640 = vmatprep.subr.bf16.mxu0 0
      %641 = vmatpush1.bf16.msra.mxu0 %v638
      %642 = vmatprep.subr.bf16.mxu0 0
      %643 = vmatpush1.bf16.msra.mxu0 0
      %644 = vmatprep.subr.bf16.mxu0 0
      %645 = vmatpush1.bf16.msra.mxu0 0
      %646 = vmatprep.subr.bf16.mxu0 0
      %647 = vmatpush1.bf16.msra.mxu0 0
      %648 = vmatprep.subr.bf16.mxu0 0
      %649 = vmatpush1.bf16.msra.mxu0 0
      %650 = vmatprep.subr.bf16.mxu0 0
      %651 = vmatpush1.bf16.msra.mxu0 0
      %652 = vmatprep.subr.bf16.mxu0 0
      %653 = vmatpush1.bf16.msra.mxu0 0
      %654 = vmatprep.subr.bf16.mxu0 0
      %655 = vmatpush1.bf16.msra.mxu0 0
      %656 = vmatprep.subr.bf16.mxu0 0
      %657 = vmatpush1.bf16.msra.mxu0 0
      %658 = vmatprep.subr.bf16.mxu0 0
      %659 = vmatpush1.bf16.msra.mxu0 0
      %660 = vmatprep.subr.bf16.mxu0 0
      %661 = vmatpush1.bf16.msra.mxu0 0
      %662 = vmatprep.subr.bf16.mxu0 0
      %663 = vmatpush1.bf16.msra.mxu0 0
      %664 = vmatprep.subr.bf16.mxu0 0
      %665 = vmatpush1.bf16.msra.mxu0 0
      %666 = vmatprep.subr.bf16.mxu0 0
      %667 = vmatpush1.bf16.msra.mxu0 0
      %668 = vmatprep.subr.bf16.mxu0 0
      %669 = vmatpush1.bf16.msra.mxu0 0
      %670 = vmatprep.subr.bf16.mxu0 0
      %671 = vmatpush1.bf16.msra.mxu0 0
      %672 = vmatprep.mubr.bf16.mxu0 0
      %673 = vmatmul.mubr.bf16.gmra.mrb[0].mxu0 %v635
      %v674 = vpop.f32.mrb[0].mxu0
      %v675 = vadd.f32 0.0, %v674
      %v676 = vpop.f32.mrb[0].mxu0
      %v677 = vpop.f32.mrb[0].mxu0
      %v678 = vpop.f32.mrb[0].mxu0
      %679 = vdwg.mxu0
      %v680 = vrcp.pop %v630
      %v681 = vmul.f32 %v675, %v680
      %683 = vrot.lane.b32.xlu0 %v461, 8
      %v684 = vpop.permute.xlu0 %683
      %687 = vrot.lane.b32.xlu0 %v571, 16
      %v688 = vpop.permute.xlu0 %687
      %691 = vrot.lane.b32.xlu0 %v681, 24
      %v692 = vpop.permute.xlu0 %691
      %v694 = vsel %vm235, %v342, %v684
      %vm695 = vcmask 130048
      %v696 = vsel %vm695, %v694, %v688
      %vm697 = vcmask 195584
      %v698 = vsel %vm697, %v696, %v692
      %vm699 = vcmask 259072
      %700 = vst.msk [vmem:[%s230] sm:$0x3f] %vm699, %v698
      %p701 = scmp.lt.s32.totalorder %s18, 1
      %s702 = scalar_select %p701, %s18, 1
      %p703 = scmp.lt.s32.totalorder %s19, 0
      %s704 = scalar_select %p703, %s19, 0
      %s705 = sadd.s32 %s704, %s702
      %s706 = smul.addr %s705, 8
      %s707 = scalar_lea.vmem %s3, %s706
      // Predicated region
      $region33: #{_lambda_.46} parent=31 // pred_check
        %p708 = pneg %p126
      $region34: #{_lambda_.46} parent=31 // pred_check_branch
        %710 = sbr.rel (%p708) target = $region36
      $region35: #{_lambda_.46} parent=31 // pred_region
        _
      $region36: #{_lambda_.46} parent=31 // pred_fallthru
        _
    $region32: #{_lambda_.46} parent=5 // pred_fallthru
      _
    %p711 = scmp.le.s32.totalorder 2, %s9
    // Predicated region
    $region37: #{_lambda_.46} parent=5 // pred_check
      %p712 = pneg %p711
    $region38: #{_lambda_.46} parent=5 // pred_check_branch
      %714 = sbr.rel (%p712) target = $region40
    $region39: #{_lambda_.46} parent=5 // pred_region
      %s715 = ssub.s32 %s9, 2
      // Predicated region
      $region41: #{_lambda_.46} parent=39 // pred_check
        %p716 = pneg %p132
      $region42: #{_lambda_.46} parent=39 // pred_check_branch
        %718 = sbr.rel (%p716) target = $region44
      $region43: #{_lambda_.46} parent=39 // pred_region
        %p719 = scmp.lt.s32.totalorder %s20, 1
        %s720 = scalar_select %p719, %s20, 1
        %p721 = scmp.lt.s32.totalorder %s21, 0
        %s722 = scalar_select %p721, %s21, 0
        %s723 = sadd.s32 %s722, %s720
        %s724 = smul.addr %s723, 8
        %s725 = scalar_lea.vmem %s3, %s724
      $region44: #{_lambda_.46} parent=39 // pred_fallthru
        _
    $region40: #{_lambda_.46} parent=5 // pred_fallthru
      _
  $region6: #{_lambda_.46} parent=0 // loop_footer
    %s13 = sadd.s32 1, %s9
  $region7: #{_lambda_.46} parent=0 // loop_footer_branch
    %8 = sbr.rel target = $region3
  $region8: #{_lambda_.46} parent=0 // loop_exit
    _

// kernel: _lambda_.58
$region0: #{_lambda_.58}
  #allocation0 [shape = 'u32[]', space=smem, size = 0x4, offset = 0x4, fixed_abs, tag = 'smem constant byte address 0x4 - core index']
  #allocation1 [shape = 'u32[144,128]{1,0:T(1,128)}', space=vmem, size = 0x12000, scoped, tag = 'internal scratch']
  %s0 = inlined_call_operand.vmem [shape: f32[16,32], index: 0, kind: input, shape index: {}]
  %s1 = inlined_call_operand.vmem [shape: f32[1,32], index: 1, kind: input, shape index: {}]
  %s2 = inlined_call_operand.vmem [shape: f32[1,32], index: 2, kind: input, shape index: {}]
  %s3 = inlined_call_operand.vmem [shape: f32[16,32], index: 3, kind: output, shape index: {}]
  %s4 = sld [smem:[#allocation0]]
  $region22: #{_lambda_.58} parent=0
    _
  %s6 = ssub.s32 1, %s4
  %s7 = scalar_select 0, %s6, %s4
  // Predicated region
  $region2: #{_lambda_.58} parent=0 // pred_check
    _
  $region3: #{_lambda_.58} parent=0 // pred_check_branch
    %9 = sbr.rel (0) target = $region5
  $region4: #{_lambda_.58} parent=0 // pred_region
    _
  $region5: #{_lambda_.58} parent=0 // pred_fallthru
    _
  // Predicated region
  $region6: #{_lambda_.58} parent=0 // pred_check
    _
  $region7: #{_lambda_.58} parent=0 // pred_check_branch
    %11 = sbr.rel (0) target = $region9
  $region8: #{_lambda_.58} parent=0 // pred_region
    _
  $region9: #{_lambda_.58} parent=0 // pred_fallthru
    _
  // Predicated region
  $region10: #{_lambda_.58} parent=0 // pred_check
    _
  $region11: #{_lambda_.58} parent=0 // pred_check_branch
    %13 = sbr.rel (0) target = $region13
  $region12: #{_lambda_.58} parent=0 // pred_region
    _
  $region13: #{_lambda_.58} parent=0 // pred_fallthru
    _
  %v14 = vld [vmem:[%s0] sm:$0xff]
  %v15 = vld [vmem:[%s0 + $0x8] sm:$0xff]
  %vm16 = vcmask 261120
  %v17 = vsel %vm16, %v14, 0.0
  %18 = vadd.xlane.f32.xlu0 %v17
  %v19 = vpop.xlane.xlu0 %18
  %v20 = vsel %vm16, %v15, 0.0
  %21 = vadd.xlane.f32.xlu0 %v20
  %v22 = vpop.xlane.xlu0 %21
  %v23 = vrcp.pop 32.0
  %v24 = vmul.f32 %v19, %v23
  %v25 = vmul.f32 %v22, %v23
  %v26 = vsub.f32 %v14, %v24
  %v27 = vsub.f32 %v15, %v25
  %v28 = vmul.f32 %v26, %v26
  %v29 = vmul.f32 %v27, %v27
  %v30 = vsel %vm16, %v28, 0.0
  %31 = vadd.xlane.f32.xlu0 %v30
  %v32 = vpop.xlane.xlu0 %31
  %v33 = vsel %vm16, %v29, 0.0
  %34 = vadd.xlane.f32.xlu0 %v33
  %v35 = vpop.xlane.xlu0 %34
  %v36 = vmul.f32 %v32, %v23
  %v37 = vmul.f32 %v35, %v23
  %v38 = vadd.f32 %v36, 1e-05
  %v39 = vadd.f32 %v37, 1e-05
  %v40 = vrsqrt.pop %v38
  %v41 = vrsqrt.pop %v39
  %v42 = vmul.f32 %v26, %v40
  %v43 = vmul.f32 %v27, %v41
  %v44 = vld [vmem:[%s1] sm:$0x1]
  %v46 = vlaneseq
  %v47 = vshrl.u32 %v46, 7
  %v48 = vsub.s32 0, %v47
  %v49 = vrot.slane %v44, %v48
  %v51 = vmul.f32 %v42, %v49
  %v52 = vmul.f32 %v43, %v49
  %v53 = vld [vmem:[%s2] sm:$0x1]
  %v55 = vlaneseq
  %v56 = vshrl.u32 %v55, 7
  %v57 = vsub.s32 0, %v56
  %v58 = vrot.slane %v53, %v57
  %v60 = vadd.f32 %v51, %v58
  %v61 = vadd.f32 %v52, %v58
  %62 = vst.msk [vmem:[%s3] sm:$0xff] %vm16, %v60
  %63 = vst.msk [vmem:[%s3 + $0x8] sm:$0xff] %vm16, %v61
  // Predicated region
  $region14: #{_lambda_.58} parent=0 // pred_check
    _
  $region15: #{_lambda_.58} parent=0 // pred_check_branch
    %65 = sbr.rel (0) target = $region17
  $region16: #{_lambda_.58} parent=0 // pred_region
    _
  $region17: #{_lambda_.58} parent=0 // pred_fallthru
    _
  // Predicated region
  $region18: #{_lambda_.58} parent=0 // pred_check
    _
  $region19: #{_lambda_.58} parent=0 // pred_check_branch
    %67 = sbr.rel (0) target = $region21
  $region20: #{_lambda_.58} parent=0 // pred_region
    _
  $region21: #{_lambda_.58} parent=0 // pred_fallthru
    _

// kernel: _lambda_.59
$region0: #{_lambda_.59}
  #allocation0 [shape = 'u32[]', space=smem, size = 0x4, offset = 0x4, fixed_abs, tag = 'smem constant byte address 0x4 - core index']
  #allocation1 [shape = 'u32[144,128]{1,0:T(1,128)}', space=vmem, size = 0x12000, scoped, tag = 'internal scratch']
  %s0 = inlined_call_operand.vmem [shape: bf16[16,32], index: 0, kind: input, shape index: {}]
  %s1 = inlined_call_operand.vmem [shape: bf16[32,32], index: 1, kind: input, shape index: {}]
  %s2 = inlined_call_operand.vmem [shape: f32[1,32], index: 2, kind: input, shape index: {}]
  %s3 = inlined_call_operand.vmem [shape: f32[16,32], index: 3, kind: output, shape index: {}]
  %s4 = sld [smem:[#allocation0]]
  $region22: #{_lambda_.59} parent=0
    _
  %s6 = ssub.s32 1, %s4
  %s7 = scalar_select 0, %s6, %s4
  // Predicated region
  $region2: #{_lambda_.59} parent=0 // pred_check
    _
  $region3: #{_lambda_.59} parent=0 // pred_check_branch
    %9 = sbr.rel (0) target = $region5
  $region4: #{_lambda_.59} parent=0 // pred_region
    _
  $region5: #{_lambda_.59} parent=0 // pred_fallthru
    _
  // Predicated region
  $region6: #{_lambda_.59} parent=0 // pred_check
    _
  $region7: #{_lambda_.59} parent=0 // pred_check_branch
    %11 = sbr.rel (0) target = $region9
  $region8: #{_lambda_.59} parent=0 // pred_region
    _
  $region9: #{_lambda_.59} parent=0 // pred_fallthru
    _
  // Predicated region
  $region10: #{_lambda_.59} parent=0 // pred_check
    _
  $region11: #{_lambda_.59} parent=0 // pred_check_branch
    %13 = sbr.rel (0) target = $region13
  $region12: #{_lambda_.59} parent=0 // pred_region
    _
  $region13: #{_lambda_.59} parent=0 // pred_fallthru
    _
  %v15 = vld [vmem:[%s0] sm:$0xf]
  %v16 = vld [vmem:[%s0 + $0x4] sm:$0xf]
  %v17 = vld [vmem:[%s1] sm:$0xf]
  %v18 = vld [vmem:[%s1 + $0x4] sm:$0xf]
  %v19 = vld [vmem:[%s1 + $0x8] sm:$0xf]
  %v20 = vld [vmem:[%s1 + $0xc] sm:$0xf]
  %v21 = vld [vmem:[%s2] sm:$0x1]
  %v23 = vlaneseq
  %v24 = vshrl.u32 %v23, 7
  %v25 = vsub.s32 0, %v24
  %v26 = vrot.slane %v21, %v25
  %v30 = vunpack.c.l.b16 %v15
  %v31 = vunpack.c.l.b16 %v16
  %v32 = vpack.c.b16 %v31, %v30
  %v37 = vunpack.c.l.b16 %v17
  %v38 = vunpack.c.l.b16 %v18
  %v39 = vunpack.c.l.b16 %v19
  %v40 = vunpack.c.l.b16 %v20
  %v41 = vpack.c.b16 %v38, %v37
  %v42 = vpack.c.b16 %v40, %v39
  %vm45 = vcmask 261120
  %v47 = vsel %vm45, %v32, 0
  %49 = vmatprep.subr.bf16.mxu0 0
  %50 = vmatpush1.bf16.msra.mxu0 %v41
  %51 = vmatprep.subr.bf16.mxu0 0
  %52 = vmatpush1.bf16.msra.mxu0 %v42
  %53 = vmatprep.subr.bf16.mxu0 0
  %54 = vmatpush1.bf16.msra.mxu0 0
  %55 = vmatprep.subr.bf16.mxu0 0
  %56 = vmatpush1.bf16.msra.mxu0 0
  %57 = vmatprep.subr.bf16.mxu0 0
  %58 = vmatpush1.bf16.msra.mxu0 0
  %59 = vmatprep.subr.bf16.mxu0 0
  %60 = vmatpush1.bf16.msra.mxu0 0
  %61 = vmatprep.subr.bf16.mxu0 0
  %62 = vmatpush1.bf16.msra.mxu0 0
  %63 = vmatprep.subr.bf16.mxu0 0
  %64 = vmatpush1.bf16.msra.mxu0 0
  %65 = vmatprep.subr.bf16.mxu0 0
  %66 = vmatpush1.bf16.msra.mxu0 0
  %67 = vmatprep.subr.bf16.mxu0 0
  %68 = vmatpush1.bf16.msra.mxu0 0
  %69 = vmatprep.subr.bf16.mxu0 0
  %70 = vmatpush1.bf16.msra.mxu0 0
  %71 = vmatprep.subr.bf16.mxu0 0
  %72 = vmatpush1.bf16.msra.mxu0 0
  %73 = vmatprep.subr.bf16.mxu0 0
  %74 = vmatpush1.bf16.msra.mxu0 0
  %75 = vmatprep.subr.bf16.mxu0 0
  %76 = vmatpush1.bf16.msra.mxu0 0
  %77 = vmatprep.subr.bf16.mxu0 0
  %78 = vmatpush1.bf16.msra.mxu0 0
  %79 = vmatprep.subr.bf16.mxu0 0
  %80 = vmatpush1.bf16.msra.mxu0 0
  %81 = vmatprep.mubr.bf16.mxu0 0
  %82 = vmatmul.mubr.bf16.gmra.mrb[0].mxu0 %v47
  %v83 = vpop.f32.mrb[0].mxu0
  %v84 = vadd.f32 %v26, %v83
  %v85 = vpop.f32.mrb[0].mxu0
  %v86 = vpop.f32.mrb[0].mxu0
  %v87 = vadd.f32 %v26, %v86
  %v88 = vpop.f32.mrb[0].mxu0
  %89 = vdwg.mxu0
  %90 = vst.msk [vmem:[%s3] sm:$0xff] %vm45, %v84
  %91 = vst.msk [vmem:[%s3 + $0x8] sm:$0xff] %vm45, %v87
  // Predicated region
  $region14: #{_lambda_.59} parent=0 // pred_check
    _
  $region15: #{_lambda_.59} parent=0 // pred_check_branch
    %93 = sbr.rel (0) target = $region17
  $region16: #{_lambda_.59} parent=0 // pred_region
    _
  $region17: #{_lambda_.59} parent=0 // pred_fallthru
    _
  // Predicated region
  $region18: #{_lambda_.59} parent=0 // pred_check
    _
  $region19: #{_lambda_.59} parent=0 // pred_check_branch
    %95 = sbr.rel (0) target = $region21
  $region20: #{_lambda_.59} parent=0 // pred_region
    _
  $region21: #{_lambda_.59} parent=0 // pred_fallthru
    _

// kernel: _lambda_.60
$region0: #{_lambda_.60}
  #allocation0 [shape = 'u32[]', space=smem, size = 0x4, offset = 0x4, fixed_abs, tag = 'smem constant byte address 0x4 - core index']
  #allocation1 [shape = 'u32[144,128]{1,0:T(1,128)}', space=vmem, size = 0x12000, scoped, tag = 'internal scratch']
  %s0 = inlined_call_operand.vmem [shape: bf16[16,32], index: 0, kind: input, shape index: {}]
  %s1 = inlined_call_operand.vmem [shape: bf16[32,64], index: 1, kind: input, shape index: {}]
  %s2 = inlined_call_operand.vmem [shape: f32[1,64], index: 2, kind: input, shape index: {}]
  %s3 = inlined_call_operand.vmem [shape: f32[16,64], index: 3, kind: output, shape index: {}]
  %s4 = sld [smem:[#allocation0]]
  $region22: #{_lambda_.60} parent=0
    _
  %s6 = ssub.s32 1, %s4
  %s7 = scalar_select 0, %s6, %s4
  // Predicated region
  $region2: #{_lambda_.60} parent=0 // pred_check
    _
  $region3: #{_lambda_.60} parent=0 // pred_check_branch
    %9 = sbr.rel (0) target = $region5
  $region4: #{_lambda_.60} parent=0 // pred_region
    _
  $region5: #{_lambda_.60} parent=0 // pred_fallthru
    _
  // Predicated region
  $region6: #{_lambda_.60} parent=0 // pred_check
    _
  $region7: #{_lambda_.60} parent=0 // pred_check_branch
    %11 = sbr.rel (0) target = $region9
  $region8: #{_lambda_.60} parent=0 // pred_region
    _
  $region9: #{_lambda_.60} parent=0 // pred_fallthru
    _
  // Predicated region
  $region10: #{_lambda_.60} parent=0 // pred_check
    _
  $region11: #{_lambda_.60} parent=0 // pred_check_branch
    %13 = sbr.rel (0) target = $region13
  $region12: #{_lambda_.60} parent=0 // pred_region
    _
  $region13: #{_lambda_.60} parent=0 // pred_fallthru
    _
  %v15 = vld [vmem:[%s0] sm:$0xf]
  %v16 = vld [vmem:[%s0 + $0x4] sm:$0xf]
  %v17 = vld [vmem:[%s1] sm:$0xf]
  %v18 = vld [vmem:[%s1 + $0x4] sm:$0xf]
  %v19 = vld [vmem:[%s1 + $0x8] sm:$0xf]
  %v20 = vld [vmem:[%s1 + $0xc] sm:$0xf]
  %v21 = vld [vmem:[%s2] sm:$0x1]
  %v23 = vlaneseq
  %v24 = vshrl.u32 %v23, 7
  %v25 = vsub.s32 0, %v24
  %v26 = vrot.slane %v21, %v25
  %v30 = vunpack.c.l.b16 %v15
  %v31 = vunpack.c.l.b16 %v16
  %v32 = vpack.c.b16 %v31, %v30
  %v37 = vunpack.c.l.b16 %v17
  %v38 = vunpack.c.l.b16 %v18
  %v39 = vunpack.c.l.b16 %v19
  %v40 = vunpack.c.l.b16 %v20
  %v41 = vpack.c.b16 %v38, %v37
  %v42 = vpack.c.b16 %v40, %v39
  %vm45 = vcmask 261120
  %v47 = vsel %vm45, %v32, 0
  %49 = vmatprep.subr.bf16.mxu0 0
  %50 = vmatpush1.bf16.msra.mxu0 %v41
  %51 = vmatprep.subr.bf16.mxu0 0
  %52 = vmatpush1.bf16.msra.mxu0 %v42
  %53 = vmatprep.subr.bf16.mxu0 0
  %54 = vmatpush1.bf16.msra.mxu0 0
  %55 = vmatprep.subr.bf16.mxu0 0
  %56 = vmatpush1.bf16.msra.mxu0 0
  %57 = vmatprep.subr.bf16.mxu0 0
  %58 = vmatpush1.bf16.msra.mxu0 0
  %59 = vmatprep.subr.bf16.mxu0 0
  %60 = vmatpush1.bf16.msra.mxu0 0
  %61 = vmatprep.subr.bf16.mxu0 0
  %62 = vmatpush1.bf16.msra.mxu0 0
  %63 = vmatprep.subr.bf16.mxu0 0
  %64 = vmatpush1.bf16.msra.mxu0 0
  %65 = vmatprep.subr.bf16.mxu0 0
  %66 = vmatpush1.bf16.msra.mxu0 0
  %67 = vmatprep.subr.bf16.mxu0 0
  %68 = vmatpush1.bf16.msra.mxu0 0
  %69 = vmatprep.subr.bf16.mxu0 0
  %70 = vmatpush1.bf16.msra.mxu0 0
  %71 = vmatprep.subr.bf16.mxu0 0
  %72 = vmatpush1.bf16.msra.mxu0 0
  %73 = vmatprep.subr.bf16.mxu0 0
  %74 = vmatpush1.bf16.msra.mxu0 0
  %75 = vmatprep.subr.bf16.mxu0 0
  %76 = vmatpush1.bf16.msra.mxu0 0
  %77 = vmatprep.subr.bf16.mxu0 0
  %78 = vmatpush1.bf16.msra.mxu0 0
  %79 = vmatprep.subr.bf16.mxu0 0
  %80 = vmatpush1.bf16.msra.mxu0 0
  %81 = vmatprep.mubr.bf16.mxu0 0
  %82 = vmatmul.mubr.bf16.gmra.mrb[0].mxu0 %v47
  %v83 = vpop.f32.mrb[0].mxu0
  %v84 = vadd.f32 %v26, %v83
  %v85 = vpop.f32.mrb[0].mxu0
  %v86 = vpop.f32.mrb[0].mxu0
  %v87 = vadd.f32 %v26, %v86
  %v88 = vpop.f32.mrb[0].mxu0
  %89 = vdwg.mxu0
  %vm90 = vcmask 523264
  %91 = vst.msk [vmem:[%s3] sm:$0xff] %vm90, %v84
  %92 = vst.msk [vmem:[%s3 + $0x8] sm:$0xff] %vm90, %v87
  // Predicated region
  $region14: #{_lambda_.60} parent=0 // pred_check
    _
  $region15: #{_lambda_.60} parent=0 // pred_check_branch
    %94 = sbr.rel (0) target = $region17
  $region16: #{_lambda_.60} parent=0 // pred_region
    _
  $region17: #{_lambda_.60} parent=0 // pred_fallthru
    _
  // Predicated region
  $region18: #{_lambda_.60} parent=0 // pred_check
    _
  $region19: #{_lambda_.60} parent=0 // pred_check_branch
    %96 = sbr.rel (0) target = $region21
  $region20: #{_lambda_.60} parent=0 // pred_region
    _
  $region21: #{_lambda_.60} parent=0 // pred_fallthru
    _

// kernel: _lambda_.63
$region0: #{_lambda_.63}
  #allocation0 [shape = 'u32[]', space=smem, size = 0x4, offset = 0x4, fixed_abs, tag = 'smem constant byte address 0x4 - core index']
  #allocation1 [shape = 'u32[144,128]{1,0:T(1,128)}', space=vmem, size = 0x12000, scoped, tag = 'internal scratch']
  %s0 = inlined_call_operand.vmem [shape: f32[16,32], index: 0, kind: input, shape index: {}]
  %s1 = inlined_call_operand.vmem [shape: f32[16,32], index: 1, kind: input, shape index: {}]
  %s2 = inlined_call_operand.vmem [shape: f32[1,32], index: 2, kind: input, shape index: {}]
  %s3 = inlined_call_operand.vmem [shape: f32[1,32], index: 3, kind: input, shape index: {}]
  %s4 = inlined_call_operand.vmem [shape: f32[16,32], index: 4, kind: output, shape index: {}]
  %s5 = sld [smem:[#allocation0]]
  $region26: #{_lambda_.63} parent=0
    _
  %s7 = ssub.s32 1, %s5
  %s8 = scalar_select 0, %s7, %s5
  // Predicated region
  $region2: #{_lambda_.63} parent=0 // pred_check
    _
  $region3: #{_lambda_.63} parent=0 // pred_check_branch
    %10 = sbr.rel (0) target = $region5
  $region4: #{_lambda_.63} parent=0 // pred_region
    _
  $region5: #{_lambda_.63} parent=0 // pred_fallthru
    _
  // Predicated region
  $region6: #{_lambda_.63} parent=0 // pred_check
    _
  $region7: #{_lambda_.63} parent=0 // pred_check_branch
    %12 = sbr.rel (0) target = $region9
  $region8: #{_lambda_.63} parent=0 // pred_region
    _
  $region9: #{_lambda_.63} parent=0 // pred_fallthru
    _
  // Predicated region
  $region10: #{_lambda_.63} parent=0 // pred_check
    _
  $region11: #{_lambda_.63} parent=0 // pred_check_branch
    %14 = sbr.rel (0) target = $region13
  $region12: #{_lambda_.63} parent=0 // pred_region
    _
  $region13: #{_lambda_.63} parent=0 // pred_fallthru
    _
  // Predicated region
  $region14: #{_lambda_.63} parent=0 // pred_check
    _
  $region15: #{_lambda_.63} parent=0 // pred_check_branch
    %16 = sbr.rel (0) target = $region17
  $region16: #{_lambda_.63} parent=0 // pred_region
    _
  $region17: #{_lambda_.63} parent=0 // pred_fallthru
    _
  %v17 = vld [vmem:[%s0] sm:$0xff]
  %v18 = vld [vmem:[%s0 + $0x8] sm:$0xff]
  %v19 = vld [vmem:[%s1] sm:$0xff]
  %v20 = vld [vmem:[%s1 + $0x8] sm:$0xff]
  %v21 = vadd.f32 %v17, %v19
  %v22 = vadd.f32 %v18, %v20
  %vm23 = vcmask 261120
  %v24 = vsel %vm23, %v21, 0.0
  %25 = vadd.xlane.f32.xlu0 %v24
  %v26 = vpop.xlane.xlu0 %25
  %v27 = vsel %vm23, %v22, 0.0
  %28 = vadd.xlane.f32.xlu0 %v27
  %v29 = vpop.xlane.xlu0 %28
  %v30 = vrcp.pop 32.0
  %v31 = vmul.f32 %v26, %v30
  %v32 = vmul.f32 %v29, %v30
  %v33 = vsub.f32 %v21, %v31
  %v34 = vsub.f32 %v22, %v32
  %v35 = vmul.f32 %v33, %v33
  %v36 = vmul.f32 %v34, %v34
  %v37 = vsel %vm23, %v35, 0.0
  %38 = vadd.xlane.f32.xlu0 %v37
  %v39 = vpop.xlane.xlu0 %38
  %v40 = vsel %vm23, %v36, 0.0
  %41 = vadd.xlane.f32.xlu0 %v40
  %v42 = vpop.xlane.xlu0 %41
  %v43 = vmul.f32 %v39, %v30
  %v44 = vmul.f32 %v42, %v30
  %v45 = vadd.f32 %v43, 1e-05
  %v46 = vadd.f32 %v44, 1e-05
  %v47 = vrsqrt.pop %v45
  %v48 = vrsqrt.pop %v46
  %v49 = vmul.f32 %v33, %v47
  %v50 = vmul.f32 %v34, %v48
  %v51 = vld [vmem:[%s2] sm:$0x1]
  %v53 = vlaneseq
  %v54 = vshrl.u32 %v53, 7
  %v55 = vsub.s32 0, %v54
  %v56 = vrot.slane %v51, %v55
  %v58 = vmul.f32 %v49, %v56
  %v59 = vmul.f32 %v50, %v56
  %v60 = vld [vmem:[%s3] sm:$0x1]
  %v62 = vlaneseq
  %v63 = vshrl.u32 %v62, 7
  %v64 = vsub.s32 0, %v63
  %v65 = vrot.slane %v60, %v64
  %v67 = vadd.f32 %v58, %v65
  %v68 = vadd.f32 %v59, %v65
  %69 = vst.msk [vmem:[%s4] sm:$0xff] %vm23, %v67
  %70 = vst.msk [vmem:[%s4 + $0x8] sm:$0xff] %vm23, %v68
  // Predicated region
  $region18: #{_lambda_.63} parent=0 // pred_check
    _
  $region19: #{_lambda_.63} parent=0 // pred_check_branch
    %72 = sbr.rel (0) target = $region21
  $region20: #{_lambda_.63} parent=0 // pred_region
    _
  $region21: #{_lambda_.63} parent=0 // pred_fallthru
    _
  // Predicated region
  $region22: #{_lambda_.63} parent=0 // pred_check
    _
  $region23: #{_lambda_.63} parent=0 // pred_check_branch
    %74 = sbr.rel (0) target = $region25
  $region24: #{_lambda_.63} parent=0 // pred_region
    _
  $region25: #{_lambda_.63} parent=0 // pred_fallthru
    _

// kernel: _lambda_.65
$region0: #{_lambda_.65}
  #allocation0 [shape = 'u32[]', space=smem, size = 0x4, offset = 0x4, fixed_abs, tag = 'smem constant byte address 0x4 - core index']
  #allocation1 [shape = 'u32[144,128]{1,0:T(1,128)}', space=vmem, size = 0x12000, scoped, tag = 'internal scratch']
  %s0 = inlined_call_operand.vmem [shape: bf16[12,32], index: 0, kind: input, shape index: {}]
  %s1 = inlined_call_operand.vmem [shape: bf16[32,64], index: 1, kind: input, shape index: {}]
  %s2 = inlined_call_operand.vmem [shape: f32[1,64], index: 2, kind: input, shape index: {}]
  %s3 = inlined_call_operand.vmem [shape: f32[12,64], index: 3, kind: output, shape index: {}]
  %s4 = sld [smem:[#allocation0]]
  $region22: #{_lambda_.65} parent=0
    _
  %s6 = ssub.s32 1, %s4
  %s7 = scalar_select 0, %s6, %s4
  // Predicated region
  $region2: #{_lambda_.65} parent=0 // pred_check
    _
  $region3: #{_lambda_.65} parent=0 // pred_check_branch
    %9 = sbr.rel (0) target = $region5
  $region4: #{_lambda_.65} parent=0 // pred_region
    _
  $region5: #{_lambda_.65} parent=0 // pred_fallthru
    _
  // Predicated region
  $region6: #{_lambda_.65} parent=0 // pred_check
    _
  $region7: #{_lambda_.65} parent=0 // pred_check_branch
    %11 = sbr.rel (0) target = $region9
  $region8: #{_lambda_.65} parent=0 // pred_region
    _
  $region9: #{_lambda_.65} parent=0 // pred_fallthru
    _
  // Predicated region
  $region10: #{_lambda_.65} parent=0 // pred_check
    _
  $region11: #{_lambda_.65} parent=0 // pred_check_branch
    %13 = sbr.rel (0) target = $region13
  $region12: #{_lambda_.65} parent=0 // pred_region
    _
  $region13: #{_lambda_.65} parent=0 // pred_fallthru
    _
  %v15 = vld [vmem:[%s0] sm:$0xf]
  %v16 = vld [vmem:[%s0 + $0x4] sm:$0x3]
  %v17 = vld [vmem:[%s1] sm:$0xf]
  %v18 = vld [vmem:[%s1 + $0x4] sm:$0xf]
  %v19 = vld [vmem:[%s1 + $0x8] sm:$0xf]
  %v20 = vld [vmem:[%s1 + $0xc] sm:$0xf]
  %v21 = vld [vmem:[%s2] sm:$0x1]
  %v23 = vlaneseq
  %v24 = vshrl.u32 %v23, 7
  %v25 = vsub.s32 0, %v24
  %v26 = vrot.slane %v21, %v25
  %v30 = vunpack.c.l.b16 %v15
  %v31 = vunpack.c.l.b16 %v16
  %v32 = vpack.c.b16 %v31, %v30
  %v37 = vunpack.c.l.b16 %v17
  %v38 = vunpack.c.l.b16 %v18
  %v39 = vunpack.c.l.b16 %v19
  %v40 = vunpack.c.l.b16 %v20
  %v41 = vpack.c.b16 %v38, %v37
  %v42 = vpack.c.b16 %v40, %v39
  %vm45 = vcmask 261120
  %v47 = vsel %vm45, %v32, 0
  %49 = vmatprep.subr.bf16.mxu0 0
  %50 = vmatpush1.bf16.msra.mxu0 %v41
  %51 = vmatprep.subr.bf16.mxu0 0
  %52 = vmatpush1.bf16.msra.mxu0 %v42
  %53 = vmatprep.subr.bf16.mxu0 0
  %54 = vmatpush1.bf16.msra.mxu0 0
  %55 = vmatprep.subr.bf16.mxu0 0
  %56 = vmatpush1.bf16.msra.mxu0 0
  %57 = vmatprep.subr.bf16.mxu0 0
  %58 = vmatpush1.bf16.msra.mxu0 0
  %59 = vmatprep.subr.bf16.mxu0 0
  %60 = vmatpush1.bf16.msra.mxu0 0
  %61 = vmatprep.subr.bf16.mxu0 0
  %62 = vmatpush1.bf16.msra.mxu0 0
  %63 = vmatprep.subr.bf16.mxu0 0
  %64 = vmatpush1.bf16.msra.mxu0 0
  %65 = vmatprep.subr.bf16.mxu0 0
  %66 = vmatpush1.bf16.msra.mxu0 0
  %67 = vmatprep.subr.bf16.mxu0 0
  %68 = vmatpush1.bf16.msra.mxu0 0
  %69 = vmatprep.subr.bf16.mxu0 0
  %70 = vmatpush1.bf16.msra.mxu0 0
  %71 = vmatprep.subr.bf16.mxu0 0
  %72 = vmatpush1.bf16.msra.mxu0 0
  %73 = vmatprep.subr.bf16.mxu0 0
  %74 = vmatpush1.bf16.msra.mxu0 0
  %75 = vmatprep.subr.bf16.mxu0 0
  %76 = vmatpush1.bf16.msra.mxu0 0
  %77 = vmatprep.subr.bf16.mxu0 0
  %78 = vmatpush1.bf16.msra.mxu0 0
  %79 = vmatprep.subr.bf16.mxu0 0
  %80 = vmatpush1.bf16.msra.mxu0 0
  %81 = vmatprep.mubr.bf16.mxu0 0
  %82 = vmatmul.mubr.bf16.gmra.mrb[0].mxu0 %v47
  %v83 = vpop.f32.mrb[0].mxu0
  %v84 = vadd.f32 %v26, %v83
  %v85 = vpop.f32.mrb[0].mxu0
  %v86 = vpop.f32.mrb[0].mxu0
  %v87 = vadd.f32 %v26, %v86
  %v88 = vpop.f32.mrb[0].mxu0
  %89 = vdwg.mxu0
  %vm90 = vcmask 523264
  %91 = vst.msk [vmem:[%s3] sm:$0xff] %vm90, %v84
  %vm92 = vcmask 519168
  %93 = vst.msk [vmem:[%s3 + $0x8] sm:$0xf] %vm92, %v87
  // Predicated region
  $region14: #{_lambda_.65} parent=0 // pred_check
    _
  $region15: #{_lambda_.65} parent=0 // pred_check_branch
    %95 = sbr.rel (0) target = $region17
  $region16: #{_lambda_.65} parent=0 // pred_region
    _
  $region17: #{_lambda_.65} parent=0 // pred_fallthru
    _
  // Predicated region
  $region18: #{_lambda_.65} parent=0 // pred_check
    _
  $region19: #{_lambda_.65} parent=0 // pred_check_branch
    %97 = sbr.rel (0) target = $region21
  $region20: #{_lambda_.65} parent=0 // pred_region
    _
  $region21: #{_lambda_.65} parent=0 // pred_fallthru
    _

// kernel: _lambda_.66
$region0: #{_lambda_.66}
  #allocation0 [shape = 'u32[]', space=smem, size = 0x4, offset = 0x4, fixed_abs, tag = 'smem constant byte address 0x4 - core index']
  #allocation1 [shape = 'u32[144,128]{1,0:T(1,128)}', space=vmem, size = 0x12000, scoped, tag = 'internal scratch']
  %s0 = inlined_call_operand.vmem [shape: bf16[2,8,32], index: 0, kind: input, shape index: {}]
  %s1 = inlined_call_operand.vmem [shape: bf16[2,6,32], index: 1, kind: input, shape index: {}]
  %s2 = inlined_call_operand.vmem [shape: bf16[2,6,32], index: 2, kind: input, shape index: {}]
  %s3 = inlined_call_operand.vmem [shape: f32[2,8,32], index: 3, kind: output, shape index: {}]
  %s4 = sld [smem:[#allocation0]]
  $region45: #{_lambda_.66} parent=0
    _
  %s6 = ssub.s32 1, %s4
  %s7 = scalar_select 0, %s6, %s4
  loop: start=0, step=1, limit=4
  $region2: #{_lambda_.66} parent=0 // loop_pre_header
    _
  $region3: #{_lambda_.66} parent=0 // loop_header
    %s9 = sphi 0, %s13
    %p10 = scmp.ge.s32.totalorder %s9, 4
    %s16 = sphi 0, %s28
    %s17 = sphi 0, %s24
    %s18 = sphi 0, %s16
    %s19 = sphi 0, %s17
    %s20 = sphi 0, %s18
    %s21 = sphi 0, %s19
    %s33 = sphi 0, %s35
    %s36 = sphi 0, %s33
    %s37 = sphi 0, %s36
    %s53 = sphi 0, %s37
    %s59 = sphi 0, %s61
    %s62 = sphi 0, %s59
    %s63 = sphi 0, %s62
    %s79 = sphi 0, %s63
    %s85 = sphi 0, %s87
    %s88 = sphi 0, %s85
    %s89 = sphi 0, %s88
    %s105 = sphi 0, %s89
    %s113 = sphi 0, %s115
    %s116 = sphi 0, %s113
    %s117 = sphi 0, %s116
    %s133 = sphi 0, %s117
  $region4: #{_lambda_.66} parent=0 // loop_header_branch
    %12 = sbr.rel (%p10) target = $region8
  $region5: #{_lambda_.66} parent=0 // loop_body
    %s14 = ssub.s32 %s9, 1
    %s15 = ssub.s32 %s9, 2
    %s22 = sadd.s32 1, %s17
    %p23 = scmp.ge.s32.totalorder %s22, 1
    %s24 = scalar_select %p23, 0, %s22
    %s25 = sadd.s32 1, %s16
    %s26 = scalar_select %p23, %s25, %s16
    %p27 = scmp.ge.s32.totalorder %s26, 2
    %s28 = scalar_select %p27, 0, %s26
    %s29 = ssub.s32 %s16, %s28
    %s30 = ssub.s32 %s17, %s24
    %s31 = sor.u32 %s29, %s30
    %p32 = scmp.eq.s32.totalorder %s31, 0
    %s34 = sadd.s32 %s33, 1
    %s35 = scalar_select %p32, %s33, %s34
    %p38 = pneg %p32
    %p39 = scmp.eq.s32.totalorder %s9, 1
    %p40 = por %p38, %p39
    %p41 = scmp.ne.s32.totalorder %s33, %s36
    %p42 = scmp.eq.s32.totalorder %s9, 0
    %p43 = por %p41, %p42
    %p44 = scmp.ne.s32.totalorder %s33, %s36
    %p45 = scmp.eq.s32.totalorder %s14, 1
    %p46 = por %p44, %p45
    %p47 = scmp.ne.s32.totalorder %s36, %s37
    %p48 = scmp.eq.s32.totalorder %s14, 0
    %p49 = por %p47, %p48
    %p50 = scmp.ne.s32.totalorder %s36, %s37
    %p51 = scmp.eq.s32.totalorder %s15, 1
    %p52 = por %p50, %p51
    %p54 = scmp.ne.s32.totalorder %s37, %s53
    %p55 = scmp.eq.s32.totalorder %s15, 0
    %p56 = por %p54, %p55
    %s57 = ssub.s32 %s16, %s28
    %p58 = scmp.eq.s32.totalorder %s57, 0
    %s60 = sadd.s32 %s59, 1
    %s61 = scalar_select %p58, %s59, %s60
    %p64 = pneg %p58
    %p65 = scmp.eq.s32.totalorder %s9, 1
    %p66 = por %p64, %p65
    %p67 = scmp.ne.s32.totalorder %s59, %s62
    %p68 = scmp.eq.s32.totalorder %s9, 0
    %p69 = por %p67, %p68
    %p70 = scmp.ne.s32.totalorder %s59, %s62
    %p71 = scmp.eq.s32.totalorder %s14, 1
    %p72 = por %p70, %p71
    %p73 = scmp.ne.s32.totalorder %s62, %s63
    %p74 = scmp.eq.s32.totalorder %s14, 0
    %p75 = por %p73, %p74
    %p76 = scmp.ne.s32.totalorder %s62, %s63
    %p77 = scmp.eq.s32.totalorder %s15, 1
    %p78 = por %p76, %p77
    %p80 = scmp.ne.s32.totalorder %s63, %s79
    %p81 = scmp.eq.s32.totalorder %s15, 0
    %p82 = por %p80, %p81
    %s83 = ssub.s32 %s16, %s28
    %p84 = scmp.eq.s32.totalorder %s83, 0
    %s86 = sadd.s32 %s85, 1
    %s87 = scalar_select %p84, %s85, %s86
    %p90 = pneg %p84
    %p91 = scmp.eq.s32.totalorder %s9, 1
    %p92 = por %p90, %p91
    %p93 = scmp.ne.s32.totalorder %s85, %s88
    %p94 = scmp.eq.s32.totalorder %s9, 0
    %p95 = por %p93, %p94
    %p96 = scmp.ne.s32.totalorder %s85, %s88
    %p97 = scmp.eq.s32.totalorder %s14, 1
    %p98 = por %p96, %p97
    %p99 = scmp.ne.s32.totalorder %s88, %s89
    %p100 = scmp.eq.s32.totalorder %s14, 0
    %p101 = por %p99, %p100
    %p102 = scmp.ne.s32.totalorder %s88, %s89
    %p103 = scmp.eq.s32.totalorder %s15, 1
    %p104 = por %p102, %p103
    %p106 = scmp.ne.s32.totalorder %s89, %s105
    %p107 = scmp.eq.s32.totalorder %s15, 0
    %p108 = por %p106, %p107
    %s109 = ssub.s32 %s16, %s28
    %s110 = ssub.s32 %s17, %s24
    %s111 = sor.u32 %s109, %s110
    %p112 = scmp.eq.s32.totalorder %s111, 0
    %s114 = sadd.s32 %s113, 1
    %s115 = scalar_select %p112, %s113, %s114
    %p118 = pneg %p112
    %p119 = scmp.eq.s32.totalorder %s9, 1
    %p120 = por %p118, %p119
    %p121 = scmp.ne.s32.totalorder %s113, %s116
    %p122 = scmp.eq.s32.totalorder %s9, 0
    %p123 = por %p121, %p122
    %p124 = scmp.ne.s32.totalorder %s113, %s116
    %p125 = scmp.eq.s32.totalorder %s14, 1
    %p126 = por %p124, %p125
    %p127 = scmp.ne.s32.totalorder %s116, %s117
    %p128 = scmp.eq.s32.totalorder %s14, 0
    %p129 = por %p127, %p128
    %p130 = scmp.ne.s32.totalorder %s116, %s117
    %p131 = scmp.eq.s32.totalorder %s15, 1
    %p132 = por %p130, %p131
    %p134 = scmp.ne.s32.totalorder %s117, %s133
    %p135 = scmp.eq.s32.totalorder %s15, 0
    %p136 = por %p134, %p135
    %p137 = scmp.le.s32.totalorder 1, %s9
    %p138 = scmp.lt.s32.totalorder %s9, 3
    %p139 = pnand %p137, %p138
    %p140 = pneg %p139
    // Predicated region
    $region9: #{_lambda_.66} parent=5 // pred_check
      _
    $region10: #{_lambda_.66} parent=5 // pred_check_branch
      %142 = sbr.rel (%p139) target = $region12
    $region11: #{_lambda_.66} parent=5 // pred_region
      %s143 = ssub.s32 %s9, 1
    $region12: #{_lambda_.66} parent=5 // pred_fallthru
      _
    %p144 = scmp.lt.s32.totalorder %s9, 2
    // Predicated region
    $region13: #{_lambda_.66} parent=5 // pred_check
      %p145 = pneg %p144
    $region14: #{_lambda_.66} parent=5 // pred_check_branch
      %147 = sbr.rel (%p145) target = $region16
    $region15: #{_lambda_.66} parent=5 // pred_region
      // Predicated region
      $region17: #{_lambda_.66} parent=15 // pred_check
        %p148 = pneg %p43
      $region18: #{_lambda_.66} parent=15 // pred_check_branch
        %150 = sbr.rel (%p148) target = $region20
      $region19: #{_lambda_.66} parent=15 // pred_region
        %p151 = scmp.lt.s32.totalorder %s16, 1
        %s152 = scalar_select %p151, %s16, 1
        %p153 = scmp.lt.s32.totalorder %s17, 0
        %s154 = scalar_select %p153, %s17, 0
        %s155 = sadd.s32 %s154, %s152
        %s156 = smul.addr %s155, 4
        %s157 = scalar_lea.vmem %s0, %s156
      $region20: #{_lambda_.66} parent=15 // pred_fallthru
        _
      // Predicated region
      $region21: #{_lambda_.66} parent=15 // pred_check
        %p158 = pneg %p69
      $region22: #{_lambda_.66} parent=15 // pred_check_branch
        %160 = sbr.rel (%p158) target = $region24
      $region23: #{_lambda_.66} parent=15 // pred_region
        %p161 = scmp.lt.s32.totalorder %s16, 1
        %s162 = scalar_select %p161, %s16, 1
        %s163 = smul.addr %s162, 4
        %s164 = scalar_lea.vmem %s1, %s163
      $region24: #{_lambda_.66} parent=15 // pred_fallthru
        _
      // Predicated region
      $region25: #{_lambda_.66} parent=15 // pred_check
        %p165 = pneg %p95
      $region26: #{_lambda_.66} parent=15 // pred_check_branch
        %167 = sbr.rel (%p165) target = $region28
      $region27: #{_lambda_.66} parent=15 // pred_region
        %p168 = scmp.lt.s32.totalorder %s16, 1
        %s169 = scalar_select %p168, %s16, 1
        %s170 = smul.addr %s169, 4
        %s171 = scalar_lea.vmem %s2, %s170
      $region28: #{_lambda_.66} parent=15 // pred_fallthru
        _
    $region16: #{_lambda_.66} parent=5 // pred_fallthru
      _
    %p172 = scmp.le.s32.totalorder 1, %s9
    %p173 = scmp.lt.s32.totalorder %s9, 3
    %p174 = pnand %p172, %p173
    %p175 = pneg %p174
    // Predicated region
    $region29: #{_lambda_.66} parent=5 // pred_check
      _
    $region30: #{_lambda_.66} parent=5 // pred_check_branch
      %177 = sbr.rel (%p174) target = $region32
    $region31: #{_lambda_.66} parent=5 // pred_region
      %s178 = ssub.s32 %s9, 1
      %p179 = scmp.lt.s32.totalorder %s18, 1
      %s180 = scalar_select %p179, %s18, 1
      %p181 = scmp.lt.s32.totalorder %s19, 0
      %s182 = scalar_select %p181, %s19, 0
      %s183 = sadd.s32 %s182, %s180
      %s184 = smul.addr %s183, 4
      %s185 = scalar_lea.vmem %s0, %s184
      %p186 = pneg %p49
      %p187 = pneg %p46
      %p188 = scmp.lt.s32.totalorder %s18, 1
      %s189 = scalar_select %p188, %s18, 1
      %s190 = smul.addr %s189, 4
      %s191 = scalar_lea.vmem %s1, %s190
      %p192 = pneg %p75
      %p193 = pneg %p72
      %p194 = scmp.lt.s32.totalorder %s18, 1
      %s195 = scalar_select %p194, %s18, 1
      %s196 = smul.addr %s195, 4
      %s197 = scalar_lea.vmem %s2, %s196
      %p198 = pneg %p101
      %p199 = pneg %p98
      %p200 = pneg %p129
      %p201 = pneg %p126
      %p202 = scmp.lt.s32.totalorder %s18, 1
      %s203 = scalar_select %p202, %s18, 1
      %p204 = scmp.lt.s32.totalorder %s19, 0
      %s205 = scalar_select %p204, %s19, 0
      %s206 = sadd.s32 %s205, %s203
      %s207 = smul.addr %s206, 8
      %s208 = scalar_lea.vmem %s3, %s207
      %p209 = scmp.lt.s32.totalorder %s18, 1
      %s210 = scalar_select %p209, %s18, 1
      %p211 = scmp.lt.s32.totalorder %s19, 0
      %s212 = scalar_select %p211, %s19, 0
      %s213 = sadd.s32 %s212, %s210
      %s214 = smul.addr %s213, 4
      %s215 = scalar_lea.vmem %s0, %s214
      %p216 = scmp.lt.s32.totalorder %s18, 1
      %s217 = scalar_select %p216, %s18, 1
      %s218 = smul.addr %s217, 4
      %s219 = scalar_lea.vmem %s1, %s218
      %p220 = scmp.lt.s32.totalorder %s18, 1
      %s221 = scalar_select %p220, %s18, 1
      %s222 = smul.addr %s221, 4
      %s223 = scalar_lea.vmem %s2, %s222
      %p224 = scmp.lt.s32.totalorder %s18, 1
      %s225 = scalar_select %p224, %s18, 1
      %p226 = scmp.lt.s32.totalorder %s19, 0
      %s227 = scalar_select %p226, %s19, 0
      %s228 = sadd.s32 %s227, %s225
      %s229 = smul.addr %s228, 8
      %s230 = scalar_lea.vmem %s3, %s229
      %v232 = vld [vmem:[%s215] sm:$0xf]
      %v233 = vld [vmem:[%s219] sm:$0x7]
      %v234 = vld [vmem:[%s223] sm:$0x7]
      %s235 = smul.u32 %s19, 8
      %v236 = vlaneseq
      %v237 = vshrl.u32 %v236, 7
      %v238 = vstv %s235
      %v239 = vadd.s32 %v238, %v237
      %v240 = vlaneseq
      %v241 = vand.u32 %v240, 127
      %vm242 = vcmp.gt.s32.totalorder %v241, %v239
      %v243 = vsel %vm242, -1e+12, 0.0
      %vm244 = vcmask 64512
      %v246 = vsel %vm244, %v232, 0
      %v249 = vsel %vm244, %v233, 0
      %251 = vmatprep.subr.bf16.mxu0 0
      %252 = vmatpush1.bf16.xpose.msra.mxu0 %v249
      %253 = vmatprep.subr.bf16.mxu0 0
      %254 = vmatpush1.bf16.xpose.msra.mxu0 0
      %255 = vmatprep.subr.bf16.mxu0 0
      %256 = vmatpush1.bf16.xpose.msra.mxu0 0
      %257 = vmatprep.subr.bf16.mxu0 0
      %258 = vmatpush1.bf16.xpose.msra.mxu0 0
      %259 = vmatprep.subr.bf16.mxu0 0
      %260 = vmatpush1.bf16.xpose.msra.mxu0 0
      %261 = vmatprep.subr.bf16.mxu0 0
      %262 = vmatpush1.bf16.xpose.msra.mxu0 0
      %263 = vmatprep.subr.bf16.mxu0 0
      %264 = vmatpush1.bf16.xpose.msra.mxu0 0
      %265 = vmatprep.subr.bf16.mxu0 0
      %266 = vmatpush1.bf16.xpose.msra.mxu0 0
      %267 = vmatprep.subr.bf16.mxu0 0
      %268 = vmatpush1.bf16.xpose.msra.mxu0 0
      %269 = vmatprep.subr.bf16.mxu0 0
      %270 = vmatpush1.bf16.xpose.msra.mxu0 0
      %271 = vmatprep.subr.bf16.mxu0 0
      %272 = vmatpush1.bf16.xpose.msra.mxu0 0
      %273 = vmatprep.subr.bf16.mxu0 0
      %274 = vmatpush1.bf16.xpose.msra.mxu0 0
      %275 = vmatprep.subr.bf16.mxu0 0
      %276 = vmatpush1.bf16.xpose.msra.mxu0 0
      %277 = vmatprep.subr.bf16.mxu0 0
      %278 = vmatpush1.bf16.xpose.msra.mxu0 0
      %279 = vmatprep.subr.bf16.mxu0 0
      %280 = vmatpush1.bf16.xpose.msra.mxu0 0
      %281 = vmatprep.subr.bf16.mxu0 0
      %282 = vmatpush1.bf16.xpose.msra.mxu0 0
      %283 = vmatprep.mubr.bf16.mxu0 0
      %284 = vmatmul.mubr.bf16.gmra.mrb[0].mxu0 %v246
      %v285 = vpop.f32.mrb[0].mxu0
      %v286 = vadd.f32 %v243, %v285
      %v287 = vpop.f32.mrb[0].mxu0
      %v288 = vpop.f32.mrb[0].mxu0
      %v289 = vpop.f32.mrb[0].mxu0
      %290 = vdwg.mxu0
      %vm291 = vcmask 48128
      %v292 = vsel %vm291, %v286, -inf
      %293 = vmax.xlane.f32.xlu0 %v292
      %v294 = vpop.xlane.xlu0 %293
      %v295 = vsub.f32 %v286, %v294
      %v296 = vmul.f32 %v295, 1.442695
      %v297 = vpow.pop %v296
      %v298 = vsel %vm291, %v297, 0.0
      %299 = vadd.xlane.f32.xlu0 %v298
      %v300 = vpop.xlane.xlu0 %299
      %v301 = vpack.c.bf16 %v297, %v297
      %v303 = vsel %vm291, %v301, 0
      %vm305 = vcmask 1042432
      %v307 = vsel %vm305, %v234, 0
      %309 = vmatprep.subr.bf16.mxu0 0
      %310 = vmatpush1.bf16.msra.mxu0 %v307
      %311 = vmatprep.subr.bf16.mxu0 0
      %312 = vmatpush1.bf16.msra.mxu0 0
      %313 = vmatprep.subr.bf16.mxu0 0
      %314 = vmatpush1.bf16.msra.mxu0 0
      %315 = vmatprep.subr.bf16.mxu0 0
      %316 = vmatpush1.bf16.msra.mxu0 0
      %317 = vmatprep.subr.bf16.mxu0 0
      %318 = vmatpush1.bf16.msra.mxu0 0
      %319 = vmatprep.subr.bf16.mxu0 0
      %320 = vmatpush1.bf16.msra.mxu0 0
      %321 = vmatprep.subr.bf16.mxu0 0
      %322 = vmatpush1.bf16.msra.mxu0 0
      %323 = vmatprep.subr.bf16.mxu0 0
      %324 = vmatpush1.bf16.msra.mxu0 0
      %325 = vmatprep.subr.bf16.mxu0 0
      %326 = vmatpush1.bf16.msra.mxu0 0
      %327 = vmatprep.subr.bf16.mxu0 0
      %328 = vmatpush1.bf16.msra.mxu0 0
      %329 = vmatprep.subr.bf16.mxu0 0
      %330 = vmatpush1.bf16.msra.mxu0 0
      %331 = vmatprep.subr.bf16.mxu0 0
      %332 = vmatpush1.bf16.msra.mxu0 0
      %333 = vmatprep.subr.bf16.mxu0 0
      %334 = vmatpush1.bf16.msra.mxu0 0
      %335 = vmatprep.subr.bf16.mxu0 0
      %336 = vmatpush1.bf16.msra.mxu0 0
      %337 = vmatprep.subr.bf16.mxu0 0
      %338 = vmatpush1.bf16.msra.mxu0 0
      %339 = vmatprep.subr.bf16.mxu0 0
      %340 = vmatpush1.bf16.msra.mxu0 0
      %341 = vmatprep.mubr.bf16.mxu0 0
      %342 = vmatmul.mubr.bf16.gmra.mrb[0].mxu0 %v303
      %v343 = vpop.f32.mrb[0].mxu0
      %v344 = vadd.f32 0.0, %v343
      %v345 = vpop.f32.mrb[0].mxu0
      %v346 = vpop.f32.mrb[0].mxu0
      %v347 = vpop.f32.mrb[0].mxu0
      %348 = vdwg.mxu0
      %v349 = vrcp.pop %v300
      %v350 = vmul.f32 %v344, %v349
      %v352 = vunpack.c.l.b16 %v232
      %v353 = vpack.c.b16 %v352, %v352
      %354 = vrot.lane.b32.xlu0 %v353, 120
      %v355 = vpop.permute.xlu0 %354
      %v357 = vunpack.c.l.b16 %v233
      %v358 = vpack.c.b16 %v357, %v357
      %359 = vrot.lane.b32.xlu0 %v358, 120
      %v360 = vpop.permute.xlu0 %359
      %v362 = vsel %vm244, %v355, 0
      %v365 = vsel %vm244, %v360, 0
      %367 = vmatprep.subr.bf16.mxu0 0
      %368 = vmatpush1.bf16.xpose.msra.mxu0 %v365
      %369 = vmatprep.subr.bf16.mxu0 0
      %370 = vmatpush1.bf16.xpose.msra.mxu0 0
      %371 = vmatprep.subr.bf16.mxu0 0
      %372 = vmatpush1.bf16.xpose.msra.mxu0 0
      %373 = vmatprep.subr.bf16.mxu0 0
      %374 = vmatpush1.bf16.xpose.msra.mxu0 0
      %375 = vmatprep.subr.bf16.mxu0 0
      %376 = vmatpush1.bf16.xpose.msra.mxu0 0
      %377 = vmatprep.subr.bf16.mxu0 0
      %378 = vmatpush1.bf16.xpose.msra.mxu0 0
      %379 = vmatprep.subr.bf16.mxu0 0
      %380 = vmatpush1.bf16.xpose.msra.mxu0 0
      %381 = vmatprep.subr.bf16.mxu0 0
      %382 = vmatpush1.bf16.xpose.msra.mxu0 0
      %383 = vmatprep.subr.bf16.mxu0 0
      %384 = vmatpush1.bf16.xpose.msra.mxu0 0
      %385 = vmatprep.subr.bf16.mxu0 0
      %386 = vmatpush1.bf16.xpose.msra.mxu0 0
      %387 = vmatprep.subr.bf16.mxu0 0
      %388 = vmatpush1.bf16.xpose.msra.mxu0 0
      %389 = vmatprep.subr.bf16.mxu0 0
      %390 = vmatpush1.bf16.xpose.msra.mxu0 0
      %391 = vmatprep.subr.bf16.mxu0 0
      %392 = vmatpush1.bf16.xpose.msra.mxu0 0
      %393 = vmatprep.subr.bf16.mxu0 0
      %394 = vmatpush1.bf16.xpose.msra.mxu0 0
      %395 = vmatprep.subr.bf16.mxu0 0
      %396 = vmatpush1.bf16.xpose.msra.mxu0 0
      %397 = vmatprep.subr.bf16.mxu0 0
      %398 = vmatpush1.bf16.xpose.msra.mxu0 0
      %399 = vmatprep.mubr.bf16.mxu0 0
      %400 = vmatmul.mubr.bf16.gmra.mrb[0].mxu0 %v362
      %v401 = vpop.f32.mrb[0].mxu0
      %v402 = vadd.f32 %v243, %v401
      %v403 = vpop.f32.mrb[0].mxu0
      %v404 = vpop.f32.mrb[0].mxu0
      %v405 = vpop.f32.mrb[0].mxu0
      %406 = vdwg.mxu0
      %v407 = vsel %vm291, %v402, -inf
      %408 = vmax.xlane.f32.xlu0 %v407
      %v409 = vpop.xlane.xlu0 %408
      %v410 = vsub.f32 %v402, %v409
      %v411 = vmul.f32 %v410, 1.442695
      %v412 = vpow.pop %v411
      %v413 = vsel %vm291, %v412, 0.0
      %414 = vadd.xlane.f32.xlu0 %v413
      %v415 = vpop.xlane.xlu0 %414
      %v416 = vpack.c.bf16 %v412, %v412
      %v418 = vunpack.c.l.b16 %v234
      %v419 = vpack.c.b16 %v418, %v418
      %420 = vrot.lane.b32.xlu0 %v419, 120
      %v421 = vpop.permute.xlu0 %420
      %v423 = vsel %vm291, %v416, 0
      %v426 = vsel %vm305, %v421, 0
      %428 = vmatprep.subr.bf16.mxu0 0
      %429 = vmatpush1.bf16.msra.mxu0 %v426
      %430 = vmatprep.subr.bf16.mxu0 0
      %431 = vmatpush1.bf16.msra.mxu0 0
      %432 = vmatprep.subr.bf16.mxu0 0
      %433 = vmatpush1.bf16.msra.mxu0 0
      %434 = vmatprep.subr.bf16.mxu0 0
      %435 = vmatpush1.bf16.msra.mxu0 0
      %436 = vmatprep.subr.bf16.mxu0 0
      %437 = vmatpush1.bf16.msra.mxu0 0
      %438 = vmatprep.subr.bf16.mxu0 0
      %439 = vmatpush1.bf16.msra.mxu0 0
      %440 = vmatprep.subr.bf16.mxu0 0
      %441 = vmatpush1.bf16.msra.mxu0 0
      %442 = vmatprep.subr.bf16.mxu0 0
      %443 = vmatpush1.bf16.msra.mxu0 0
      %444 = vmatprep.subr.bf16.mxu0 0
      %445 = vmatpush1.bf16.msra.mxu0 0
      %446 = vmatprep.subr.bf16.mxu0 0
      %447 = vmatpush1.bf16.msra.mxu0 0
      %448 = vmatprep.subr.bf16.mxu0 0
      %449 = vmatpush1.bf16.msra.mxu0 0
      %450 = vmatprep.subr.bf16.mxu0 0
      %451 = vmatpush1.bf16.msra.mxu0 0
      %452 = vmatprep.subr.bf16.mxu0 0
      %453 = vmatpush1.bf16.msra.mxu0 0
      %454 = vmatprep.subr.bf16.mxu0 0
      %455 = vmatpush1.bf16.msra.mxu0 0
      %456 = vmatprep.subr.bf16.mxu0 0
      %457 = vmatpush1.bf16.msra.mxu0 0
      %458 = vmatprep.subr.bf16.mxu0 0
      %459 = vmatpush1.bf16.msra.mxu0 0
      %460 = vmatprep.mubr.bf16.mxu0 0
      %461 = vmatmul.mubr.bf16.gmra.mrb[0].mxu0 %v423
      %v462 = vpop.f32.mrb[0].mxu0
      %v463 = vadd.f32 0.0, %v462
      %v464 = vpop.f32.mrb[0].mxu0
      %v465 = vpop.f32.mrb[0].mxu0
      %v466 = vpop.f32.mrb[0].mxu0
      %467 = vdwg.mxu0
      %v468 = vrcp.pop %v415
      %v469 = vmul.f32 %v463, %v468
      %470 = vrot.lane.b32.xlu0 %v353, 112
      %v471 = vpop.permute.xlu0 %470
      %472 = vrot.lane.b32.xlu0 %v358, 112
      %v473 = vpop.permute.xlu0 %472
      %v475 = vsel %vm244, %v471, 0
      %v478 = vsel %vm244, %v473, 0
      %480 = vmatprep.subr.bf16.mxu0 0
      %481 = vmatpush1.bf16.xpose.msra.mxu0 %v478
      %482 = vmatprep.subr.bf16.mxu0 0
      %483 = vmatpush1.bf16.xpose.msra.mxu0 0
      %484 = vmatprep.subr.bf16.mxu0 0
      %485 = vmatpush1.bf16.xpose.msra.mxu0 0
      %486 = vmatprep.subr.bf16.mxu0 0
      %487 = vmatpush1.bf16.xpose.msra.mxu0 0
      %488 = vmatprep.subr.bf16.mxu0 0
      %489 = vmatpush1.bf16.xpose.msra.mxu0 0
      %490 = vmatprep.subr.bf16.mxu0 0
      %491 = vmatpush1.bf16.xpose.msra.mxu0 0
      %492 = vmatprep.subr.bf16.mxu0 0
      %493 = vmatpush1.bf16.xpose.msra.mxu0 0
      %494 = vmatprep.subr.bf16.mxu0 0
      %495 = vmatpush1.bf16.xpose.msra.mxu0 0
      %496 = vmatprep.subr.bf16.mxu0 0
      %497 = vmatpush1.bf16.xpose.msra.mxu0 0
      %498 = vmatprep.subr.bf16.mxu0 0
      %499 = vmatpush1.bf16.xpose.msra.mxu0 0
      %500 = vmatprep.subr.bf16.mxu0 0
      %501 = vmatpush1.bf16.xpose.msra.mxu0 0
      %502 = vmatprep.subr.bf16.mxu0 0
      %503 = vmatpush1.bf16.xpose.msra.mxu0 0
      %504 = vmatprep.subr.bf16.mxu0 0
      %505 = vmatpush1.bf16.xpose.msra.mxu0 0
      %506 = vmatprep.subr.bf16.mxu0 0
      %507 = vmatpush1.bf16.xpose.msra.mxu0 0
      %508 = vmatprep.subr.bf16.mxu0 0
      %509 = vmatpush1.bf16.xpose.msra.mxu0 0
      %510 = vmatprep.subr.bf16.mxu0 0
      %511 = vmatpush1.bf16.xpose.msra.mxu0 0
      %512 = vmatprep.mubr.bf16.mxu0 0
      %513 = vmatmul.mubr.bf16.gmra.mrb[0].mxu0 %v475
      %v514 = vpop.f32.mrb[0].mxu0
      %v515 = vadd.f32 %v243, %v514
      %v516 = vpop.f32.mrb[0].mxu0
      %v517 = vpop.f32.mrb[0].mxu0
      %v518 = vpop.f32.mrb[0].mxu0
      %519 = vdwg.mxu0
      %v520 = vsel %vm291, %v515, -inf
      %521 = vmax.xlane.f32.xlu0 %v520
      %v522 = vpop.xlane.xlu0 %521
      %v523 = vsub.f32 %v515, %v522
      %v524 = vmul.f32 %v523, 1.442695
      %v525 = vpow.pop %v524
      %v526 = vsel %vm291, %v525, 0.0
      %527 = vadd.xlane.f32.xlu0 %v526
      %v528 = vpop.xlane.xlu0 %527
      %v529 = vpack.c.bf16 %v525, %v525
      %530 = vrot.lane.b32.xlu0 %v419, 112
      %v531 = vpop.permute.xlu0 %530
      %v533 = vsel %vm291, %v529, 0
      %v536 = vsel %vm305, %v531, 0
      %538 = vmatprep.subr.bf16.mxu0 0
      %539 = vmatpush1.bf16.msra.mxu0 %v536
      %540 = vmatprep.subr.bf16.mxu0 0
      %541 = vmatpush1.bf16.msra.mxu0 0
      %542 = vmatprep.subr.bf16.mxu0 0
      %543 = vmatpush1.bf16.msra.mxu0 0
      %544 = vmatprep.subr.bf16.mxu0 0
      %545 = vmatpush1.bf16.msra.mxu0 0
      %546 = vmatprep.subr.bf16.mxu0 0
      %547 = vmatpush1.bf16.msra.mxu0 0
      %548 = vmatprep.subr.bf16.mxu0 0
      %549 = vmatpush1.bf16.msra.mxu0 0
      %550 = vmatprep.subr.bf16.mxu0 0
      %551 = vmatpush1.bf16.msra.mxu0 0
      %552 = vmatprep.subr.bf16.mxu0 0
      %553 = vmatpush1.bf16.msra.mxu0 0
      %554 = vmatprep.subr.bf16.mxu0 0
      %555 = vmatpush1.bf16.msra.mxu0 0
      %556 = vmatprep.subr.bf16.mxu0 0
      %557 = vmatpush1.bf16.msra.mxu0 0
      %558 = vmatprep.subr.bf16.mxu0 0
      %559 = vmatpush1.bf16.msra.mxu0 0
      %560 = vmatprep.subr.bf16.mxu0 0
      %561 = vmatpush1.bf16.msra.mxu0 0
      %562 = vmatprep.subr.bf16.mxu0 0
      %563 = vmatpush1.bf16.msra.mxu0 0
      %564 = vmatprep.subr.bf16.mxu0 0
      %565 = vmatpush1.bf16.msra.mxu0 0
      %566 = vmatprep.subr.bf16.mxu0 0
      %567 = vmatpush1.bf16.msra.mxu0 0
      %568 = vmatprep.subr.bf16.mxu0 0
      %569 = vmatpush1.bf16.msra.mxu0 0
      %570 = vmatprep.mubr.bf16.mxu0 0
      %571 = vmatmul.mubr.bf16.gmra.mrb[0].mxu0 %v533
      %v572 = vpop.f32.mrb[0].mxu0
      %v573 = vadd.f32 0.0, %v572
      %v574 = vpop.f32.mrb[0].mxu0
      %v575 = vpop.f32.mrb[0].mxu0
      %v576 = vpop.f32.mrb[0].mxu0
      %577 = vdwg.mxu0
      %v578 = vrcp.pop %v528
      %v579 = vmul.f32 %v573, %v578
      %580 = vrot.lane.b32.xlu0 %v353, 104
      %v581 = vpop.permute.xlu0 %580
      %582 = vrot.lane.b32.xlu0 %v358, 104
      %v583 = vpop.permute.xlu0 %582
      %v585 = vsel %vm244, %v581, 0
      %v588 = vsel %vm244, %v583, 0
      %590 = vmatprep.subr.bf16.mxu0 0
      %591 = vmatpush1.bf16.xpose.msra.mxu0 %v588
      %592 = vmatprep.subr.bf16.mxu0 0
      %593 = vmatpush1.bf16.xpose.msra.mxu0 0
      %594 = vmatprep.subr.bf16.mxu0 0
      %595 = vmatpush1.bf16.xpose.msra.mxu0 0
      %596 = vmatprep.subr.bf16.mxu0 0
      %597 = vmatpush1.bf16.xpose.msra.mxu0 0
      %598 = vmatprep.subr.bf16.mxu0 0
      %599 = vmatpush1.bf16.xpose.msra.mxu0 0
      %600 = vmatprep.subr.bf16.mxu0 0
      %601 = vmatpush1.bf16.xpose.msra.mxu0 0
      %602 = vmatprep.subr.bf16.mxu0 0
      %603 = vmatpush1.bf16.xpose.msra.mxu0 0
      %604 = vmatprep.subr.bf16.mxu0 0
      %605 = vmatpush1.bf16.xpose.msra.mxu0 0
      %606 = vmatprep.subr.bf16.mxu0 0
      %607 = vmatpush1.bf16.xpose.msra.mxu0 0
      %608 = vmatprep.subr.bf16.mxu0 0
      %609 = vmatpush1.bf16.xpose.msra.mxu0 0
      %610 = vmatprep.subr.bf16.mxu0 0
      %611 = vmatpush1.bf16.xpose.msra.mxu0 0
      %612 = vmatprep.subr.bf16.mxu0 0
      %613 = vmatpush1.bf16.xpose.msra.mxu0 0
      %614 = vmatprep.subr.bf16.mxu0 0
      %615 = vmatpush1.bf16.xpose.msra.mxu0 0
      %616 = vmatprep.subr.bf16.mxu0 0
      %617 = vmatpush1.bf16.xpose.msra.mxu0 0
      %618 = vmatprep.subr.bf16.mxu0 0
      %619 = vmatpush1.bf16.xpose.msra.mxu0 0
      %620 = vmatprep.subr.bf16.mxu0 0
      %621 = vmatpush1.bf16.xpose.msra.mxu0 0
      %622 = vmatprep.mubr.bf16.mxu0 0
      %623 = vmatmul.mubr.bf16.gmra.mrb[0].mxu0 %v585
      %v624 = vpop.f32.mrb[0].mxu0
      %v625 = vadd.f32 %v243, %v624
      %v626 = vpop.f32.mrb[0].mxu0
      %v627 = vpop.f32.mrb[0].mxu0
      %v628 = vpop.f32.mrb[0].mxu0
      %629 = vdwg.mxu0
      %v630 = vsel %vm291, %v625, -inf
      %631 = vmax.xlane.f32.xlu0 %v630
      %v632 = vpop.xlane.xlu0 %631
      %v633 = vsub.f32 %v625, %v632
      %v634 = vmul.f32 %v633, 1.442695
      %v635 = vpow.pop %v634
      %v636 = vsel %vm291, %v635, 0.0
      %637 = vadd.xlane.f32.xlu0 %v636
      %v638 = vpop.xlane.xlu0 %637
      %v639 = vpack.c.bf16 %v635, %v635
      %640 = vrot.lane.b32.xlu0 %v419, 104
      %v641 = vpop.permute.xlu0 %640
      %v643 = vsel %vm291, %v639, 0
      %v646 = vsel %vm305, %v641, 0
      %648 = vmatprep.subr.bf16.mxu0 0
      %649 = vmatpush1.bf16.msra.mxu0 %v646
      %650 = vmatprep.subr.bf16.mxu0 0
      %651 = vmatpush1.bf16.msra.mxu0 0
      %652 = vmatprep.subr.bf16.mxu0 0
      %653 = vmatpush1.bf16.msra.mxu0 0
      %654 = vmatprep.subr.bf16.mxu0 0
      %655 = vmatpush1.bf16.msra.mxu0 0
      %656 = vmatprep.subr.bf16.mxu0 0
      %657 = vmatpush1.bf16.msra.mxu0 0
      %658 = vmatprep.subr.bf16.mxu0 0
      %659 = vmatpush1.bf16.msra.mxu0 0
      %660 = vmatprep.subr.bf16.mxu0 0
      %661 = vmatpush1.bf16.msra.mxu0 0
      %662 = vmatprep.subr.bf16.mxu0 0
      %663 = vmatpush1.bf16.msra.mxu0 0
      %664 = vmatprep.subr.bf16.mxu0 0
      %665 = vmatpush1.bf16.msra.mxu0 0
      %666 = vmatprep.subr.bf16.mxu0 0
      %667 = vmatpush1.bf16.msra.mxu0 0
      %668 = vmatprep.subr.bf16.mxu0 0
      %669 = vmatpush1.bf16.msra.mxu0 0
      %670 = vmatprep.subr.bf16.mxu0 0
      %671 = vmatpush1.bf16.msra.mxu0 0
      %672 = vmatprep.subr.bf16.mxu0 0
      %673 = vmatpush1.bf16.msra.mxu0 0
      %674 = vmatprep.subr.bf16.mxu0 0
      %675 = vmatpush1.bf16.msra.mxu0 0
      %676 = vmatprep.subr.bf16.mxu0 0
      %677 = vmatpush1.bf16.msra.mxu0 0
      %678 = vmatprep.subr.bf16.mxu0 0
      %679 = vmatpush1.bf16.msra.mxu0 0
      %680 = vmatprep.mubr.bf16.mxu0 0
      %681 = vmatmul.mubr.bf16.gmra.mrb[0].mxu0 %v643
      %v682 = vpop.f32.mrb[0].mxu0
      %v683 = vadd.f32 0.0, %v682
      %v684 = vpop.f32.mrb[0].mxu0
      %v685 = vpop.f32.mrb[0].mxu0
      %v686 = vpop.f32.mrb[0].mxu0
      %687 = vdwg.mxu0
      %v688 = vrcp.pop %v638
      %v689 = vmul.f32 %v683, %v688
      %691 = vrot.lane.b32.xlu0 %v469, 8
      %v692 = vpop.permute.xlu0 %691
      %695 = vrot.lane.b32.xlu0 %v579, 16
      %v696 = vpop.permute.xlu0 %695
      %699 = vrot.lane.b32.xlu0 %v689, 24
      %v700 = vpop.permute.xlu0 %699
      %v702 = vsel %vm244, %v350, %v692
      %vm703 = vcmask 130048
      %v704 = vsel %vm703, %v702, %v696
      %vm705 = vcmask 195584
      %v706 = vsel %vm705, %v704, %v700
      %vm707 = vcmask 261120
      %708 = vst.msk [vmem:[%s230] sm:$0xff] %vm707, %v706
      %p709 = scmp.lt.s32.totalorder %s18, 1
      %s710 = scalar_select %p709, %s18, 1
      %p711 = scmp.lt.s32.totalorder %s19, 0
      %s712 = scalar_select %p711, %s19, 0
      %s713 = sadd.s32 %s712, %s710
      %s714 = smul.addr %s713, 8
      %s715 = scalar_lea.vmem %s3, %s714
      // Predicated region
      $region33: #{_lambda_.66} parent=31 // pred_check
        %p716 = pneg %p126
      $region34: #{_lambda_.66} parent=31 // pred_check_branch
        %718 = sbr.rel (%p716) target = $region36
      $region35: #{_lambda_.66} parent=31 // pred_region
        _
      $region36: #{_lambda_.66} parent=31 // pred_fallthru
        _
    $region32: #{_lambda_.66} parent=5 // pred_fallthru
      _
    %p719 = scmp.le.s32.totalorder 2, %s9
    // Predicated region
    $region37: #{_lambda_.66} parent=5 // pred_check
      %p720 = pneg %p719
    $region38: #{_lambda_.66} parent=5 // pred_check_branch
      %722 = sbr.rel (%p720) target = $region40
    $region39: #{_lambda_.66} parent=5 // pred_region
      %s723 = ssub.s32 %s9, 2
      // Predicated region
      $region41: #{_lambda_.66} parent=39 // pred_check
        %p724 = pneg %p132
      $region42: #{_lambda_.66} parent=39 // pred_check_branch
        %726 = sbr.rel (%p724) target = $region44
      $region43: #{_lambda_.66} parent=39 // pred_region
        %p727 = scmp.lt.s32.totalorder %s20, 1
        %s728 = scalar_select %p727, %s20, 1
        %p729 = scmp.lt.s32.totalorder %s21, 0
        %s730 = scalar_select %p729, %s21, 0
        %s731 = sadd.s32 %s730, %s728
        %s732 = smul.addr %s731, 8
        %s733 = scalar_lea.vmem %s3, %s732
      $region44: #{_lambda_.66} parent=39 // pred_fallthru
        _
    $region40: #{_lambda_.66} parent=5 // pred_fallthru
      _
  $region6: #{_lambda_.66} parent=0 // loop_footer
    %s13 = sadd.s32 1, %s9
  $region7: #{_lambda_.66} parent=0 // loop_footer_branch
    %8 = sbr.rel target = $region3
  $region8: #{_lambda_.66} parent=0 // loop_exit
    _

// kernel: _lambda_.69
$region0: #{_lambda_.69}
  #allocation0 [shape = 'u32[]', space=smem, size = 0x4, offset = 0x4, fixed_abs, tag = 'smem constant byte address 0x4 - core index']
  #allocation1 [shape = 'u32[144,128]{1,0:T(1,128)}', space=vmem, size = 0x12000, scoped, tag = 'internal scratch']
  %s0 = inlined_call_operand.vmem [shape: bf16[16,32], index: 0, kind: input, shape index: {}]
  %s1 = inlined_call_operand.vmem [shape: bf16[32,64], index: 1, kind: input, shape index: {}]
  %s2 = inlined_call_operand.vmem [shape: f32[1,64], index: 2, kind: input, shape index: {}]
  %s3 = inlined_call_operand.vmem [shape: f32[16,64], index: 3, kind: output, shape index: {}]
  %s4 = sld [smem:[#allocation0]]
  $region22: #{_lambda_.69} parent=0
    _
  %s6 = ssub.s32 1, %s4
  %s7 = scalar_select 0, %s6, %s4
  // Predicated region
  $region2: #{_lambda_.69} parent=0 // pred_check
    _
  $region3: #{_lambda_.69} parent=0 // pred_check_branch
    %9 = sbr.rel (0) target = $region5
  $region4: #{_lambda_.69} parent=0 // pred_region
    _
  $region5: #{_lambda_.69} parent=0 // pred_fallthru
    _
  // Predicated region
  $region6: #{_lambda_.69} parent=0 // pred_check
    _
  $region7: #{_lambda_.69} parent=0 // pred_check_branch
    %11 = sbr.rel (0) target = $region9
  $region8: #{_lambda_.69} parent=0 // pred_region
    _
  $region9: #{_lambda_.69} parent=0 // pred_fallthru
    _
  // Predicated region
  $region10: #{_lambda_.69} parent=0 // pred_check
    _
  $region11: #{_lambda_.69} parent=0 // pred_check_branch
    %13 = sbr.rel (0) target = $region13
  $region12: #{_lambda_.69} parent=0 // pred_region
    _
  $region13: #{_lambda_.69} parent=0 // pred_fallthru
    _
  %v15 = vld [vmem:[%s0] sm:$0xf]
  %v16 = vld [vmem:[%s0 + $0x4] sm:$0xf]
  %v17 = vld [vmem:[%s1] sm:$0xf]
  %v18 = vld [vmem:[%s1 + $0x4] sm:$0xf]
  %v19 = vld [vmem:[%s1 + $0x8] sm:$0xf]
  %v20 = vld [vmem:[%s1 + $0xc] sm:$0xf]
  %v21 = vld [vmem:[%s2] sm:$0x1]
  %v23 = vlaneseq
  %v24 = vshrl.u32 %v23, 7
  %v25 = vsub.s32 0, %v24
  %v26 = vrot.slane %v21, %v25
  %v30 = vunpack.c.l.b16 %v15
  %v31 = vunpack.c.l.b16 %v16
  %v32 = vpack.c.b16 %v31, %v30
  %v37 = vunpack.c.l.b16 %v17
  %v38 = vunpack.c.l.b16 %v18
  %v39 = vunpack.c.l.b16 %v19
  %v40 = vunpack.c.l.b16 %v20
  %v41 = vpack.c.b16 %v38, %v37
  %v42 = vpack.c.b16 %v40, %v39
  %vm45 = vcmask 261120
  %v47 = vsel %vm45, %v32, 0
  %49 = vmatprep.subr.bf16.mxu0 0
  %50 = vmatpush1.bf16.msra.mxu0 %v41
  %51 = vmatprep.subr.bf16.mxu0 0
  %52 = vmatpush1.bf16.msra.mxu0 %v42
  %53 = vmatprep.subr.bf16.mxu0 0
  %54 = vmatpush1.bf16.msra.mxu0 0
  %55 = vmatprep.subr.bf16.mxu0 0
  %56 = vmatpush1.bf16.msra.mxu0 0
  %57 = vmatprep.subr.bf16.mxu0 0
  %58 = vmatpush1.bf16.msra.mxu0 0
  %59 = vmatprep.subr.bf16.mxu0 0
  %60 = vmatpush1.bf16.msra.mxu0 0
  %61 = vmatprep.subr.bf16.mxu0 0
  %62 = vmatpush1.bf16.msra.mxu0 0
  %63 = vmatprep.subr.bf16.mxu0 0
  %64 = vmatpush1.bf16.msra.mxu0 0
  %65 = vmatprep.subr.bf16.mxu0 0
  %66 = vmatpush1.bf16.msra.mxu0 0
  %67 = vmatprep.subr.bf16.mxu0 0
  %68 = vmatpush1.bf16.msra.mxu0 0
  %69 = vmatprep.subr.bf16.mxu0 0
  %70 = vmatpush1.bf16.msra.mxu0 0
  %71 = vmatprep.subr.bf16.mxu0 0
  %72 = vmatpush1.bf16.msra.mxu0 0
  %73 = vmatprep.subr.bf16.mxu0 0
  %74 = vmatpush1.bf16.msra.mxu0 0
  %75 = vmatprep.subr.bf16.mxu0 0
  %76 = vmatpush1.bf16.msra.mxu0 0
  %77 = vmatprep.subr.bf16.mxu0 0
  %78 = vmatpush1.bf16.msra.mxu0 0
  %79 = vmatprep.subr.bf16.mxu0 0
  %80 = vmatpush1.bf16.msra.mxu0 0
  %81 = vmatprep.mubr.bf16.mxu0 0
  %82 = vmatmul.mubr.bf16.gmra.mrb[0].mxu0 %v47
  %v83 = vpop.f32.mrb[0].mxu0
  %v84 = vadd.f32 %v26, %v83
  %v85 = vpop.f32.mrb[0].mxu0
  %v86 = vpop.f32.mrb[0].mxu0
  %v87 = vadd.f32 %v26, %v86
  %v88 = vpop.f32.mrb[0].mxu0
  %89 = vdwg.mxu0
  %v90 = vmax.f32 %v84, 0.0
  %v91 = vmax.f32 %v87, 0.0
  %vm92 = vcmask 523264
  %93 = vst.msk [vmem:[%s3] sm:$0xff] %vm92, %v90
  %94 = vst.msk [vmem:[%s3 + $0x8] sm:$0xff] %vm92, %v91
  // Predicated region
  $region14: #{_lambda_.69} parent=0 // pred_check
    _
  $region15: #{_lambda_.69} parent=0 // pred_check_branch
    %96 = sbr.rel (0) target = $region17
  $region16: #{_lambda_.69} parent=0 // pred_region
    _
  $region17: #{_lambda_.69} parent=0 // pred_fallthru
    _
  // Predicated region
  $region18: #{_lambda_.69} parent=0 // pred_check
    _
  $region19: #{_lambda_.69} parent=0 // pred_check_branch
    %98 = sbr.rel (0) target = $region21
  $region20: #{_lambda_.69} parent=0 // pred_region
    _
  $region21: #{_lambda_.69} parent=0 // pred_fallthru
    _

// kernel: _lambda_.70
$region0: #{_lambda_.70}
  #allocation0 [shape = 'u32[]', space=smem, size = 0x4, offset = 0x4, fixed_abs, tag = 'smem constant byte address 0x4 - core index']
  #allocation1 [shape = 'u32[144,128]{1,0:T(1,128)}', space=vmem, size = 0x12000, scoped, tag = 'internal scratch']
  %s0 = inlined_call_operand.vmem [shape: bf16[16,64], index: 0, kind: input, shape index: {}]
  %s1 = inlined_call_operand.vmem [shape: bf16[64,32], index: 1, kind: input, shape index: {}]
  %s2 = inlined_call_operand.vmem [shape: f32[1,32], index: 2, kind: input, shape index: {}]
  %s3 = inlined_call_operand.vmem [shape: f32[16,32], index: 3, kind: input, shape index: {}]
  %s4 = inlined_call_operand.vmem [shape: f32[16,32], index: 4, kind: output, shape index: {}]
  %s5 = sld [smem:[#allocation0]]
  $region26: #{_lambda_.70} parent=0
    _
  %s7 = ssub.s32 1, %s5
  %s8 = scalar_select 0, %s7, %s5
  // Predicated region
  $region2: #{_lambda_.70} parent=0 // pred_check
    _
  $region3: #{_lambda_.70} parent=0 // pred_check_branch
    %10 = sbr.rel (0) target = $region5
  $region4: #{_lambda_.70} parent=0 // pred_region
    _
  $region5: #{_lambda_.70} parent=0 // pred_fallthru
    _
  // Predicated region
  $region6: #{_lambda_.70} parent=0 // pred_check
    _
  $region7: #{_lambda_.70} parent=0 // pred_check_branch
    %12 = sbr.rel (0) target = $region9
  $region8: #{_lambda_.70} parent=0 // pred_region
    _
  $region9: #{_lambda_.70} parent=0 // pred_fallthru
    _
  // Predicated region
  $region10: #{_lambda_.70} parent=0 // pred_check
    _
  $region11: #{_lambda_.70} parent=0 // pred_check_branch
    %14 = sbr.rel (0) target = $region13
  $region12: #{_lambda_.70} parent=0 // pred_region
    _
  $region13: #{_lambda_.70} parent=0 // pred_fallthru
    _
  // Predicated region
  $region14: #{_lambda_.70} parent=0 // pred_check
    _
  $region15: #{_lambda_.70} parent=0 // pred_check_branch
    %16 = sbr.rel (0) target = $region17
  $region16: #{_lambda_.70} parent=0 // pred_region
    _
  $region17: #{_lambda_.70} parent=0 // pred_fallthru
    _
  %v18 = vld [vmem:[%s0] sm:$0xf]
  %v19 = vld [vmem:[%s0 + $0x4] sm:$0xf]
  %v20 = vld [vmem:[%s1] sm:$0xf]
  %v21 = vld [vmem:[%s1 + $0x4] sm:$0xf]
  %v22 = vld [vmem:[%s1 + $0x8] sm:$0xf]
  %v23 = vld [vmem:[%s1 + $0xc] sm:$0xf]
  %v24 = vld [vmem:[%s1 + $0x10] sm:$0xf]
  %v25 = vld [vmem:[%s1 + $0x14] sm:$0xf]
  %v26 = vld [vmem:[%s1 + $0x18] sm:$0xf]
  %v27 = vld [vmem:[%s1 + $0x1c] sm:$0xf]
  %v28 = vld [vmem:[%s2] sm:$0x1]
  %v30 = vlaneseq
  %v31 = vshrl.u32 %v30, 7
  %v32 = vsub.s32 0, %v31
  %v33 = vrot.slane %v28, %v32
  %v37 = vunpack.c.l.b16 %v18
  %v38 = vunpack.c.l.b16 %v19
  %v39 = vpack.c.b16 %v38, %v37
  %v48 = vunpack.c.l.b16 %v20
  %v49 = vunpack.c.l.b16 %v21
  %v50 = vunpack.c.l.b16 %v22
  %v51 = vunpack.c.l.b16 %v23
  %v52 = vunpack.c.l.b16 %v24
  %v53 = vunpack.c.l.b16 %v25
  %v54 = vunpack.c.l.b16 %v26
  %v55 = vunpack.c.l.b16 %v27
  %v56 = vpack.c.b16 %v49, %v48
  %v57 = vpack.c.b16 %v51, %v50
  %v58 = vpack.c.b16 %v53, %v52
  %v59 = vpack.c.b16 %v55, %v54
  %vm64 = vcmask 523264
  %v66 = vsel %vm64, %v39, 0
  %68 = vmatprep.subr.bf16.mxu0 0
  %69 = vmatpush1.bf16.msra.mxu0 %v56
  %70 = vmatprep.subr.bf16.mxu0 0
  %71 = vmatpush1.bf16.msra.mxu0 %v57
  %72 = vmatprep.subr.bf16.mxu0 0
  %73 = vmatpush1.bf16.msra.mxu0 %v58
  %74 = vmatprep.subr.bf16.mxu0 0
  %75 = vmatpush1.bf16.msra.mxu0 %v59
  %76 = vmatprep.subr.bf16.mxu0 0
  %77 = vmatpush1.bf16.msra.mxu0 0
  %78 = vmatprep.subr.bf16.mxu0 0
  %79 = vmatpush1.bf16.msra.mxu0 0
  %80 = vmatprep.subr.bf16.mxu0 0
  %81 = vmatpush1.bf16.msra.mxu0 0
  %82 = vmatprep.subr.bf16.mxu0 0
  %83 = vmatpush1.bf16.msra.mxu0 0
  %84 = vmatprep.subr.bf16.mxu0 0
  %85 = vmatpush1.bf16.msra.mxu0 0
  %86 = vmatprep.subr.bf16.mxu0 0
  %87 = vmatpush1.bf16.msra.mxu0 0
  %88 = vmatprep.subr.bf16.mxu0 0
  %89 = vmatpush1.bf16.msra.mxu0 0
  %90 = vmatprep.subr.bf16.mxu0 0
  %91 = vmatpush1.bf16.msra.mxu0 0
  %92 = vmatprep.subr.bf16.mxu0 0
  %93 = vmatpush1.bf16.msra.mxu0 0
  %94 = vmatprep.subr.bf16.mxu0 0
  %95 = vmatpush1.bf16.msra.mxu0 0
  %96 = vmatprep.subr.bf16.mxu0 0
  %97 = vmatpush1.bf16.msra.mxu0 0
  %98 = vmatprep.subr.bf16.mxu0 0
  %99 = vmatpush1.bf16.msra.mxu0 0
  %100 = vmatprep.mubr.bf16.mxu0 0
  %101 = vmatmul.mubr.bf16.gmra.mrb[0].mxu0 %v66
  %v102 = vpop.f32.mrb[0].mxu0
  %v103 = vadd.f32 %v33, %v102
  %v104 = vpop.f32.mrb[0].mxu0
  %v105 = vpop.f32.mrb[0].mxu0
  %v106 = vadd.f32 %v33, %v105
  %v107 = vpop.f32.mrb[0].mxu0
  %108 = vdwg.mxu0
  %v109 = vld [vmem:[%s3] sm:$0xff]
  %v110 = vld [vmem:[%s3 + $0x8] sm:$0xff]
  %v111 = vadd.f32 %v103, %v109
  %v112 = vadd.f32 %v106, %v110
  %vm113 = vcmask 261120
  %114 = vst.msk [vmem:[%s4] sm:$0xff] %vm113, %v111
  %115 = vst.msk [vmem:[%s4 + $0x8] sm:$0xff] %vm113, %v112
  // Predicated region
  $region18: #{_lambda_.70} parent=0 // pred_check
    _
  $region19: #{_lambda_.70} parent=0 // pred_check_branch
    %117 = sbr.rel (0) target = $region21
  $region20: #{_lambda_.70} parent=0 // pred_region
    _
  $region21: #{_lambda_.70} parent=0 // pred_fallthru
    _
  // Predicated region
  $region22: #{_lambda_.70} parent=0 // pred_check
    _
  $region23: #{_lambda_.70} parent=0 // pred_check_branch
    %119 = sbr.rel (0) target = $region25
  $region24: #{_lambda_.70} parent=0 // pred_region
    _
  $region25: #{_lambda_.70} parent=0 // pred_fallthru
    _

// kernel: _lambda_.61
$region0: #{_lambda_.61}
  #allocation0 [shape = 'u32[]', space=smem, size = 0x4, offset = 0x4, fixed_abs, tag = 'smem constant byte address 0x4 - core index']
  #allocation1 [shape = 'u32[144,128]{1,0:T(1,128)}', space=vmem, size = 0x12000, scoped, tag = 'internal scratch']
  %s0 = inlined_call_operand.vmem [shape: f32[2,8,32], index: 0, kind: input, shape index: {}]
  %s1 = inlined_call_operand.vmem [shape: bf16[2,8,32], index: 1, kind: input, shape index: {}]
  %s2 = inlined_call_operand.vmem [shape: bf16[1,8,32], index: 2, kind: input, shape index: {}]
  %s3 = inlined_call_operand.vmem [shape: bf16[2,8,32], index: 3, kind: input, shape index: {}]
  %s4 = inlined_call_operand.vmem [shape: f32[1,8], index: 4, kind: input, shape index: {}]
  %s5 = inlined_call_operand.vmem [shape: f32[1,8], index: 5, kind: input, shape index: {}]
  %s6 = inlined_call_operand.vmem [shape: f32[2,8,32], index: 6, kind: output, shape index: {}]
  %s7 = sld [smem:[#allocation0]]
  $region57: #{_lambda_.61} parent=0
    _
  %s9 = ssub.s32 1, %s7
  %s10 = scalar_select 0, %s9, %s7
  loop: start=0, step=1, limit=4
  $region2: #{_lambda_.61} parent=0 // loop_pre_header
    _
  $region3: #{_lambda_.61} parent=0 // loop_header
    %s12 = sphi 0, %s16
    %p13 = scmp.ge.s32.totalorder %s12, 4
    %s19 = sphi 0, %s31
    %s20 = sphi 0, %s27
    %s21 = sphi 0, %s19
    %s22 = sphi 0, %s20
    %s23 = sphi 0, %s21
    %s24 = sphi 0, %s22
    %s36 = sphi 0, %s38
    %s39 = sphi 0, %s36
    %s40 = sphi 0, %s39
    %s56 = sphi 0, %s40
    %s62 = sphi 0, %s64
    %s65 = sphi 0, %s62
    %s66 = sphi 0, %s65
    %s82 = sphi 0, %s66
    %s86 = sphi 0, %s86
    %s88 = sphi 0, %s86
    %s89 = sphi 0, %s88
    %s103 = sphi 0, %s89
    %s109 = sphi 0, %s111
    %s112 = sphi 0, %s109
    %s113 = sphi 0, %s112
    %s129 = sphi 0, %s113
    %s133 = sphi 0, %s133
    %s135 = sphi 0, %s133
    %s136 = sphi 0, %s135
    %s150 = sphi 0, %s136
    %s154 = sphi 0, %s154
    %s156 = sphi 0, %s154
    %s157 = sphi 0, %s156
    %s171 = sphi 0, %s157
    %s179 = sphi 0, %s181
    %s182 = sphi 0, %s179
    %s183 = sphi 0, %s182
    %s199 = sphi 0, %s183
  $region4: #{_lambda_.61} parent=0 // loop_header_branch
    %15 = sbr.rel (%p13) target = $region8
  $region5: #{_lambda_.61} parent=0 // loop_body
    %s17 = ssub.s32 %s12, 1
    %s18 = ssub.s32 %s12, 2
    %s25 = sadd.s32 1, %s20
    %p26 = scmp.ge.s32.totalorder %s25, 1
    %s27 = scalar_select %p26, 0, %s25
    %s28 = sadd.s32 1, %s19
    %s29 = scalar_select %p26, %s28, %s19
    %p30 = scmp.ge.s32.totalorder %s29, 2
    %s31 = scalar_select %p30, 0, %s29
    %s32 = ssub.s32 %s19, %s31
    %s33 = ssub.s32 %s20, %s27
    %s34 = sor.u32 %s32, %s33
    %p35 = scmp.eq.s32.totalorder %s34, 0
    %s37 = sadd.s32 %s36, 1
    %s38 = scalar_select %p35, %s36, %s37
    %p41 = pneg %p35
    %p42 = scmp.eq.s32.totalorder %s12, 1
    %p43 = por %p41, %p42
    %p44 = scmp.ne.s32.totalorder %s36, %s39
    %p45 = scmp.eq.s32.totalorder %s12, 0
    %p46 = por %p44, %p45
    %p47 = scmp.ne.s32.totalorder %s36, %s39
    %p48 = scmp.eq.s32.totalorder %s17, 1
    %p49 = por %p47, %p48
    %p50 = scmp.ne.s32.totalorder %s39, %s40
    %p51 = scmp.eq.s32.totalorder %s17, 0
    %p52 = por %p50, %p51
    %p53 = scmp.ne.s32.totalorder %s39, %s40
    %p54 = scmp.eq.s32.totalorder %s18, 1
    %p55 = por %p53, %p54
    %p57 = scmp.ne.s32.totalorder %s40, %s56
    %p58 = scmp.eq.s32.totalorder %s18, 0
    %p59 = por %p57, %p58
    %s60 = ssub.s32 %s19, %s31
    %p61 = scmp.eq.s32.totalorder %s60, 0
    %s63 = sadd.s32 %s62, 1
    %s64 = scalar_select %p61, %s62, %s63
    %p67 = pneg %p61
    %p68 = scmp.eq.s32.totalorder %s12, 1
    %p69 = por %p67, %p68
    %p70 = scmp.ne.s32.totalorder %s62, %s65
    %p71 = scmp.eq.s32.totalorder %s12, 0
    %p72 = por %p70, %p71
    %p73 = scmp.ne.s32.totalorder %s62, %s65
    %p74 = scmp.eq.s32.totalorder %s17, 1
    %p75 = por %p73, %p74
    %p76 = scmp.ne.s32.totalorder %s65, %s66
    %p77 = scmp.eq.s32.totalorder %s17, 0
    %p78 = por %p76, %p77
    %p79 = scmp.ne.s32.totalorder %s65, %s66
    %p80 = scmp.eq.s32.totalorder %s18, 1
    %p81 = por %p79, %p80
    %p83 = scmp.ne.s32.totalorder %s66, %s82
    %p84 = scmp.eq.s32.totalorder %s18, 0
    %p85 = por %p83, %p84
    %s87 = sadd.s32 %s86, 1
    %p90 = scmp.eq.s32.totalorder %s12, 1
    %p91 = scmp.ne.s32.totalorder %s86, %s88
    %p92 = scmp.eq.s32.totalorder %s12, 0
    %p93 = por %p91, %p92
    %p94 = scmp.ne.s32.totalorder %s86, %s88
    %p95 = scmp.eq.s32.totalorder %s17, 1
    %p96 = por %p94, %p95
    %p97 = scmp.ne.s32.totalorder %s88, %s89
    %p98 = scmp.eq.s32.totalorder %s17, 0
    %p99 = por %p97, %p98
    %p100 = scmp.ne.s32.totalorder %s88, %s89
    %p101 = scmp.eq.s32.totalorder %s18, 1
    %p102 = por %p100, %p101
    %p104 = scmp.ne.s32.totalorder %s89, %s103
    %p105 = scmp.eq.s32.totalorder %s18, 0
    %p106 = por %p104, %p105
    %s107 = ssub.s32 %s19, %s31
    %p108 = scmp.eq.s32.totalorder %s107, 0
    %s110 = sadd.s32 %s109, 1
    %s111 = scalar_select %p108, %s109, %s110
    %p114 = pneg %p108
    %p115 = scmp.eq.s32.totalorder %s12, 1
    %p116 = por %p114, %p115
    %p117 = scmp.ne.s32.totalorder %s109, %s112
    %p118 = scmp.eq.s32.totalorder %s12, 0
    %p119 = por %p117, %p118
    %p120 = scmp.ne.s32.totalorder %s109, %s112
    %p121 = scmp.eq.s32.totalorder %s17, 1
    %p122 = por %p120, %p121
    %p123 = scmp.ne.s32.totalorder %s112, %s113
    %p124 = scmp.eq.s32.totalorder %s17, 0
    %p125 = por %p123, %p124
    %p126 = scmp.ne.s32.totalorder %s112, %s113
    %p127 = scmp.eq.s32.totalorder %s18, 1
    %p128 = por %p126, %p127
    %p130 = scmp.ne.s32.totalorder %s113, %s129
    %p131 = scmp.eq.s32.totalorder %s18, 0
    %p132 = por %p130, %p131
    %s134 = sadd.s32 %s133, 1
    %p137 = scmp.eq.s32.totalorder %s12, 1
    %p138 = scmp.ne.s32.totalorder %s133, %s135
    %p139 = scmp.eq.s32.totalorder %s12, 0
    %p140 = por %p138, %p139
    %p141 = scmp.ne.s32.totalorder %s133, %s135
    %p142 = scmp.eq.s32.totalorder %s17, 1
    %p143 = por %p141, %p142
    %p144 = scmp.ne.s32.totalorder %s135, %s136
    %p145 = scmp.eq.s32.totalorder %s17, 0
    %p146 = por %p144, %p145
    %p147 = scmp.ne.s32.totalorder %s135, %s136
    %p148 = scmp.eq.s32.totalorder %s18, 1
    %p149 = por %p147, %p148
    %p151 = scmp.ne.s32.totalorder %s136, %s150
    %p152 = scmp.eq.s32.totalorder %s18, 0
    %p153 = por %p151, %p152
    %s155 = sadd.s32 %s154, 1
    %p158 = scmp.eq.s32.totalorder %s12, 1
    %p159 = scmp.ne.s32.totalorder %s154, %s156
    %p160 = scmp.eq.s32.totalorder %s12, 0
    %p161 = por %p159, %p160
    %p162 = scmp.ne.s32.totalorder %s154, %s156
    %p163 = scmp.eq.s32.totalorder %s17, 1
    %p164 = por %p162, %p163
    %p165 = scmp.ne.s32.totalorder %s156, %s157
    %p166 = scmp.eq.s32.totalorder %s17, 0
    %p167 = por %p165, %p166
    %p168 = scmp.ne.s32.totalorder %s156, %s157
    %p169 = scmp.eq.s32.totalorder %s18, 1
    %p170 = por %p168, %p169
    %p172 = scmp.ne.s32.totalorder %s157, %s171
    %p173 = scmp.eq.s32.totalorder %s18, 0
    %p174 = por %p172, %p173
    %s175 = ssub.s32 %s19, %s31
    %s176 = ssub.s32 %s20, %s27
    %s177 = sor.u32 %s175, %s176
    %p178 = scmp.eq.s32.totalorder %s177, 0
    %s180 = sadd.s32 %s179, 1
    %s181 = scalar_select %p178, %s179, %s180
    %p184 = pneg %p178
    %p185 = scmp.eq.s32.totalorder %s12, 1
    %p186 = por %p184, %p185
    %p187 = scmp.ne.s32.totalorder %s179, %s182
    %p188 = scmp.eq.s32.totalorder %s12, 0
    %p189 = por %p187, %p188
    %p190 = scmp.ne.s32.totalorder %s179, %s182
    %p191 = scmp.eq.s32.totalorder %s17, 1
    %p192 = por %p190, %p191
    %p193 = scmp.ne.s32.totalorder %s182, %s183
    %p194 = scmp.eq.s32.totalorder %s17, 0
    %p195 = por %p193, %p194
    %p196 = scmp.ne.s32.totalorder %s182, %s183
    %p197 = scmp.eq.s32.totalorder %s18, 1
    %p198 = por %p196, %p197
    %p200 = scmp.ne.s32.totalorder %s183, %s199
    %p201 = scmp.eq.s32.totalorder %s18, 0
    %p202 = por %p200, %p201
    %p203 = scmp.le.s32.totalorder 1, %s12
    %p204 = scmp.lt.s32.totalorder %s12, 3
    %p205 = pnand %p203, %p204
    %p206 = pneg %p205
    // Predicated region
    $region9: #{_lambda_.61} parent=5 // pred_check
      _
    $region10: #{_lambda_.61} parent=5 // pred_check_branch
      %208 = sbr.rel (%p205) target = $region12
    $region11: #{_lambda_.61} parent=5 // pred_region
      %s209 = ssub.s32 %s12, 1
      // Predicated region
      $region13: #{_lambda_.61} parent=11 // pred_check
        %p210 = pneg %p99
      $region14: #{_lambda_.61} parent=11 // pred_check_branch
        %212 = sbr.rel (%p210) target = $region16
      $region15: #{_lambda_.61} parent=11 // pred_region
        _
      $region16: #{_lambda_.61} parent=11 // pred_fallthru
        _
      // Predicated region
      $region17: #{_lambda_.61} parent=11 // pred_check
        %p213 = pneg %p146
      $region18: #{_lambda_.61} parent=11 // pred_check_branch
        %215 = sbr.rel (%p213) target = $region20
      $region19: #{_lambda_.61} parent=11 // pred_region
        _
      $region20: #{_lambda_.61} parent=11 // pred_fallthru
        _
      // Predicated region
      $region21: #{_lambda_.61} parent=11 // pred_check
        %p216 = pneg %p167
      $region22: #{_lambda_.61} parent=11 // pred_check_branch
        %218 = sbr.rel (%p216) target = $region24
      $region23: #{_lambda_.61} parent=11 // pred_region
        _
      $region24: #{_lambda_.61} parent=11 // pred_fallthru
        _
    $region12: #{_lambda_.61} parent=5 // pred_fallthru
      _
    %p219 = scmp.lt.s32.totalorder %s12, 2
    // Predicated region
    $region25: #{_lambda_.61} parent=5 // pred_check
      %p220 = pneg %p219
    $region26: #{_lambda_.61} parent=5 // pred_check_branch
      %222 = sbr.rel (%p220) target = $region28
    $region27: #{_lambda_.61} parent=5 // pred_region
      // Predicated region
      $region29: #{_lambda_.61} parent=27 // pred_check
        %p223 = pneg %p46
      $region30: #{_lambda_.61} parent=27 // pred_check_branch
        %225 = sbr.rel (%p223) target = $region32
      $region31: #{_lambda_.61} parent=27 // pred_region
        %p226 = scmp.lt.s32.totalorder %s19, 1
        %s227 = scalar_select %p226, %s19, 1
        %p228 = scmp.lt.s32.totalorder %s20, 0
        %s229 = scalar_select %p228, %s20, 0
        %s230 = sadd.s32 %s229, %s227
        %s231 = smul.addr %s230, 8
        %s232 = scalar_lea.vmem %s0, %s231
      $region32: #{_lambda_.61} parent=27 // pred_fallthru
        _
      // Predicated region
      $region33: #{_lambda_.61} parent=27 // pred_check
        %p233 = pneg %p72
      $region34: #{_lambda_.61} parent=27 // pred_check_branch
        %235 = sbr.rel (%p233) target = $region36
      $region35: #{_lambda_.61} parent=27 // pred_region
        %p236 = scmp.lt.s32.totalorder %s19, 1
        %s237 = scalar_select %p236, %s19, 1
        %s238 = smul.addr %s237, 4
        %s239 = scalar_lea.vmem %s1, %s238
      $region36: #{_lambda_.61} parent=27 // pred_fallthru
        _
      // Predicated region
      $region37: #{_lambda_.61} parent=27 // pred_check
        %p240 = pneg %p119
      $region38: #{_lambda_.61} parent=27 // pred_check_branch
        %242 = sbr.rel (%p240) target = $region40
      $region39: #{_lambda_.61} parent=27 // pred_region
        %p243 = scmp.lt.s32.totalorder %s19, 1
        %s244 = scalar_select %p243, %s19, 1
        %s245 = smul.addr %s244, 4
        %s246 = scalar_lea.vmem %s3, %s245
      $region40: #{_lambda_.61} parent=27 // pred_fallthru
        _
    $region28: #{_lambda_.61} parent=5 // pred_fallthru
      _
    %p247 = scmp.le.s32.totalorder 1, %s12
    %p248 = scmp.lt.s32.totalorder %s12, 3
    %p249 = pnand %p247, %p248
    %p250 = pneg %p249
    // Predicated region
    $region41: #{_lambda_.61} parent=5 // pred_check
      _
    $region42: #{_lambda_.61} parent=5 // pred_check_branch
      %252 = sbr.rel (%p249) target = $region44
    $region43: #{_lambda_.61} parent=5 // pred_region
      %s253 = ssub.s32 %s12, 1
      %p254 = scmp.lt.s32.totalorder %s21, 1
      %s255 = scalar_select %p254, %s21, 1
      %p256 = scmp.lt.s32.totalorder %s22, 0
      %s257 = scalar_select %p256, %s22, 0
      %s258 = sadd.s32 %s257, %s255
      %s259 = smul.addr %s258, 8
      %s260 = scalar_lea.vmem %s0, %s259
      %p261 = pneg %p52
      %p262 = pneg %p49
      %p263 = scmp.lt.s32.totalorder %s21, 1
      %s264 = scalar_select %p263, %s21, 1
      %s265 = smul.addr %s264, 4
      %s266 = scalar_lea.vmem %s1, %s265
      %p267 = pneg %p78
      %p268 = pneg %p75
      %p269 = pneg %p99
      %p270 = pneg %p96
      %p271 = scmp.lt.s32.totalorder %s21, 1
      %s272 = scalar_select %p271, %s21, 1
      %s273 = smul.addr %s272, 4
      %s274 = scalar_lea.vmem %s3, %s273
      %p275 = pneg %p125
      %p276 = pneg %p122
      %p277 = pneg %p146
      %p278 = pneg %p143
      %p279 = pneg %p167
      %p280 = pneg %p164
      %p281 = pneg %p195
      %p282 = pneg %p192
      %p283 = scmp.lt.s32.totalorder %s21, 1
      %s284 = scalar_select %p283, %s21, 1
      %p285 = scmp.lt.s32.totalorder %s22, 0
      %s286 = scalar_select %p285, %s22, 0
      %s287 = sadd.s32 %s286, %s284
      %s288 = smul.addr %s287, 8
      %s289 = scalar_lea.vmem %s6, %s288
      %p290 = scmp.lt.s32.totalorder %s21, 1
      %s291 = scalar_select %p290, %s21, 1
      %p292 = scmp.lt.s32.totalorder %s22, 0
      %s293 = scalar_select %p292, %s22, 0
      %s294 = sadd.s32 %s293, %s291
      %s295 = smul.addr %s294, 8
      %s296 = scalar_lea.vmem %s0, %s295
      %p297 = scmp.lt.s32.totalorder %s21, 1
      %s298 = scalar_select %p297, %s21, 1
      %s299 = smul.addr %s298, 4
      %s300 = scalar_lea.vmem %s1, %s299
      %p301 = scmp.lt.s32.totalorder %s21, 1
      %s302 = scalar_select %p301, %s21, 1
      %s303 = smul.addr %s302, 4
      %s304 = scalar_lea.vmem %s3, %s303
      %p305 = scmp.lt.s32.totalorder %s21, 1
      %s306 = scalar_select %p305, %s21, 1
      %p307 = scmp.lt.s32.totalorder %s22, 0
      %s308 = scalar_select %p307, %s22, 0
      %s309 = sadd.s32 %s308, %s306
      %s310 = smul.addr %s309, 8
      %s311 = scalar_lea.vmem %s6, %s310
      %v313 = vld [vmem:[%s296] sm:$0xff]
      %v314 = vld [vmem:[%s300] sm:$0xf]
      %v315 = vld [vmem:[%s2] sm:$0xf]
      %v316 = vld [vmem:[%s304] sm:$0xf]
      %v317 = vld [vmem:[%s4] sm:$0x1]
      %v318 = vld [vmem:[%s5] sm:$0x1]
      %s319 = smul.u32 %s22, 8
      %v320 = vlaneseq
      %v321 = vshrl.u32 %v320, 7
      %v322 = vstv %s319
      %v323 = vadd.s32 %v322, %v321
      %v324 = vlaneseq
      %v325 = vand.u32 %v324, 127
      %s326 = sadd.s32 %s319, 1
      %v327 = vstv %s326
      %v328 = vadd.s32 %v327, %v321
      %v330 = vlaneseq
      %v331 = vshrl.u32 %v330, 7
      %v332 = vsub.s32 0, %v331
      %v333 = vrot.slane %v317, %v332
      %v335 = vadd.f32 %v313, %v333
      %v336 = vmul.f32 %v335, 0.17677669
      %v337 = vpack.c.bf16 %v336, %v336
      %v339 = vlaneseq
      %v340 = vshrl.u32 %v339, 7
      %v341 = vsub.s32 0, %v340
      %v342 = vrot.slane %v318, %v341
      %v344 = vadd.f32 %v313, %v342
      %v345 = vmul.f32 %v344, 0.17677669
      %v346 = vpack.c.bf16 %v345, %v345
      %vm347 = vcmask 64512
      %v349 = vsel %vm347, %v346, 0
      %v352 = vsel %vm347, %v315, 0
      %354 = vmatprep.subr.bf16.mxu0 0
      %355 = vmatpush1.bf16.xpose.msra.mxu0 %v352
      %356 = vmatprep.subr.bf16.mxu0 0
      %357 = vmatpush1.bf16.xpose.msra.mxu0 0
      %358 = vmatprep.subr.bf16.mxu0 0
      %359 = vmatpush1.bf16.xpose.msra.mxu0 0
      %360 = vmatprep.subr.bf16.mxu0 0
      %361 = vmatpush1.bf16.xpose.msra.mxu0 0
      %362 = vmatprep.subr.bf16.mxu0 0
      %363 = vmatpush1.bf16.xpose.msra.mxu0 0
      %364 = vmatprep.subr.bf16.mxu0 0
      %365 = vmatpush1.bf16.xpose.msra.mxu0 0
      %366 = vmatprep.subr.bf16.mxu0 0
      %367 = vmatpush1.bf16.xpose.msra.mxu0 0
      %368 = vmatprep.subr.bf16.mxu0 0
      %369 = vmatpush1.bf16.xpose.msra.mxu0 0
      %370 = vmatprep.subr.bf16.mxu0 0
      %371 = vmatpush1.bf16.xpose.msra.mxu0 0
      %372 = vmatprep.subr.bf16.mxu0 0
      %373 = vmatpush1.bf16.xpose.msra.mxu0 0
      %374 = vmatprep.subr.bf16.mxu0 0
      %375 = vmatpush1.bf16.xpose.msra.mxu0 0
      %376 = vmatprep.subr.bf16.mxu0 0
      %377 = vmatpush1.bf16.xpose.msra.mxu0 0
      %378 = vmatprep.subr.bf16.mxu0 0
      %379 = vmatpush1.bf16.xpose.msra.mxu0 0
      %380 = vmatprep.subr.bf16.mxu0 0
      %381 = vmatpush1.bf16.xpose.msra.mxu0 0
      %382 = vmatprep.subr.bf16.mxu0 0
      %383 = vmatpush1.bf16.xpose.msra.mxu0 0
      %384 = vmatprep.subr.bf16.mxu0 0
      %385 = vmatpush1.bf16.xpose.msra.mxu0 0
      %386 = vmatprep.mubr.bf16.mxu0 0
      %387 = vmatmul.mubr.bf16.gmra.mrb[0].mxu0 %v349
      %v388 = vpop.f32.mrb[0].mxu0
      %v389 = vadd.f32 0.0, %v388
      %v390 = vpop.f32.mrb[0].mxu0
      %v391 = vpop.f32.mrb[0].mxu0
      %v392 = vpop.f32.mrb[0].mxu0
      %393 = vdwg.mxu0
      %395 = vrot.lane.b32.xlu0 %v389, 121
      %v396 = vpop.permute.xlu0 %395
      %398 = vrot.lane.b32.xlu0 %v389, 1
      %v399 = vpop.permute.xlu0 %398
      %vm401 = vcmask 7168
      %v402 = vsel %vm401, %v396, %v399
      %v403 = vand.u32 %v328, 1
      %vm404 = vcmp.eq.s32.totalorder %v403, 1
      %v405 = vsel %vm404, 1, 0
      %vm406 = vcmp.eq.s32.totalorder %v405, 1
      %v407 = vsel %vm406, %v402, %v389
      %409 = vrot.lane.b32.xlu0 %v407, 122
      %v410 = vpop.permute.xlu0 %409
      %412 = vrot.lane.b32.xlu0 %v407, 2
      %v413 = vpop.permute.xlu0 %412
      %vm415 = vcmask 15360
      %v416 = vsel %vm415, %v410, %v413
      %v417 = vshra.s32 %v328, 1
      %v418 = vand.u32 %v417, 1
      %vm419 = vcmp.eq.s32.totalorder %v418, 1
      %v420 = vsel %vm419, 1, 0
      %vm421 = vcmp.eq.s32.totalorder %v420, 1
      %v422 = vsel %vm421, %v416, %v407
      %424 = vrot.lane.b32.xlu0 %v422, 124
      %v425 = vpop.permute.xlu0 %424
      %427 = vrot.lane.b32.xlu0 %v422, 4
      %v428 = vpop.permute.xlu0 %427
      %vm430 = vcmask 31744
      %v431 = vsel %vm430, %v425, %v428
      %v432 = vshra.s32 %v328, 2
      %v433 = vand.u32 %v432, 1
      %vm434 = vcmp.eq.s32.totalorder %v433, 1
      %v435 = vsel %vm434, 1, 0
      %vm436 = vcmp.eq.s32.totalorder %v435, 1
      %v437 = vsel %vm436, %v431, %v422
      %v439 = vsel %vm347, %v337, 0
      %v442 = vsel %vm347, %v314, 0
      %444 = vmatprep.subr.bf16.mxu0 0
      %445 = vmatpush1.bf16.xpose.msra.mxu0 %v442
      %446 = vmatprep.subr.bf16.mxu0 0
      %447 = vmatpush1.bf16.xpose.msra.mxu0 0
      %448 = vmatprep.subr.bf16.mxu0 0
      %449 = vmatpush1.bf16.xpose.msra.mxu0 0
      %450 = vmatprep.subr.bf16.mxu0 0
      %451 = vmatpush1.bf16.xpose.msra.mxu0 0
      %452 = vmatprep.subr.bf16.mxu0 0
      %453 = vmatpush1.bf16.xpose.msra.mxu0 0
      %454 = vmatprep.subr.bf16.mxu0 0
      %455 = vmatpush1.bf16.xpose.msra.mxu0 0
      %456 = vmatprep.subr.bf16.mxu0 0
      %457 = vmatpush1.bf16.xpose.msra.mxu0 0
      %458 = vmatprep.subr.bf16.mxu0 0
      %459 = vmatpush1.bf16.xpose.msra.mxu0 0
      %460 = vmatprep.subr.bf16.mxu0 0
      %461 = vmatpush1.bf16.xpose.msra.mxu0 0
      %462 = vmatprep.subr.bf16.mxu0 0
      %463 = vmatpush1.bf16.xpose.msra.mxu0 0
      %464 = vmatprep.subr.bf16.mxu0 0
      %465 = vmatpush1.bf16.xpose.msra.mxu0 0
      %466 = vmatprep.subr.bf16.mxu0 0
      %467 = vmatpush1.bf16.xpose.msra.mxu0 0
      %468 = vmatprep.subr.bf16.mxu0 0
      %469 = vmatpush1.bf16.xpose.msra.mxu0 0
      %470 = vmatprep.subr.bf16.mxu0 0
      %471 = vmatpush1.bf16.xpose.msra.mxu0 0
      %472 = vmatprep.subr.bf16.mxu0 0
      %473 = vmatpush1.bf16.xpose.msra.mxu0 0
      %474 = vmatprep.subr.bf16.mxu0 0
      %475 = vmatpush1.bf16.xpose.msra.mxu0 0
      %476 = vmatprep.mubr.bf16.mxu0 0
      %477 = vmatmul.mubr.bf16.gmra.mrb[0].mxu0 %v439
      %v478 = vpop.f32.mrb[0].mxu0
      %v479 = vadd.f32 %v437, %v478
      %v480 = vpop.f32.mrb[0].mxu0
      %v481 = vpop.f32.mrb[0].mxu0
      %v482 = vpop.f32.mrb[0].mxu0
      %483 = vdwg.mxu0
      %vm484 = vcmp.gt.s32.totalorder %v325, %v323
      %v485 = vsel %vm484, -1e+12, %v479
      %v486 = vsel %vm347, %v485, -inf
      %487 = vmax.xlane.f32.xlu0 %v486
      %v488 = vpop.xlane.xlu0 %487
      %v489 = vsub.f32 %v485, %v488
      %v490 = vmul.f32 %v489, 1.442695
      %v491 = vpow.pop %v490
      %v492 = vsel %vm347, %v491, 0.0
      %493 = vadd.xlane.f32.xlu0 %v492
      %v494 = vpop.xlane.xlu0 %493
      %v495 = vpack.c.bf16 %v491, %v491
      %v497 = vsel %vm347, %v495, 0
      %vm499 = vcmask 1043456
      %v501 = vsel %vm499, %v316, 0
      %503 = vmatprep.subr.bf16.mxu0 0
      %504 = vmatpush1.bf16.msra.mxu0 %v501
      %505 = vmatprep.subr.bf16.mxu0 0
      %506 = vmatpush1.bf16.msra.mxu0 0
      %507 = vmatprep.subr.bf16.mxu0 0
      %508 = vmatpush1.bf16.msra.mxu0 0
      %509 = vmatprep.subr.bf16.mxu0 0
      %510 = vmatpush1.bf16.msra.mxu0 0
      %511 = vmatprep.subr.bf16.mxu0 0
      %512 = vmatpush1.bf16.msra.mxu0 0
      %513 = vmatprep.subr.bf16.mxu0 0
      %514 = vmatpush1.bf16.msra.mxu0 0
      %515 = vmatprep.subr.bf16.mxu0 0
      %516 = vmatpush1.bf16.msra.mxu0 0
      %517 = vmatprep.subr.bf16.mxu0 0
      %518 = vmatpush1.bf16.msra.mxu0 0
      %519 = vmatprep.subr.bf16.mxu0 0
      %520 = vmatpush1.bf16.msra.mxu0 0
      %521 = vmatprep.subr.bf16.mxu0 0
      %522 = vmatpush1.bf16.msra.mxu0 0
      %523 = vmatprep.subr.bf16.mxu0 0
      %524 = vmatpush1.bf16.msra.mxu0 0
      %525 = vmatprep.subr.bf16.mxu0 0
      %526 = vmatpush1.bf16.msra.mxu0 0
      %527 = vmatprep.subr.bf16.mxu0 0
      %528 = vmatpush1.bf16.msra.mxu0 0
      %529 = vmatprep.subr.bf16.mxu0 0
      %530 = vmatpush1.bf16.msra.mxu0 0
      %531 = vmatprep.subr.bf16.mxu0 0
      %532 = vmatpush1.bf16.msra.mxu0 0
      %533 = vmatprep.subr.bf16.mxu0 0
      %534 = vmatpush1.bf16.msra.mxu0 0
      %535 = vmatprep.mubr.bf16.mxu0 0
      %536 = vmatmul.mubr.bf16.gmra.mrb[0].mxu0 %v497
      %v537 = vpop.f32.mrb[0].mxu0
      %v538 = vadd.f32 0.0, %v537
      %v539 = vpop.f32.mrb[0].mxu0
      %v540 = vpop.f32.mrb[0].mxu0
      %v541 = vpop.f32.mrb[0].mxu0
      %542 = vdwg.mxu0
      %v543 = vrcp.pop %v494
      %v544 = vmul.f32 %v538, %v543
      %545 = vrot.lane.b32.xlu0 %v333, 8
      %v546 = vpop.permute.xlu0 %545
      %v548 = vadd.f32 %v313, %v546
      %v549 = vmul.f32 %v548, 0.17677669
      %v550 = vpack.c.bf16 %v549, %v549
      %551 = vrot.lane.b32.xlu0 %v342, 8
      %v552 = vpop.permute.xlu0 %551
      %v554 = vadd.f32 %v313, %v552
      %v555 = vmul.f32 %v554, 0.17677669
      %v556 = vpack.c.bf16 %v555, %v555
      %558 = vrot.lane.b32.xlu0 %v556, 120
      %v559 = vpop.permute.xlu0 %558
      %v561 = vunpack.c.l.b16 %v315
      %v562 = vpack.c.b16 %v561, %v561
      %563 = vrot.lane.b32.xlu0 %v562, 120
      %v564 = vpop.permute.xlu0 %563
      %v566 = vsel %vm347, %v559, 0
      %v569 = vsel %vm347, %v564, 0
      %571 = vmatprep.subr.bf16.mxu0 0
      %572 = vmatpush1.bf16.xpose.msra.mxu0 %v569
      %573 = vmatprep.subr.bf16.mxu0 0
      %574 = vmatpush1.bf16.xpose.msra.mxu0 0
      %575 = vmatprep.subr.bf16.mxu0 0
      %576 = vmatpush1.bf16.xpose.msra.mxu0 0
      %577 = vmatprep.subr.bf16.mxu0 0
      %578 = vmatpush1.bf16.xpose.msra.mxu0 0
      %579 = vmatprep.subr.bf16.mxu0 0
      %580 = vmatpush1.bf16.xpose.msra.mxu0 0
      %581 = vmatprep.subr.bf16.mxu0 0
      %582 = vmatpush1.bf16.xpose.msra.mxu0 0
      %583 = vmatprep.subr.bf16.mxu0 0
      %584 = vmatpush1.bf16.xpose.msra.mxu0 0
      %585 = vmatprep.subr.bf16.mxu0 0
      %586 = vmatpush1.bf16.xpose.msra.mxu0 0
      %587 = vmatprep.subr.bf16.mxu0 0
      %588 = vmatpush1.bf16.xpose.msra.mxu0 0
      %589 = vmatprep.subr.bf16.mxu0 0
      %590 = vmatpush1.bf16.xpose.msra.mxu0 0
      %591 = vmatprep.subr.bf16.mxu0 0
      %592 = vmatpush1.bf16.xpose.msra.mxu0 0
      %593 = vmatprep.subr.bf16.mxu0 0
      %594 = vmatpush1.bf16.xpose.msra.mxu0 0
      %595 = vmatprep.subr.bf16.mxu0 0
      %596 = vmatpush1.bf16.xpose.msra.mxu0 0
      %597 = vmatprep.subr.bf16.mxu0 0
      %598 = vmatpush1.bf16.xpose.msra.mxu0 0
      %599 = vmatprep.subr.bf16.mxu0 0
      %600 = vmatpush1.bf16.xpose.msra.mxu0 0
      %601 = vmatprep.subr.bf16.mxu0 0
      %602 = vmatpush1.bf16.xpose.msra.mxu0 0
      %603 = vmatprep.mubr.bf16.mxu0 0
      %604 = vmatmul.mubr.bf16.gmra.mrb[0].mxu0 %v566
      %v605 = vpop.f32.mrb[0].mxu0
      %v606 = vadd.f32 0.0, %v605
      %v607 = vpop.f32.mrb[0].mxu0
      %v608 = vpop.f32.mrb[0].mxu0
      %v609 = vpop.f32.mrb[0].mxu0
      %610 = vdwg.mxu0
      %612 = vrot.lane.b32.xlu0 %v606, 121
      %v613 = vpop.permute.xlu0 %612
      %615 = vrot.lane.b32.xlu0 %v606, 1
      %v616 = vpop.permute.xlu0 %615
      %v618 = vsel %vm401, %v613, %v616
      %v619 = vsel %vm406, %v618, %v606
      %621 = vrot.lane.b32.xlu0 %v619, 122
      %v622 = vpop.permute.xlu0 %621
      %624 = vrot.lane.b32.xlu0 %v619, 2
      %v625 = vpop.permute.xlu0 %624
      %v627 = vsel %vm415, %v622, %v625
      %v628 = vsel %vm421, %v627, %v619
      %630 = vrot.lane.b32.xlu0 %v628, 124
      %v631 = vpop.permute.xlu0 %630
      %633 = vrot.lane.b32.xlu0 %v628, 4
      %v634 = vpop.permute.xlu0 %633
      %v636 = vsel %vm430, %v631, %v634
      %v637 = vsel %vm436, %v636, %v628
      %639 = vrot.lane.b32.xlu0 %v550, 120
      %v640 = vpop.permute.xlu0 %639
      %v642 = vunpack.c.l.b16 %v314
      %v643 = vpack.c.b16 %v642, %v642
      %644 = vrot.lane.b32.xlu0 %v643, 120
      %v645 = vpop.permute.xlu0 %644
      %v647 = vsel %vm347, %v640, 0
      %v650 = vsel %vm347, %v645, 0
      %652 = vmatprep.subr.bf16.mxu0 0
      %653 = vmatpush1.bf16.xpose.msra.mxu0 %v650
      %654 = vmatprep.subr.bf16.mxu0 0
      %655 = vmatpush1.bf16.xpose.msra.mxu0 0
      %656 = vmatprep.subr.bf16.mxu0 0
      %657 = vmatpush1.bf16.xpose.msra.mxu0 0
      %658 = vmatprep.subr.bf16.mxu0 0
      %659 = vmatpush1.bf16.xpose.msra.mxu0 0
      %660 = vmatprep.subr.bf16.mxu0 0
      %661 = vmatpush1.bf16.xpose.msra.mxu0 0
      %662 = vmatprep.subr.bf16.mxu0 0
      %663 = vmatpush1.bf16.xpose.msra.mxu0 0
      %664 = vmatprep.subr.bf16.mxu0 0
      %665 = vmatpush1.bf16.xpose.msra.mxu0 0
      %666 = vmatprep.subr.bf16.mxu0 0
      %667 = vmatpush1.bf16.xpose.msra.mxu0 0
      %668 = vmatprep.subr.bf16.mxu0 0
      %669 = vmatpush1.bf16.xpose.msra.mxu0 0
      %670 = vmatprep.subr.bf16.mxu0 0
      %671 = vmatpush1.bf16.xpose.msra.mxu0 0
      %672 = vmatprep.subr.bf16.mxu0 0
      %673 = vmatpush1.bf16.xpose.msra.mxu0 0
      %674 = vmatprep.subr.bf16.mxu0 0
      %675 = vmatpush1.bf16.xpose.msra.mxu0 0
      %676 = vmatprep.subr.bf16.mxu0 0
      %677 = vmatpush1.bf16.xpose.msra.mxu0 0
      %678 = vmatprep.subr.bf16.mxu0 0
      %679 = vmatpush1.bf16.xpose.msra.mxu0 0
      %680 = vmatprep.subr.bf16.mxu0 0
      %681 = vmatpush1.bf16.xpose.msra.mxu0 0
      %682 = vmatprep.subr.bf16.mxu0 0
      %683 = vmatpush1.bf16.xpose.msra.mxu0 0
      %684 = vmatprep.mubr.bf16.mxu0 0
      %685 = vmatmul.mubr.bf16.gmra.mrb[0].mxu0 %v647
      %v686 = vpop.f32.mrb[0].mxu0
      %v687 = vadd.f32 %v637, %v686
      %v688 = vpop.f32.mrb[0].mxu0
      %v689 = vpop.f32.mrb[0].mxu0
      %v690 = vpop.f32.mrb[0].mxu0
      %691 = vdwg.mxu0
      %v692 = vsel %vm484, -1e+12, %v687
      %v693 = vsel %vm347, %v692, -inf
      %694 = vmax.xlane.f32.xlu0 %v693
      %v695 = vpop.xlane.xlu0 %694
      %v696 = vsub.f32 %v692, %v695
      %v697 = vmul.f32 %v696, 1.442695
      %v698 = vpow.pop %v697
      %v699 = vsel %vm347, %v698, 0.0
      %700 = vadd.xlane.f32.xlu0 %v699
      %v701 = vpop.xlane.xlu0 %700
      %v702 = vpack.c.bf16 %v698, %v698
      %v704 = vunpack.c.l.b16 %v316
      %v705 = vpack.c.b16 %v704, %v704
      %706 = vrot.lane.b32.xlu0 %v705, 120
      %v707 = vpop.permute.xlu0 %706
      %v709 = vsel %vm347, %v702, 0
      %v712 = vsel %vm499, %v707, 0
      %714 = vmatprep.subr.bf16.mxu0 0
      %715 = vmatpush1.bf16.msra.mxu0 %v712
      %716 = vmatprep.subr.bf16.mxu0 0
      %717 = vmatpush1.bf16.msra.mxu0 0
      %718 = vmatprep.subr.bf16.mxu0 0
      %719 = vmatpush1.bf16.msra.mxu0 0
      %720 = vmatprep.subr.bf16.mxu0 0
      %721 = vmatpush1.bf16.msra.mxu0 0
      %722 = vmatprep.subr.bf16.mxu0 0
      %723 = vmatpush1.bf16.msra.mxu0 0
      %724 = vmatprep.subr.bf16.mxu0 0
      %725 = vmatpush1.bf16.msra.mxu0 0
      %726 = vmatprep.subr.bf16.mxu0 0
      %727 = vmatpush1.bf16.msra.mxu0 0
      %728 = vmatprep.subr.bf16.mxu0 0
      %729 = vmatpush1.bf16.msra.mxu0 0
      %730 = vmatprep.subr.bf16.mxu0 0
      %731 = vmatpush1.bf16.msra.mxu0 0
      %732 = vmatprep.subr.bf16.mxu0 0
      %733 = vmatpush1.bf16.msra.mxu0 0
      %734 = vmatprep.subr.bf16.mxu0 0
      %735 = vmatpush1.bf16.msra.mxu0 0
      %736 = vmatprep.subr.bf16.mxu0 0
      %737 = vmatpush1.bf16.msra.mxu0 0
      %738 = vmatprep.subr.bf16.mxu0 0
      %739 = vmatpush1.bf16.msra.mxu0 0
      %740 = vmatprep.subr.bf16.mxu0 0
      %741 = vmatpush1.bf16.msra.mxu0 0
      %742 = vmatprep.subr.bf16.mxu0 0
      %743 = vmatpush1.bf16.msra.mxu0 0
      %744 = vmatprep.subr.bf16.mxu0 0
      %745 = vmatpush1.bf16.msra.mxu0 0
      %746 = vmatprep.mubr.bf16.mxu0 0
      %747 = vmatmul.mubr.bf16.gmra.mrb[0].mxu0 %v709
      %v748 = vpop.f32.mrb[0].mxu0
      %v749 = vadd.f32 0.0, %v748
      %v750 = vpop.f32.mrb[0].mxu0
      %v751 = vpop.f32.mrb[0].mxu0
      %v752 = vpop.f32.mrb[0].mxu0
      %753 = vdwg.mxu0
      %v754 = vrcp.pop %v701
      %v755 = vmul.f32 %v749, %v754
      %756 = vrot.lane.b32.xlu0 %v333, 16
      %v757 = vpop.permute.xlu0 %756
      %v759 = vadd.f32 %v313, %v757
      %v760 = vmul.f32 %v759, 0.17677669
      %v761 = vpack.c.bf16 %v760, %v760
      %762 = vrot.lane.b32.xlu0 %v342, 16
      %v763 = vpop.permute.xlu0 %762
      %v765 = vadd.f32 %v313, %v763
      %v766 = vmul.f32 %v765, 0.17677669
      %v767 = vpack.c.bf16 %v766, %v766
      %769 = vrot.lane.b32.xlu0 %v767, 112
      %v770 = vpop.permute.xlu0 %769
      %771 = vrot.lane.b32.xlu0 %v562, 112
      %v772 = vpop.permute.xlu0 %771
      %v774 = vsel %vm347, %v770, 0
      %v777 = vsel %vm347, %v772, 0
      %779 = vmatprep.subr.bf16.mxu0 0
      %780 = vmatpush1.bf16.xpose.msra.mxu0 %v777
      %781 = vmatprep.subr.bf16.mxu0 0
      %782 = vmatpush1.bf16.xpose.msra.mxu0 0
      %783 = vmatprep.subr.bf16.mxu0 0
      %784 = vmatpush1.bf16.xpose.msra.mxu0 0
      %785 = vmatprep.subr.bf16.mxu0 0
      %786 = vmatpush1.bf16.xpose.msra.mxu0 0
      %787 = vmatprep.subr.bf16.mxu0 0
      %788 = vmatpush1.bf16.xpose.msra.mxu0 0
      %789 = vmatprep.subr.bf16.mxu0 0
      %790 = vmatpush1.bf16.xpose.msra.mxu0 0
      %791 = vmatprep.subr.bf16.mxu0 0
      %792 = vmatpush1.bf16.xpose.msra.mxu0 0
      %793 = vmatprep.subr.bf16.mxu0 0
      %794 = vmatpush1.bf16.xpose.msra.mxu0 0
      %795 = vmatprep.subr.bf16.mxu0 0
      %796 = vmatpush1.bf16.xpose.msra.mxu0 0
      %797 = vmatprep.subr.bf16.mxu0 0
      %798 = vmatpush1.bf16.xpose.msra.mxu0 0
      %799 = vmatprep.subr.bf16.mxu0 0
      %800 = vmatpush1.bf16.xpose.msra.mxu0 0
      %801 = vmatprep.subr.bf16.mxu0 0
      %802 = vmatpush1.bf16.xpose.msra.mxu0 0
      %803 = vmatprep.subr.bf16.mxu0 0
      %804 = vmatpush1.bf16.xpose.msra.mxu0 0
      %805 = vmatprep.subr.bf16.mxu0 0
      %806 = vmatpush1.bf16.xpose.msra.mxu0 0
      %807 = vmatprep.subr.bf16.mxu0 0
      %808 = vmatpush1.bf16.xpose.msra.mxu0 0
      %809 = vmatprep.subr.bf16.mxu0 0
      %810 = vmatpush1.bf16.xpose.msra.mxu0 0
      %811 = vmatprep.mubr.bf16.mxu0 0
      %812 = vmatmul.mubr.bf16.gmra.mrb[0].mxu0 %v774
      %v813 = vpop.f32.mrb[0].mxu0
      %v814 = vadd.f32 0.0, %v813
      %v815 = vpop.f32.mrb[0].mxu0
      %v816 = vpop.f32.mrb[0].mxu0
      %v817 = vpop.f32.mrb[0].mxu0
      %818 = vdwg.mxu0
      %820 = vrot.lane.b32.xlu0 %v814, 121
      %v821 = vpop.permute.xlu0 %820
      %823 = vrot.lane.b32.xlu0 %v814, 1
      %v824 = vpop.permute.xlu0 %823
      %v826 = vsel %vm401, %v821, %v824
      %v827 = vsel %vm406, %v826, %v814
      %829 = vrot.lane.b32.xlu0 %v827, 122
      %v830 = vpop.permute.xlu0 %829
      %832 = vrot.lane.b32.xlu0 %v827, 2
      %v833 = vpop.permute.xlu0 %832
      %v835 = vsel %vm415, %v830, %v833
      %v836 = vsel %vm421, %v835, %v827
      %838 = vrot.lane.b32.xlu0 %v836, 124
      %v839 = vpop.permute.xlu0 %838
      %841 = vrot.lane.b32.xlu0 %v836, 4
      %v842 = vpop.permute.xlu0 %841
      %v844 = vsel %vm430, %v839, %v842
      %v845 = vsel %vm436, %v844, %v836
      %847 = vrot.lane.b32.xlu0 %v761, 112
      %v848 = vpop.permute.xlu0 %847
      %849 = vrot.lane.b32.xlu0 %v643, 112
      %v850 = vpop.permute.xlu0 %849
      %v852 = vsel %vm347, %v848, 0
      %v855 = vsel %vm347, %v850, 0
      %857 = vmatprep.subr.bf16.mxu0 0
      %858 = vmatpush1.bf16.xpose.msra.mxu0 %v855
      %859 = vmatprep.subr.bf16.mxu0 0
      %860 = vmatpush1.bf16.xpose.msra.mxu0 0
      %861 = vmatprep.subr.bf16.mxu0 0
      %862 = vmatpush1.bf16.xpose.msra.mxu0 0
      %863 = vmatprep.subr.bf16.mxu0 0
      %864 = vmatpush1.bf16.xpose.msra.mxu0 0
      %865 = vmatprep.subr.bf16.mxu0 0
      %866 = vmatpush1.bf16.xpose.msra.mxu0 0
      %867 = vmatprep.subr.bf16.mxu0 0
      %868 = vmatpush1.bf16.xpose.msra.mxu0 0
      %869 = vmatprep.subr.bf16.mxu0 0
      %870 = vmatpush1.bf16.xpose.msra.mxu0 0
      %871 = vmatprep.subr.bf16.mxu0 0
      %872 = vmatpush1.bf16.xpose.msra.mxu0 0
      %873 = vmatprep.subr.bf16.mxu0 0
      %874 = vmatpush1.bf16.xpose.msra.mxu0 0
      %875 = vmatprep.subr.bf16.mxu0 0
      %876 = vmatpush1.bf16.xpose.msra.mxu0 0
      %877 = vmatprep.subr.bf16.mxu0 0
      %878 = vmatpush1.bf16.xpose.msra.mxu0 0
      %879 = vmatprep.subr.bf16.mxu0 0
      %880 = vmatpush1.bf16.xpose.msra.mxu0 0
      %881 = vmatprep.subr.bf16.mxu0 0
      %882 = vmatpush1.bf16.xpose.msra.mxu0 0
      %883 = vmatprep.subr.bf16.mxu0 0
      %884 = vmatpush1.bf16.xpose.msra.mxu0 0
      %885 = vmatprep.subr.bf16.mxu0 0
      %886 = vmatpush1.bf16.xpose.msra.mxu0 0
      %887 = vmatprep.subr.bf16.mxu0 0
      %888 = vmatpush1.bf16.xpose.msra.mxu0 0
      %889 = vmatprep.mubr.bf16.mxu0 0
      %890 = vmatmul.mubr.bf16.gmra.mrb[0].mxu0 %v852
      %v891 = vpop.f32.mrb[0].mxu0
      %v892 = vadd.f32 %v845, %v891
      %v893 = vpop.f32.mrb[0].mxu0
      %v894 = vpop.f32.mrb[0].mxu0
      %v895 = vpop.f32.mrb[0].mxu0
      %896 = vdwg.mxu0
      %v897 = vsel %vm484, -1e+12, %v892
      %v898 = vsel %vm347, %v897, -inf
      %899 = vmax.xlane.f32.xlu0 %v898
      %v900 = vpop.xlane.xlu0 %899
      %v901 = vsub.f32 %v897, %v900
      %v902 = vmul.f32 %v901, 1.442695
      %v903 = vpow.pop %v902
      %v904 = vsel %vm347, %v903, 0.0
      %905 = vadd.xlane.f32.xlu0 %v904
      %v906 = vpop.xlane.xlu0 %905
      %v907 = vpack.c.bf16 %v903, %v903
      %908 = vrot.lane.b32.xlu0 %v705, 112
      %v909 = vpop.permute.xlu0 %908
      %v911 = vsel %vm347, %v907, 0
      %v914 = vsel %vm499, %v909, 0
      %916 = vmatprep.subr.bf16.mxu0 0
      %917 = vmatpush1.bf16.msra.mxu0 %v914
      %918 = vmatprep.subr.bf16.mxu0 0
      %919 = vmatpush1.bf16.msra.mxu0 0
      %920 = vmatprep.subr.bf16.mxu0 0
      %921 = vmatpush1.bf16.msra.mxu0 0
      %922 = vmatprep.subr.bf16.mxu0 0
      %923 = vmatpush1.bf16.msra.mxu0 0
      %924 = vmatprep.subr.bf16.mxu0 0
      %925 = vmatpush1.bf16.msra.mxu0 0
      %926 = vmatprep.subr.bf16.mxu0 0
      %927 = vmatpush1.bf16.msra.mxu0 0
      %928 = vmatprep.subr.bf16.mxu0 0
      %929 = vmatpush1.bf16.msra.mxu0 0
      %930 = vmatprep.subr.bf16.mxu0 0
      %931 = vmatpush1.bf16.msra.mxu0 0
      %932 = vmatprep.subr.bf16.mxu0 0
      %933 = vmatpush1.bf16.msra.mxu0 0
      %934 = vmatprep.subr.bf16.mxu0 0
      %935 = vmatpush1.bf16.msra.mxu0 0
      %936 = vmatprep.subr.bf16.mxu0 0
      %937 = vmatpush1.bf16.msra.mxu0 0
      %938 = vmatprep.subr.bf16.mxu0 0
      %939 = vmatpush1.bf16.msra.mxu0 0
      %940 = vmatprep.subr.bf16.mxu0 0
      %941 = vmatpush1.bf16.msra.mxu0 0
      %942 = vmatprep.subr.bf16.mxu0 0
      %943 = vmatpush1.bf16.msra.mxu0 0
      %944 = vmatprep.subr.bf16.mxu0 0
      %945 = vmatpush1.bf16.msra.mxu0 0
      %946 = vmatprep.subr.bf16.mxu0 0
      %947 = vmatpush1.bf16.msra.mxu0 0
      %948 = vmatprep.mubr.bf16.mxu0 0
      %949 = vmatmul.mubr.bf16.gmra.mrb[0].mxu0 %v911
      %v950 = vpop.f32.mrb[0].mxu0
      %v951 = vadd.f32 0.0, %v950
      %v952 = vpop.f32.mrb[0].mxu0
      %v953 = vpop.f32.mrb[0].mxu0
      %v954 = vpop.f32.mrb[0].mxu0
      %955 = vdwg.mxu0
      %v956 = vrcp.pop %v906
      %v957 = vmul.f32 %v951, %v956
      %958 = vrot.lane.b32.xlu0 %v333, 24
      %v959 = vpop.permute.xlu0 %958
      %v961 = vadd.f32 %v313, %v959
      %v962 = vmul.f32 %v961, 0.17677669
      %v963 = vpack.c.bf16 %v962, %v962
      %964 = vrot.lane.b32.xlu0 %v342, 24
      %v965 = vpop.permute.xlu0 %964
      %v967 = vadd.f32 %v313, %v965
      %v968 = vmul.f32 %v967, 0.17677669
      %v969 = vpack.c.bf16 %v968, %v968
      %971 = vrot.lane.b32.xlu0 %v969, 104
      %v972 = vpop.permute.xlu0 %971
      %973 = vrot.lane.b32.xlu0 %v562, 104
      %v974 = vpop.permute.xlu0 %973
      %v976 = vsel %vm347, %v972, 0
      %v979 = vsel %vm347, %v974, 0
      %981 = vmatprep.subr.bf16.mxu0 0
      %982 = vmatpush1.bf16.xpose.msra.mxu0 %v979
      %983 = vmatprep.subr.bf16.mxu0 0
      %984 = vmatpush1.bf16.xpose.msra.mxu0 0
      %985 = vmatprep.subr.bf16.mxu0 0
      %986 = vmatpush1.bf16.xpose.msra.mxu0 0
      %987 = vmatprep.subr.bf16.mxu0 0
      %988 = vmatpush1.bf16.xpose.msra.mxu0 0
      %989 = vmatprep.subr.bf16.mxu0 0
      %990 = vmatpush1.bf16.xpose.msra.mxu0 0
      %991 = vmatprep.subr.bf16.mxu0 0
      %992 = vmatpush1.bf16.xpose.msra.mxu0 0
      %993 = vmatprep.subr.bf16.mxu0 0
      %994 = vmatpush1.bf16.xpose.msra.mxu0 0
      %995 = vmatprep.subr.bf16.mxu0 0
      %996 = vmatpush1.bf16.xpose.msra.mxu0 0
      %997 = vmatprep.subr.bf16.mxu0 0
      %998 = vmatpush1.bf16.xpose.msra.mxu0 0
      %999 = vmatprep.subr.bf16.mxu0 0
      %1000 = vmatpush1.bf16.xpose.msra.mxu0 0
      %1001 = vmatprep.subr.bf16.mxu0 0
      %1002 = vmatpush1.bf16.xpose.msra.mxu0 0
      %1003 = vmatprep.subr.bf16.mxu0 0
      %1004 = vmatpush1.bf16.xpose.msra.mxu0 0
      %1005 = vmatprep.subr.bf16.mxu0 0
      %1006 = vmatpush1.bf16.xpose.msra.mxu0 0
      %1007 = vmatprep.subr.bf16.mxu0 0
      %1008 = vmatpush1.bf16.xpose.msra.mxu0 0
      %1009 = vmatprep.subr.bf16.mxu0 0
      %1010 = vmatpush1.bf16.xpose.msra.mxu0 0
      %1011 = vmatprep.subr.bf16.mxu0 0
      %1012 = vmatpush1.bf16.xpose.msra.mxu0 0
      %1013 = vmatprep.mubr.bf16.mxu0 0
      %1014 = vmatmul.mubr.bf16.gmra.mrb[0].mxu0 %v976
      %v1015 = vpop.f32.mrb[0].mxu0
      %v1016 = vadd.f32 0.0, %v1015
      %v1017 = vpop.f32.mrb[0].mxu0
      %v1018 = vpop.f32.mrb[0].mxu0
      %v1019 = vpop.f32.mrb[0].mxu0
      %1020 = vdwg.mxu0
      %1022 = vrot.lane.b32.xlu0 %v1016, 121
      %v1023 = vpop.permute.xlu0 %1022
      %1025 = vrot.lane.b32.xlu0 %v1016, 1
      %v1026 = vpop.permute.xlu0 %1025
      %v1028 = vsel %vm401, %v1023, %v1026
      %v1029 = vsel %vm406, %v1028, %v1016
      %1031 = vrot.lane.b32.xlu0 %v1029, 122
      %v1032 = vpop.permute.xlu0 %1031
      %1034 = vrot.lane.b32.xlu0 %v1029, 2
      %v1035 = vpop.permute.xlu0 %1034
      %v1037 = vsel %vm415, %v1032, %v1035
      %v1038 = vsel %vm421, %v1037, %v1029
      %1040 = vrot.lane.b32.xlu0 %v1038, 124
      %v1041 = vpop.permute.xlu0 %1040
      %1043 = vrot.lane.b32.xlu0 %v1038, 4
      %v1044 = vpop.permute.xlu0 %1043
      %v1046 = vsel %vm430, %v1041, %v1044
      %v1047 = vsel %vm436, %v1046, %v1038
      %1049 = vrot.lane.b32.xlu0 %v963, 104
      %v1050 = vpop.permute.xlu0 %1049
      %1051 = vrot.lane.b32.xlu0 %v643, 104
      %v1052 = vpop.permute.xlu0 %1051
      %v1054 = vsel %vm347, %v1050, 0
      %v1057 = vsel %vm347, %v1052, 0
      %1059 = vmatprep.subr.bf16.mxu0 0
      %1060 = vmatpush1.bf16.xpose.msra.mxu0 %v1057
      %1061 = vmatprep.subr.bf16.mxu0 0
      %1062 = vmatpush1.bf16.xpose.msra.mxu0 0
      %1063 = vmatprep.subr.bf16.mxu0 0
      %1064 = vmatpush1.bf16.xpose.msra.mxu0 0
      %1065 = vmatprep.subr.bf16.mxu0 0
      %1066 = vmatpush1.bf16.xpose.msra.mxu0 0
      %1067 = vmatprep.subr.bf16.mxu0 0
      %1068 = vmatpush1.bf16.xpose.msra.mxu0 0
      %1069 = vmatprep.subr.bf16.mxu0 0
      %1070 = vmatpush1.bf16.xpose.msra.mxu0 0
      %1071 = vmatprep.subr.bf16.mxu0 0
      %1072 = vmatpush1.bf16.xpose.msra.mxu0 0
      %1073 = vmatprep.subr.bf16.mxu0 0
      %1074 = vmatpush1.bf16.xpose.msra.mxu0 0
      %1075 = vmatprep.subr.bf16.mxu0 0
      %1076 = vmatpush1.bf16.xpose.msra.mxu0 0
      %1077 = vmatprep.subr.bf16.mxu0 0
      %1078 = vmatpush1.bf16.xpose.msra.mxu0 0
      %1079 = vmatprep.subr.bf16.mxu0 0
      %1080 = vmatpush1.bf16.xpose.msra.mxu0 0
      %1081 = vmatprep.subr.bf16.mxu0 0
      %1082 = vmatpush1.bf16.xpose.msra.mxu0 0
      %1083 = vmatprep.subr.bf16.mxu0 0
      %1084 = vmatpush1.bf16.xpose.msra.mxu0 0
      %1085 = vmatprep.subr.bf16.mxu0 0
      %1086 = vmatpush1.bf16.xpose.msra.mxu0 0
      %1087 = vmatprep.subr.bf16.mxu0 0
      %1088 = vmatpush1.bf16.xpose.msra.mxu0 0
      %1089 = vmatprep.subr.bf16.mxu0 0
      %1090 = vmatpush1.bf16.xpose.msra.mxu0 0
      %1091 = vmatprep.mubr.bf16.mxu0 0
      %1092 = vmatmul.mubr.bf16.gmra.mrb[0].mxu0 %v1054
      %v1093 = vpop.f32.mrb[0].mxu0
      %v1094 = vadd.f32 %v1047, %v1093
      %v1095 = vpop.f32.mrb[0].mxu0
      %v1096 = vpop.f32.mrb[0].mxu0
      %v1097 = vpop.f32.mrb[0].mxu0
      %1098 = vdwg.mxu0
      %v1099 = vsel %vm484, -1e+12, %v1094
      %v1100 = vsel %vm347, %v1099, -inf
      %1101 = vmax.xlane.f32.xlu0 %v1100
      %v1102 = vpop.xlane.xlu0 %1101
      %v1103 = vsub.f32 %v1099, %v1102
      %v1104 = vmul.f32 %v1103, 1.442695
      %v1105 = vpow.pop %v1104
      %v1106 = vsel %vm347, %v1105, 0.0
      %1107 = vadd.xlane.f32.xlu0 %v1106
      %v1108 = vpop.xlane.xlu0 %1107
      %v1109 = vpack.c.bf16 %v1105, %v1105
      %1110 = vrot.lane.b32.xlu0 %v705, 104
      %v1111 = vpop.permute.xlu0 %1110
      %v1113 = vsel %vm347, %v1109, 0
      %v1116 = vsel %vm499, %v1111, 0
      %1118 = vmatprep.subr.bf16.mxu0 0
      %1119 = vmatpush1.bf16.msra.mxu0 %v1116
      %1120 = vmatprep.subr.bf16.mxu0 0
      %1121 = vmatpush1.bf16.msra.mxu0 0
      %1122 = vmatprep.subr.bf16.mxu0 0
      %1123 = vmatpush1.bf16.msra.mxu0 0
      %1124 = vmatprep.subr.bf16.mxu0 0
      %1125 = vmatpush1.bf16.msra.mxu0 0
      %1126 = vmatprep.subr.bf16.mxu0 0
      %1127 = vmatpush1.bf16.msra.mxu0 0
      %1128 = vmatprep.subr.bf16.mxu0 0
      %1129 = vmatpush1.bf16.msra.mxu0 0
      %1130 = vmatprep.subr.bf16.mxu0 0
      %1131 = vmatpush1.bf16.msra.mxu0 0
      %1132 = vmatprep.subr.bf16.mxu0 0
      %1133 = vmatpush1.bf16.msra.mxu0 0
      %1134 = vmatprep.subr.bf16.mxu0 0
      %1135 = vmatpush1.bf16.msra.mxu0 0
      %1136 = vmatprep.subr.bf16.mxu0 0
      %1137 = vmatpush1.bf16.msra.mxu0 0
      %1138 = vmatprep.subr.bf16.mxu0 0
      %1139 = vmatpush1.bf16.msra.mxu0 0
      %1140 = vmatprep.subr.bf16.mxu0 0
      %1141 = vmatpush1.bf16.msra.mxu0 0
      %1142 = vmatprep.subr.bf16.mxu0 0
      %1143 = vmatpush1.bf16.msra.mxu0 0
      %1144 = vmatprep.subr.bf16.mxu0 0
      %1145 = vmatpush1.bf16.msra.mxu0 0
      %1146 = vmatprep.subr.bf16.mxu0 0
      %1147 = vmatpush1.bf16.msra.mxu0 0
      %1148 = vmatprep.subr.bf16.mxu0 0
      %1149 = vmatpush1.bf16.msra.mxu0 0
      %1150 = vmatprep.mubr.bf16.mxu0 0
      %1151 = vmatmul.mubr.bf16.gmra.mrb[0].mxu0 %v1113
      %v1152 = vpop.f32.mrb[0].mxu0
      %v1153 = vadd.f32 0.0, %v1152
      %v1154 = vpop.f32.mrb[0].mxu0
      %v1155 = vpop.f32.mrb[0].mxu0
      %v1156 = vpop.f32.mrb[0].mxu0
      %1157 = vdwg.mxu0
      %v1158 = vrcp.pop %v1108
      %v1159 = vmul.f32 %v1153, %v1158
      %1161 = vrot.lane.b32.xlu0 %v755, 8
      %v1162 = vpop.permute.xlu0 %1161
      %1165 = vrot.lane.b32.xlu0 %v957, 16
      %v1166 = vpop.permute.xlu0 %1165
      %1169 = vrot.lane.b32.xlu0 %v1159, 24
      %v1170 = vpop.permute.xlu0 %1169
      %v1172 = vsel %vm347, %v544, %v1162
      %vm1173 = vcmask 130048
      %v1174 = vsel %vm1173, %v1172, %v1166
      %vm1175 = vcmask 195584
      %v1176 = vsel %vm1175, %v1174, %v1170
      %vm1177 = vcmask 261120
      %1178 = vst.msk [vmem:[%s311] sm:$0xff] %vm1177, %v1176
      %p1179 = scmp.lt.s32.totalorder %s21, 1
      %s1180 = scalar_select %p1179, %s21, 1
      %p1181 = scmp.lt.s32.totalorder %s22, 0
      %s1182 = scalar_select %p1181, %s22, 0
      %s1183 = sadd.s32 %s1182, %s1180
      %s1184 = smul.addr %s1183, 8
      %s1185 = scalar_lea.vmem %s6, %s1184
      // Predicated region
      $region45: #{_lambda_.61} parent=43 // pred_check
        %p1186 = pneg %p192
      $region46: #{_lambda_.61} parent=43 // pred_check_branch
        %1188 = sbr.rel (%p1186) target = $region48
      $region47: #{_lambda_.61} parent=43 // pred_region
        _
      $region48: #{_lambda_.61} parent=43 // pred_fallthru
        _
    $region44: #{_lambda_.61} parent=5 // pred_fallthru
      _
    %p1189 = scmp.le.s32.totalorder 2, %s12
    // Predicated region
    $region49: #{_lambda_.61} parent=5 // pred_check
      %p1190 = pneg %p1189
    $region50: #{_lambda_.61} parent=5 // pred_check_branch
      %1192 = sbr.rel (%p1190) target = $region52
    $region51: #{_lambda_.61} parent=5 // pred_region
      %s1193 = ssub.s32 %s12, 2
      // Predicated region
      $region53: #{_lambda_.61} parent=51 // pred_check
        %p1194 = pneg %p198
      $region54: #{_lambda_.61} parent=51 // pred_check_branch
        %1196 = sbr.rel (%p1194) target = $region56
      $region55: #{_lambda_.61} parent=51 // pred_region
        %p1197 = scmp.lt.s32.totalorder %s23, 1
        %s1198 = scalar_select %p1197, %s23, 1
        %p1199 = scmp.lt.s32.totalorder %s24, 0
        %s1200 = scalar_select %p1199, %s24, 0
        %s1201 = sadd.s32 %s1200, %s1198
        %s1202 = smul.addr %s1201, 8
        %s1203 = scalar_lea.vmem %s6, %s1202
      $region56: #{_lambda_.61} parent=51 // pred_fallthru
        _
    $region52: #{_lambda_.61} parent=5 // pred_fallthru
      _
  $region6: #{_lambda_.61} parent=0 // loop_footer
    %s16 = sadd.s32 1, %s12
  $region7: #{_lambda_.61} parent=0 // loop_footer_branch
    %11 = sbr.rel target = $region3
  $region8: #{_lambda_.61} parent=0 // loop_exit
    _

// kernel: _lambda_.83
$region0: #{_lambda_.83}
  #allocation0 [shape = 'u32[]', space=smem, size = 0x4, offset = 0x4, fixed_abs, tag = 'smem constant byte address 0x4 - core index']
  #allocation1 [shape = 'u32[144,128]{1,0:T(1,128)}', space=vmem, size = 0x12000, scoped, tag = 'internal scratch']
  %s0 = inlined_call_operand.vmem [shape: bf16[16,64], index: 0, kind: input, shape index: {}]
  %s1 = inlined_call_operand.vmem [shape: bf16[64,32], index: 1, kind: input, shape index: {}]
  %s2 = inlined_call_operand.vmem [shape: f32[1,32], index: 2, kind: input, shape index: {}]
  %s3 = inlined_call_operand.vmem [shape: f32[16,32], index: 3, kind: input, shape index: {}]
  %s4 = inlined_call_operand.hbm [shape: f32[16,32], index: 4, kind: output, shape index: {}]
  %s5 = sld [smem:[#allocation0]]
  $region26: #{_lambda_.83} parent=0
    _
  %s7 = ssub.s32 1, %s5
  %s8 = scalar_select 0, %s7, %s5
  $region1: #{_lambda_.83} parent=0
    #allocation2 [shape = 'u8[8192]{0}', space=vmem, size = 0x2000, scoped, tag = 'output window, operand 0, single buffered']
    #allocation3 [shape = 's32[1]{0}', space=sflag, size = 0x4, scoped, tag = 'scoped memory for _lambda_.83']
    %9 = vsyncpa [#allocation3], 0
    // Predicated region
    $region2: #{_lambda_.83} parent=1 // pred_check
      _
    $region3: #{_lambda_.83} parent=1 // pred_check_branch
      %11 = sbr.rel (0) target = $region5
    $region4: #{_lambda_.83} parent=1 // pred_region
      _
    $region5: #{_lambda_.83} parent=1 // pred_fallthru
      _
    // Predicated region
    $region6: #{_lambda_.83} parent=1 // pred_check
      _
    $region7: #{_lambda_.83} parent=1 // pred_check_branch
      %13 = sbr.rel (0) target = $region9
    $region8: #{_lambda_.83} parent=1 // pred_region
      _
    $region9: #{_lambda_.83} parent=1 // pred_fallthru
      _
    // Predicated region
    $region10: #{_lambda_.83} parent=1 // pred_check
      _
    $region11: #{_lambda_.83} parent=1 // pred_check_branch
      %15 = sbr.rel (0) target = $region13
    $region12: #{_lambda_.83} parent=1 // pred_region
      _
    $region13: #{_lambda_.83} parent=1 // pred_fallthru
      _
    // Predicated region
    $region14: #{_lambda_.83} parent=1 // pred_check
      _
    $region15: #{_lambda_.83} parent=1 // pred_check_branch
      %17 = sbr.rel (0) target = $region17
    $region16: #{_lambda_.83} parent=1 // pred_region
      _
    $region17: #{_lambda_.83} parent=1 // pred_fallthru
      _
    %v19 = vld [vmem:[%s0] sm:$0xf]
    %v20 = vld [vmem:[%s0 + $0x4] sm:$0xf]
    %v21 = vld [vmem:[%s1] sm:$0xf]
    %v22 = vld [vmem:[%s1 + $0x4] sm:$0xf]
    %v23 = vld [vmem:[%s1 + $0x8] sm:$0xf]
    %v24 = vld [vmem:[%s1 + $0xc] sm:$0xf]
    %v25 = vld [vmem:[%s1 + $0x10] sm:$0xf]
    %v26 = vld [vmem:[%s1 + $0x14] sm:$0xf]
    %v27 = vld [vmem:[%s1 + $0x18] sm:$0xf]
    %v28 = vld [vmem:[%s1 + $0x1c] sm:$0xf]
    %v29 = vld [vmem:[%s2] sm:$0x1]
    %v31 = vlaneseq
    %v32 = vshrl.u32 %v31, 7
    %v33 = vsub.s32 0, %v32
    %v34 = vrot.slane %v29, %v33
    %v38 = vunpack.c.l.b16 %v19
    %v39 = vunpack.c.l.b16 %v20
    %v40 = vpack.c.b16 %v39, %v38
    %v49 = vunpack.c.l.b16 %v21
    %v50 = vunpack.c.l.b16 %v22
    %v51 = vunpack.c.l.b16 %v23
    %v52 = vunpack.c.l.b16 %v24
    %v53 = vunpack.c.l.b16 %v25
    %v54 = vunpack.c.l.b16 %v26
    %v55 = vunpack.c.l.b16 %v27
    %v56 = vunpack.c.l.b16 %v28
    %v57 = vpack.c.b16 %v50, %v49
    %v58 = vpack.c.b16 %v52, %v51
    %v59 = vpack.c.b16 %v54, %v53
    %v60 = vpack.c.b16 %v56, %v55
    %vm65 = vcmask 523264
    %v67 = vsel %vm65, %v40, 0
    %69 = vmatprep.subr.bf16.mxu0 0
    %70 = vmatpush1.bf16.msra.mxu0 %v57
    %71 = vmatprep.subr.bf16.mxu0 0
    %72 = vmatpush1.bf16.msra.mxu0 %v58
    %73 = vmatprep.subr.bf16.mxu0 0
    %74 = vmatpush1.bf16.msra.mxu0 %v59
    %75 = vmatprep.subr.bf16.mxu0 0
    %76 = vmatpush1.bf16.msra.mxu0 %v60
    %77 = vmatprep.subr.bf16.mxu0 0
    %78 = vmatpush1.bf16.msra.mxu0 0
    %79 = vmatprep.subr.bf16.mxu0 0
    %80 = vmatpush1.bf16.msra.mxu0 0
    %81 = vmatprep.subr.bf16.mxu0 0
    %82 = vmatpush1.bf16.msra.mxu0 0
    %83 = vmatprep.subr.bf16.mxu0 0
    %84 = vmatpush1.bf16.msra.mxu0 0
    %85 = vmatprep.subr.bf16.mxu0 0
    %86 = vmatpush1.bf16.msra.mxu0 0
    %87 = vmatprep.subr.bf16.mxu0 0
    %88 = vmatpush1.bf16.msra.mxu0 0
    %89 = vmatprep.subr.bf16.mxu0 0
    %90 = vmatpush1.bf16.msra.mxu0 0
    %91 = vmatprep.subr.bf16.mxu0 0
    %92 = vmatpush1.bf16.msra.mxu0 0
    %93 = vmatprep.subr.bf16.mxu0 0
    %94 = vmatpush1.bf16.msra.mxu0 0
    %95 = vmatprep.subr.bf16.mxu0 0
    %96 = vmatpush1.bf16.msra.mxu0 0
    %97 = vmatprep.subr.bf16.mxu0 0
    %98 = vmatpush1.bf16.msra.mxu0 0
    %99 = vmatprep.subr.bf16.mxu0 0
    %100 = vmatpush1.bf16.msra.mxu0 0
    %101 = vmatprep.mubr.bf16.mxu0 0
    %102 = vmatmul.mubr.bf16.gmra.mrb[0].mxu0 %v67
    %v103 = vpop.f32.mrb[0].mxu0
    %v104 = vadd.f32 %v34, %v103
    %v105 = vpop.f32.mrb[0].mxu0
    %v106 = vpop.f32.mrb[0].mxu0
    %v107 = vadd.f32 %v34, %v106
    %v108 = vpop.f32.mrb[0].mxu0
    %109 = vdwg.mxu0
    %v110 = vld [vmem:[%s3] sm:$0xff]
    %v111 = vld [vmem:[%s3 + $0x8] sm:$0xff]
    %v112 = vadd.f32 %v104, %v110
    %v113 = vadd.f32 %v107, %v111
    %vm114 = vcmask 261120
    %115 = vst.msk [vmem:[#allocation2] sm:$0xff] %vm114, %v112
    %116 = vst.msk [vmem:[#allocation2 + $0x8] sm:$0xff] %vm114, %v113
    // Predicated region
    $region18: #{_lambda_.83} parent=1 // pred_check
      _
    $region19: #{_lambda_.83} parent=1 // pred_check_branch
      %118 = sbr.rel (0) target = $region21
    $region20: #{_lambda_.83} parent=1 // pred_region
      %s120 = ssub.s32 256, 256
      %121 = vsyncadd [#allocation3], %s120
      %s122 = sshll.u32 [#allocation2], 4
      %s123 = int_to_ptr.vmem [resolvable:$true] %s122
      %128 = dma.vmem_to_hbm [thread:$0]  %s123, 256, %s4, [#allocation3], 128, 128, 8
    $region21: #{_lambda_.83} parent=1 // pred_fallthru
      _
    // Predicated region
    $region22: #{_lambda_.83} parent=1 // pred_check
      _
    $region23: #{_lambda_.83} parent=1 // pred_check_branch
      %130 = sbr.rel (0) target = $region25
    $region24: #{_lambda_.83} parent=1 // pred_region
      %131 = dma.done [#allocation3], 256
    $region25: #{_lambda_.83} parent=1 // pred_fallthru
      _
    %132 = vsyncpa [#allocation3], 1

</llo_original>
